<compile_context>
chip_gen: v5e
topology: v5e:2x2
jax: 0.10.0
libtpu: 0.0.40
codegen_flags: <defaults>
</compile_context>

<pallas_src>
import math

import numpy as np
import jax
import jax.numpy as jnp
from jax import lax
from jax.experimental import pallas as pl
from jax.experimental.pallas import tpu as pltpu  # noqa: F401  (TPU-specific tuning hooks)

# ----------------------------- configuration --------------------------------
SEQ_LEN    = 16      # encoder input length
LABEL_LEN  = 8
PRED_LEN   = 8       # target_lags
ENC_IN     = 4
DEC_IN     = 4
C_OUT      = 4       # must equal ENC_IN so trend accumulation broadcasts like torch
OUT_SIZE   = 4
D_MODEL    = 32
D_FF       = 32
N_HEADS    = 4       # AutoCorrelation is head-agnostic when output_attention=False
E_LAYERS   = 1
D_LAYERS   = 1
MOVING_AVG = 5       # odd kernel -> same-length moving average
FACTOR     = 1
BATCH      = 2
DEC_LEN    = LABEL_LEN + PRED_LEN
TOP_K      = max(1, int(FACTOR * math.log(SEQ_LEN)))

# The same constant index matrices are reused for encoder & decoder sequences.
assert DEC_LEN == SEQ_LEN, "this fused kernel assumes label_len + pred_len == seq_len"
assert C_OUT == ENC_IN
L  = SEQ_LEN
LL = L * L
# TODO(synk): handle L != S (zero-pad / truncate K,V in cross attention) if the
#             decoder length ever diverges from the encoder length.


# ----------------------------- constant matrices ------------------------------
def build_constants():
    """Small 0/1 selection matrices so all circular gathers become MXU matmuls."""
    roll = np.zeros((LL, L), np.float32)   # roll[tau*L+t, s] = [s == (t+tau) % L]
    tile = np.zeros((LL, L), np.float32)   # tile[tau*L+t, u] = [u == t]
    seg  = np.zeros((L, LL), np.float32)   # seg[tau, tau*L+t] = 1
    for tau in range(L):
        for t in range(L):
            roll[tau * L + t, (t + tau) % L] = 1.0
            tile[tau * L + t, t] = 1.0
            seg[tau, tau * L + t] = 1.0
    pad = (MOVING_AVG - 1) // 2
    dcmp = np.zeros((L, L), np.float32)    # replicate-pad moving-average operator
    for t in range(L):
        for j in range(-pad, pad + 1):
            dcmp[t, min(max(t + j, 0), L - 1)] += 1.0 / MOVING_AVG
    sel = np.zeros((DEC_LEN, L), np.float32)   # picks the trailing label window, zero after
    for t in range(LABEL_LEN):
        sel[t, L - LABEL_LEN + t] = 1.0
    sh_m1 = np.zeros((L, L), np.float32)   # circular shift t -> t-1
    sh_p1 = np.zeros((L, L), np.float32)   # circular shift t -> t+1
    for t in range(L):
        sh_m1[t, (t - 1) % L] = 1.0
        sh_p1[t, (t + 1) % L] = 1.0
    return dict(
        pack_rolls=jnp.asarray(np.stack([roll, tile, seg.T.copy()])),          # (3, L*L, L)
        pack_wide=jnp.asarray(np.stack([tile.T.copy(), seg])),                 # (2, L, L*L)
        pack_small=jnp.asarray(np.stack([dcmp, sel, sh_m1, sh_p1])),           # (4, L, L)
    )


# ----------------------------- the fused kernel -------------------------------
def _autoformer_kernel(*refs):
    x_ref, rolls_ref, wide_ref, small_ref = refs[0], refs[1], refs[2], refs[3]
    wrefs = refs[4:-1]
    out_ref = refs[-1]

    expected = 2 + E_LAYERS * 4 + 1 + D_LAYERS * 7 + 1 + 3
    assert len(wrefs) == expected, (len(wrefs), expected)

    ROLL  = rolls_ref[0]          # (L*L, L): row tau*L+t selects q[(t+tau)%L]
    TILE  = rolls_ref[1]          # (L*L, L): row tau*L+t selects k[t]
    SEGT  = rolls_ref[2]          # (L*L, L): row tau*L+t selects w[tau]
    IDT   = wide_ref[0]           # (L, L*L): TILE^T
    SEG   = wide_ref[1]           # (L, L*L): sums each length-L segment
    DCMP  = small_ref[0]          # (L, L):   replicate-pad moving average
    SEL   = small_ref[1]          # (DEC_LEN, L): trailing-label-window selector
    SH_M1 = small_ref[2]          # (L, L):   circular shift t -> t-1
    SH_P1 = small_ref[3]          # (L, L):   circular shift t -> t+1

    it = iter(wrefs)

    def nxt():
        return next(it)

    def read_attn():
        w = nxt()                 # (4, D, D): q, k, v, o projection weights
        b = nxt()                 # (4, 1, D): q, k, v, o projection biases
        return {'wq': w[0], 'wk': w[1], 'wv': w[2], 'wo': w[3],
                'bq': b[0], 'bk': b[1], 'bv': b[2], 'bo': b[3]}

    enc_emb = nxt()[...]          # (3, ENC_IN, D_MODEL)
    dec_emb = nxt()[...]          # (3, DEC_IN, D_MODEL)
    enc_layers = [{'attn': read_attn(), 'c1': nxt()[...], 'c2': nxt()[...]}
                  for _ in range(E_LAYERS)]
    enc_norm = nxt()              # (2, 1, D): gamma, beta
    dec_layers = [{'self_attn': read_attn(), 'cross_attn': read_attn(),
                   'c1': nxt()[...], 'c2': nxt()[...], 'trend_w': nxt()[...]}
                  for _ in range(D_LAYERS)]
    dec_norm = nxt()              # (2, 1, D)
    proj_w = nxt()[...]; proj_b = nxt()[...]; trend_proj_w = nxt()[...]
    enc_g, enc_b = enc_norm[0], enc_norm[1]
    dec_g, dec_b = dec_norm[0], dec_norm[1]

    def mm(a, b):
        return jnp.dot(a, b, preferred_element_type=jnp.float32)

    def decomp(x):                # x: (T, C) -> (seasonal, trend)
        trend = mm(DCMP, x)
        return x - trend, trend

    def my_layernorm(x, g, b):
        mu = jnp.mean(x, axis=-1, keepdims=True)
        var = jnp.mean(jnp.square(x - mu), axis=-1, keepdims=True)
        xh = (x - mu) * lax.rsqrt(var + 1e-5)
        xh = xh * g + b
        return xh - jnp.mean(xh, axis=0, keepdims=True)   # my_Layernorm: subtract time-mean

    def circular_conv3(x, w3):    # w3: (3, Cin, Cout); circular taps x[t-1], x[t], x[t+1]
        return mm(mm(SH_M1, x), w3[0]) + mm(x, w3[1]) + mm(mm(SH_P1, x), w3[2])

    IDX = lax.broadcasted_iota(jnp.int32, (L, 1), 0).astype(jnp.float32)   # lag index column

    def auto_correlation(q_in, kv_in, p):
        q = mm(q_in, p['wq']) + p['bq']                 # (L, D)
        k = mm(kv_in, p['wk']) + p['bk']                # (L, D)
        v = mm(kv_in, p['wv']) + p['bv']                # (L, D)

        # circular cross-correlation for all lags at once (== irfft(rfft(q)*conj(rfft(k)))):
        qs = mm(ROLL, q)                                # (L*L, D): row tau*L+t = q[(t+tau)%L]
        kt = mm(TILE, k)                                # (L*L, D): row tau*L+t = k[t]
        r = jnp.sum(qs * kt, axis=-1, keepdims=True)    # (L*L, 1)
        corr = mm(SEG, r) * (1.0 / D_MODEL)             # (L, 1): mean over heads*channels

        # time_delay_agg_inference: top-k lags + softmax over their correlation values
        remaining = corr
        vals, onehots = [], []
        for _ in range(TOP_K):
            m = jnp.max(remaining, axis=0, keepdims=True)                       # (1, 1)
            first = jnp.min(jnp.where(remaining >= m, IDX, float(L)),
                            axis=0, keepdims=True)                              # (1, 1)
            oh = (IDX == first).astype(jnp.float32)                             # (L, 1)
            vals.append(m)
            onehots.append(oh)
            remaining = jnp.where(oh > 0.5, jnp.full_like(remaining, -1e30), remaining)
        exps = [jnp.exp(vv - vals[0]) for vv in vals]
        denom = exps[0]
        for e in exps[1:]:
            denom = denom + e
        w_oh = onehots[0] * (exps[0] / denom)
        for i in range(1, TOP_K):
            w_oh = w_oh + onehots[i] * (exps[i] / denom)                         # (L, 1)

        # aggregation matrix A[t,s] = sum_tau w[tau] * [s == (t+tau)%L], built on the MXU
        w_expand = mm(SEGT, w_oh)                        # (L*L, 1): weight of each (tau, t) row
        agg = mm(IDT, w_expand * ROLL)                   # (L, L)
        out = mm(agg, v)                                 # (L, D): weighted rolled values
        return mm(out, p['wo']) + p['bo']

    def encoder_layer(x, p):
        x = x + auto_correlation(x, x, p['attn'])
        x, _ = decomp(x)
        y = mm(jnp.maximum(mm(x, p['c1']), 0.0), p['c2'])     # FFN (k=1 convs), relu
        x, _ = decomp(x + y)
        return x

    def decoder_layer(x, cross, p):
        x = x + auto_correlation(x, x, p['self_attn'])
        x, t1 = decomp(x)
        x = x + auto_correlation(x, cross, p['cross_attn'])
        x, t2 = decomp(x)
        y = mm(jnp.maximum(mm(x, p['c1']), 0.0), p['c2'])
        x, t3 = decomp(x + y)
        residual_trend = circular_conv3(t1 + t2 + t3, p['trend_w'])   # d_model -> c_out
        return x, residual_trend

    batch = x_ref.shape[0]
    pred_mask = (lax.broadcasted_iota(jnp.int32, (DEC_LEN, 1), 0)
                 >= LABEL_LEN).astype(jnp.float32)                    # (DEC_LEN, 1)

    for b in range(batch):                                            # B=2, unrolled in-kernel
        x = x_ref[b]                                                  # (L, ENC_IN)
        seasonal, trend_full = decomp(x)
        mean_row = jnp.mean(x, axis=0, keepdims=True)                 # (1, ENC_IN)
        trend = mm(SEL, trend_full) + pred_mask * mean_row            # label window + mean tail
        seasonal_init = mm(SEL, seasonal)                             # label window + zero tail

        # embeddings (embed_type=4: circular token conv only, dropout=0)
        enc_out = circular_conv3(x, enc_emb)
        for p in enc_layers:
            enc_out = encoder_layer(enc_out, p)
        enc_out = my_layernorm(enc_out, enc_g, enc_b)

        dec_x = circular_conv3(seasonal_init, dec_emb)
        for p in dec_layers:
            dec_x, residual_trend = decoder_layer(dec_x, enc_out, p)
            trend = trend + residual_trend
        dec_x = my_layernorm(dec_x, dec_g, dec_b)

        dec_out = mm(trend, trend_proj_w) + mm(dec_x, proj_w) + proj_b
        out_ref[b] = dec_out[DEC_LEN - PRED_LEN:, :]


# ----------------------------- wrapper ----------------------------------------
def autoformer_forward(params, consts, x_enc):
    inputs = [x_enc,
              consts['pack_rolls'], consts['pack_wide'], consts['pack_small'],
              params['enc_emb_w3'], params['dec_emb_w3']]
    for lp in params['enc_layers']:
        inputs += [lp['attn']['w'], lp['attn']['b'], lp['conv1_w'], lp['conv2_w']]
    inputs += [params['enc_norm']]
    for lp in params['dec_layers']:
        inputs += [lp['self_attn']['w'], lp['self_attn']['b'],
                   lp['cross_attn']['w'], lp['cross_attn']['b'],
                   lp['conv1_w'], lp['conv2_w'], lp['trend_w3']]
    inputs += [params['dec_norm'],
               params['proj_w'], params['proj_b'], params['trend_proj_w']]

    batch = x_enc.shape[0]
    return pl.pallas_call(
        _autoformer_kernel,
        out_shape=jax.ShapeDtypeStruct((batch, PRED_LEN, OUT_SIZE), jnp.float32),
    )(*[jnp.asarray(a, jnp.float32) for a in inputs])


# ----------------------------- parameter init ---------------------------------
def init_params(key):
    keys = iter(jax.random.split(key, 128))

    def nrm(shape, scale=0.1):
        return jax.random.normal(next(keys), shape, jnp.float32) * scale

    def conv3_weight(c_in, c_out):
        # PyTorch Conv1d weight (c_out, c_in, 3) -> stacked (3, c_in, c_out), taps t-1, t, t+1
        w = nrm((c_out, c_in, 3))
        return jnp.stack([w[:, :, 0].T, w[:, :, 1].T, w[:, :, 2].T], axis=0)

    def attn_params():
        # packed q/k/v/o projections: (4, D, D) weights + (4, 1, D) biases
        return dict(
            w=jnp.stack([nrm((D_MODEL, D_MODEL)) for _ in range(4)], axis=0),
            b=jnp.stack([nrm((1, D_MODEL)) for _ in range(4)], axis=0),
        )

    def norm_params():
        return jnp.stack([jnp.ones((1, D_MODEL), jnp.float32),
                          jnp.zeros((1, D_MODEL), jnp.float32)], axis=0)   # (2, 1, D)

    return dict(
        enc_emb_w3=conv3_weight(ENC_IN, D_MODEL),
        dec_emb_w3=conv3_weight(DEC_IN, D_MODEL),
        enc_layers=[dict(attn=attn_params(),
                         conv1_w=nrm((D_MODEL, D_FF)),
                         conv2_w=nrm((D_FF, D_MODEL))) for _ in range(E_LAYERS)],
        enc_norm=norm_params(),
        dec_layers=[dict(self_attn=attn_params(), cross_attn=attn_params(),
                         conv1_w=nrm((D_MODEL, D_FF)),
                         conv2_w=nrm((D_FF, D_MODEL)),
                         trend_w3=conv3_weight(D_MODEL, C_OUT)) for _ in range(D_LAYERS)],
        dec_norm=norm_params(),
        proj_w=nrm((D_MODEL, OUT_SIZE)), proj_b=nrm((1, OUT_SIZE)),
        trend_proj_w=nrm((ENC_IN, OUT_SIZE)),
    )


# --------------------------------- main ----------------------------------------
if __name__ == "__main__":
    key = jax.random.PRNGKey(0)
    pkey, xkey = jax.random.split(key)
    params = init_params(pkey)
    consts = build_constants()
    x_enc = jax.random.normal(xkey, (BATCH, SEQ_LEN, ENC_IN), jnp.float32)

    fwd = jax.jit(autoformer_forward)
    out = jax.block_until_ready(fwd(params, consts, x_enc))
    assert out.shape == (BATCH, PRED_LEN, OUT_SIZE), out.shape
    assert bool(jnp.all(jnp.isfinite(out)))
    print("KERNEL_OK")
</pallas_src>

<mosaic_0001>
module attributes {stable_mosaic.version = 11 : i64} {
  func.func @_autoformer_kernel(%arg0: memref<2x16x4xf32, #tpu.memory_space<vmem>>, %arg1: memref<3x256x16xf32, #tpu.memory_space<vmem>>, %arg2: memref<2x16x256xf32, #tpu.memory_space<vmem>>, %arg3: memref<4x16x16xf32, #tpu.memory_space<vmem>>, %arg4: memref<3x4x32xf32, #tpu.memory_space<vmem>>, %arg5: memref<3x4x32xf32, #tpu.memory_space<vmem>>, %arg6: memref<4x32x32xf32, #tpu.memory_space<vmem>>, %arg7: memref<4x1x32xf32, #tpu.memory_space<vmem>>, %arg8: memref<32x32xf32, #tpu.memory_space<vmem>>, %arg9: memref<32x32xf32, #tpu.memory_space<vmem>>, %arg10: memref<2x1x32xf32, #tpu.memory_space<vmem>>, %arg11: memref<4x32x32xf32, #tpu.memory_space<vmem>>, %arg12: memref<4x1x32xf32, #tpu.memory_space<vmem>>, %arg13: memref<4x32x32xf32, #tpu.memory_space<vmem>>, %arg14: memref<4x1x32xf32, #tpu.memory_space<vmem>>, %arg15: memref<32x32xf32, #tpu.memory_space<vmem>>, %arg16: memref<32x32xf32, #tpu.memory_space<vmem>>, %arg17: memref<3x32x4xf32, #tpu.memory_space<vmem>>, %arg18: memref<2x1x32xf32, #tpu.memory_space<vmem>>, %arg19: memref<32x4xf32, #tpu.memory_space<vmem>>, %arg20: memref<1x4xf32, #tpu.memory_space<vmem>>, %arg21: memref<4x4xf32, #tpu.memory_space<vmem>>, %arg22: memref<2x8x4xf32, #tpu.memory_space<vmem>>) attributes {dimension_semantics = [], scalar_prefetch = 0 : i64, scratch_operands = 0 : i64, tpu.core_type = #tpu.core_type<tc>} {
    %c0 = arith.constant 0 : index
    %c0_0 = arith.constant 0 : index
    %c0_1 = arith.constant 0 : index
    %0 = vector.load %arg1[%c0, %c0_0, %c0_1] : memref<3x256x16xf32, #tpu.memory_space<vmem>>, vector<1x256x16xf32>
    %1 = vector.shape_cast %0 : vector<1x256x16xf32> to vector<256x16xf32>
    %c1 = arith.constant 1 : index
    %c0_2 = arith.constant 0 : index
    %c0_3 = arith.constant 0 : index
    %2 = vector.load %arg1[%c1, %c0_2, %c0_3] : memref<3x256x16xf32, #tpu.memory_space<vmem>>, vector<1x256x16xf32>
    %3 = vector.shape_cast %2 : vector<1x256x16xf32> to vector<256x16xf32>
    %c2 = arith.constant 2 : index
    %c0_4 = arith.constant 0 : index
    %c0_5 = arith.constant 0 : index
    %4 = vector.load %arg1[%c2, %c0_4, %c0_5] : memref<3x256x16xf32, #tpu.memory_space<vmem>>, vector<1x256x16xf32>
    %5 = vector.shape_cast %4 : vector<1x256x16xf32> to vector<256x16xf32>
    %c0_6 = arith.constant 0 : index
    %c0_7 = arith.constant 0 : index
    %c0_8 = arith.constant 0 : index
    %6 = vector.load %arg2[%c0_6, %c0_7, %c0_8] : memref<2x16x256xf32, #tpu.memory_space<vmem>>, vector<1x16x256xf32>
    %7 = vector.shape_cast %6 : vector<1x16x256xf32> to vector<16x256xf32>
    %c1_9 = arith.constant 1 : index
    %c0_10 = arith.constant 0 : index
    %c0_11 = arith.constant 0 : index
    %8 = vector.load %arg2[%c1_9, %c0_10, %c0_11] : memref<2x16x256xf32, #tpu.memory_space<vmem>>, vector<1x16x256xf32>
    %9 = vector.shape_cast %8 : vector<1x16x256xf32> to vector<16x256xf32>
    %c0_12 = arith.constant 0 : index
    %c0_13 = arith.constant 0 : index
    %c0_14 = arith.constant 0 : index
    %10 = vector.load %arg3[%c0_12, %c0_13, %c0_14] : memref<4x16x16xf32, #tpu.memory_space<vmem>>, vector<1x16x16xf32>
    %11 = vector.shape_cast %10 : vector<1x16x16xf32> to vector<16x16xf32>
    %c1_15 = arith.constant 1 : index
    %c0_16 = arith.constant 0 : index
    %c0_17 = arith.constant 0 : index
    %12 = vector.load %arg3[%c1_15, %c0_16, %c0_17] : memref<4x16x16xf32, #tpu.memory_space<vmem>>, vector<1x16x16xf32>
    %13 = vector.shape_cast %12 : vector<1x16x16xf32> to vector<16x16xf32>
    %c2_18 = arith.constant 2 : index
    %c0_19 = arith.constant 0 : index
    %c0_20 = arith.constant 0 : index
    %14 = vector.load %arg3[%c2_18, %c0_19, %c0_20] : memref<4x16x16xf32, #tpu.memory_space<vmem>>, vector<1x16x16xf32>
    %15 = vector.shape_cast %14 : vector<1x16x16xf32> to vector<16x16xf32>
    %c3 = arith.constant 3 : index
    %c0_21 = arith.constant 0 : index
    %c0_22 = arith.constant 0 : index
    %16 = vector.load %arg3[%c3, %c0_21, %c0_22] : memref<4x16x16xf32, #tpu.memory_space<vmem>>, vector<1x16x16xf32>
    %17 = vector.shape_cast %16 : vector<1x16x16xf32> to vector<16x16xf32>
    %c0_23 = arith.constant 0 : index
    %c0_24 = arith.constant 0 : index
    %c0_25 = arith.constant 0 : index
    %18 = vector.load %arg4[%c0_23, %c0_24, %c0_25] : memref<3x4x32xf32, #tpu.memory_space<vmem>>, vector<3x4x32xf32>
    %c0_26 = arith.constant 0 : index
    %c0_27 = arith.constant 0 : index
    %c0_28 = arith.constant 0 : index
    %19 = vector.load %arg5[%c0_26, %c0_27, %c0_28] : memref<3x4x32xf32, #tpu.memory_space<vmem>>, vector<3x4x32xf32>
    %c0_29 = arith.constant 0 : index
    %c0_30 = arith.constant 0 : index
    %c0_31 = arith.constant 0 : index
    %20 = vector.load %arg6[%c0_29, %c0_30, %c0_31] : memref<4x32x32xf32, #tpu.memory_space<vmem>>, vector<1x32x32xf32>
    %21 = vector.shape_cast %20 : vector<1x32x32xf32> to vector<32x32xf32>
    %c1_32 = arith.constant 1 : index
    %c0_33 = arith.constant 0 : index
    %c0_34 = arith.constant 0 : index
    %22 = vector.load %arg6[%c1_32, %c0_33, %c0_34] : memref<4x32x32xf32, #tpu.memory_space<vmem>>, vector<1x32x32xf32>
    %23 = vector.shape_cast %22 : vector<1x32x32xf32> to vector<32x32xf32>
    %c2_35 = arith.constant 2 : index
    %c0_36 = arith.constant 0 : index
    %c0_37 = arith.constant 0 : index
    %24 = vector.load %arg6[%c2_35, %c0_36, %c0_37] : memref<4x32x32xf32, #tpu.memory_space<vmem>>, vector<1x32x32xf32>
    %25 = vector.shape_cast %24 : vector<1x32x32xf32> to vector<32x32xf32>
    %c3_38 = arith.constant 3 : index
    %c0_39 = arith.constant 0 : index
    %c0_40 = arith.constant 0 : index
    %26 = vector.load %arg6[%c3_38, %c0_39, %c0_40] : memref<4x32x32xf32, #tpu.memory_space<vmem>>, vector<1x32x32xf32>
    %27 = vector.shape_cast %26 : vector<1x32x32xf32> to vector<32x32xf32>
    %c0_41 = arith.constant 0 : index
    %c0_42 = arith.constant 0 : index
    %c0_43 = arith.constant 0 : index
    %28 = vector.load %arg7[%c0_41, %c0_42, %c0_43] : memref<4x1x32xf32, #tpu.memory_space<vmem>>, vector<1x1x32xf32>
    %29 = vector.shape_cast %28 : vector<1x1x32xf32> to vector<1x32xf32>
    %c1_44 = arith.constant 1 : index
    %c0_45 = arith.constant 0 : index
    %c0_46 = arith.constant 0 : index
    %30 = vector.load %arg7[%c1_44, %c0_45, %c0_46] : memref<4x1x32xf32, #tpu.memory_space<vmem>>, vector<1x1x32xf32>
    %31 = vector.shape_cast %30 : vector<1x1x32xf32> to vector<1x32xf32>
    %c2_47 = arith.constant 2 : index
    %c0_48 = arith.constant 0 : index
    %c0_49 = arith.constant 0 : index
    %32 = vector.load %arg7[%c2_47, %c0_48, %c0_49] : memref<4x1x32xf32, #tpu.memory_space<vmem>>, vector<1x1x32xf32>
    %33 = vector.shape_cast %32 : vector<1x1x32xf32> to vector<1x32xf32>
    %c3_50 = arith.constant 3 : index
    %c0_51 = arith.constant 0 : index
    %c0_52 = arith.constant 0 : index
    %34 = vector.load %arg7[%c3_50, %c0_51, %c0_52] : memref<4x1x32xf32, #tpu.memory_space<vmem>>, vector<1x1x32xf32>
    %35 = vector.shape_cast %34 : vector<1x1x32xf32> to vector<1x32xf32>
    %c0_53 = arith.constant 0 : index
    %c0_54 = arith.constant 0 : index
    %36 = vector.load %arg8[%c0_53, %c0_54] : memref<32x32xf32, #tpu.memory_space<vmem>>, vector<32x32xf32>
    %c0_55 = arith.constant 0 : index
    %c0_56 = arith.constant 0 : index
    %37 = vector.load %arg9[%c0_55, %c0_56] : memref<32x32xf32, #tpu.memory_space<vmem>>, vector<32x32xf32>
    %c0_57 = arith.constant 0 : index
    %c0_58 = arith.constant 0 : index
    %c0_59 = arith.constant 0 : index
    %38 = vector.load %arg11[%c0_57, %c0_58, %c0_59] : memref<4x32x32xf32, #tpu.memory_space<vmem>>, vector<1x32x32xf32>
    %39 = vector.shape_cast %38 : vector<1x32x32xf32> to vector<32x32xf32>
    %c1_60 = arith.constant 1 : index
    %c0_61 = arith.constant 0 : index
    %c0_62 = arith.constant 0 : index
    %40 = vector.load %arg11[%c1_60, %c0_61, %c0_62] : memref<4x32x32xf32, #tpu.memory_space<vmem>>, vector<1x32x32xf32>
    %41 = vector.shape_cast %40 : vector<1x32x32xf32> to vector<32x32xf32>
    %c2_63 = arith.constant 2 : index
    %c0_64 = arith.constant 0 : index
    %c0_65 = arith.constant 0 : index
    %42 = vector.load %arg11[%c2_63, %c0_64, %c0_65] : memref<4x32x32xf32, #tpu.memory_space<vmem>>, vector<1x32x32xf32>
    %43 = vector.shape_cast %42 : vector<1x32x32xf32> to vector<32x32xf32>
    %c3_66 = arith.constant 3 : index
    %c0_67 = arith.constant 0 : index
    %c0_68 = arith.constant 0 : index
    %44 = vector.load %arg11[%c3_66, %c0_67, %c0_68] : memref<4x32x32xf32, #tpu.memory_space<vmem>>, vector<1x32x32xf32>
    %45 = vector.shape_cast %44 : vector<1x32x32xf32> to vector<32x32xf32>
    %c0_69 = arith.constant 0 : index
    %c0_70 = arith.constant 0 : index
    %c0_71 = arith.constant 0 : index
    %46 = vector.load %arg12[%c0_69, %c0_70, %c0_71] : memref<4x1x32xf32, #tpu.memory_space<vmem>>, vector<1x1x32xf32>
    %47 = vector.shape_cast %46 : vector<1x1x32xf32> to vector<1x32xf32>
    %c1_72 = arith.constant 1 : index
    %c0_73 = arith.constant 0 : index
    %c0_74 = arith.constant 0 : index
    %48 = vector.load %arg12[%c1_72, %c0_73, %c0_74] : memref<4x1x32xf32, #tpu.memory_space<vmem>>, vector<1x1x32xf32>
    %49 = vector.shape_cast %48 : vector<1x1x32xf32> to vector<1x32xf32>
    %c2_75 = arith.constant 2 : index
    %c0_76 = arith.constant 0 : index
    %c0_77 = arith.constant 0 : index
    %50 = vector.load %arg12[%c2_75, %c0_76, %c0_77] : memref<4x1x32xf32, #tpu.memory_space<vmem>>, vector<1x1x32xf32>
    %51 = vector.shape_cast %50 : vector<1x1x32xf32> to vector<1x32xf32>
    %c3_78 = arith.constant 3 : index
    %c0_79 = arith.constant 0 : index
    %c0_80 = arith.constant 0 : index
    %52 = vector.load %arg12[%c3_78, %c0_79, %c0_80] : memref<4x1x32xf32, #tpu.memory_space<vmem>>, vector<1x1x32xf32>
    %53 = vector.shape_cast %52 : vector<1x1x32xf32> to vector<1x32xf32>
    %c0_81 = arith.constant 0 : index
    %c0_82 = arith.constant 0 : index
    %c0_83 = arith.constant 0 : index
    %54 = vector.load %arg13[%c0_81, %c0_82, %c0_83] : memref<4x32x32xf32, #tpu.memory_space<vmem>>, vector<1x32x32xf32>
    %55 = vector.shape_cast %54 : vector<1x32x32xf32> to vector<32x32xf32>
    %c1_84 = arith.constant 1 : index
    %c0_85 = arith.constant 0 : index
    %c0_86 = arith.constant 0 : index
    %56 = vector.load %arg13[%c1_84, %c0_85, %c0_86] : memref<4x32x32xf32, #tpu.memory_space<vmem>>, vector<1x32x32xf32>
    %57 = vector.shape_cast %56 : vector<1x32x32xf32> to vector<32x32xf32>
    %c2_87 = arith.constant 2 : index
    %c0_88 = arith.constant 0 : index
    %c0_89 = arith.constant 0 : index
    %58 = vector.load %arg13[%c2_87, %c0_88, %c0_89] : memref<4x32x32xf32, #tpu.memory_space<vmem>>, vector<1x32x32xf32>
    %59 = vector.shape_cast %58 : vector<1x32x32xf32> to vector<32x32xf32>
    %c3_90 = arith.constant 3 : index
    %c0_91 = arith.constant 0 : index
    %c0_92 = arith.constant 0 : index
    %60 = vector.load %arg13[%c3_90, %c0_91, %c0_92] : memref<4x32x32xf32, #tpu.memory_space<vmem>>, vector<1x32x32xf32>
    %61 = vector.shape_cast %60 : vector<1x32x32xf32> to vector<32x32xf32>
    %c0_93 = arith.constant 0 : index
    %c0_94 = arith.constant 0 : index
    %c0_95 = arith.constant 0 : index
    %62 = vector.load %arg14[%c0_93, %c0_94, %c0_95] : memref<4x1x32xf32, #tpu.memory_space<vmem>>, vector<1x1x32xf32>
    %63 = vector.shape_cast %62 : vector<1x1x32xf32> to vector<1x32xf32>
    %c1_96 = arith.constant 1 : index
    %c0_97 = arith.constant 0 : index
    %c0_98 = arith.constant 0 : index
    %64 = vector.load %arg14[%c1_96, %c0_97, %c0_98] : memref<4x1x32xf32, #tpu.memory_space<vmem>>, vector<1x1x32xf32>
    %65 = vector.shape_cast %64 : vector<1x1x32xf32> to vector<1x32xf32>
    %c2_99 = arith.constant 2 : index
    %c0_100 = arith.constant 0 : index
    %c0_101 = arith.constant 0 : index
    %66 = vector.load %arg14[%c2_99, %c0_100, %c0_101] : memref<4x1x32xf32, #tpu.memory_space<vmem>>, vector<1x1x32xf32>
    %67 = vector.shape_cast %66 : vector<1x1x32xf32> to vector<1x32xf32>
    %c3_102 = arith.constant 3 : index
    %c0_103 = arith.constant 0 : index
    %c0_104 = arith.constant 0 : index
    %68 = vector.load %arg14[%c3_102, %c0_103, %c0_104] : memref<4x1x32xf32, #tpu.memory_space<vmem>>, vector<1x1x32xf32>
    %69 = vector.shape_cast %68 : vector<1x1x32xf32> to vector<1x32xf32>
    %c0_105 = arith.constant 0 : index
    %c0_106 = arith.constant 0 : index
    %70 = vector.load %arg15[%c0_105, %c0_106] : memref<32x32xf32, #tpu.memory_space<vmem>>, vector<32x32xf32>
    %c0_107 = arith.constant 0 : index
    %c0_108 = arith.constant 0 : index
    %71 = vector.load %arg16[%c0_107, %c0_108] : memref<32x32xf32, #tpu.memory_space<vmem>>, vector<32x32xf32>
    %c0_109 = arith.constant 0 : index
    %c0_110 = arith.constant 0 : index
    %c0_111 = arith.constant 0 : index
    %72 = vector.load %arg17[%c0_109, %c0_110, %c0_111] : memref<3x32x4xf32, #tpu.memory_space<vmem>>, vector<3x32x4xf32>
    %c0_112 = arith.constant 0 : index
    %c0_113 = arith.constant 0 : index
    %73 = vector.load %arg19[%c0_112, %c0_113] : memref<32x4xf32, #tpu.memory_space<vmem>>, vector<32x4xf32>
    %c0_114 = arith.constant 0 : index
    %c0_115 = arith.constant 0 : index
    %74 = vector.load %arg20[%c0_114, %c0_115] : memref<1x4xf32, #tpu.memory_space<vmem>>, vector<1x4xf32>
    %c0_116 = arith.constant 0 : index
    %c0_117 = arith.constant 0 : index
    %75 = vector.load %arg21[%c0_116, %c0_117] : memref<4x4xf32, #tpu.memory_space<vmem>>, vector<4x4xf32>
    %c0_118 = arith.constant 0 : index
    %c0_119 = arith.constant 0 : index
    %c0_120 = arith.constant 0 : index
    %76 = vector.load %arg10[%c0_118, %c0_119, %c0_120] : memref<2x1x32xf32, #tpu.memory_space<vmem>>, vector<1x1x32xf32>
    %77 = vector.shape_cast %76 : vector<1x1x32xf32> to vector<1x32xf32>
    %c1_121 = arith.constant 1 : index
    %c0_122 = arith.constant 0 : index
    %c0_123 = arith.constant 0 : index
    %78 = vector.load %arg10[%c1_121, %c0_122, %c0_123] : memref<2x1x32xf32, #tpu.memory_space<vmem>>, vector<1x1x32xf32>
    %79 = vector.shape_cast %78 : vector<1x1x32xf32> to vector<1x32xf32>
    %c0_124 = arith.constant 0 : index
    %c0_125 = arith.constant 0 : index
    %c0_126 = arith.constant 0 : index
    %80 = vector.load %arg18[%c0_124, %c0_125, %c0_126] : memref<2x1x32xf32, #tpu.memory_space<vmem>>, vector<1x1x32xf32>
    %81 = vector.shape_cast %80 : vector<1x1x32xf32> to vector<1x32xf32>
    %c1_127 = arith.constant 1 : index
    %c0_128 = arith.constant 0 : index
    %c0_129 = arith.constant 0 : index
    %82 = vector.load %arg18[%c1_127, %c0_128, %c0_129] : memref<2x1x32xf32, #tpu.memory_space<vmem>>, vector<1x1x32xf32>
    %83 = vector.shape_cast %82 : vector<1x1x32xf32> to vector<1x32xf32>
    %84 = tpu.iota {dimensions = array<i32: 0>} : vector<16x1xi32>
    %85 = arith.sitofp %84 : vector<16x1xi32> to vector<16x1xf32>
    %86 = tpu.iota {dimensions = array<i32: 0>} : vector<16x1xi32>
    %c8_i32 = arith.constant 8 : i32
    %87 = vector.broadcast %c8_i32 : i32 to vector<16x1xi32>
    %88 = arith.cmpi sge, %86, %87 : vector<16x1xi32>
    %89 = arith.extui %88 : vector<16x1xi1> to vector<16x1xi32>
    %90 = arith.sitofp %89 : vector<16x1xi32> to vector<16x1xf32>
    %c0_130 = arith.constant 0 : index
    %c0_131 = arith.constant 0 : index
    %c0_132 = arith.constant 0 : index
    %91 = vector.load %arg0[%c0_130, %c0_131, %c0_132] : memref<2x16x4xf32, #tpu.memory_space<vmem>>, vector<1x16x4xf32>
    %92 = vector.shape_cast %91 : vector<1x16x4xf32> to vector<16x4xf32>
    %cst = arith.constant dense<0.000000e+00> : vector<16x4xf32>
    %93 = tpu.matmul %11, %92, %cst {dimension_numbers = #tpu.dot_dimension_numbers<[1], [0], [0], [1], [0, 0, 1, 1], [], []>} : vector<16x16xf32>, vector<16x4xf32>, vector<16x4xf32> -> vector<16x4xf32>
    %94 = arith.subf %92, %93 : vector<16x4xf32>
    %cst_133 = arith.constant dense<0.000000e+00> : vector<4xf32>
    %95 = vector.multi_reduction <add>, %92, %cst_133 [0] : vector<16x4xf32> to vector<4xf32>
    %96 = vector.shape_cast %95 : vector<4xf32> to vector<1x4xf32>
    %cst_134 = arith.constant 1.600000e+01 : f32
    %97 = vector.broadcast %cst_134 : f32 to vector<1x4xf32>
    %98 = arith.divf %96, %97 : vector<1x4xf32>
    %cst_135 = arith.constant dense<0.000000e+00> : vector<16x4xf32>
    %99 = tpu.matmul %13, %93, %cst_135 {dimension_numbers = #tpu.dot_dimension_numbers<[1], [0], [0], [1], [0, 0, 1, 1], [], []>} : vector<16x16xf32>, vector<16x4xf32>, vector<16x4xf32> -> vector<16x4xf32>
    %100 = vector.broadcast %90 : vector<16x1xf32> to vector<16x4xf32>
    %101 = vector.broadcast %98 : vector<1x4xf32> to vector<16x4xf32>
    %102 = arith.mulf %100, %101 : vector<16x4xf32>
    %103 = arith.addf %99, %102 : vector<16x4xf32>
    %cst_136 = arith.constant dense<0.000000e+00> : vector<16x4xf32>
    %104 = tpu.matmul %13, %94, %cst_136 {dimension_numbers = #tpu.dot_dimension_numbers<[1], [0], [0], [1], [0, 0, 1, 1], [], []>} : vector<16x16xf32>, vector<16x4xf32>, vector<16x4xf32> -> vector<16x4xf32>
    %cst_137 = arith.constant dense<0.000000e+00> : vector<16x4xf32>
    %105 = tpu.matmul %15, %92, %cst_137 {dimension_numbers = #tpu.dot_dimension_numbers<[1], [0], [0], [1], [0, 0, 1, 1], [], []>} : vector<16x16xf32>, vector<16x4xf32>, vector<16x4xf32> -> vector<16x4xf32>
    %106 = vector.extract_strided_slice %18 {offsets = [0, 0, 0], sizes = [1, 4, 32], strides = [1, 1, 1]} : vector<3x4x32xf32> to vector<1x4x32xf32>
    %107 = vector.shape_cast %106 : vector<1x4x32xf32> to vector<4x32xf32>
    %cst_138 = arith.constant dense<0.000000e+00> : vector<16x32xf32>
    %108 = tpu.matmul %105, %107, %cst_138 {dimension_numbers = #tpu.dot_dimension_numbers<[1], [0], [0], [1], [0, 0, 1, 1], [], []>} : vector<16x4xf32>, vector<4x32xf32>, vector<16x32xf32> -> vector<16x32xf32>
    %109 = vector.extract_strided_slice %18 {offsets = [1, 0, 0], sizes = [1, 4, 32], strides = [1, 1, 1]} : vector<3x4x32xf32> to vector<1x4x32xf32>
    %110 = vector.shape_cast %109 : vector<1x4x32xf32> to vector<4x32xf32>
    %cst_139 = arith.constant dense<0.000000e+00> : vector<16x32xf32>
    %111 = tpu.matmul %92, %110, %cst_139 {dimension_numbers = #tpu.dot_dimension_numbers<[1], [0], [0], [1], [0, 0, 1, 1], [], []>} : vector<16x4xf32>, vector<4x32xf32>, vector<16x32xf32> -> vector<16x32xf32>
    %112 = arith.addf %108, %111 : vector<16x32xf32>
    %cst_140 = arith.constant dense<0.000000e+00> : vector<16x4xf32>
    %113 = tpu.matmul %17, %92, %cst_140 {dimension_numbers = #tpu.dot_dimension_numbers<[1], [0], [0], [1], [0, 0, 1, 1], [], []>} : vector<16x16xf32>, vector<16x4xf32>, vector<16x4xf32> -> vector<16x4xf32>
    %114 = vector.extract_strided_slice %18 {offsets = [2, 0, 0], sizes = [1, 4, 32], strides = [1, 1, 1]} : vector<3x4x32xf32> to vector<1x4x32xf32>
    %115 = vector.shape_cast %114 : vector<1x4x32xf32> to vector<4x32xf32>
    %cst_141 = arith.constant dense<0.000000e+00> : vector<16x32xf32>
    %116 = tpu.matmul %113, %115, %cst_141 {dimension_numbers = #tpu.dot_dimension_numbers<[1], [0], [0], [1], [0, 0, 1, 1], [], []>} : vector<16x4xf32>, vector<4x32xf32>, vector<16x32xf32> -> vector<16x32xf32>
    %117 = arith.addf %112, %116 : vector<16x32xf32>
    %cst_142 = arith.constant dense<0.000000e+00> : vector<16x32xf32>
    %118 = tpu.matmul %117, %21, %cst_142 {dimension_numbers = #tpu.dot_dimension_numbers<[1], [0], [0], [1], [0, 0, 1, 1], [], []>} : vector<16x32xf32>, vector<32x32xf32>, vector<16x32xf32> -> vector<16x32xf32>
    %119 = vector.broadcast %29 : vector<1x32xf32> to vector<16x32xf32>
    %120 = arith.addf %118, %119 : vector<16x32xf32>
    %cst_143 = arith.constant dense<0.000000e+00> : vector<16x32xf32>
    %121 = tpu.matmul %117, %23, %cst_143 {dimension_numbers = #tpu.dot_dimension_numbers<[1], [0], [0], [1], [0, 0, 1, 1], [], []>} : vector<16x32xf32>, vector<32x32xf32>, vector<16x32xf32> -> vector<16x32xf32>
    %122 = vector.broadcast %31 : vector<1x32xf32> to vector<16x32xf32>
    %123 = arith.addf %121, %122 : vector<16x32xf32>
    %cst_144 = arith.constant dense<0.000000e+00> : vector<16x32xf32>
    %124 = tpu.matmul %117, %25, %cst_144 {dimension_numbers = #tpu.dot_dimension_numbers<[1], [0], [0], [1], [0, 0, 1, 1], [], []>} : vector<16x32xf32>, vector<32x32xf32>, vector<16x32xf32> -> vector<16x32xf32>
    %125 = vector.broadcast %33 : vector<1x32xf32> to vector<16x32xf32>
    %126 = arith.addf %124, %125 : vector<16x32xf32>
    %cst_145 = arith.constant dense<0.000000e+00> : vector<256x32xf32>
    %127 = tpu.matmul %1, %120, %cst_145 {dimension_numbers = #tpu.dot_dimension_numbers<[1], [0], [0], [1], [0, 0, 1, 1], [], []>} : vector<256x16xf32>, vector<16x32xf32>, vector<256x32xf32> -> vector<256x32xf32>
    %cst_146 = arith.constant dense<0.000000e+00> : vector<256x32xf32>
    %128 = tpu.matmul %3, %123, %cst_146 {dimension_numbers = #tpu.dot_dimension_numbers<[1], [0], [0], [1], [0, 0, 1, 1], [], []>} : vector<256x16xf32>, vector<16x32xf32>, vector<256x32xf32> -> vector<256x32xf32>
    %129 = arith.mulf %127, %128 : vector<256x32xf32>
    %cst_147 = arith.constant dense<0.000000e+00> : vector<256xf32>
    %130 = vector.multi_reduction <add>, %129, %cst_147 [1] : vector<256x32xf32> to vector<256xf32>
    %131 = vector.shape_cast %130 : vector<256xf32> to vector<256x1xf32>
    %cst_148 = arith.constant dense<0.000000e+00> : vector<16x1xf32>
    %132 = tpu.matmul %9, %131, %cst_148 {dimension_numbers = #tpu.dot_dimension_numbers<[1], [0], [0], [1], [0, 0, 1, 1], [], []>} : vector<16x256xf32>, vector<256x1xf32>, vector<16x1xf32> -> vector<16x1xf32>
    %cst_149 = arith.constant 3.125000e-02 : f32
    %133 = vector.broadcast %cst_149 : f32 to vector<16x1xf32>
    %134 = arith.mulf %132, %133 : vector<16x1xf32>
    %cst_150 = arith.constant dense<0xFF800000> : vector<1xf32>
    %135 = vector.multi_reduction <maximumf>, %134, %cst_150 [0] : vector<16x1xf32> to vector<1xf32>
    %136 = vector.shape_cast %135 : vector<1xf32> to vector<1x1xf32>
    %137 = vector.broadcast %136 : vector<1x1xf32> to vector<16x1xf32>
    %138 = arith.cmpf oge, %134, %137 : vector<16x1xf32>
    %cst_151 = arith.constant 1.600000e+01 : f32
    %139 = vector.broadcast %cst_151 : f32 to vector<16x1xf32>
    %140 = arith.select %138, %85, %139 : vector<16x1xi1>, vector<16x1xf32>
    %cst_152 = arith.constant dense<0x7F800000> : vector<1xf32>
    %141 = vector.multi_reduction <minimumf>, %140, %cst_152 [0] : vector<16x1xf32> to vector<1xf32>
    %142 = vector.shape_cast %141 : vector<1xf32> to vector<1x1xf32>
    %143 = vector.broadcast %142 : vector<1x1xf32> to vector<16x1xf32>
    %144 = arith.cmpf oeq, %85, %143 : vector<16x1xf32>
    %145 = arith.extui %144 : vector<16x1xi1> to vector<16x1xi32>
    %146 = arith.sitofp %145 : vector<16x1xi32> to vector<16x1xf32>
    %cst_153 = arith.constant 5.000000e-01 : f32
    %147 = vector.broadcast %cst_153 : f32 to vector<16x1xf32>
    %148 = arith.cmpf ogt, %146, %147 : vector<16x1xf32>
    %cst_154 = arith.constant -1.000000e+30 : f32
    %149 = vector.broadcast %cst_154 : f32 to vector<16x1xf32>
    %150 = arith.select %148, %149, %134 : vector<16x1xi1>, vector<16x1xf32>
    %cst_155 = arith.constant dense<0xFF800000> : vector<1xf32>
    %151 = vector.multi_reduction <maximumf>, %150, %cst_155 [0] : vector<16x1xf32> to vector<1xf32>
    %152 = vector.shape_cast %151 : vector<1xf32> to vector<1x1xf32>
    %153 = vector.broadcast %152 : vector<1x1xf32> to vector<16x1xf32>
    %154 = arith.cmpf oge, %150, %153 : vector<16x1xf32>
    %cst_156 = arith.constant 1.600000e+01 : f32
    %155 = vector.broadcast %cst_156 : f32 to vector<16x1xf32>
    %156 = arith.select %154, %85, %155 : vector<16x1xi1>, vector<16x1xf32>
    %cst_157 = arith.constant dense<0x7F800000> : vector<1xf32>
    %157 = vector.multi_reduction <minimumf>, %156, %cst_157 [0] : vector<16x1xf32> to vector<1xf32>
    %158 = vector.shape_cast %157 : vector<1xf32> to vector<1x1xf32>
    %159 = vector.broadcast %158 : vector<1x1xf32> to vector<16x1xf32>
    %160 = arith.cmpf oeq, %85, %159 : vector<16x1xf32>
    %161 = arith.extui %160 : vector<16x1xi1> to vector<16x1xi32>
    %162 = arith.sitofp %161 : vector<16x1xi32> to vector<16x1xf32>
    %163 = arith.subf %136, %136 : vector<1x1xf32>
    %164 = math.exp %163 : vector<1x1xf32>
    %165 = arith.subf %152, %136 : vector<1x1xf32>
    %166 = math.exp %165 : vector<1x1xf32>
    %167 = arith.addf %164, %166 : vector<1x1xf32>
    %168 = arith.divf %164, %167 : vector<1x1xf32>
    %169 = vector.broadcast %168 : vector<1x1xf32> to vector<16x1xf32>
    %170 = arith.mulf %146, %169 : vector<16x1xf32>
    %171 = arith.divf %166, %167 : vector<1x1xf32>
    %172 = vector.broadcast %171 : vector<1x1xf32> to vector<16x1xf32>
    %173 = arith.mulf %162, %172 : vector<16x1xf32>
    %174 = arith.addf %170, %173 : vector<16x1xf32>
    %cst_158 = arith.constant dense<0.000000e+00> : vector<256x1xf32>
    %175 = tpu.matmul %5, %174, %cst_158 {dimension_numbers = #tpu.dot_dimension_numbers<[1], [0], [0], [1], [0, 0, 1, 1], [], []>} : vector<256x16xf32>, vector<16x1xf32>, vector<256x1xf32> -> vector<256x1xf32>
    %176 = vector.broadcast %175 : vector<256x1xf32> to vector<256x16xf32>
    %177 = arith.mulf %176, %1 : vector<256x16xf32>
    %cst_159 = arith.constant dense<0.000000e+00> : vector<16x16xf32>
    %178 = tpu.matmul %7, %177, %cst_159 {dimension_numbers = #tpu.dot_dimension_numbers<[1], [0], [0], [1], [0, 0, 1, 1], [], []>} : vector<16x256xf32>, vector<256x16xf32>, vector<16x16xf32> -> vector<16x16xf32>
    %cst_160 = arith.constant dense<0.000000e+00> : vector<16x32xf32>
    %179 = tpu.matmul %178, %126, %cst_160 {dimension_numbers = #tpu.dot_dimension_numbers<[1], [0], [0], [1], [0, 0, 1, 1], [], []>} : vector<16x16xf32>, vector<16x32xf32>, vector<16x32xf32> -> vector<16x32xf32>
    %cst_161 = arith.constant dense<0.000000e+00> : vector<16x32xf32>
    %180 = tpu.matmul %179, %27, %cst_161 {dimension_numbers = #tpu.dot_dimension_numbers<[1], [0], [0], [1], [0, 0, 1, 1], [], []>} : vector<16x32xf32>, vector<32x32xf32>, vector<16x32xf32> -> vector<16x32xf32>
    %181 = vector.broadcast %35 : vector<1x32xf32> to vector<16x32xf32>
    %182 = arith.addf %180, %181 : vector<16x32xf32>
    %183 = arith.addf %117, %182 : vector<16x32xf32>
    %cst_162 = arith.constant dense<0.000000e+00> : vector<16x32xf32>
    %184 = tpu.matmul %11, %183, %cst_162 {dimension_numbers = #tpu.dot_dimension_numbers<[1], [0], [0], [1], [0, 0, 1, 1], [], []>} : vector<16x16xf32>, vector<16x32xf32>, vector<16x32xf32> -> vector<16x32xf32>
    %185 = arith.subf %183, %184 : vector<16x32xf32>
    %cst_163 = arith.constant dense<0.000000e+00> : vector<16x32xf32>
    %186 = tpu.matmul %185, %36, %cst_163 {dimension_numbers = #tpu.dot_dimension_numbers<[1], [0], [0], [1], [0, 0, 1, 1], [], []>} : vector<16x32xf32>, vector<32x32xf32>, vector<16x32xf32> -> vector<16x32xf32>
    %cst_164 = arith.constant 0.000000e+00 : f32
    %187 = vector.broadcast %cst_164 : f32 to vector<16x32xf32>
    %188 = arith.maximumf %186, %187 : vector<16x32xf32>
    %cst_165 = arith.constant dense<0.000000e+00> : vector<16x32xf32>
    %189 = tpu.matmul %188, %37, %cst_165 {dimension_numbers = #tpu.dot_dimension_numbers<[1], [0], [0], [1], [0, 0, 1, 1], [], []>} : vector<16x32xf32>, vector<32x32xf32>, vector<16x32xf32> -> vector<16x32xf32>
    %190 = arith.addf %185, %189 : vector<16x32xf32>
    %cst_166 = arith.constant dense<0.000000e+00> : vector<16x32xf32>
    %191 = tpu.matmul %11, %190, %cst_166 {dimension_numbers = #tpu.dot_dimension_numbers<[1], [0], [0], [1], [0, 0, 1, 1], [], []>} : vector<16x16xf32>, vector<16x32xf32>, vector<16x32xf32> -> vector<16x32xf32>
    %192 = arith.subf %190, %191 : vector<16x32xf32>
    %cst_167 = arith.constant dense<0.000000e+00> : vector<16xf32>
    %193 = vector.multi_reduction <add>, %192, %cst_167 [1] : vector<16x32xf32> to vector<16xf32>
    %194 = vector.shape_cast %193 : vector<16xf32> to vector<16x1xf32>
    %cst_168 = arith.constant 3.200000e+01 : f32
    %195 = vector.broadcast %cst_168 : f32 to vector<16x1xf32>
    %196 = arith.divf %194, %195 : vector<16x1xf32>
    %197 = vector.broadcast %196 : vector<16x1xf32> to vector<16x32xf32>
    %198 = arith.subf %192, %197 : vector<16x32xf32>
    %199 = arith.mulf %198, %198 : vector<16x32xf32>
    %cst_169 = arith.constant dense<0.000000e+00> : vector<16xf32>
    %200 = vector.multi_reduction <add>, %199, %cst_169 [1] : vector<16x32xf32> to vector<16xf32>
    %201 = vector.shape_cast %200 : vector<16xf32> to vector<16x1xf32>
    %cst_170 = arith.constant 3.200000e+01 : f32
    %202 = vector.broadcast %cst_170 : f32 to vector<16x1xf32>
    %203 = arith.divf %201, %202 : vector<16x1xf32>
    %204 = vector.broadcast %196 : vector<16x1xf32> to vector<16x32xf32>
    %205 = arith.subf %192, %204 : vector<16x32xf32>
    %cst_171 = arith.constant 9.99999974E-6 : f32
    %206 = vector.broadcast %cst_171 : f32 to vector<16x1xf32>
    %207 = arith.addf %203, %206 : vector<16x1xf32>
    %208 = math.rsqrt %207 : vector<16x1xf32>
    %209 = vector.broadcast %208 : vector<16x1xf32> to vector<16x32xf32>
    %210 = arith.mulf %205, %209 : vector<16x32xf32>
    %211 = vector.broadcast %77 : vector<1x32xf32> to vector<16x32xf32>
    %212 = arith.mulf %210, %211 : vector<16x32xf32>
    %213 = vector.broadcast %79 : vector<1x32xf32> to vector<16x32xf32>
    %214 = arith.addf %212, %213 : vector<16x32xf32>
    %cst_172 = arith.constant dense<0.000000e+00> : vector<32xf32>
    %215 = vector.multi_reduction <add>, %214, %cst_172 [0] : vector<16x32xf32> to vector<32xf32>
    %216 = vector.shape_cast %215 : vector<32xf32> to vector<1x32xf32>
    %cst_173 = arith.constant 1.600000e+01 : f32
    %217 = vector.broadcast %cst_173 : f32 to vector<1x32xf32>
    %218 = arith.divf %216, %217 : vector<1x32xf32>
    %219 = vector.broadcast %218 : vector<1x32xf32> to vector<16x32xf32>
    %220 = arith.subf %214, %219 : vector<16x32xf32>
    %cst_174 = arith.constant dense<0.000000e+00> : vector<16x4xf32>
    %221 = tpu.matmul %15, %104, %cst_174 {dimension_numbers = #tpu.dot_dimension_numbers<[1], [0], [0], [1], [0, 0, 1, 1], [], []>} : vector<16x16xf32>, vector<16x4xf32>, vector<16x4xf32> -> vector<16x4xf32>
    %222 = vector.extract_strided_slice %19 {offsets = [0, 0, 0], sizes = [1, 4, 32], strides = [1, 1, 1]} : vector<3x4x32xf32> to vector<1x4x32xf32>
    %223 = vector.shape_cast %222 : vector<1x4x32xf32> to vector<4x32xf32>
    %cst_175 = arith.constant dense<0.000000e+00> : vector<16x32xf32>
    %224 = tpu.matmul %221, %223, %cst_175 {dimension_numbers = #tpu.dot_dimension_numbers<[1], [0], [0], [1], [0, 0, 1, 1], [], []>} : vector<16x4xf32>, vector<4x32xf32>, vector<16x32xf32> -> vector<16x32xf32>
    %225 = vector.extract_strided_slice %19 {offsets = [1, 0, 0], sizes = [1, 4, 32], strides = [1, 1, 1]} : vector<3x4x32xf32> to vector<1x4x32xf32>
    %226 = vector.shape_cast %225 : vector<1x4x32xf32> to vector<4x32xf32>
    %cst_176 = arith.constant dense<0.000000e+00> : vector<16x32xf32>
    %227 = tpu.matmul %104, %226, %cst_176 {dimension_numbers = #tpu.dot_dimension_numbers<[1], [0], [0], [1], [0, 0, 1, 1], [], []>} : vector<16x4xf32>, vector<4x32xf32>, vector<16x32xf32> -> vector<16x32xf32>
    %228 = arith.addf %224, %227 : vector<16x32xf32>
    %cst_177 = arith.constant dense<0.000000e+00> : vector<16x4xf32>
    %229 = tpu.matmul %17, %104, %cst_177 {dimension_numbers = #tpu.dot_dimension_numbers<[1], [0], [0], [1], [0, 0, 1, 1], [], []>} : vector<16x16xf32>, vector<16x4xf32>, vector<16x4xf32> -> vector<16x4xf32>
    %230 = vector.extract_strided_slice %19 {offsets = [2, 0, 0], sizes = [1, 4, 32], strides = [1, 1, 1]} : vector<3x4x32xf32> to vector<1x4x32xf32>
    %231 = vector.shape_cast %230 : vector<1x4x32xf32> to vector<4x32xf32>
    %cst_178 = arith.constant dense<0.000000e+00> : vector<16x32xf32>
    %232 = tpu.matmul %229, %231, %cst_178 {dimension_numbers = #tpu.dot_dimension_numbers<[1], [0], [0], [1], [0, 0, 1, 1], [], []>} : vector<16x4xf32>, vector<4x32xf32>, vector<16x32xf32> -> vector<16x32xf32>
    %233 = arith.addf %228, %232 : vector<16x32xf32>
    %cst_179 = arith.constant dense<0.000000e+00> : vector<16x32xf32>
    %234 = tpu.matmul %233, %39, %cst_179 {dimension_numbers = #tpu.dot_dimension_numbers<[1], [0], [0], [1], [0, 0, 1, 1], [], []>} : vector<16x32xf32>, vector<32x32xf32>, vector<16x32xf32> -> vector<16x32xf32>
    %235 = vector.broadcast %47 : vector<1x32xf32> to vector<16x32xf32>
    %236 = arith.addf %234, %235 : vector<16x32xf32>
    %cst_180 = arith.constant dense<0.000000e+00> : vector<16x32xf32>
    %237 = tpu.matmul %233, %41, %cst_180 {dimension_numbers = #tpu.dot_dimension_numbers<[1], [0], [0], [1], [0, 0, 1, 1], [], []>} : vector<16x32xf32>, vector<32x32xf32>, vector<16x32xf32> -> vector<16x32xf32>
    %238 = vector.broadcast %49 : vector<1x32xf32> to vector<16x32xf32>
    %239 = arith.addf %237, %238 : vector<16x32xf32>
    %cst_181 = arith.constant dense<0.000000e+00> : vector<16x32xf32>
    %240 = tpu.matmul %233, %43, %cst_181 {dimension_numbers = #tpu.dot_dimension_numbers<[1], [0], [0], [1], [0, 0, 1, 1], [], []>} : vector<16x32xf32>, vector<32x32xf32>, vector<16x32xf32> -> vector<16x32xf32>
    %241 = vector.broadcast %51 : vector<1x32xf32> to vector<16x32xf32>
    %242 = arith.addf %240, %241 : vector<16x32xf32>
    %cst_182 = arith.constant dense<0.000000e+00> : vector<256x32xf32>
    %243 = tpu.matmul %1, %236, %cst_182 {dimension_numbers = #tpu.dot_dimension_numbers<[1], [0], [0], [1], [0, 0, 1, 1], [], []>} : vector<256x16xf32>, vector<16x32xf32>, vector<256x32xf32> -> vector<256x32xf32>
    %cst_183 = arith.constant dense<0.000000e+00> : vector<256x32xf32>
    %244 = tpu.matmul %3, %239, %cst_183 {dimension_numbers = #tpu.dot_dimension_numbers<[1], [0], [0], [1], [0, 0, 1, 1], [], []>} : vector<256x16xf32>, vector<16x32xf32>, vector<256x32xf32> -> vector<256x32xf32>
    %245 = arith.mulf %243, %244 : vector<256x32xf32>
    %cst_184 = arith.constant dense<0.000000e+00> : vector<256xf32>
    %246 = vector.multi_reduction <add>, %245, %cst_184 [1] : vector<256x32xf32> to vector<256xf32>
    %247 = vector.shape_cast %246 : vector<256xf32> to vector<256x1xf32>
    %cst_185 = arith.constant dense<0.000000e+00> : vector<16x1xf32>
    %248 = tpu.matmul %9, %247, %cst_185 {dimension_numbers = #tpu.dot_dimension_numbers<[1], [0], [0], [1], [0, 0, 1, 1], [], []>} : vector<16x256xf32>, vector<256x1xf32>, vector<16x1xf32> -> vector<16x1xf32>
    %cst_186 = arith.constant 3.125000e-02 : f32
    %249 = vector.broadcast %cst_186 : f32 to vector<16x1xf32>
    %250 = arith.mulf %248, %249 : vector<16x1xf32>
    %cst_187 = arith.constant dense<0xFF800000> : vector<1xf32>
    %251 = vector.multi_reduction <maximumf>, %250, %cst_187 [0] : vector<16x1xf32> to vector<1xf32>
    %252 = vector.shape_cast %251 : vector<1xf32> to vector<1x1xf32>
    %253 = vector.broadcast %252 : vector<1x1xf32> to vector<16x1xf32>
    %254 = arith.cmpf oge, %250, %253 : vector<16x1xf32>
    %cst_188 = arith.constant 1.600000e+01 : f32
    %255 = vector.broadcast %cst_188 : f32 to vector<16x1xf32>
    %256 = arith.select %254, %85, %255 : vector<16x1xi1>, vector<16x1xf32>
    %cst_189 = arith.constant dense<0x7F800000> : vector<1xf32>
    %257 = vector.multi_reduction <minimumf>, %256, %cst_189 [0] : vector<16x1xf32> to vector<1xf32>
    %258 = vector.shape_cast %257 : vector<1xf32> to vector<1x1xf32>
    %259 = vector.broadcast %258 : vector<1x1xf32> to vector<16x1xf32>
    %260 = arith.cmpf oeq, %85, %259 : vector<16x1xf32>
    %261 = arith.extui %260 : vector<16x1xi1> to vector<16x1xi32>
    %262 = arith.sitofp %261 : vector<16x1xi32> to vector<16x1xf32>
    %cst_190 = arith.constant 5.000000e-01 : f32
    %263 = vector.broadcast %cst_190 : f32 to vector<16x1xf32>
    %264 = arith.cmpf ogt, %262, %263 : vector<16x1xf32>
    %cst_191 = arith.constant -1.000000e+30 : f32
    %265 = vector.broadcast %cst_191 : f32 to vector<16x1xf32>
    %266 = arith.select %264, %265, %250 : vector<16x1xi1>, vector<16x1xf32>
    %cst_192 = arith.constant dense<0xFF800000> : vector<1xf32>
    %267 = vector.multi_reduction <maximumf>, %266, %cst_192 [0] : vector<16x1xf32> to vector<1xf32>
    %268 = vector.shape_cast %267 : vector<1xf32> to vector<1x1xf32>
    %269 = vector.broadcast %268 : vector<1x1xf32> to vector<16x1xf32>
    %270 = arith.cmpf oge, %266, %269 : vector<16x1xf32>
    %cst_193 = arith.constant 1.600000e+01 : f32
    %271 = vector.broadcast %cst_193 : f32 to vector<16x1xf32>
    %272 = arith.select %270, %85, %271 : vector<16x1xi1>, vector<16x1xf32>
    %cst_194 = arith.constant dense<0x7F800000> : vector<1xf32>
    %273 = vector.multi_reduction <minimumf>, %272, %cst_194 [0] : vector<16x1xf32> to vector<1xf32>
    %274 = vector.shape_cast %273 : vector<1xf32> to vector<1x1xf32>
    %275 = vector.broadcast %274 : vector<1x1xf32> to vector<16x1xf32>
    %276 = arith.cmpf oeq, %85, %275 : vector<16x1xf32>
    %277 = arith.extui %276 : vector<16x1xi1> to vector<16x1xi32>
    %278 = arith.sitofp %277 : vector<16x1xi32> to vector<16x1xf32>
    %279 = arith.subf %252, %252 : vector<1x1xf32>
    %280 = math.exp %279 : vector<1x1xf32>
    %281 = arith.subf %268, %252 : vector<1x1xf32>
    %282 = math.exp %281 : vector<1x1xf32>
    %283 = arith.addf %280, %282 : vector<1x1xf32>
    %284 = arith.divf %280, %283 : vector<1x1xf32>
    %285 = vector.broadcast %284 : vector<1x1xf32> to vector<16x1xf32>
    %286 = arith.mulf %262, %285 : vector<16x1xf32>
    %287 = arith.divf %282, %283 : vector<1x1xf32>
    %288 = vector.broadcast %287 : vector<1x1xf32> to vector<16x1xf32>
    %289 = arith.mulf %278, %288 : vector<16x1xf32>
    %290 = arith.addf %286, %289 : vector<16x1xf32>
    %cst_195 = arith.constant dense<0.000000e+00> : vector<256x1xf32>
    %291 = tpu.matmul %5, %290, %cst_195 {dimension_numbers = #tpu.dot_dimension_numbers<[1], [0], [0], [1], [0, 0, 1, 1], [], []>} : vector<256x16xf32>, vector<16x1xf32>, vector<256x1xf32> -> vector<256x1xf32>
    %292 = vector.broadcast %291 : vector<256x1xf32> to vector<256x16xf32>
    %293 = arith.mulf %292, %1 : vector<256x16xf32>
    %cst_196 = arith.constant dense<0.000000e+00> : vector<16x16xf32>
    %294 = tpu.matmul %7, %293, %cst_196 {dimension_numbers = #tpu.dot_dimension_numbers<[1], [0], [0], [1], [0, 0, 1, 1], [], []>} : vector<16x256xf32>, vector<256x16xf32>, vector<16x16xf32> -> vector<16x16xf32>
    %cst_197 = arith.constant dense<0.000000e+00> : vector<16x32xf32>
    %295 = tpu.matmul %294, %242, %cst_197 {dimension_numbers = #tpu.dot_dimension_numbers<[1], [0], [0], [1], [0, 0, 1, 1], [], []>} : vector<16x16xf32>, vector<16x32xf32>, vector<16x32xf32> -> vector<16x32xf32>
    %cst_198 = arith.constant dense<0.000000e+00> : vector<16x32xf32>
    %296 = tpu.matmul %295, %45, %cst_198 {dimension_numbers = #tpu.dot_dimension_numbers<[1], [0], [0], [1], [0, 0, 1, 1], [], []>} : vector<16x32xf32>, vector<32x32xf32>, vector<16x32xf32> -> vector<16x32xf32>
    %297 = vector.broadcast %53 : vector<1x32xf32> to vector<16x32xf32>
    %298 = arith.addf %296, %297 : vector<16x32xf32>
    %299 = arith.addf %233, %298 : vector<16x32xf32>
    %cst_199 = arith.constant dense<0.000000e+00> : vector<16x32xf32>
    %300 = tpu.matmul %11, %299, %cst_199 {dimension_numbers = #tpu.dot_dimension_numbers<[1], [0], [0], [1], [0, 0, 1, 1], [], []>} : vector<16x16xf32>, vector<16x32xf32>, vector<16x32xf32> -> vector<16x32xf32>
    %301 = arith.subf %299, %300 : vector<16x32xf32>
    %cst_200 = arith.constant dense<0.000000e+00> : vector<16x32xf32>
    %302 = tpu.matmul %301, %55, %cst_200 {dimension_numbers = #tpu.dot_dimension_numbers<[1], [0], [0], [1], [0, 0, 1, 1], [], []>} : vector<16x32xf32>, vector<32x32xf32>, vector<16x32xf32> -> vector<16x32xf32>
    %303 = vector.broadcast %63 : vector<1x32xf32> to vector<16x32xf32>
    %304 = arith.addf %302, %303 : vector<16x32xf32>
    %cst_201 = arith.constant dense<0.000000e+00> : vector<16x32xf32>
    %305 = tpu.matmul %220, %57, %cst_201 {dimension_numbers = #tpu.dot_dimension_numbers<[1], [0], [0], [1], [0, 0, 1, 1], [], []>} : vector<16x32xf32>, vector<32x32xf32>, vector<16x32xf32> -> vector<16x32xf32>
    %306 = vector.broadcast %65 : vector<1x32xf32> to vector<16x32xf32>
    %307 = arith.addf %305, %306 : vector<16x32xf32>
    %cst_202 = arith.constant dense<0.000000e+00> : vector<16x32xf32>
    %308 = tpu.matmul %220, %59, %cst_202 {dimension_numbers = #tpu.dot_dimension_numbers<[1], [0], [0], [1], [0, 0, 1, 1], [], []>} : vector<16x32xf32>, vector<32x32xf32>, vector<16x32xf32> -> vector<16x32xf32>
    %309 = vector.broadcast %67 : vector<1x32xf32> to vector<16x32xf32>
    %310 = arith.addf %308, %309 : vector<16x32xf32>
    %cst_203 = arith.constant dense<0.000000e+00> : vector<256x32xf32>
    %311 = tpu.matmul %1, %304, %cst_203 {dimension_numbers = #tpu.dot_dimension_numbers<[1], [0], [0], [1], [0, 0, 1, 1], [], []>} : vector<256x16xf32>, vector<16x32xf32>, vector<256x32xf32> -> vector<256x32xf32>
    %cst_204 = arith.constant dense<0.000000e+00> : vector<256x32xf32>
    %312 = tpu.matmul %3, %307, %cst_204 {dimension_numbers = #tpu.dot_dimension_numbers<[1], [0], [0], [1], [0, 0, 1, 1], [], []>} : vector<256x16xf32>, vector<16x32xf32>, vector<256x32xf32> -> vector<256x32xf32>
    %313 = arith.mulf %311, %312 : vector<256x32xf32>
    %cst_205 = arith.constant dense<0.000000e+00> : vector<256xf32>
    %314 = vector.multi_reduction <add>, %313, %cst_205 [1] : vector<256x32xf32> to vector<256xf32>
    %315 = vector.shape_cast %314 : vector<256xf32> to vector<256x1xf32>
    %cst_206 = arith.constant dense<0.000000e+00> : vector<16x1xf32>
    %316 = tpu.matmul %9, %315, %cst_206 {dimension_numbers = #tpu.dot_dimension_numbers<[1], [0], [0], [1], [0, 0, 1, 1], [], []>} : vector<16x256xf32>, vector<256x1xf32>, vector<16x1xf32> -> vector<16x1xf32>
    %cst_207 = arith.constant 3.125000e-02 : f32
    %317 = vector.broadcast %cst_207 : f32 to vector<16x1xf32>
    %318 = arith.mulf %316, %317 : vector<16x1xf32>
    %cst_208 = arith.constant dense<0xFF800000> : vector<1xf32>
    %319 = vector.multi_reduction <maximumf>, %318, %cst_208 [0] : vector<16x1xf32> to vector<1xf32>
    %320 = vector.shape_cast %319 : vector<1xf32> to vector<1x1xf32>
    %321 = vector.broadcast %320 : vector<1x1xf32> to vector<16x1xf32>
    %322 = arith.cmpf oge, %318, %321 : vector<16x1xf32>
    %cst_209 = arith.constant 1.600000e+01 : f32
    %323 = vector.broadcast %cst_209 : f32 to vector<16x1xf32>
    %324 = arith.select %322, %85, %323 : vector<16x1xi1>, vector<16x1xf32>
    %cst_210 = arith.constant dense<0x7F800000> : vector<1xf32>
    %325 = vector.multi_reduction <minimumf>, %324, %cst_210 [0] : vector<16x1xf32> to vector<1xf32>
    %326 = vector.shape_cast %325 : vector<1xf32> to vector<1x1xf32>
    %327 = vector.broadcast %326 : vector<1x1xf32> to vector<16x1xf32>
    %328 = arith.cmpf oeq, %85, %327 : vector<16x1xf32>
    %329 = arith.extui %328 : vector<16x1xi1> to vector<16x1xi32>
    %330 = arith.sitofp %329 : vector<16x1xi32> to vector<16x1xf32>
    %cst_211 = arith.constant 5.000000e-01 : f32
    %331 = vector.broadcast %cst_211 : f32 to vector<16x1xf32>
    %332 = arith.cmpf ogt, %330, %331 : vector<16x1xf32>
    %cst_212 = arith.constant -1.000000e+30 : f32
    %333 = vector.broadcast %cst_212 : f32 to vector<16x1xf32>
    %334 = arith.select %332, %333, %318 : vector<16x1xi1>, vector<16x1xf32>
    %cst_213 = arith.constant dense<0xFF800000> : vector<1xf32>
    %335 = vector.multi_reduction <maximumf>, %334, %cst_213 [0] : vector<16x1xf32> to vector<1xf32>
    %336 = vector.shape_cast %335 : vector<1xf32> to vector<1x1xf32>
    %337 = vector.broadcast %336 : vector<1x1xf32> to vector<16x1xf32>
    %338 = arith.cmpf oge, %334, %337 : vector<16x1xf32>
    %cst_214 = arith.constant 1.600000e+01 : f32
    %339 = vector.broadcast %cst_214 : f32 to vector<16x1xf32>
    %340 = arith.select %338, %85, %339 : vector<16x1xi1>, vector<16x1xf32>
    %cst_215 = arith.constant dense<0x7F800000> : vector<1xf32>
    %341 = vector.multi_reduction <minimumf>, %340, %cst_215 [0] : vector<16x1xf32> to vector<1xf32>
    %342 = vector.shape_cast %341 : vector<1xf32> to vector<1x1xf32>
    %343 = vector.broadcast %342 : vector<1x1xf32> to vector<16x1xf32>
    %344 = arith.cmpf oeq, %85, %343 : vector<16x1xf32>
    %345 = arith.extui %344 : vector<16x1xi1> to vector<16x1xi32>
    %346 = arith.sitofp %345 : vector<16x1xi32> to vector<16x1xf32>
    %347 = arith.subf %320, %320 : vector<1x1xf32>
    %348 = math.exp %347 : vector<1x1xf32>
    %349 = arith.subf %336, %320 : vector<1x1xf32>
    %350 = math.exp %349 : vector<1x1xf32>
    %351 = arith.addf %348, %350 : vector<1x1xf32>
    %352 = arith.divf %348, %351 : vector<1x1xf32>
    %353 = vector.broadcast %352 : vector<1x1xf32> to vector<16x1xf32>
    %354 = arith.mulf %330, %353 : vector<16x1xf32>
    %355 = arith.divf %350, %351 : vector<1x1xf32>
    %356 = vector.broadcast %355 : vector<1x1xf32> to vector<16x1xf32>
    %357 = arith.mulf %346, %356 : vector<16x1xf32>
    %358 = arith.addf %354, %357 : vector<16x1xf32>
    %cst_216 = arith.constant dense<0.000000e+00> : vector<256x1xf32>
    %359 = tpu.matmul %5, %358, %cst_216 {dimension_numbers = #tpu.dot_dimension_numbers<[1], [0], [0], [1], [0, 0, 1, 1], [], []>} : vector<256x16xf32>, vector<16x1xf32>, vector<256x1xf32> -> vector<256x1xf32>
    %360 = vector.broadcast %359 : vector<256x1xf32> to vector<256x16xf32>
    %361 = arith.mulf %360, %1 : vector<256x16xf32>
    %cst_217 = arith.constant dense<0.000000e+00> : vector<16x16xf32>
    %362 = tpu.matmul %7, %361, %cst_217 {dimension_numbers = #tpu.dot_dimension_numbers<[1], [0], [0], [1], [0, 0, 1, 1], [], []>} : vector<16x256xf32>, vector<256x16xf32>, vector<16x16xf32> -> vector<16x16xf32>
    %cst_218 = arith.constant dense<0.000000e+00> : vector<16x32xf32>
    %363 = tpu.matmul %362, %310, %cst_218 {dimension_numbers = #tpu.dot_dimension_numbers<[1], [0], [0], [1], [0, 0, 1, 1], [], []>} : vector<16x16xf32>, vector<16x32xf32>, vector<16x32xf32> -> vector<16x32xf32>
    %cst_219 = arith.constant dense<0.000000e+00> : vector<16x32xf32>
    %364 = tpu.matmul %363, %61, %cst_219 {dimension_numbers = #tpu.dot_dimension_numbers<[1], [0], [0], [1], [0, 0, 1, 1], [], []>} : vector<16x32xf32>, vector<32x32xf32>, vector<16x32xf32> -> vector<16x32xf32>
    %365 = vector.broadcast %69 : vector<1x32xf32> to vector<16x32xf32>
    %366 = arith.addf %364, %365 : vector<16x32xf32>
    %367 = arith.addf %301, %366 : vector<16x32xf32>
    %cst_220 = arith.constant dense<0.000000e+00> : vector<16x32xf32>
    %368 = tpu.matmul %11, %367, %cst_220 {dimension_numbers = #tpu.dot_dimension_numbers<[1], [0], [0], [1], [0, 0, 1, 1], [], []>} : vector<16x16xf32>, vector<16x32xf32>, vector<16x32xf32> -> vector<16x32xf32>
    %369 = arith.subf %367, %368 : vector<16x32xf32>
    %cst_221 = arith.constant dense<0.000000e+00> : vector<16x32xf32>
    %370 = tpu.matmul %369, %70, %cst_221 {dimension_numbers = #tpu.dot_dimension_numbers<[1], [0], [0], [1], [0, 0, 1, 1], [], []>} : vector<16x32xf32>, vector<32x32xf32>, vector<16x32xf32> -> vector<16x32xf32>
    %cst_222 = arith.constant 0.000000e+00 : f32
    %371 = vector.broadcast %cst_222 : f32 to vector<16x32xf32>
    %372 = arith.maximumf %370, %371 : vector<16x32xf32>
    %cst_223 = arith.constant dense<0.000000e+00> : vector<16x32xf32>
    %373 = tpu.matmul %372, %71, %cst_223 {dimension_numbers = #tpu.dot_dimension_numbers<[1], [0], [0], [1], [0, 0, 1, 1], [], []>} : vector<16x32xf32>, vector<32x32xf32>, vector<16x32xf32> -> vector<16x32xf32>
    %374 = arith.addf %369, %373 : vector<16x32xf32>
    %cst_224 = arith.constant dense<0.000000e+00> : vector<16x32xf32>
    %375 = tpu.matmul %11, %374, %cst_224 {dimension_numbers = #tpu.dot_dimension_numbers<[1], [0], [0], [1], [0, 0, 1, 1], [], []>} : vector<16x16xf32>, vector<16x32xf32>, vector<16x32xf32> -> vector<16x32xf32>
    %376 = arith.subf %374, %375 : vector<16x32xf32>
    %377 = arith.addf %300, %368 : vector<16x32xf32>
    %378 = arith.addf %377, %375 : vector<16x32xf32>
    %cst_225 = arith.constant dense<0.000000e+00> : vector<16x32xf32>
    %379 = tpu.matmul %15, %378, %cst_225 {dimension_numbers = #tpu.dot_dimension_numbers<[1], [0], [0], [1], [0, 0, 1, 1], [], []>} : vector<16x16xf32>, vector<16x32xf32>, vector<16x32xf32> -> vector<16x32xf32>
    %380 = vector.extract_strided_slice %72 {offsets = [0, 0, 0], sizes = [1, 32, 4], strides = [1, 1, 1]} : vector<3x32x4xf32> to vector<1x32x4xf32>
    %381 = vector.shape_cast %380 : vector<1x32x4xf32> to vector<32x4xf32>
    %cst_226 = arith.constant dense<0.000000e+00> : vector<16x4xf32>
    %382 = tpu.matmul %379, %381, %cst_226 {dimension_numbers = #tpu.dot_dimension_numbers<[1], [0], [0], [1], [0, 0, 1, 1], [], []>} : vector<16x32xf32>, vector<32x4xf32>, vector<16x4xf32> -> vector<16x4xf32>
    %383 = vector.extract_strided_slice %72 {offsets = [1, 0, 0], sizes = [1, 32, 4], strides = [1, 1, 1]} : vector<3x32x4xf32> to vector<1x32x4xf32>
    %384 = vector.shape_cast %383 : vector<1x32x4xf32> to vector<32x4xf32>
    %cst_227 = arith.constant dense<0.000000e+00> : vector<16x4xf32>
    %385 = tpu.matmul %378, %384, %cst_227 {dimension_numbers = #tpu.dot_dimension_numbers<[1], [0], [0], [1], [0, 0, 1, 1], [], []>} : vector<16x32xf32>, vector<32x4xf32>, vector<16x4xf32> -> vector<16x4xf32>
    %386 = arith.addf %382, %385 : vector<16x4xf32>
    %cst_228 = arith.constant dense<0.000000e+00> : vector<16x32xf32>
    %387 = tpu.matmul %17, %378, %cst_228 {dimension_numbers = #tpu.dot_dimension_numbers<[1], [0], [0], [1], [0, 0, 1, 1], [], []>} : vector<16x16xf32>, vector<16x32xf32>, vector<16x32xf32> -> vector<16x32xf32>
    %388 = vector.extract_strided_slice %72 {offsets = [2, 0, 0], sizes = [1, 32, 4], strides = [1, 1, 1]} : vector<3x32x4xf32> to vector<1x32x4xf32>
    %389 = vector.shape_cast %388 : vector<1x32x4xf32> to vector<32x4xf32>
    %cst_229 = arith.constant dense<0.000000e+00> : vector<16x4xf32>
    %390 = tpu.matmul %387, %389, %cst_229 {dimension_numbers = #tpu.dot_dimension_numbers<[1], [0], [0], [1], [0, 0, 1, 1], [], []>} : vector<16x32xf32>, vector<32x4xf32>, vector<16x4xf32> -> vector<16x4xf32>
    %391 = arith.addf %386, %390 : vector<16x4xf32>
    %392 = arith.addf %103, %391 : vector<16x4xf32>
    %cst_230 = arith.constant dense<0.000000e+00> : vector<16xf32>
    %393 = vector.multi_reduction <add>, %376, %cst_230 [1] : vector<16x32xf32> to vector<16xf32>
    %394 = vector.shape_cast %393 : vector<16xf32> to vector<16x1xf32>
    %cst_231 = arith.constant 3.200000e+01 : f32
    %395 = vector.broadcast %cst_231 : f32 to vector<16x1xf32>
    %396 = arith.divf %394, %395 : vector<16x1xf32>
    %397 = vector.broadcast %396 : vector<16x1xf32> to vector<16x32xf32>
    %398 = arith.subf %376, %397 : vector<16x32xf32>
    %399 = arith.mulf %398, %398 : vector<16x32xf32>
    %cst_232 = arith.constant dense<0.000000e+00> : vector<16xf32>
    %400 = vector.multi_reduction <add>, %399, %cst_232 [1] : vector<16x32xf32> to vector<16xf32>
    %401 = vector.shape_cast %400 : vector<16xf32> to vector<16x1xf32>
    %cst_233 = arith.constant 3.200000e+01 : f32
    %402 = vector.broadcast %cst_233 : f32 to vector<16x1xf32>
    %403 = arith.divf %401, %402 : vector<16x1xf32>
    %404 = vector.broadcast %396 : vector<16x1xf32> to vector<16x32xf32>
    %405 = arith.subf %376, %404 : vector<16x32xf32>
    %cst_234 = arith.constant 9.99999974E-6 : f32
    %406 = vector.broadcast %cst_234 : f32 to vector<16x1xf32>
    %407 = arith.addf %403, %406 : vector<16x1xf32>
    %408 = math.rsqrt %407 : vector<16x1xf32>
    %409 = vector.broadcast %408 : vector<16x1xf32> to vector<16x32xf32>
    %410 = arith.mulf %405, %409 : vector<16x32xf32>
    %411 = vector.broadcast %81 : vector<1x32xf32> to vector<16x32xf32>
    %412 = arith.mulf %410, %411 : vector<16x32xf32>
    %413 = vector.broadcast %83 : vector<1x32xf32> to vector<16x32xf32>
    %414 = arith.addf %412, %413 : vector<16x32xf32>
    %cst_235 = arith.constant dense<0.000000e+00> : vector<32xf32>
    %415 = vector.multi_reduction <add>, %414, %cst_235 [0] : vector<16x32xf32> to vector<32xf32>
    %416 = vector.shape_cast %415 : vector<32xf32> to vector<1x32xf32>
    %cst_236 = arith.constant 1.600000e+01 : f32
    %417 = vector.broadcast %cst_236 : f32 to vector<1x32xf32>
    %418 = arith.divf %416, %417 : vector<1x32xf32>
    %419 = vector.broadcast %418 : vector<1x32xf32> to vector<16x32xf32>
    %420 = arith.subf %414, %419 : vector<16x32xf32>
    %cst_237 = arith.constant dense<0.000000e+00> : vector<16x4xf32>
    %421 = tpu.matmul %392, %75, %cst_237 {dimension_numbers = #tpu.dot_dimension_numbers<[1], [0], [0], [1], [0, 0, 1, 1], [], []>} : vector<16x4xf32>, vector<4x4xf32>, vector<16x4xf32> -> vector<16x4xf32>
    %cst_238 = arith.constant dense<0.000000e+00> : vector<16x4xf32>
    %422 = tpu.matmul %420, %73, %cst_238 {dimension_numbers = #tpu.dot_dimension_numbers<[1], [0], [0], [1], [0, 0, 1, 1], [], []>} : vector<16x32xf32>, vector<32x4xf32>, vector<16x4xf32> -> vector<16x4xf32>
    %423 = arith.addf %421, %422 : vector<16x4xf32>
    %424 = vector.broadcast %74 : vector<1x4xf32> to vector<16x4xf32>
    %425 = arith.addf %423, %424 : vector<16x4xf32>
    %426 = vector.extract_strided_slice %425 {offsets = [8, 0], sizes = [8, 4], strides = [1, 1]} : vector<16x4xf32> to vector<8x4xf32>
    %c0_239 = arith.constant 0 : index
    %c0_240 = arith.constant 0 : index
    %c0_241 = arith.constant 0 : index
    %427 = vector.load %arg22[%c0_239, %c0_240, %c0_241] : memref<2x8x4xf32, #tpu.memory_space<vmem>>, vector<1x8x4xf32>
    %428 = vector.shape_cast %427 : vector<1x8x4xf32> to vector<8x4xf32>
    %429 = vector.shape_cast %426 : vector<8x4xf32> to vector<1x8x4xf32>
    tpu.vector_store %arg22[%c0_239, %c0_240, %c0_241], %429 {strides = array<i32>} : memref<2x8x4xf32, #tpu.memory_space<vmem>>, vector<1x8x4xf32>,
    %c1_242 = arith.constant 1 : index
    %c0_243 = arith.constant 0 : index
    %c0_244 = arith.constant 0 : index
    %430 = vector.load %arg0[%c1_242, %c0_243, %c0_244] : memref<2x16x4xf32, #tpu.memory_space<vmem>>, vector<1x16x4xf32>
    %431 = vector.shape_cast %430 : vector<1x16x4xf32> to vector<16x4xf32>
    %cst_245 = arith.constant dense<0.000000e+00> : vector<16x4xf32>
    %432 = tpu.matmul %11, %431, %cst_245 {dimension_numbers = #tpu.dot_dimension_numbers<[1], [0], [0], [1], [0, 0, 1, 1], [], []>} : vector<16x16xf32>, vector<16x4xf32>, vector<16x4xf32> -> vector<16x4xf32>
    %433 = arith.subf %431, %432 : vector<16x4xf32>
    %cst_246 = arith.constant dense<0.000000e+00> : vector<4xf32>
    %434 = vector.multi_reduction <add>, %431, %cst_246 [0] : vector<16x4xf32> to vector<4xf32>
    %435 = vector.shape_cast %434 : vector<4xf32> to vector<1x4xf32>
    %cst_247 = arith.constant 1.600000e+01 : f32
    %436 = vector.broadcast %cst_247 : f32 to vector<1x4xf32>
    %437 = arith.divf %435, %436 : vector<1x4xf32>
    %cst_248 = arith.constant dense<0.000000e+00> : vector<16x4xf32>
    %438 = tpu.matmul %13, %432, %cst_248 {dimension_numbers = #tpu.dot_dimension_numbers<[1], [0], [0], [1], [0, 0, 1, 1], [], []>} : vector<16x16xf32>, vector<16x4xf32>, vector<16x4xf32> -> vector<16x4xf32>
    %439 = vector.broadcast %90 : vector<16x1xf32> to vector<16x4xf32>
    %440 = vector.broadcast %437 : vector<1x4xf32> to vector<16x4xf32>
    %441 = arith.mulf %439, %440 : vector<16x4xf32>
    %442 = arith.addf %438, %441 : vector<16x4xf32>
    %cst_249 = arith.constant dense<0.000000e+00> : vector<16x4xf32>
    %443 = tpu.matmul %13, %433, %cst_249 {dimension_numbers = #tpu.dot_dimension_numbers<[1], [0], [0], [1], [0, 0, 1, 1], [], []>} : vector<16x16xf32>, vector<16x4xf32>, vector<16x4xf32> -> vector<16x4xf32>
    %cst_250 = arith.constant dense<0.000000e+00> : vector<16x4xf32>
    %444 = tpu.matmul %15, %431, %cst_250 {dimension_numbers = #tpu.dot_dimension_numbers<[1], [0], [0], [1], [0, 0, 1, 1], [], []>} : vector<16x16xf32>, vector<16x4xf32>, vector<16x4xf32> -> vector<16x4xf32>
    %445 = vector.extract_strided_slice %18 {offsets = [0, 0, 0], sizes = [1, 4, 32], strides = [1, 1, 1]} : vector<3x4x32xf32> to vector<1x4x32xf32>
    %446 = vector.shape_cast %445 : vector<1x4x32xf32> to vector<4x32xf32>
    %cst_251 = arith.constant dense<0.000000e+00> : vector<16x32xf32>
    %447 = tpu.matmul %444, %446, %cst_251 {dimension_numbers = #tpu.dot_dimension_numbers<[1], [0], [0], [1], [0, 0, 1, 1], [], []>} : vector<16x4xf32>, vector<4x32xf32>, vector<16x32xf32> -> vector<16x32xf32>
    %448 = vector.extract_strided_slice %18 {offsets = [1, 0, 0], sizes = [1, 4, 32], strides = [1, 1, 1]} : vector<3x4x32xf32> to vector<1x4x32xf32>
    %449 = vector.shape_cast %448 : vector<1x4x32xf32> to vector<4x32xf32>
    %cst_252 = arith.constant dense<0.000000e+00> : vector<16x32xf32>
    %450 = tpu.matmul %431, %449, %cst_252 {dimension_numbers = #tpu.dot_dimension_numbers<[1], [0], [0], [1], [0, 0, 1, 1], [], []>} : vector<16x4xf32>, vector<4x32xf32>, vector<16x32xf32> -> vector<16x32xf32>
    %451 = arith.addf %447, %450 : vector<16x32xf32>
    %cst_253 = arith.constant dense<0.000000e+00> : vector<16x4xf32>
    %452 = tpu.matmul %17, %431, %cst_253 {dimension_numbers = #tpu.dot_dimension_numbers<[1], [0], [0], [1], [0, 0, 1, 1], [], []>} : vector<16x16xf32>, vector<16x4xf32>, vector<16x4xf32> -> vector<16x4xf32>
    %453 = vector.extract_strided_slice %18 {offsets = [2, 0, 0], sizes = [1, 4, 32], strides = [1, 1, 1]} : vector<3x4x32xf32> to vector<1x4x32xf32>
    %454 = vector.shape_cast %453 : vector<1x4x32xf32> to vector<4x32xf32>
    %cst_254 = arith.constant dense<0.000000e+00> : vector<16x32xf32>
    %455 = tpu.matmul %452, %454, %cst_254 {dimension_numbers = #tpu.dot_dimension_numbers<[1], [0], [0], [1], [0, 0, 1, 1], [], []>} : vector<16x4xf32>, vector<4x32xf32>, vector<16x32xf32> -> vector<16x32xf32>
    %456 = arith.addf %451, %455 : vector<16x32xf32>
    %cst_255 = arith.constant dense<0.000000e+00> : vector<16x32xf32>
    %457 = tpu.matmul %456, %21, %cst_255 {dimension_numbers = #tpu.dot_dimension_numbers<[1], [0], [0], [1], [0, 0, 1, 1], [], []>} : vector<16x32xf32>, vector<32x32xf32>, vector<16x32xf32> -> vector<16x32xf32>
    %458 = vector.broadcast %29 : vector<1x32xf32> to vector<16x32xf32>
    %459 = arith.addf %457, %458 : vector<16x32xf32>
    %cst_256 = arith.constant dense<0.000000e+00> : vector<16x32xf32>
    %460 = tpu.matmul %456, %23, %cst_256 {dimension_numbers = #tpu.dot_dimension_numbers<[1], [0], [0], [1], [0, 0, 1, 1], [], []>} : vector<16x32xf32>, vector<32x32xf32>, vector<16x32xf32> -> vector<16x32xf32>
    %461 = vector.broadcast %31 : vector<1x32xf32> to vector<16x32xf32>
    %462 = arith.addf %460, %461 : vector<16x32xf32>
    %cst_257 = arith.constant dense<0.000000e+00> : vector<16x32xf32>
    %463 = tpu.matmul %456, %25, %cst_257 {dimension_numbers = #tpu.dot_dimension_numbers<[1], [0], [0], [1], [0, 0, 1, 1], [], []>} : vector<16x32xf32>, vector<32x32xf32>, vector<16x32xf32> -> vector<16x32xf32>
    %464 = vector.broadcast %33 : vector<1x32xf32> to vector<16x32xf32>
    %465 = arith.addf %463, %464 : vector<16x32xf32>
    %cst_258 = arith.constant dense<0.000000e+00> : vector<256x32xf32>
    %466 = tpu.matmul %1, %459, %cst_258 {dimension_numbers = #tpu.dot_dimension_numbers<[1], [0], [0], [1], [0, 0, 1, 1], [], []>} : vector<256x16xf32>, vector<16x32xf32>, vector<256x32xf32> -> vector<256x32xf32>
    %cst_259 = arith.constant dense<0.000000e+00> : vector<256x32xf32>
    %467 = tpu.matmul %3, %462, %cst_259 {dimension_numbers = #tpu.dot_dimension_numbers<[1], [0], [0], [1], [0, 0, 1, 1], [], []>} : vector<256x16xf32>, vector<16x32xf32>, vector<256x32xf32> -> vector<256x32xf32>
    %468 = arith.mulf %466, %467 : vector<256x32xf32>
    %cst_260 = arith.constant dense<0.000000e+00> : vector<256xf32>
    %469 = vector.multi_reduction <add>, %468, %cst_260 [1] : vector<256x32xf32> to vector<256xf32>
    %470 = vector.shape_cast %469 : vector<256xf32> to vector<256x1xf32>
    %cst_261 = arith.constant dense<0.000000e+00> : vector<16x1xf32>
    %471 = tpu.matmul %9, %470, %cst_261 {dimension_numbers = #tpu.dot_dimension_numbers<[1], [0], [0], [1], [0, 0, 1, 1], [], []>} : vector<16x256xf32>, vector<256x1xf32>, vector<16x1xf32> -> vector<16x1xf32>
    %cst_262 = arith.constant 3.125000e-02 : f32
    %472 = vector.broadcast %cst_262 : f32 to vector<16x1xf32>
    %473 = arith.mulf %471, %472 : vector<16x1xf32>
    %cst_263 = arith.constant dense<0xFF800000> : vector<1xf32>
    %474 = vector.multi_reduction <maximumf>, %473, %cst_263 [0] : vector<16x1xf32> to vector<1xf32>
    %475 = vector.shape_cast %474 : vector<1xf32> to vector<1x1xf32>
    %476 = vector.broadcast %475 : vector<1x1xf32> to vector<16x1xf32>
    %477 = arith.cmpf oge, %473, %476 : vector<16x1xf32>
    %cst_264 = arith.constant 1.600000e+01 : f32
    %478 = vector.broadcast %cst_264 : f32 to vector<16x1xf32>
    %479 = arith.select %477, %85, %478 : vector<16x1xi1>, vector<16x1xf32>
    %cst_265 = arith.constant dense<0x7F800000> : vector<1xf32>
    %480 = vector.multi_reduction <minimumf>, %479, %cst_265 [0] : vector<16x1xf32> to vector<1xf32>
    %481 = vector.shape_cast %480 : vector<1xf32> to vector<1x1xf32>
    %482 = vector.broadcast %481 : vector<1x1xf32> to vector<16x1xf32>
    %483 = arith.cmpf oeq, %85, %482 : vector<16x1xf32>
    %484 = arith.extui %483 : vector<16x1xi1> to vector<16x1xi32>
    %485 = arith.sitofp %484 : vector<16x1xi32> to vector<16x1xf32>
    %cst_266 = arith.constant 5.000000e-01 : f32
    %486 = vector.broadcast %cst_266 : f32 to vector<16x1xf32>
    %487 = arith.cmpf ogt, %485, %486 : vector<16x1xf32>
    %cst_267 = arith.constant -1.000000e+30 : f32
    %488 = vector.broadcast %cst_267 : f32 to vector<16x1xf32>
    %489 = arith.select %487, %488, %473 : vector<16x1xi1>, vector<16x1xf32>
    %cst_268 = arith.constant dense<0xFF800000> : vector<1xf32>
    %490 = vector.multi_reduction <maximumf>, %489, %cst_268 [0] : vector<16x1xf32> to vector<1xf32>
    %491 = vector.shape_cast %490 : vector<1xf32> to vector<1x1xf32>
    %492 = vector.broadcast %491 : vector<1x1xf32> to vector<16x1xf32>
    %493 = arith.cmpf oge, %489, %492 : vector<16x1xf32>
    %cst_269 = arith.constant 1.600000e+01 : f32
    %494 = vector.broadcast %cst_269 : f32 to vector<16x1xf32>
    %495 = arith.select %493, %85, %494 : vector<16x1xi1>, vector<16x1xf32>
    %cst_270 = arith.constant dense<0x7F800000> : vector<1xf32>
    %496 = vector.multi_reduction <minimumf>, %495, %cst_270 [0] : vector<16x1xf32> to vector<1xf32>
    %497 = vector.shape_cast %496 : vector<1xf32> to vector<1x1xf32>
    %498 = vector.broadcast %497 : vector<1x1xf32> to vector<16x1xf32>
    %499 = arith.cmpf oeq, %85, %498 : vector<16x1xf32>
    %500 = arith.extui %499 : vector<16x1xi1> to vector<16x1xi32>
    %501 = arith.sitofp %500 : vector<16x1xi32> to vector<16x1xf32>
    %502 = arith.subf %475, %475 : vector<1x1xf32>
    %503 = math.exp %502 : vector<1x1xf32>
    %504 = arith.subf %491, %475 : vector<1x1xf32>
    %505 = math.exp %504 : vector<1x1xf32>
    %506 = arith.addf %503, %505 : vector<1x1xf32>
    %507 = arith.divf %503, %506 : vector<1x1xf32>
    %508 = vector.broadcast %507 : vector<1x1xf32> to vector<16x1xf32>
    %509 = arith.mulf %485, %508 : vector<16x1xf32>
    %510 = arith.divf %505, %506 : vector<1x1xf32>
    %511 = vector.broadcast %510 : vector<1x1xf32> to vector<16x1xf32>
    %512 = arith.mulf %501, %511 : vector<16x1xf32>
    %513 = arith.addf %509, %512 : vector<16x1xf32>
    %cst_271 = arith.constant dense<0.000000e+00> : vector<256x1xf32>
    %514 = tpu.matmul %5, %513, %cst_271 {dimension_numbers = #tpu.dot_dimension_numbers<[1], [0], [0], [1], [0, 0, 1, 1], [], []>} : vector<256x16xf32>, vector<16x1xf32>, vector<256x1xf32> -> vector<256x1xf32>
    %515 = vector.broadcast %514 : vector<256x1xf32> to vector<256x16xf32>
    %516 = arith.mulf %515, %1 : vector<256x16xf32>
    %cst_272 = arith.constant dense<0.000000e+00> : vector<16x16xf32>
    %517 = tpu.matmul %7, %516, %cst_272 {dimension_numbers = #tpu.dot_dimension_numbers<[1], [0], [0], [1], [0, 0, 1, 1], [], []>} : vector<16x256xf32>, vector<256x16xf32>, vector<16x16xf32> -> vector<16x16xf32>
    %cst_273 = arith.constant dense<0.000000e+00> : vector<16x32xf32>
    %518 = tpu.matmul %517, %465, %cst_273 {dimension_numbers = #tpu.dot_dimension_numbers<[1], [0], [0], [1], [0, 0, 1, 1], [], []>} : vector<16x16xf32>, vector<16x32xf32>, vector<16x32xf32> -> vector<16x32xf32>
    %cst_274 = arith.constant dense<0.000000e+00> : vector<16x32xf32>
    %519 = tpu.matmul %518, %27, %cst_274 {dimension_numbers = #tpu.dot_dimension_numbers<[1], [0], [0], [1], [0, 0, 1, 1], [], []>} : vector<16x32xf32>, vector<32x32xf32>, vector<16x32xf32> -> vector<16x32xf32>
    %520 = vector.broadcast %35 : vector<1x32xf32> to vector<16x32xf32>
    %521 = arith.addf %519, %520 : vector<16x32xf32>
    %522 = arith.addf %456, %521 : vector<16x32xf32>
    %cst_275 = arith.constant dense<0.000000e+00> : vector<16x32xf32>
    %523 = tpu.matmul %11, %522, %cst_275 {dimension_numbers = #tpu.dot_dimension_numbers<[1], [0], [0], [1], [0, 0, 1, 1], [], []>} : vector<16x16xf32>, vector<16x32xf32>, vector<16x32xf32> -> vector<16x32xf32>
    %524 = arith.subf %522, %523 : vector<16x32xf32>
    %cst_276 = arith.constant dense<0.000000e+00> : vector<16x32xf32>
    %525 = tpu.matmul %524, %36, %cst_276 {dimension_numbers = #tpu.dot_dimension_numbers<[1], [0], [0], [1], [0, 0, 1, 1], [], []>} : vector<16x32xf32>, vector<32x32xf32>, vector<16x32xf32> -> vector<16x32xf32>
    %cst_277 = arith.constant 0.000000e+00 : f32
    %526 = vector.broadcast %cst_277 : f32 to vector<16x32xf32>
    %527 = arith.maximumf %525, %526 : vector<16x32xf32>
    %cst_278 = arith.constant dense<0.000000e+00> : vector<16x32xf32>
    %528 = tpu.matmul %527, %37, %cst_278 {dimension_numbers = #tpu.dot_dimension_numbers<[1], [0], [0], [1], [0, 0, 1, 1], [], []>} : vector<16x32xf32>, vector<32x32xf32>, vector<16x32xf32> -> vector<16x32xf32>
    %529 = arith.addf %524, %528 : vector<16x32xf32>
    %cst_279 = arith.constant dense<0.000000e+00> : vector<16x32xf32>
    %530 = tpu.matmul %11, %529, %cst_279 {dimension_numbers = #tpu.dot_dimension_numbers<[1], [0], [0], [1], [0, 0, 1, 1], [], []>} : vector<16x16xf32>, vector<16x32xf32>, vector<16x32xf32> -> vector<16x32xf32>
    %531 = arith.subf %529, %530 : vector<16x32xf32>
    %cst_280 = arith.constant dense<0.000000e+00> : vector<16xf32>
    %532 = vector.multi_reduction <add>, %531, %cst_280 [1] : vector<16x32xf32> to vector<16xf32>
    %533 = vector.shape_cast %532 : vector<16xf32> to vector<16x1xf32>
    %cst_281 = arith.constant 3.200000e+01 : f32
    %534 = vector.broadcast %cst_281 : f32 to vector<16x1xf32>
    %535 = arith.divf %533, %534 : vector<16x1xf32>
    %536 = vector.broadcast %535 : vector<16x1xf32> to vector<16x32xf32>
    %537 = arith.subf %531, %536 : vector<16x32xf32>
    %538 = arith.mulf %537, %537 : vector<16x32xf32>
    %cst_282 = arith.constant dense<0.000000e+00> : vector<16xf32>
    %539 = vector.multi_reduction <add>, %538, %cst_282 [1] : vector<16x32xf32> to vector<16xf32>
    %540 = vector.shape_cast %539 : vector<16xf32> to vector<16x1xf32>
    %cst_283 = arith.constant 3.200000e+01 : f32
    %541 = vector.broadcast %cst_283 : f32 to vector<16x1xf32>
    %542 = arith.divf %540, %541 : vector<16x1xf32>
    %543 = vector.broadcast %535 : vector<16x1xf32> to vector<16x32xf32>
    %544 = arith.subf %531, %543 : vector<16x32xf32>
    %cst_284 = arith.constant 9.99999974E-6 : f32
    %545 = vector.broadcast %cst_284 : f32 to vector<16x1xf32>
    %546 = arith.addf %542, %545 : vector<16x1xf32>
    %547 = math.rsqrt %546 : vector<16x1xf32>
    %548 = vector.broadcast %547 : vector<16x1xf32> to vector<16x32xf32>
    %549 = arith.mulf %544, %548 : vector<16x32xf32>
    %550 = vector.broadcast %77 : vector<1x32xf32> to vector<16x32xf32>
    %551 = arith.mulf %549, %550 : vector<16x32xf32>
    %552 = vector.broadcast %79 : vector<1x32xf32> to vector<16x32xf32>
    %553 = arith.addf %551, %552 : vector<16x32xf32>
    %cst_285 = arith.constant dense<0.000000e+00> : vector<32xf32>
    %554 = vector.multi_reduction <add>, %553, %cst_285 [0] : vector<16x32xf32> to vector<32xf32>
    %555 = vector.shape_cast %554 : vector<32xf32> to vector<1x32xf32>
    %cst_286 = arith.constant 1.600000e+01 : f32
    %556 = vector.broadcast %cst_286 : f32 to vector<1x32xf32>
    %557 = arith.divf %555, %556 : vector<1x32xf32>
    %558 = vector.broadcast %557 : vector<1x32xf32> to vector<16x32xf32>
    %559 = arith.subf %553, %558 : vector<16x32xf32>
    %cst_287 = arith.constant dense<0.000000e+00> : vector<16x4xf32>
    %560 = tpu.matmul %15, %443, %cst_287 {dimension_numbers = #tpu.dot_dimension_numbers<[1], [0], [0], [1], [0, 0, 1, 1], [], []>} : vector<16x16xf32>, vector<16x4xf32>, vector<16x4xf32> -> vector<16x4xf32>
    %561 = vector.extract_strided_slice %19 {offsets = [0, 0, 0], sizes = [1, 4, 32], strides = [1, 1, 1]} : vector<3x4x32xf32> to vector<1x4x32xf32>
    %562 = vector.shape_cast %561 : vector<1x4x32xf32> to vector<4x32xf32>
    %cst_288 = arith.constant dense<0.000000e+00> : vector<16x32xf32>
    %563 = tpu.matmul %560, %562, %cst_288 {dimension_numbers = #tpu.dot_dimension_numbers<[1], [0], [0], [1], [0, 0, 1, 1], [], []>} : vector<16x4xf32>, vector<4x32xf32>, vector<16x32xf32> -> vector<16x32xf32>
    %564 = vector.extract_strided_slice %19 {offsets = [1, 0, 0], sizes = [1, 4, 32], strides = [1, 1, 1]} : vector<3x4x32xf32> to vector<1x4x32xf32>
    %565 = vector.shape_cast %564 : vector<1x4x32xf32> to vector<4x32xf32>
    %cst_289 = arith.constant dense<0.000000e+00> : vector<16x32xf32>
    %566 = tpu.matmul %443, %565, %cst_289 {dimension_numbers = #tpu.dot_dimension_numbers<[1], [0], [0], [1], [0, 0, 1, 1], [], []>} : vector<16x4xf32>, vector<4x32xf32>, vector<16x32xf32> -> vector<16x32xf32>
    %567 = arith.addf %563, %566 : vector<16x32xf32>
    %cst_290 = arith.constant dense<0.000000e+00> : vector<16x4xf32>
    %568 = tpu.matmul %17, %443, %cst_290 {dimension_numbers = #tpu.dot_dimension_numbers<[1], [0], [0], [1], [0, 0, 1, 1], [], []>} : vector<16x16xf32>, vector<16x4xf32>, vector<16x4xf32> -> vector<16x4xf32>
    %569 = vector.extract_strided_slice %19 {offsets = [2, 0, 0], sizes = [1, 4, 32], strides = [1, 1, 1]} : vector<3x4x32xf32> to vector<1x4x32xf32>
    %570 = vector.shape_cast %569 : vector<1x4x32xf32> to vector<4x32xf32>
    %cst_291 = arith.constant dense<0.000000e+00> : vector<16x32xf32>
    %571 = tpu.matmul %568, %570, %cst_291 {dimension_numbers = #tpu.dot_dimension_numbers<[1], [0], [0], [1], [0, 0, 1, 1], [], []>} : vector<16x4xf32>, vector<4x32xf32>, vector<16x32xf32> -> vector<16x32xf32>
    %572 = arith.addf %567, %571 : vector<16x32xf32>
    %cst_292 = arith.constant dense<0.000000e+00> : vector<16x32xf32>
    %573 = tpu.matmul %572, %39, %cst_292 {dimension_numbers = #tpu.dot_dimension_numbers<[1], [0], [0], [1], [0, 0, 1, 1], [], []>} : vector<16x32xf32>, vector<32x32xf32>, vector<16x32xf32> -> vector<16x32xf32>
    %574 = vector.broadcast %47 : vector<1x32xf32> to vector<16x32xf32>
    %575 = arith.addf %573, %574 : vector<16x32xf32>
    %cst_293 = arith.constant dense<0.000000e+00> : vector<16x32xf32>
    %576 = tpu.matmul %572, %41, %cst_293 {dimension_numbers = #tpu.dot_dimension_numbers<[1], [0], [0], [1], [0, 0, 1, 1], [], []>} : vector<16x32xf32>, vector<32x32xf32>, vector<16x32xf32> -> vector<16x32xf32>
    %577 = vector.broadcast %49 : vector<1x32xf32> to vector<16x32xf32>
    %578 = arith.addf %576, %577 : vector<16x32xf32>
    %cst_294 = arith.constant dense<0.000000e+00> : vector<16x32xf32>
    %579 = tpu.matmul %572, %43, %cst_294 {dimension_numbers = #tpu.dot_dimension_numbers<[1], [0], [0], [1], [0, 0, 1, 1], [], []>} : vector<16x32xf32>, vector<32x32xf32>, vector<16x32xf32> -> vector<16x32xf32>
    %580 = vector.broadcast %51 : vector<1x32xf32> to vector<16x32xf32>
    %581 = arith.addf %579, %580 : vector<16x32xf32>
    %cst_295 = arith.constant dense<0.000000e+00> : vector<256x32xf32>
    %582 = tpu.matmul %1, %575, %cst_295 {dimension_numbers = #tpu.dot_dimension_numbers<[1], [0], [0], [1], [0, 0, 1, 1], [], []>} : vector<256x16xf32>, vector<16x32xf32>, vector<256x32xf32> -> vector<256x32xf32>
    %cst_296 = arith.constant dense<0.000000e+00> : vector<256x32xf32>
    %583 = tpu.matmul %3, %578, %cst_296 {dimension_numbers = #tpu.dot_dimension_numbers<[1], [0], [0], [1], [0, 0, 1, 1], [], []>} : vector<256x16xf32>, vector<16x32xf32>, vector<256x32xf32> -> vector<256x32xf32>
    %584 = arith.mulf %582, %583 : vector<256x32xf32>
    %cst_297 = arith.constant dense<0.000000e+00> : vector<256xf32>
    %585 = vector.multi_reduction <add>, %584, %cst_297 [1] : vector<256x32xf32> to vector<256xf32>
    %586 = vector.shape_cast %585 : vector<256xf32> to vector<256x1xf32>
    %cst_298 = arith.constant dense<0.000000e+00> : vector<16x1xf32>
    %587 = tpu.matmul %9, %586, %cst_298 {dimension_numbers = #tpu.dot_dimension_numbers<[1], [0], [0], [1], [0, 0, 1, 1], [], []>} : vector<16x256xf32>, vector<256x1xf32>, vector<16x1xf32> -> vector<16x1xf32>
    %cst_299 = arith.constant 3.125000e-02 : f32
    %588 = vector.broadcast %cst_299 : f32 to vector<16x1xf32>
    %589 = arith.mulf %587, %588 : vector<16x1xf32>
    %cst_300 = arith.constant dense<0xFF800000> : vector<1xf32>
    %590 = vector.multi_reduction <maximumf>, %589, %cst_300 [0] : vector<16x1xf32> to vector<1xf32>
    %591 = vector.shape_cast %590 : vector<1xf32> to vector<1x1xf32>
    %592 = vector.broadcast %591 : vector<1x1xf32> to vector<16x1xf32>
    %593 = arith.cmpf oge, %589, %592 : vector<16x1xf32>
    %cst_301 = arith.constant 1.600000e+01 : f32
    %594 = vector.broadcast %cst_301 : f32 to vector<16x1xf32>
    %595 = arith.select %593, %85, %594 : vector<16x1xi1>, vector<16x1xf32>
    %cst_302 = arith.constant dense<0x7F800000> : vector<1xf32>
    %596 = vector.multi_reduction <minimumf>, %595, %cst_302 [0] : vector<16x1xf32> to vector<1xf32>
    %597 = vector.shape_cast %596 : vector<1xf32> to vector<1x1xf32>
    %598 = vector.broadcast %597 : vector<1x1xf32> to vector<16x1xf32>
    %599 = arith.cmpf oeq, %85, %598 : vector<16x1xf32>
    %600 = arith.extui %599 : vector<16x1xi1> to vector<16x1xi32>
    %601 = arith.sitofp %600 : vector<16x1xi32> to vector<16x1xf32>
    %cst_303 = arith.constant 5.000000e-01 : f32
    %602 = vector.broadcast %cst_303 : f32 to vector<16x1xf32>
    %603 = arith.cmpf ogt, %601, %602 : vector<16x1xf32>
    %cst_304 = arith.constant -1.000000e+30 : f32
    %604 = vector.broadcast %cst_304 : f32 to vector<16x1xf32>
    %605 = arith.select %603, %604, %589 : vector<16x1xi1>, vector<16x1xf32>
    %cst_305 = arith.constant dense<0xFF800000> : vector<1xf32>
    %606 = vector.multi_reduction <maximumf>, %605, %cst_305 [0] : vector<16x1xf32> to vector<1xf32>
    %607 = vector.shape_cast %606 : vector<1xf32> to vector<1x1xf32>
    %608 = vector.broadcast %607 : vector<1x1xf32> to vector<16x1xf32>
    %609 = arith.cmpf oge, %605, %608 : vector<16x1xf32>
    %cst_306 = arith.constant 1.600000e+01 : f32
    %610 = vector.broadcast %cst_306 : f32 to vector<16x1xf32>
    %611 = arith.select %609, %85, %610 : vector<16x1xi1>, vector<16x1xf32>
    %cst_307 = arith.constant dense<0x7F800000> : vector<1xf32>
    %612 = vector.multi_reduction <minimumf>, %611, %cst_307 [0] : vector<16x1xf32> to vector<1xf32>
    %613 = vector.shape_cast %612 : vector<1xf32> to vector<1x1xf32>
    %614 = vector.broadcast %613 : vector<1x1xf32> to vector<16x1xf32>
    %615 = arith.cmpf oeq, %85, %614 : vector<16x1xf32>
    %616 = arith.extui %615 : vector<16x1xi1> to vector<16x1xi32>
    %617 = arith.sitofp %616 : vector<16x1xi32> to vector<16x1xf32>
    %618 = arith.subf %591, %591 : vector<1x1xf32>
    %619 = math.exp %618 : vector<1x1xf32>
    %620 = arith.subf %607, %591 : vector<1x1xf32>
    %621 = math.exp %620 : vector<1x1xf32>
    %622 = arith.addf %619, %621 : vector<1x1xf32>
    %623 = arith.divf %619, %622 : vector<1x1xf32>
    %624 = vector.broadcast %623 : vector<1x1xf32> to vector<16x1xf32>
    %625 = arith.mulf %601, %624 : vector<16x1xf32>
    %626 = arith.divf %621, %622 : vector<1x1xf32>
    %627 = vector.broadcast %626 : vector<1x1xf32> to vector<16x1xf32>
    %628 = arith.mulf %617, %627 : vector<16x1xf32>
    %629 = arith.addf %625, %628 : vector<16x1xf32>
    %cst_308 = arith.constant dense<0.000000e+00> : vector<256x1xf32>
    %630 = tpu.matmul %5, %629, %cst_308 {dimension_numbers = #tpu.dot_dimension_numbers<[1], [0], [0], [1], [0, 0, 1, 1], [], []>} : vector<256x16xf32>, vector<16x1xf32>, vector<256x1xf32> -> vector<256x1xf32>
    %631 = vector.broadcast %630 : vector<256x1xf32> to vector<256x16xf32>
    %632 = arith.mulf %631, %1 : vector<256x16xf32>
    %cst_309 = arith.constant dense<0.000000e+00> : vector<16x16xf32>
    %633 = tpu.matmul %7, %632, %cst_309 {dimension_numbers = #tpu.dot_dimension_numbers<[1], [0], [0], [1], [0, 0, 1, 1], [], []>} : vector<16x256xf32>, vector<256x16xf32>, vector<16x16xf32> -> vector<16x16xf32>
    %cst_310 = arith.constant dense<0.000000e+00> : vector<16x32xf32>
    %634 = tpu.matmul %633, %581, %cst_310 {dimension_numbers = #tpu.dot_dimension_numbers<[1], [0], [0], [1], [0, 0, 1, 1], [], []>} : vector<16x16xf32>, vector<16x32xf32>, vector<16x32xf32> -> vector<16x32xf32>
    %cst_311 = arith.constant dense<0.000000e+00> : vector<16x32xf32>
    %635 = tpu.matmul %634, %45, %cst_311 {dimension_numbers = #tpu.dot_dimension_numbers<[1], [0], [0], [1], [0, 0, 1, 1], [], []>} : vector<16x32xf32>, vector<32x32xf32>, vector<16x32xf32> -> vector<16x32xf32>
    %636 = vector.broadcast %53 : vector<1x32xf32> to vector<16x32xf32>
    %637 = arith.addf %635, %636 : vector<16x32xf32>
    %638 = arith.addf %572, %637 : vector<16x32xf32>
    %cst_312 = arith.constant dense<0.000000e+00> : vector<16x32xf32>
    %639 = tpu.matmul %11, %638, %cst_312 {dimension_numbers = #tpu.dot_dimension_numbers<[1], [0], [0], [1], [0, 0, 1, 1], [], []>} : vector<16x16xf32>, vector<16x32xf32>, vector<16x32xf32> -> vector<16x32xf32>
    %640 = arith.subf %638, %639 : vector<16x32xf32>
    %cst_313 = arith.constant dense<0.000000e+00> : vector<16x32xf32>
    %641 = tpu.matmul %640, %55, %cst_313 {dimension_numbers = #tpu.dot_dimension_numbers<[1], [0], [0], [1], [0, 0, 1, 1], [], []>} : vector<16x32xf32>, vector<32x32xf32>, vector<16x32xf32> -> vector<16x32xf32>
    %642 = vector.broadcast %63 : vector<1x32xf32> to vector<16x32xf32>
    %643 = arith.addf %641, %642 : vector<16x32xf32>
    %cst_314 = arith.constant dense<0.000000e+00> : vector<16x32xf32>
    %644 = tpu.matmul %559, %57, %cst_314 {dimension_numbers = #tpu.dot_dimension_numbers<[1], [0], [0], [1], [0, 0, 1, 1], [], []>} : vector<16x32xf32>, vector<32x32xf32>, vector<16x32xf32> -> vector<16x32xf32>
    %645 = vector.broadcast %65 : vector<1x32xf32> to vector<16x32xf32>
    %646 = arith.addf %644, %645 : vector<16x32xf32>
    %cst_315 = arith.constant dense<0.000000e+00> : vector<16x32xf32>
    %647 = tpu.matmul %559, %59, %cst_315 {dimension_numbers = #tpu.dot_dimension_numbers<[1], [0], [0], [1], [0, 0, 1, 1], [], []>} : vector<16x32xf32>, vector<32x32xf32>, vector<16x32xf32> -> vector<16x32xf32>
    %648 = vector.broadcast %67 : vector<1x32xf32> to vector<16x32xf32>
    %649 = arith.addf %647, %648 : vector<16x32xf32>
    %cst_316 = arith.constant dense<0.000000e+00> : vector<256x32xf32>
    %650 = tpu.matmul %1, %643, %cst_316 {dimension_numbers = #tpu.dot_dimension_numbers<[1], [0], [0], [1], [0, 0, 1, 1], [], []>} : vector<256x16xf32>, vector<16x32xf32>, vector<256x32xf32> -> vector<256x32xf32>
    %cst_317 = arith.constant dense<0.000000e+00> : vector<256x32xf32>
    %651 = tpu.matmul %3, %646, %cst_317 {dimension_numbers = #tpu.dot_dimension_numbers<[1], [0], [0], [1], [0, 0, 1, 1], [], []>} : vector<256x16xf32>, vector<16x32xf32>, vector<256x32xf32> -> vector<256x32xf32>
    %652 = arith.mulf %650, %651 : vector<256x32xf32>
    %cst_318 = arith.constant dense<0.000000e+00> : vector<256xf32>
    %653 = vector.multi_reduction <add>, %652, %cst_318 [1] : vector<256x32xf32> to vector<256xf32>
    %654 = vector.shape_cast %653 : vector<256xf32> to vector<256x1xf32>
    %cst_319 = arith.constant dense<0.000000e+00> : vector<16x1xf32>
    %655 = tpu.matmul %9, %654, %cst_319 {dimension_numbers = #tpu.dot_dimension_numbers<[1], [0], [0], [1], [0, 0, 1, 1], [], []>} : vector<16x256xf32>, vector<256x1xf32>, vector<16x1xf32> -> vector<16x1xf32>
    %cst_320 = arith.constant 3.125000e-02 : f32
    %656 = vector.broadcast %cst_320 : f32 to vector<16x1xf32>
    %657 = arith.mulf %655, %656 : vector<16x1xf32>
    %cst_321 = arith.constant dense<0xFF800000> : vector<1xf32>
    %658 = vector.multi_reduction <maximumf>, %657, %cst_321 [0] : vector<16x1xf32> to vector<1xf32>
    %659 = vector.shape_cast %658 : vector<1xf32> to vector<1x1xf32>
    %660 = vector.broadcast %659 : vector<1x1xf32> to vector<16x1xf32>
    %661 = arith.cmpf oge, %657, %660 : vector<16x1xf32>
    %cst_322 = arith.constant 1.600000e+01 : f32
    %662 = vector.broadcast %cst_322 : f32 to vector<16x1xf32>
    %663 = arith.select %661, %85, %662 : vector<16x1xi1>, vector<16x1xf32>
    %cst_323 = arith.constant dense<0x7F800000> : vector<1xf32>
    %664 = vector.multi_reduction <minimumf>, %663, %cst_323 [0] : vector<16x1xf32> to vector<1xf32>
    %665 = vector.shape_cast %664 : vector<1xf32> to vector<1x1xf32>
    %666 = vector.broadcast %665 : vector<1x1xf32> to vector<16x1xf32>
    %667 = arith.cmpf oeq, %85, %666 : vector<16x1xf32>
    %668 = arith.extui %667 : vector<16x1xi1> to vector<16x1xi32>
    %669 = arith.sitofp %668 : vector<16x1xi32> to vector<16x1xf32>
    %cst_324 = arith.constant 5.000000e-01 : f32
    %670 = vector.broadcast %cst_324 : f32 to vector<16x1xf32>
    %671 = arith.cmpf ogt, %669, %670 : vector<16x1xf32>
    %cst_325 = arith.constant -1.000000e+30 : f32
    %672 = vector.broadcast %cst_325 : f32 to vector<16x1xf32>
    %673 = arith.select %671, %672, %657 : vector<16x1xi1>, vector<16x1xf32>
    %cst_326 = arith.constant dense<0xFF800000> : vector<1xf32>
    %674 = vector.multi_reduction <maximumf>, %673, %cst_326 [0] : vector<16x1xf32> to vector<1xf32>
    %675 = vector.shape_cast %674 : vector<1xf32> to vector<1x1xf32>
    %676 = vector.broadcast %675 : vector<1x1xf32> to vector<16x1xf32>
    %677 = arith.cmpf oge, %673, %676 : vector<16x1xf32>
    %cst_327 = arith.constant 1.600000e+01 : f32
    %678 = vector.broadcast %cst_327 : f32 to vector<16x1xf32>
    %679 = arith.select %677, %85, %678 : vector<16x1xi1>, vector<16x1xf32>
    %cst_328 = arith.constant dense<0x7F800000> : vector<1xf32>
    %680 = vector.multi_reduction <minimumf>, %679, %cst_328 [0] : vector<16x1xf32> to vector<1xf32>
    %681 = vector.shape_cast %680 : vector<1xf32> to vector<1x1xf32>
    %682 = vector.broadcast %681 : vector<1x1xf32> to vector<16x1xf32>
    %683 = arith.cmpf oeq, %85, %682 : vector<16x1xf32>
    %684 = arith.extui %683 : vector<16x1xi1> to vector<16x1xi32>
    %685 = arith.sitofp %684 : vector<16x1xi32> to vector<16x1xf32>
    %686 = arith.subf %659, %659 : vector<1x1xf32>
    %687 = math.exp %686 : vector<1x1xf32>
    %688 = arith.subf %675, %659 : vector<1x1xf32>
    %689 = math.exp %688 : vector<1x1xf32>
    %690 = arith.addf %687, %689 : vector<1x1xf32>
    %691 = arith.divf %687, %690 : vector<1x1xf32>
    %692 = vector.broadcast %691 : vector<1x1xf32> to vector<16x1xf32>
    %693 = arith.mulf %669, %692 : vector<16x1xf32>
    %694 = arith.divf %689, %690 : vector<1x1xf32>
    %695 = vector.broadcast %694 : vector<1x1xf32> to vector<16x1xf32>
    %696 = arith.mulf %685, %695 : vector<16x1xf32>
    %697 = arith.addf %693, %696 : vector<16x1xf32>
    %cst_329 = arith.constant dense<0.000000e+00> : vector<256x1xf32>
    %698 = tpu.matmul %5, %697, %cst_329 {dimension_numbers = #tpu.dot_dimension_numbers<[1], [0], [0], [1], [0, 0, 1, 1], [], []>} : vector<256x16xf32>, vector<16x1xf32>, vector<256x1xf32> -> vector<256x1xf32>
    %699 = vector.broadcast %698 : vector<256x1xf32> to vector<256x16xf32>
    %700 = arith.mulf %699, %1 : vector<256x16xf32>
    %cst_330 = arith.constant dense<0.000000e+00> : vector<16x16xf32>
    %701 = tpu.matmul %7, %700, %cst_330 {dimension_numbers = #tpu.dot_dimension_numbers<[1], [0], [0], [1], [0, 0, 1, 1], [], []>} : vector<16x256xf32>, vector<256x16xf32>, vector<16x16xf32> -> vector<16x16xf32>
    %cst_331 = arith.constant dense<0.000000e+00> : vector<16x32xf32>
    %702 = tpu.matmul %701, %649, %cst_331 {dimension_numbers = #tpu.dot_dimension_numbers<[1], [0], [0], [1], [0, 0, 1, 1], [], []>} : vector<16x16xf32>, vector<16x32xf32>, vector<16x32xf32> -> vector<16x32xf32>
    %cst_332 = arith.constant dense<0.000000e+00> : vector<16x32xf32>
    %703 = tpu.matmul %702, %61, %cst_332 {dimension_numbers = #tpu.dot_dimension_numbers<[1], [0], [0], [1], [0, 0, 1, 1], [], []>} : vector<16x32xf32>, vector<32x32xf32>, vector<16x32xf32> -> vector<16x32xf32>
    %704 = vector.broadcast %69 : vector<1x32xf32> to vector<16x32xf32>
    %705 = arith.addf %703, %704 : vector<16x32xf32>
    %706 = arith.addf %640, %705 : vector<16x32xf32>
    %cst_333 = arith.constant dense<0.000000e+00> : vector<16x32xf32>
    %707 = tpu.matmul %11, %706, %cst_333 {dimension_numbers = #tpu.dot_dimension_numbers<[1], [0], [0], [1], [0, 0, 1, 1], [], []>} : vector<16x16xf32>, vector<16x32xf32>, vector<16x32xf32> -> vector<16x32xf32>
    %708 = arith.subf %706, %707 : vector<16x32xf32>
    %cst_334 = arith.constant dense<0.000000e+00> : vector<16x32xf32>
    %709 = tpu.matmul %708, %70, %cst_334 {dimension_numbers = #tpu.dot_dimension_numbers<[1], [0], [0], [1], [0, 0, 1, 1], [], []>} : vector<16x32xf32>, vector<32x32xf32>, vector<16x32xf32> -> vector<16x32xf32>
    %cst_335 = arith.constant 0.000000e+00 : f32
    %710 = vector.broadcast %cst_335 : f32 to vector<16x32xf32>
    %711 = arith.maximumf %709, %710 : vector<16x32xf32>
    %cst_336 = arith.constant dense<0.000000e+00> : vector<16x32xf32>
    %712 = tpu.matmul %711, %71, %cst_336 {dimension_numbers = #tpu.dot_dimension_numbers<[1], [0], [0], [1], [0, 0, 1, 1], [], []>} : vector<16x32xf32>, vector<32x32xf32>, vector<16x32xf32> -> vector<16x32xf32>
    %713 = arith.addf %708, %712 : vector<16x32xf32>
    %cst_337 = arith.constant dense<0.000000e+00> : vector<16x32xf32>
    %714 = tpu.matmul %11, %713, %cst_337 {dimension_numbers = #tpu.dot_dimension_numbers<[1], [0], [0], [1], [0, 0, 1, 1], [], []>} : vector<16x16xf32>, vector<16x32xf32>, vector<16x32xf32> -> vector<16x32xf32>
    %715 = arith.subf %713, %714 : vector<16x32xf32>
    %716 = arith.addf %639, %707 : vector<16x32xf32>
    %717 = arith.addf %716, %714 : vector<16x32xf32>
    %cst_338 = arith.constant dense<0.000000e+00> : vector<16x32xf32>
    %718 = tpu.matmul %15, %717, %cst_338 {dimension_numbers = #tpu.dot_dimension_numbers<[1], [0], [0], [1], [0, 0, 1, 1], [], []>} : vector<16x16xf32>, vector<16x32xf32>, vector<16x32xf32> -> vector<16x32xf32>
    %719 = vector.extract_strided_slice %72 {offsets = [0, 0, 0], sizes = [1, 32, 4], strides = [1, 1, 1]} : vector<3x32x4xf32> to vector<1x32x4xf32>
    %720 = vector.shape_cast %719 : vector<1x32x4xf32> to vector<32x4xf32>
    %cst_339 = arith.constant dense<0.000000e+00> : vector<16x4xf32>
    %721 = tpu.matmul %718, %720, %cst_339 {dimension_numbers = #tpu.dot_dimension_numbers<[1], [0], [0], [1], [0, 0, 1, 1], [], []>} : vector<16x32xf32>, vector<32x4xf32>, vector<16x4xf32> -> vector<16x4xf32>
    %722 = vector.extract_strided_slice %72 {offsets = [1, 0, 0], sizes = [1, 32, 4], strides = [1, 1, 1]} : vector<3x32x4xf32> to vector<1x32x4xf32>
    %723 = vector.shape_cast %722 : vector<1x32x4xf32> to vector<32x4xf32>
    %cst_340 = arith.constant dense<0.000000e+00> : vector<16x4xf32>
    %724 = tpu.matmul %717, %723, %cst_340 {dimension_numbers = #tpu.dot_dimension_numbers<[1], [0], [0], [1], [0, 0, 1, 1], [], []>} : vector<16x32xf32>, vector<32x4xf32>, vector<16x4xf32> -> vector<16x4xf32>
    %725 = arith.addf %721, %724 : vector<16x4xf32>
    %cst_341 = arith.constant dense<0.000000e+00> : vector<16x32xf32>
    %726 = tpu.matmul %17, %717, %cst_341 {dimension_numbers = #tpu.dot_dimension_numbers<[1], [0], [0], [1], [0, 0, 1, 1], [], []>} : vector<16x16xf32>, vector<16x32xf32>, vector<16x32xf32> -> vector<16x32xf32>
    %727 = vector.extract_strided_slice %72 {offsets = [2, 0, 0], sizes = [1, 32, 4], strides = [1, 1, 1]} : vector<3x32x4xf32> to vector<1x32x4xf32>
    %728 = vector.shape_cast %727 : vector<1x32x4xf32> to vector<32x4xf32>
    %cst_342 = arith.constant dense<0.000000e+00> : vector<16x4xf32>
    %729 = tpu.matmul %726, %728, %cst_342 {dimension_numbers = #tpu.dot_dimension_numbers<[1], [0], [0], [1], [0, 0, 1, 1], [], []>} : vector<16x32xf32>, vector<32x4xf32>, vector<16x4xf32> -> vector<16x4xf32>
    %730 = arith.addf %725, %729 : vector<16x4xf32>
    %731 = arith.addf %442, %730 : vector<16x4xf32>
    %cst_343 = arith.constant dense<0.000000e+00> : vector<16xf32>
    %732 = vector.multi_reduction <add>, %715, %cst_343 [1] : vector<16x32xf32> to vector<16xf32>
    %733 = vector.shape_cast %732 : vector<16xf32> to vector<16x1xf32>
    %cst_344 = arith.constant 3.200000e+01 : f32
    %734 = vector.broadcast %cst_344 : f32 to vector<16x1xf32>
    %735 = arith.divf %733, %734 : vector<16x1xf32>
    %736 = vector.broadcast %735 : vector<16x1xf32> to vector<16x32xf32>
    %737 = arith.subf %715, %736 : vector<16x32xf32>
    %738 = arith.mulf %737, %737 : vector<16x32xf32>
    %cst_345 = arith.constant dense<0.000000e+00> : vector<16xf32>
    %739 = vector.multi_reduction <add>, %738, %cst_345 [1] : vector<16x32xf32> to vector<16xf32>
    %740 = vector.shape_cast %739 : vector<16xf32> to vector<16x1xf32>
    %cst_346 = arith.constant 3.200000e+01 : f32
    %741 = vector.broadcast %cst_346 : f32 to vector<16x1xf32>
    %742 = arith.divf %740, %741 : vector<16x1xf32>
    %743 = vector.broadcast %735 : vector<16x1xf32> to vector<16x32xf32>
    %744 = arith.subf %715, %743 : vector<16x32xf32>
    %cst_347 = arith.constant 9.99999974E-6 : f32
    %745 = vector.broadcast %cst_347 : f32 to vector<16x1xf32>
    %746 = arith.addf %742, %745 : vector<16x1xf32>
    %747 = math.rsqrt %746 : vector<16x1xf32>
    %748 = vector.broadcast %747 : vector<16x1xf32> to vector<16x32xf32>
    %749 = arith.mulf %744, %748 : vector<16x32xf32>
    %750 = vector.broadcast %81 : vector<1x32xf32> to vector<16x32xf32>
    %751 = arith.mulf %749, %750 : vector<16x32xf32>
    %752 = vector.broadcast %83 : vector<1x32xf32> to vector<16x32xf32>
    %753 = arith.addf %751, %752 : vector<16x32xf32>
    %cst_348 = arith.constant dense<0.000000e+00> : vector<32xf32>
    %754 = vector.multi_reduction <add>, %753, %cst_348 [0] : vector<16x32xf32> to vector<32xf32>
    %755 = vector.shape_cast %754 : vector<32xf32> to vector<1x32xf32>
    %cst_349 = arith.constant 1.600000e+01 : f32
    %756 = vector.broadcast %cst_349 : f32 to vector<1x32xf32>
    %757 = arith.divf %755, %756 : vector<1x32xf32>
    %758 = vector.broadcast %757 : vector<1x32xf32> to vector<16x32xf32>
    %759 = arith.subf %753, %758 : vector<16x32xf32>
    %cst_350 = arith.constant dense<0.000000e+00> : vector<16x4xf32>
    %760 = tpu.matmul %731, %75, %cst_350 {dimension_numbers = #tpu.dot_dimension_numbers<[1], [0], [0], [1], [0, 0, 1, 1], [], []>} : vector<16x4xf32>, vector<4x4xf32>, vector<16x4xf32> -> vector<16x4xf32>
    %cst_351 = arith.constant dense<0.000000e+00> : vector<16x4xf32>
    %761 = tpu.matmul %759, %73, %cst_351 {dimension_numbers = #tpu.dot_dimension_numbers<[1], [0], [0], [1], [0, 0, 1, 1], [], []>} : vector<16x32xf32>, vector<32x4xf32>, vector<16x4xf32> -> vector<16x4xf32>
    %762 = arith.addf %760, %761 : vector<16x4xf32>
    %763 = vector.broadcast %74 : vector<1x4xf32> to vector<16x4xf32>
    %764 = arith.addf %762, %763 : vector<16x4xf32>
    %765 = vector.extract_strided_slice %764 {offsets = [8, 0], sizes = [8, 4], strides = [1, 1]} : vector<16x4xf32> to vector<8x4xf32>
    %c1_352 = arith.constant 1 : index
    %c0_353 = arith.constant 0 : index
    %c0_354 = arith.constant 0 : index
    %766 = vector.load %arg22[%c1_352, %c0_353, %c0_354] : memref<2x8x4xf32, #tpu.memory_space<vmem>>, vector<1x8x4xf32>
    %767 = vector.shape_cast %766 : vector<1x8x4xf32> to vector<8x4xf32>
    %768 = vector.shape_cast %765 : vector<8x4xf32> to vector<1x8x4xf32>
    tpu.vector_store %arg22[%c1_352, %c0_353, %c0_354], %768 {strides = array<i32>} : memref<2x8x4xf32, #tpu.memory_space<vmem>>, vector<1x8x4xf32>,
    return
  }
}

</mosaic_0001>

<llo_original>
// kernel: autoformer_forward.1
$region0: #{autoformer_forward.1}
  #allocation0 [shape = 'u32[]', space=smem, size = 0x4, offset = 0x4, fixed_abs, tag = 'smem constant byte address 0x4 - core index']
  #allocation1 [shape = 'u32[72,128]{1,0:T(1,128)}', space=vmem, size = 0x9000, scoped, tag = 'internal scratch']
  %s0 = inlined_call_operand.vmem [shape: f32[2,16,4], index: 0, kind: input, shape index: {}]
  %s1 = inlined_call_operand.vmem [shape: f32[3,256,16], index: 1, kind: input, shape index: {}]
  %s2 = inlined_call_operand.vmem [shape: f32[2,16,256], index: 2, kind: input, shape index: {}]
  %s3 = inlined_call_operand.vmem [shape: f32[4,16,16], index: 3, kind: input, shape index: {}]
  %s4 = inlined_call_operand.vmem [shape: f32[3,4,32], index: 4, kind: input, shape index: {}]
  %s5 = inlined_call_operand.vmem [shape: f32[3,4,32], index: 5, kind: input, shape index: {}]
  %s6 = inlined_call_operand.vmem [shape: f32[4,32,32], index: 6, kind: input, shape index: {}]
  %s7 = inlined_call_operand.vmem [shape: f32[4,1,32], index: 7, kind: input, shape index: {}]
  %s8 = inlined_call_operand.vmem [shape: f32[32,32], index: 8, kind: input, shape index: {}]
  %s9 = inlined_call_operand.vmem [shape: f32[32,32], index: 9, kind: input, shape index: {}]
  %s10 = inlined_call_operand.vmem [shape: f32[2,1,32], index: 10, kind: input, shape index: {}]
  %s11 = inlined_call_operand.vmem [shape: f32[4,32,32], index: 11, kind: input, shape index: {}]
  %s12 = inlined_call_operand.vmem [shape: f32[4,1,32], index: 12, kind: input, shape index: {}]
  %s13 = inlined_call_operand.vmem [shape: f32[4,32,32], index: 13, kind: input, shape index: {}]
  %s14 = inlined_call_operand.vmem [shape: f32[4,1,32], index: 14, kind: input, shape index: {}]
  %s15 = inlined_call_operand.vmem [shape: f32[32,32], index: 15, kind: input, shape index: {}]
  %s16 = inlined_call_operand.vmem [shape: f32[32,32], index: 16, kind: input, shape index: {}]
  %s17 = inlined_call_operand.vmem [shape: f32[3,32,4], index: 17, kind: input, shape index: {}]
  %s18 = inlined_call_operand.vmem [shape: f32[2,1,32], index: 18, kind: input, shape index: {}]
  %s19 = inlined_call_operand.vmem [shape: f32[32,4], index: 19, kind: input, shape index: {}]
  %s20 = inlined_call_operand.vmem [shape: f32[1,4], index: 20, kind: input, shape index: {}]
  %s21 = inlined_call_operand.vmem [shape: f32[4,4], index: 21, kind: input, shape index: {}]
  %s22 = inlined_call_operand.vmem [shape: f32[2,8,4], index: 22, kind: output, shape index: {}]
  %s23 = sld [smem:[#allocation0]]
  $region98: #{autoformer_forward.1} parent=0
    _
  %s25 = ssub.s32 1, %s23
  %s26 = scalar_select 0, %s25, %s23
  // Predicated region
  $region2: #{autoformer_forward.1} parent=0 // pred_check
    _
  $region3: #{autoformer_forward.1} parent=0 // pred_check_branch
    %28 = sbr.rel (0) target = $region5
  $region4: #{autoformer_forward.1} parent=0 // pred_region
    _
  $region5: #{autoformer_forward.1} parent=0 // pred_fallthru
    _
  // Predicated region
  $region6: #{autoformer_forward.1} parent=0 // pred_check
    _
  $region7: #{autoformer_forward.1} parent=0 // pred_check_branch
    %30 = sbr.rel (0) target = $region9
  $region8: #{autoformer_forward.1} parent=0 // pred_region
    _
  $region9: #{autoformer_forward.1} parent=0 // pred_fallthru
    _
  // Predicated region
  $region10: #{autoformer_forward.1} parent=0 // pred_check
    _
  $region11: #{autoformer_forward.1} parent=0 // pred_check_branch
    %32 = sbr.rel (0) target = $region13
  $region12: #{autoformer_forward.1} parent=0 // pred_region
    _
  $region13: #{autoformer_forward.1} parent=0 // pred_fallthru
    _
  // Predicated region
  $region14: #{autoformer_forward.1} parent=0 // pred_check
    _
  $region15: #{autoformer_forward.1} parent=0 // pred_check_branch
    %34 = sbr.rel (0) target = $region17
  $region16: #{autoformer_forward.1} parent=0 // pred_region
    _
  $region17: #{autoformer_forward.1} parent=0 // pred_fallthru
    _
  // Predicated region
  $region18: #{autoformer_forward.1} parent=0 // pred_check
    _
  $region19: #{autoformer_forward.1} parent=0 // pred_check_branch
    %36 = sbr.rel (0) target = $region21
  $region20: #{autoformer_forward.1} parent=0 // pred_region
    _
  $region21: #{autoformer_forward.1} parent=0 // pred_fallthru
    _
  // Predicated region
  $region22: #{autoformer_forward.1} parent=0 // pred_check
    _
  $region23: #{autoformer_forward.1} parent=0 // pred_check_branch
    %38 = sbr.rel (0) target = $region25
  $region24: #{autoformer_forward.1} parent=0 // pred_region
    _
  $region25: #{autoformer_forward.1} parent=0 // pred_fallthru
    _
  // Predicated region
  $region26: #{autoformer_forward.1} parent=0 // pred_check
    _
  $region27: #{autoformer_forward.1} parent=0 // pred_check_branch
    %40 = sbr.rel (0) target = $region29
  $region28: #{autoformer_forward.1} parent=0 // pred_region
    _
  $region29: #{autoformer_forward.1} parent=0 // pred_fallthru
    _
  // Predicated region
  $region30: #{autoformer_forward.1} parent=0 // pred_check
    _
  $region31: #{autoformer_forward.1} parent=0 // pred_check_branch
    %42 = sbr.rel (0) target = $region33
  $region32: #{autoformer_forward.1} parent=0 // pred_region
    _
  $region33: #{autoformer_forward.1} parent=0 // pred_fallthru
    _
  // Predicated region
  $region34: #{autoformer_forward.1} parent=0 // pred_check
    _
  $region35: #{autoformer_forward.1} parent=0 // pred_check_branch
    %44 = sbr.rel (0) target = $region37
  $region36: #{autoformer_forward.1} parent=0 // pred_region
    _
  $region37: #{autoformer_forward.1} parent=0 // pred_fallthru
    _
  // Predicated region
  $region38: #{autoformer_forward.1} parent=0 // pred_check
    _
  $region39: #{autoformer_forward.1} parent=0 // pred_check_branch
    %46 = sbr.rel (0) target = $region41
  $region40: #{autoformer_forward.1} parent=0 // pred_region
    _
  $region41: #{autoformer_forward.1} parent=0 // pred_fallthru
    _
  // Predicated region
  $region42: #{autoformer_forward.1} parent=0 // pred_check
    _
  $region43: #{autoformer_forward.1} parent=0 // pred_check_branch
    %48 = sbr.rel (0) target = $region45
  $region44: #{autoformer_forward.1} parent=0 // pred_region
    _
  $region45: #{autoformer_forward.1} parent=0 // pred_fallthru
    _
  // Predicated region
  $region46: #{autoformer_forward.1} parent=0 // pred_check
    _
  $region47: #{autoformer_forward.1} parent=0 // pred_check_branch
    %50 = sbr.rel (0) target = $region49
  $region48: #{autoformer_forward.1} parent=0 // pred_region
    _
  $region49: #{autoformer_forward.1} parent=0 // pred_fallthru
    _
  // Predicated region
  $region50: #{autoformer_forward.1} parent=0 // pred_check
    _
  $region51: #{autoformer_forward.1} parent=0 // pred_check_branch
    %52 = sbr.rel (0) target = $region53
  $region52: #{autoformer_forward.1} parent=0 // pred_region
    _
  $region53: #{autoformer_forward.1} parent=0 // pred_fallthru
    _
  // Predicated region
  $region54: #{autoformer_forward.1} parent=0 // pred_check
    _
  $region55: #{autoformer_forward.1} parent=0 // pred_check_branch
    %54 = sbr.rel (0) target = $region57
  $region56: #{autoformer_forward.1} parent=0 // pred_region
    _
  $region57: #{autoformer_forward.1} parent=0 // pred_fallthru
    _
  // Predicated region
  $region58: #{autoformer_forward.1} parent=0 // pred_check
    _
  $region59: #{autoformer_forward.1} parent=0 // pred_check_branch
    %56 = sbr.rel (0) target = $region61
  $region60: #{autoformer_forward.1} parent=0 // pred_region
    _
  $region61: #{autoformer_forward.1} parent=0 // pred_fallthru
    _
  // Predicated region
  $region62: #{autoformer_forward.1} parent=0 // pred_check
    _
  $region63: #{autoformer_forward.1} parent=0 // pred_check_branch
    %58 = sbr.rel (0) target = $region65
  $region64: #{autoformer_forward.1} parent=0 // pred_region
    _
  $region65: #{autoformer_forward.1} parent=0 // pred_fallthru
    _
  // Predicated region
  $region66: #{autoformer_forward.1} parent=0 // pred_check
    _
  $region67: #{autoformer_forward.1} parent=0 // pred_check_branch
    %60 = sbr.rel (0) target = $region69
  $region68: #{autoformer_forward.1} parent=0 // pred_region
    _
  $region69: #{autoformer_forward.1} parent=0 // pred_fallthru
    _
  // Predicated region
  $region70: #{autoformer_forward.1} parent=0 // pred_check
    _
  $region71: #{autoformer_forward.1} parent=0 // pred_check_branch
    %62 = sbr.rel (0) target = $region73
  $region72: #{autoformer_forward.1} parent=0 // pred_region
    _
  $region73: #{autoformer_forward.1} parent=0 // pred_fallthru
    _
  // Predicated region
  $region74: #{autoformer_forward.1} parent=0 // pred_check
    _
  $region75: #{autoformer_forward.1} parent=0 // pred_check_branch
    %64 = sbr.rel (0) target = $region77
  $region76: #{autoformer_forward.1} parent=0 // pred_region
    _
  $region77: #{autoformer_forward.1} parent=0 // pred_fallthru
    _
  // Predicated region
  $region78: #{autoformer_forward.1} parent=0 // pred_check
    _
  $region79: #{autoformer_forward.1} parent=0 // pred_check_branch
    %66 = sbr.rel (0) target = $region81
  $region80: #{autoformer_forward.1} parent=0 // pred_region
    _
  $region81: #{autoformer_forward.1} parent=0 // pred_fallthru
    _
  // Predicated region
  $region82: #{autoformer_forward.1} parent=0 // pred_check
    _
  $region83: #{autoformer_forward.1} parent=0 // pred_check_branch
    %68 = sbr.rel (0) target = $region85
  $region84: #{autoformer_forward.1} parent=0 // pred_region
    _
  $region85: #{autoformer_forward.1} parent=0 // pred_fallthru
    _
  // Predicated region
  $region86: #{autoformer_forward.1} parent=0 // pred_check
    _
  $region87: #{autoformer_forward.1} parent=0 // pred_check_branch
    %70 = sbr.rel (0) target = $region89
  $region88: #{autoformer_forward.1} parent=0 // pred_region
    _
  $region89: #{autoformer_forward.1} parent=0 // pred_fallthru
    _
  %v71 = vld [vmem:[%s1] sm:$0xff]
  %v72 = vld [vmem:[%s1 + $0x8] sm:$0xff]
  %v73 = vld [vmem:[%s1 + $0x10] sm:$0xff]
  %v74 = vld [vmem:[%s1 + $0x18] sm:$0xff]
  %v75 = vld [vmem:[%s1 + $0x20] sm:$0xff]
  %v76 = vld [vmem:[%s1 + $0x28] sm:$0xff]
  %v77 = vld [vmem:[%s1 + $0x30] sm:$0xff]
  %v78 = vld [vmem:[%s1 + $0x38] sm:$0xff]
  %v79 = vld [vmem:[%s1 + $0x40] sm:$0xff]
  %v80 = vld [vmem:[%s1 + $0x48] sm:$0xff]
  %v81 = vld [vmem:[%s1 + $0x50] sm:$0xff]
  %v82 = vld [vmem:[%s1 + $0x58] sm:$0xff]
  %v83 = vld [vmem:[%s1 + $0x60] sm:$0xff]
  %v84 = vld [vmem:[%s1 + $0x68] sm:$0xff]
  %v85 = vld [vmem:[%s1 + $0x70] sm:$0xff]
  %v86 = vld [vmem:[%s1 + $0x78] sm:$0xff]
  %v87 = vld [vmem:[%s1 + $0x80] sm:$0xff]
  %v88 = vld [vmem:[%s1 + $0x88] sm:$0xff]
  %v89 = vld [vmem:[%s1 + $0x90] sm:$0xff]
  %v90 = vld [vmem:[%s1 + $0x98] sm:$0xff]
  %v91 = vld [vmem:[%s1 + $0xa0] sm:$0xff]
  %v92 = vld [vmem:[%s1 + $0xa8] sm:$0xff]
  %v93 = vld [vmem:[%s1 + $0xb0] sm:$0xff]
  %v94 = vld [vmem:[%s1 + $0xb8] sm:$0xff]
  %v95 = vld [vmem:[%s1 + $0xc0] sm:$0xff]
  %v96 = vld [vmem:[%s1 + $0xc8] sm:$0xff]
  %v97 = vld [vmem:[%s1 + $0xd0] sm:$0xff]
  %v98 = vld [vmem:[%s1 + $0xd8] sm:$0xff]
  %v99 = vld [vmem:[%s1 + $0xe0] sm:$0xff]
  %v100 = vld [vmem:[%s1 + $0xe8] sm:$0xff]
  %v101 = vld [vmem:[%s1 + $0xf0] sm:$0xff]
  %v102 = vld [vmem:[%s1 + $0xf8] sm:$0xff]
  %s103 = scalar_lea.vmem %s1, 256
  %v104 = vld [vmem:[%s103] sm:$0xff]
  %v105 = vld [vmem:[%s103 + $0x8] sm:$0xff]
  %v106 = vld [vmem:[%s103 + $0x10] sm:$0xff]
  %v107 = vld [vmem:[%s103 + $0x18] sm:$0xff]
  %v108 = vld [vmem:[%s103 + $0x20] sm:$0xff]
  %v109 = vld [vmem:[%s103 + $0x28] sm:$0xff]
  %v110 = vld [vmem:[%s103 + $0x30] sm:$0xff]
  %v111 = vld [vmem:[%s103 + $0x38] sm:$0xff]
  %v112 = vld [vmem:[%s103 + $0x40] sm:$0xff]
  %v113 = vld [vmem:[%s103 + $0x48] sm:$0xff]
  %v114 = vld [vmem:[%s103 + $0x50] sm:$0xff]
  %v115 = vld [vmem:[%s103 + $0x58] sm:$0xff]
  %v116 = vld [vmem:[%s103 + $0x60] sm:$0xff]
  %v117 = vld [vmem:[%s103 + $0x68] sm:$0xff]
  %v118 = vld [vmem:[%s103 + $0x70] sm:$0xff]
  %v119 = vld [vmem:[%s103 + $0x78] sm:$0xff]
  %v120 = vld [vmem:[%s103 + $0x80] sm:$0xff]
  %v121 = vld [vmem:[%s103 + $0x88] sm:$0xff]
  %v122 = vld [vmem:[%s103 + $0x90] sm:$0xff]
  %v123 = vld [vmem:[%s103 + $0x98] sm:$0xff]
  %v124 = vld [vmem:[%s103 + $0xa0] sm:$0xff]
  %v125 = vld [vmem:[%s103 + $0xa8] sm:$0xff]
  %v126 = vld [vmem:[%s103 + $0xb0] sm:$0xff]
  %v127 = vld [vmem:[%s103 + $0xb8] sm:$0xff]
  %v128 = vld [vmem:[%s103 + $0xc0] sm:$0xff]
  %v129 = vld [vmem:[%s103 + $0xc8] sm:$0xff]
  %v130 = vld [vmem:[%s103 + $0xd0] sm:$0xff]
  %v131 = vld [vmem:[%s103 + $0xd8] sm:$0xff]
  %v132 = vld [vmem:[%s103 + $0xe0] sm:$0xff]
  %v133 = vld [vmem:[%s103 + $0xe8] sm:$0xff]
  %v134 = vld [vmem:[%s103 + $0xf0] sm:$0xff]
  %v135 = vld [vmem:[%s103 + $0xf8] sm:$0xff]
  %s136 = scalar_lea.vmem %s1, 512
  %v137 = vld [vmem:[%s136] sm:$0xff]
  %v138 = vld [vmem:[%s136 + $0x8] sm:$0xff]
  %v139 = vld [vmem:[%s136 + $0x10] sm:$0xff]
  %v140 = vld [vmem:[%s136 + $0x18] sm:$0xff]
  %v141 = vld [vmem:[%s136 + $0x20] sm:$0xff]
  %v142 = vld [vmem:[%s136 + $0x28] sm:$0xff]
  %v143 = vld [vmem:[%s136 + $0x30] sm:$0xff]
  %v144 = vld [vmem:[%s136 + $0x38] sm:$0xff]
  %v145 = vld [vmem:[%s136 + $0x40] sm:$0xff]
  %v146 = vld [vmem:[%s136 + $0x48] sm:$0xff]
  %v147 = vld [vmem:[%s136 + $0x50] sm:$0xff]
  %v148 = vld [vmem:[%s136 + $0x58] sm:$0xff]
  %v149 = vld [vmem:[%s136 + $0x60] sm:$0xff]
  %v150 = vld [vmem:[%s136 + $0x68] sm:$0xff]
  %v151 = vld [vmem:[%s136 + $0x70] sm:$0xff]
  %v152 = vld [vmem:[%s136 + $0x78] sm:$0xff]
  %v153 = vld [vmem:[%s136 + $0x80] sm:$0xff]
  %v154 = vld [vmem:[%s136 + $0x88] sm:$0xff]
  %v155 = vld [vmem:[%s136 + $0x90] sm:$0xff]
  %v156 = vld [vmem:[%s136 + $0x98] sm:$0xff]
  %v157 = vld [vmem:[%s136 + $0xa0] sm:$0xff]
  %v158 = vld [vmem:[%s136 + $0xa8] sm:$0xff]
  %v159 = vld [vmem:[%s136 + $0xb0] sm:$0xff]
  %v160 = vld [vmem:[%s136 + $0xb8] sm:$0xff]
  %v161 = vld [vmem:[%s136 + $0xc0] sm:$0xff]
  %v162 = vld [vmem:[%s136 + $0xc8] sm:$0xff]
  %v163 = vld [vmem:[%s136 + $0xd0] sm:$0xff]
  %v164 = vld [vmem:[%s136 + $0xd8] sm:$0xff]
  %v165 = vld [vmem:[%s136 + $0xe0] sm:$0xff]
  %v166 = vld [vmem:[%s136 + $0xe8] sm:$0xff]
  %v167 = vld [vmem:[%s136 + $0xf0] sm:$0xff]
  %v168 = vld [vmem:[%s136 + $0xf8] sm:$0xff]
  %v169 = vld [vmem:[%s2] sm:$0xff]
  %v170 = vld [vmem:[%s2 + $0x8] sm:$0xff]
  %v171 = vld [vmem:[%s2 + $0x10] sm:$0xff]
  %v172 = vld [vmem:[%s2 + $0x18] sm:$0xff]
  %s173 = scalar_lea.vmem %s2, 32
  %v174 = vld [vmem:[%s173] sm:$0xff]
  %v175 = vld [vmem:[%s173 + $0x8] sm:$0xff]
  %v176 = vld [vmem:[%s173 + $0x10] sm:$0xff]
  %v177 = vld [vmem:[%s173 + $0x18] sm:$0xff]
  %v178 = vld [vmem:[%s3] sm:$0xff]
  %v179 = vld [vmem:[%s3 + $0x8] sm:$0xff]
  %s180 = scalar_lea.vmem %s3, 16
  %v181 = vld [vmem:[%s180] sm:$0xff]
  %v182 = vld [vmem:[%s180 + $0x8] sm:$0xff]
  %s183 = scalar_lea.vmem %s3, 32
  %v184 = vld [vmem:[%s183] sm:$0xff]
  %v185 = vld [vmem:[%s183 + $0x8] sm:$0xff]
  %s186 = scalar_lea.vmem %s3, 48
  %v187 = vld [vmem:[%s186] sm:$0xff]
  %v188 = vld [vmem:[%s186 + $0x8] sm:$0xff]
  %v189 = vld [vmem:[%s4] sm:$0xf]
  %v190 = vld [vmem:[%s4 + $0x4] sm:$0xf]
  %v191 = vld [vmem:[%s4 + $0x8] sm:$0xf]
  %v192 = vld [vmem:[%s5] sm:$0xf]
  %v193 = vld [vmem:[%s5 + $0x4] sm:$0xf]
  %v194 = vld [vmem:[%s5 + $0x8] sm:$0xf]
  %v195 = vld [vmem:[%s6] sm:$0xff]
  %v196 = vld [vmem:[%s6 + $0x8] sm:$0xff]
  %v197 = vld [vmem:[%s6 + $0x10] sm:$0xff]
  %v198 = vld [vmem:[%s6 + $0x18] sm:$0xff]
  %s199 = scalar_lea.vmem %s6, 32
  %v200 = vld [vmem:[%s199] sm:$0xff]
  %v201 = vld [vmem:[%s199 + $0x8] sm:$0xff]
  %v202 = vld [vmem:[%s199 + $0x10] sm:$0xff]
  %v203 = vld [vmem:[%s199 + $0x18] sm:$0xff]
  %s204 = scalar_lea.vmem %s6, 64
  %v205 = vld [vmem:[%s204] sm:$0xff]
  %v206 = vld [vmem:[%s204 + $0x8] sm:$0xff]
  %v207 = vld [vmem:[%s204 + $0x10] sm:$0xff]
  %v208 = vld [vmem:[%s204 + $0x18] sm:$0xff]
  %s209 = scalar_lea.vmem %s6, 96
  %v210 = vld [vmem:[%s209] sm:$0xff]
  %v211 = vld [vmem:[%s209 + $0x8] sm:$0xff]
  %v212 = vld [vmem:[%s209 + $0x10] sm:$0xff]
  %v213 = vld [vmem:[%s209 + $0x18] sm:$0xff]
  %v214 = vld [vmem:[%s7] sm:$0x1]
  %s215 = scalar_lea.vmem %s7, 1
  %v216 = vld [vmem:[%s215] sm:$0x1]
  %s217 = scalar_lea.vmem %s7, 2
  %v218 = vld [vmem:[%s217] sm:$0x1]
  %s219 = scalar_lea.vmem %s7, 3
  %v220 = vld [vmem:[%s219] sm:$0x1]
  %v221 = vld [vmem:[%s8] sm:$0xff]
  %v222 = vld [vmem:[%s8 + $0x8] sm:$0xff]
  %v223 = vld [vmem:[%s8 + $0x10] sm:$0xff]
  %v224 = vld [vmem:[%s8 + $0x18] sm:$0xff]
  %v225 = vld [vmem:[%s9] sm:$0xff]
  %v226 = vld [vmem:[%s9 + $0x8] sm:$0xff]
  %v227 = vld [vmem:[%s9 + $0x10] sm:$0xff]
  %v228 = vld [vmem:[%s9 + $0x18] sm:$0xff]
  %v229 = vld [vmem:[%s11] sm:$0xff]
  %v230 = vld [vmem:[%s11 + $0x8] sm:$0xff]
  %v231 = vld [vmem:[%s11 + $0x10] sm:$0xff]
  %v232 = vld [vmem:[%s11 + $0x18] sm:$0xff]
  %s233 = scalar_lea.vmem %s11, 32
  %v234 = vld [vmem:[%s233] sm:$0xff]
  %v235 = vld [vmem:[%s233 + $0x8] sm:$0xff]
  %v236 = vld [vmem:[%s233 + $0x10] sm:$0xff]
  %v237 = vld [vmem:[%s233 + $0x18] sm:$0xff]
  %s238 = scalar_lea.vmem %s11, 64
  %v239 = vld [vmem:[%s238] sm:$0xff]
  %v240 = vld [vmem:[%s238 + $0x8] sm:$0xff]
  %v241 = vld [vmem:[%s238 + $0x10] sm:$0xff]
  %v242 = vld [vmem:[%s238 + $0x18] sm:$0xff]
  %s243 = scalar_lea.vmem %s11, 96
  %v244 = vld [vmem:[%s243] sm:$0xff]
  %v245 = vld [vmem:[%s243 + $0x8] sm:$0xff]
  %v246 = vld [vmem:[%s243 + $0x10] sm:$0xff]
  %v247 = vld [vmem:[%s243 + $0x18] sm:$0xff]
  %v248 = vld [vmem:[%s12] sm:$0x1]
  %s249 = scalar_lea.vmem %s12, 1
  %v250 = vld [vmem:[%s249] sm:$0x1]
  %s251 = scalar_lea.vmem %s12, 2
  %v252 = vld [vmem:[%s251] sm:$0x1]
  %s253 = scalar_lea.vmem %s12, 3
  %v254 = vld [vmem:[%s253] sm:$0x1]
  %v255 = vld [vmem:[%s13] sm:$0xff]
  %v256 = vld [vmem:[%s13 + $0x8] sm:$0xff]
  %v257 = vld [vmem:[%s13 + $0x10] sm:$0xff]
  %v258 = vld [vmem:[%s13 + $0x18] sm:$0xff]
  %s259 = scalar_lea.vmem %s13, 32
  %v260 = vld [vmem:[%s259] sm:$0xff]
  %v261 = vld [vmem:[%s259 + $0x8] sm:$0xff]
  %v262 = vld [vmem:[%s259 + $0x10] sm:$0xff]
  %v263 = vld [vmem:[%s259 + $0x18] sm:$0xff]
  %s264 = scalar_lea.vmem %s13, 64
  %v265 = vld [vmem:[%s264] sm:$0xff]
  %v266 = vld [vmem:[%s264 + $0x8] sm:$0xff]
  %v267 = vld [vmem:[%s264 + $0x10] sm:$0xff]
  %v268 = vld [vmem:[%s264 + $0x18] sm:$0xff]
  %s269 = scalar_lea.vmem %s13, 96
  %v270 = vld [vmem:[%s269] sm:$0xff]
  %v271 = vld [vmem:[%s269 + $0x8] sm:$0xff]
  %v272 = vld [vmem:[%s269 + $0x10] sm:$0xff]
  %v273 = vld [vmem:[%s269 + $0x18] sm:$0xff]
  %v274 = vld [vmem:[%s14] sm:$0x1]
  %s275 = scalar_lea.vmem %s14, 1
  %v276 = vld [vmem:[%s275] sm:$0x1]
  %s277 = scalar_lea.vmem %s14, 2
  %v278 = vld [vmem:[%s277] sm:$0x1]
  %s279 = scalar_lea.vmem %s14, 3
  %v280 = vld [vmem:[%s279] sm:$0x1]
  %v281 = vld [vmem:[%s15] sm:$0xff]
  %v282 = vld [vmem:[%s15 + $0x8] sm:$0xff]
  %v283 = vld [vmem:[%s15 + $0x10] sm:$0xff]
  %v284 = vld [vmem:[%s15 + $0x18] sm:$0xff]
  %v285 = vld [vmem:[%s16] sm:$0xff]
  %v286 = vld [vmem:[%s16 + $0x8] sm:$0xff]
  %v287 = vld [vmem:[%s16 + $0x10] sm:$0xff]
  %v288 = vld [vmem:[%s16 + $0x18] sm:$0xff]
  %v289 = vld [vmem:[%s17] sm:$0xff]
  %v290 = vld [vmem:[%s17 + $0x8] sm:$0xff]
  %v291 = vld [vmem:[%s17 + $0x10] sm:$0xff]
  %v292 = vld [vmem:[%s17 + $0x18] sm:$0xff]
  %v293 = vld [vmem:[%s17 + $0x20] sm:$0xff]
  %v294 = vld [vmem:[%s17 + $0x28] sm:$0xff]
  %v295 = vld [vmem:[%s17 + $0x30] sm:$0xff]
  %v296 = vld [vmem:[%s17 + $0x38] sm:$0xff]
  %v297 = vld [vmem:[%s17 + $0x40] sm:$0xff]
  %v298 = vld [vmem:[%s17 + $0x48] sm:$0xff]
  %v299 = vld [vmem:[%s17 + $0x50] sm:$0xff]
  %v300 = vld [vmem:[%s17 + $0x58] sm:$0xff]
  %v301 = vld [vmem:[%s19] sm:$0xff]
  %v302 = vld [vmem:[%s19 + $0x8] sm:$0xff]
  %v303 = vld [vmem:[%s19 + $0x10] sm:$0xff]
  %v304 = vld [vmem:[%s19 + $0x18] sm:$0xff]
  %v305 = vld [vmem:[%s20] sm:$0x1]
  %v306 = vld [vmem:[%s21] sm:$0xf]
  %v307 = vld [vmem:[%s10] sm:$0x1]
  %s308 = scalar_lea.vmem %s10, 1
  %v309 = vld [vmem:[%s308] sm:$0x1]
  %v310 = vld [vmem:[%s18] sm:$0x1]
  %s311 = scalar_lea.vmem %s18, 1
  %v312 = vld [vmem:[%s311] sm:$0x1]
  %v313 = vlaneseq
  %v314 = vshrl.u32 %v313, 7
  %v315 = vadd.s32 %v314, 8
  %v316 = vcvt.s32.f32 %v314
  %v317 = vcvt.s32.f32 %v315
  %vm318 = vcmp.ge.s32.totalorder %v314, 8
  %vm319 = vcmp.ge.s32.totalorder %v315, 8
  %v320 = vsel %vm318, 1, 0
  %v321 = vsel %vm319, 1, 0
  %v322 = vcvt.s32.f32 %v320
  %v323 = vcvt.s32.f32 %v321
  %v324 = vld [vmem:[%s0] sm:$0xff]
  %v325 = vld [vmem:[%s0 + $0x8] sm:$0xff]
  %vm326 = vcmask 130048
  %v328 = vsel %vm326, %v178, 0
  %v331 = vsel %vm326, %v179, 0
  %333 = vmatpush.msra.mxu0 0.0
  %334 = vmatpush.msra.mxu0 0.0
  %335 = vmatpush.msra.mxu0 0.0
  %336 = vmatpush.msra.mxu0 0.0
  %337 = vmatpush.msra.mxu0 0.0
  %338 = vmatpush.msra.mxu0 0.0
  %339 = vmatpush.msra.mxu0 0.0
  %340 = vmatpush.msra.mxu0 0.0
  %341 = vmatpush.msra.mxu0 0.0
  %342 = vmatpush.msra.mxu0 0.0
  %343 = vmatpush.msra.mxu0 0.0
  %344 = vmatpush.msra.mxu0 0.0
  %345 = vmatpush.msra.mxu0 0.0
  %346 = vmatpush.msra.mxu0 0.0
  %347 = vmatpush.msra.mxu0 %v325
  %348 = vmatpush.msra.mxu0 %v324
  %349 = vmatmul.f32.gmra.mxu0 %v328
  %v350 = vpop.f32.mrf.mxu0
  %v351 = vadd.f32 0.0, %v350
  %352 = vmatmul.f32.gmra.mxu0 %v331
  %v353 = vpop.f32.mrf.mxu0
  %v354 = vadd.f32 0.0, %v353
  %355 = vdwg.mxu0
  %v356 = vsub.f32 %v324, %v351
  %v357 = vsub.f32 %v325, %v354
  %vm358 = vcmask 31744
  %v359 = vsel %vm358, %v324, 0.0
  %v360 = vsel %vm358, %v325, 0.0
  %v361 = vadd.f32 %v359, %v360
  %v362 = vrot.slane %v361, 4
  %v363 = vadd.f32 %v361, %v362
  %v364 = vrot.slane %v363, 2
  %v365 = vadd.f32 %v363, %v364
  %v366 = vrot.slane %v365, 1
  %v367 = vadd.f32 %v365, %v366
  %v368 = vrcp.pop 16.0
  %v369 = vmul.f32 16.0, %v368
  %v370 = vsub.f32 1.0, %v369
  %v371 = vmul.f32 %v368, %v370
  %v372 = vadd.f32 %v368, %v371
  %vm373 = vweird.f32 %v368
  %v374 = vsel %vm373, %v368, %v372
  %v375 = vmul.f32 %v367, %v374
  %v376 = vmul.f32 %v322, %v375
  %v377 = vmul.f32 %v323, %v375
  %v379 = vsel %vm326, %v181, 0
  %v382 = vsel %vm326, %v182, 0
  %384 = vmatpush.msra.mxu0 0.0
  %385 = vmatpush.msra.mxu0 0.0
  %386 = vmatpush.msra.mxu0 0.0
  %387 = vmatpush.msra.mxu0 0.0
  %388 = vmatpush.msra.mxu0 0.0
  %389 = vmatpush.msra.mxu0 0.0
  %390 = vmatpush.msra.mxu0 0.0
  %391 = vmatpush.msra.mxu0 0.0
  %392 = vmatpush.msra.mxu0 0.0
  %393 = vmatpush.msra.mxu0 0.0
  %394 = vmatpush.msra.mxu0 0.0
  %395 = vmatpush.msra.mxu0 0.0
  %396 = vmatpush.msra.mxu0 0.0
  %397 = vmatpush.msra.mxu0 0.0
  %398 = vmatpush.msra.mxu0 %v354
  %399 = vmatpush.msra.mxu0 %v351
  %400 = vmatmul.f32.gmra.mxu0 %v379
  %v401 = vpop.f32.mrf.mxu0
  %v402 = vadd.f32 %v376, %v401
  %403 = vmatmul.f32.gmra.mxu0 %v382
  %v404 = vpop.f32.mrf.mxu0
  %v405 = vadd.f32 %v377, %v404
  %406 = vdwg.mxu0
  %407 = vmatpush.msra.mxu0 0.0
  %408 = vmatpush.msra.mxu0 0.0
  %409 = vmatpush.msra.mxu0 0.0
  %410 = vmatpush.msra.mxu0 0.0
  %411 = vmatpush.msra.mxu0 0.0
  %412 = vmatpush.msra.mxu0 0.0
  %413 = vmatpush.msra.mxu0 0.0
  %414 = vmatpush.msra.mxu0 0.0
  %415 = vmatpush.msra.mxu0 0.0
  %416 = vmatpush.msra.mxu0 0.0
  %417 = vmatpush.msra.mxu0 0.0
  %418 = vmatpush.msra.mxu0 0.0
  %419 = vmatpush.msra.mxu0 0.0
  %420 = vmatpush.msra.mxu0 0.0
  %421 = vmatpush.msra.mxu0 %v357
  %422 = vmatpush.msra.mxu0 %v356
  %423 = vmatmul.f32.gmra.mxu0 %v379
  %v424 = vpop.f32.mrf.mxu0
  %v425 = vadd.f32 0.0, %v424
  %426 = vmatmul.f32.gmra.mxu0 %v382
  %v427 = vpop.f32.mrf.mxu0
  %v428 = vadd.f32 0.0, %v427
  %429 = vdwg.mxu0
  %v431 = vsel %vm326, %v184, 0
  %v434 = vsel %vm326, %v185, 0
  %436 = vmatpush.msra.mxu0 0.0
  %437 = vmatpush.msra.mxu0 0.0
  %438 = vmatpush.msra.mxu0 0.0
  %439 = vmatpush.msra.mxu0 0.0
  %440 = vmatpush.msra.mxu0 0.0
  %441 = vmatpush.msra.mxu0 0.0
  %442 = vmatpush.msra.mxu0 0.0
  %443 = vmatpush.msra.mxu0 0.0
  %444 = vmatpush.msra.mxu0 0.0
  %445 = vmatpush.msra.mxu0 0.0
  %446 = vmatpush.msra.mxu0 0.0
  %447 = vmatpush.msra.mxu0 0.0
  %448 = vmatpush.msra.mxu0 0.0
  %449 = vmatpush.msra.mxu0 0.0
  %450 = vmatpush.msra.mxu0 %v325
  %451 = vmatpush.msra.mxu0 %v324
  %452 = vmatmul.f32.gmra.mxu0 %v431
  %v453 = vpop.f32.mrf.mxu0
  %v454 = vadd.f32 0.0, %v453
  %455 = vmatmul.f32.gmra.mxu0 %v434
  %v456 = vpop.f32.mrf.mxu0
  %v457 = vadd.f32 0.0, %v456
  %458 = vdwg.mxu0
  %v460 = vsel %vm358, %v324, 0
  %v463 = vsel %vm358, %v325, 0
  %vm465 = vcmask 1043456
  %v467 = vsel %vm465, %v190, 0
  %469 = vmatpush.msra.mxu0 0.0
  %470 = vmatpush.msra.mxu0 0.0
  %471 = vmatpush.msra.mxu0 0.0
  %472 = vmatpush.msra.mxu0 0.0
  %473 = vmatpush.msra.mxu0 0.0
  %474 = vmatpush.msra.mxu0 0.0
  %475 = vmatpush.msra.mxu0 0.0
  %476 = vmatpush.msra.mxu0 0.0
  %477 = vmatpush.msra.mxu0 0.0
  %478 = vmatpush.msra.mxu0 0.0
  %479 = vmatpush.msra.mxu0 0.0
  %480 = vmatpush.msra.mxu0 0.0
  %481 = vmatpush.msra.mxu0 0.0
  %482 = vmatpush.msra.mxu0 0.0
  %483 = vmatpush.msra.mxu0 0.0
  %484 = vmatpush.msra.mxu0 %v467
  %485 = vmatmul.f32.gmra.mxu0 %v460
  %v486 = vpop.f32.mrf.mxu0
  %v487 = vadd.f32 0.0, %v486
  %488 = vmatmul.f32.gmra.mxu0 %v463
  %v489 = vpop.f32.mrf.mxu0
  %v490 = vadd.f32 0.0, %v489
  %491 = vdwg.mxu0
  %v493 = vsel %vm358, %v454, 0
  %v496 = vsel %vm358, %v457, 0
  %v499 = vsel %vm465, %v189, 0
  %501 = vmatpush.msra.mxu0 0.0
  %502 = vmatpush.msra.mxu0 0.0
  %503 = vmatpush.msra.mxu0 0.0
  %504 = vmatpush.msra.mxu0 0.0
  %505 = vmatpush.msra.mxu0 0.0
  %506 = vmatpush.msra.mxu0 0.0
  %507 = vmatpush.msra.mxu0 0.0
  %508 = vmatpush.msra.mxu0 0.0
  %509 = vmatpush.msra.mxu0 0.0
  %510 = vmatpush.msra.mxu0 0.0
  %511 = vmatpush.msra.mxu0 0.0
  %512 = vmatpush.msra.mxu0 0.0
  %513 = vmatpush.msra.mxu0 0.0
  %514 = vmatpush.msra.mxu0 0.0
  %515 = vmatpush.msra.mxu0 0.0
  %516 = vmatpush.msra.mxu0 %v499
  %517 = vmatmul.f32.gmra.mxu0 %v493
  %v518 = vpop.f32.mrf.mxu0
  %v519 = vadd.f32 %v487, %v518
  %520 = vmatmul.f32.gmra.mxu0 %v496
  %v521 = vpop.f32.mrf.mxu0
  %v522 = vadd.f32 %v490, %v521
  %523 = vdwg.mxu0
  %v525 = vsel %vm326, %v187, 0
  %v528 = vsel %vm326, %v188, 0
  %530 = vmatpush.msra.mxu0 0.0
  %531 = vmatpush.msra.mxu0 0.0
  %532 = vmatpush.msra.mxu0 0.0
  %533 = vmatpush.msra.mxu0 0.0
  %534 = vmatpush.msra.mxu0 0.0
  %535 = vmatpush.msra.mxu0 0.0
  %536 = vmatpush.msra.mxu0 0.0
  %537 = vmatpush.msra.mxu0 0.0
  %538 = vmatpush.msra.mxu0 0.0
  %539 = vmatpush.msra.mxu0 0.0
  %540 = vmatpush.msra.mxu0 0.0
  %541 = vmatpush.msra.mxu0 0.0
  %542 = vmatpush.msra.mxu0 0.0
  %543 = vmatpush.msra.mxu0 0.0
  %544 = vmatpush.msra.mxu0 %v325
  %545 = vmatpush.msra.mxu0 %v324
  %546 = vmatmul.f32.gmra.mxu0 %v525
  %v547 = vpop.f32.mrf.mxu0
  %v548 = vadd.f32 0.0, %v547
  %549 = vmatmul.f32.gmra.mxu0 %v528
  %v550 = vpop.f32.mrf.mxu0
  %v551 = vadd.f32 0.0, %v550
  %552 = vdwg.mxu0
  %v554 = vsel %vm358, %v548, 0
  %v557 = vsel %vm358, %v551, 0
  %v560 = vsel %vm465, %v191, 0
  %562 = vmatpush.msra.mxu0 0.0
  %563 = vmatpush.msra.mxu0 0.0
  %564 = vmatpush.msra.mxu0 0.0
  %565 = vmatpush.msra.mxu0 0.0
  %566 = vmatpush.msra.mxu0 0.0
  %567 = vmatpush.msra.mxu0 0.0
  %568 = vmatpush.msra.mxu0 0.0
  %569 = vmatpush.msra.mxu0 0.0
  %570 = vmatpush.msra.mxu0 0.0
  %571 = vmatpush.msra.mxu0 0.0
  %572 = vmatpush.msra.mxu0 0.0
  %573 = vmatpush.msra.mxu0 0.0
  %574 = vmatpush.msra.mxu0 0.0
  %575 = vmatpush.msra.mxu0 0.0
  %576 = vmatpush.msra.mxu0 0.0
  %577 = vmatpush.msra.mxu0 %v560
  %578 = vmatmul.f32.gmra.mxu0 %v554
  %v579 = vpop.f32.mrf.mxu0
  %v580 = vadd.f32 0.0, %v579
  %581 = vmatmul.f32.gmra.mxu0 %v557
  %v582 = vpop.f32.mrf.mxu0
  %v583 = vadd.f32 0.0, %v582
  %584 = vdwg.mxu0
  %v585 = vadd.f32 %v519, %v580
  %v586 = vadd.f32 %v522, %v583
  %v588 = vperm.slane %v214, 0
  %vm590 = vcmask 261120
  %v592 = vsel %vm590, %v585, 0
  %v595 = vsel %vm590, %v586, 0
  %597 = vmatpush.msra.mxu0 0.0
  %598 = vmatpush.msra.mxu0 0.0
  %599 = vmatpush.msra.mxu0 0.0
  %600 = vmatpush.msra.mxu0 0.0
  %601 = vmatpush.msra.mxu0 0.0
  %602 = vmatpush.msra.mxu0 0.0
  %603 = vmatpush.msra.mxu0 0.0
  %604 = vmatpush.msra.mxu0 0.0
  %605 = vmatpush.msra.mxu0 0.0
  %606 = vmatpush.msra.mxu0 0.0
  %607 = vmatpush.msra.mxu0 0.0
  %608 = vmatpush.msra.mxu0 0.0
  %609 = vmatpush.msra.mxu0 %v198
  %610 = vmatpush.msra.mxu0 %v197
  %611 = vmatpush.msra.mxu0 %v196
  %612 = vmatpush.msra.mxu0 %v195
  %613 = vmatmul.f32.gmra.mxu0 %v592
  %v614 = vpop.f32.mrf.mxu0
  %v615 = vadd.f32 %v588, %v614
  %616 = vmatmul.f32.gmra.mxu0 %v595
  %v617 = vpop.f32.mrf.mxu0
  %v618 = vadd.f32 %v588, %v617
  %619 = vdwg.mxu0
  %v621 = vperm.slane %v216, 0
  %623 = vmatpush.msra.mxu0 0.0
  %624 = vmatpush.msra.mxu0 0.0
  %625 = vmatpush.msra.mxu0 0.0
  %626 = vmatpush.msra.mxu0 0.0
  %627 = vmatpush.msra.mxu0 0.0
  %628 = vmatpush.msra.mxu0 0.0
  %629 = vmatpush.msra.mxu0 0.0
  %630 = vmatpush.msra.mxu0 0.0
  %631 = vmatpush.msra.mxu0 0.0
  %632 = vmatpush.msra.mxu0 0.0
  %633 = vmatpush.msra.mxu0 0.0
  %634 = vmatpush.msra.mxu0 0.0
  %635 = vmatpush.msra.mxu0 %v203
  %636 = vmatpush.msra.mxu0 %v202
  %637 = vmatpush.msra.mxu0 %v201
  %638 = vmatpush.msra.mxu0 %v200
  %639 = vmatmul.f32.gmra.mxu0 %v592
  %v640 = vpop.f32.mrf.mxu0
  %v641 = vadd.f32 %v621, %v640
  %642 = vmatmul.f32.gmra.mxu0 %v595
  %v643 = vpop.f32.mrf.mxu0
  %v644 = vadd.f32 %v621, %v643
  %645 = vdwg.mxu0
  %v647 = vperm.slane %v218, 0
  %649 = vmatpush.msra.mxu0 0.0
  %650 = vmatpush.msra.mxu0 0.0
  %651 = vmatpush.msra.mxu0 0.0
  %652 = vmatpush.msra.mxu0 0.0
  %653 = vmatpush.msra.mxu0 0.0
  %654 = vmatpush.msra.mxu0 0.0
  %655 = vmatpush.msra.mxu0 0.0
  %656 = vmatpush.msra.mxu0 0.0
  %657 = vmatpush.msra.mxu0 0.0
  %658 = vmatpush.msra.mxu0 0.0
  %659 = vmatpush.msra.mxu0 0.0
  %660 = vmatpush.msra.mxu0 0.0
  %661 = vmatpush.msra.mxu0 %v208
  %662 = vmatpush.msra.mxu0 %v207
  %663 = vmatpush.msra.mxu0 %v206
  %664 = vmatpush.msra.mxu0 %v205
  %665 = vmatmul.f32.gmra.mxu0 %v592
  %v666 = vpop.f32.mrf.mxu0
  %v667 = vadd.f32 %v647, %v666
  %668 = vmatmul.f32.gmra.mxu0 %v595
  %v669 = vpop.f32.mrf.mxu0
  %v670 = vadd.f32 %v647, %v669
  %671 = vdwg.mxu0
  %v673 = vsel %vm326, %v71, 0
  %v676 = vsel %vm326, %v72, 0
  %v679 = vsel %vm326, %v73, 0
  %v682 = vsel %vm326, %v74, 0
  %v685 = vsel %vm326, %v75, 0
  %v688 = vsel %vm326, %v76, 0
  %v691 = vsel %vm326, %v77, 0
  %v694 = vsel %vm326, %v78, 0
  %v697 = vsel %vm326, %v79, 0
  %v700 = vsel %vm326, %v80, 0
  %v703 = vsel %vm326, %v81, 0
  %v706 = vsel %vm326, %v82, 0
  %v709 = vsel %vm326, %v83, 0
  %v712 = vsel %vm326, %v84, 0
  %v715 = vsel %vm326, %v85, 0
  %v718 = vsel %vm326, %v86, 0
  %v721 = vsel %vm326, %v87, 0
  %v724 = vsel %vm326, %v88, 0
  %v727 = vsel %vm326, %v89, 0
  %v730 = vsel %vm326, %v90, 0
  %v733 = vsel %vm326, %v91, 0
  %v736 = vsel %vm326, %v92, 0
  %v739 = vsel %vm326, %v93, 0
  %v742 = vsel %vm326, %v94, 0
  %v745 = vsel %vm326, %v95, 0
  %v748 = vsel %vm326, %v96, 0
  %v751 = vsel %vm326, %v97, 0
  %v754 = vsel %vm326, %v98, 0
  %v757 = vsel %vm326, %v99, 0
  %v760 = vsel %vm326, %v100, 0
  %v763 = vsel %vm326, %v101, 0
  %v766 = vsel %vm326, %v102, 0
  %768 = vmatpush.msra.mxu0 0.0
  %769 = vmatpush.msra.mxu0 0.0
  %770 = vmatpush.msra.mxu0 0.0
  %771 = vmatpush.msra.mxu0 0.0
  %772 = vmatpush.msra.mxu0 0.0
  %773 = vmatpush.msra.mxu0 0.0
  %774 = vmatpush.msra.mxu0 0.0
  %775 = vmatpush.msra.mxu0 0.0
  %776 = vmatpush.msra.mxu0 0.0
  %777 = vmatpush.msra.mxu0 0.0
  %778 = vmatpush.msra.mxu0 0.0
  %779 = vmatpush.msra.mxu0 0.0
  %780 = vmatpush.msra.mxu0 0.0
  %781 = vmatpush.msra.mxu0 0.0
  %782 = vmatpush.msra.mxu0 %v618
  %783 = vmatpush.msra.mxu0 %v615
  %784 = vmatmul.f32.gmra.mxu0 %v673
  %v785 = vpop.f32.mrf.mxu0
  %v786 = vadd.f32 0.0, %v785
  %787 = vmatmul.f32.gmra.mxu0 %v676
  %v788 = vpop.f32.mrf.mxu0
  %v789 = vadd.f32 0.0, %v788
  %790 = vmatmul.f32.gmra.mxu0 %v679
  %v791 = vpop.f32.mrf.mxu0
  %v792 = vadd.f32 0.0, %v791
  %793 = vmatmul.f32.gmra.mxu0 %v682
  %v794 = vpop.f32.mrf.mxu0
  %v795 = vadd.f32 0.0, %v794
  %796 = vmatmul.f32.gmra.mxu0 %v685
  %v797 = vpop.f32.mrf.mxu0
  %v798 = vadd.f32 0.0, %v797
  %799 = vmatmul.f32.gmra.mxu0 %v688
  %v800 = vpop.f32.mrf.mxu0
  %v801 = vadd.f32 0.0, %v800
  %802 = vmatmul.f32.gmra.mxu0 %v691
  %v803 = vpop.f32.mrf.mxu0
  %v804 = vadd.f32 0.0, %v803
  %805 = vmatmul.f32.gmra.mxu0 %v694
  %v806 = vpop.f32.mrf.mxu0
  %v807 = vadd.f32 0.0, %v806
  %808 = vmatmul.f32.gmra.mxu0 %v697
  %v809 = vpop.f32.mrf.mxu0
  %v810 = vadd.f32 0.0, %v809
  %811 = vmatmul.f32.gmra.mxu0 %v700
  %v812 = vpop.f32.mrf.mxu0
  %v813 = vadd.f32 0.0, %v812
  %814 = vmatmul.f32.gmra.mxu0 %v703
  %v815 = vpop.f32.mrf.mxu0
  %v816 = vadd.f32 0.0, %v815
  %817 = vmatmul.f32.gmra.mxu0 %v706
  %v818 = vpop.f32.mrf.mxu0
  %v819 = vadd.f32 0.0, %v818
  %820 = vmatmul.f32.gmra.mxu0 %v709
  %v821 = vpop.f32.mrf.mxu0
  %v822 = vadd.f32 0.0, %v821
  %823 = vmatmul.f32.gmra.mxu0 %v712
  %v824 = vpop.f32.mrf.mxu0
  %v825 = vadd.f32 0.0, %v824
  %826 = vmatmul.f32.gmra.mxu0 %v715
  %v827 = vpop.f32.mrf.mxu0
  %v828 = vadd.f32 0.0, %v827
  %829 = vmatmul.f32.gmra.mxu0 %v718
  %v830 = vpop.f32.mrf.mxu0
  %v831 = vadd.f32 0.0, %v830
  %832 = vmatmul.f32.gmra.mxu0 %v721
  %v833 = vpop.f32.mrf.mxu0
  %v834 = vadd.f32 0.0, %v833
  %835 = vmatmul.f32.gmra.mxu0 %v724
  %v836 = vpop.f32.mrf.mxu0
  %v837 = vadd.f32 0.0, %v836
  %838 = vmatmul.f32.gmra.mxu0 %v727
  %v839 = vpop.f32.mrf.mxu0
  %v840 = vadd.f32 0.0, %v839
  %841 = vmatmul.f32.gmra.mxu0 %v730
  %v842 = vpop.f32.mrf.mxu0
  %v843 = vadd.f32 0.0, %v842
  %844 = vmatmul.f32.gmra.mxu0 %v733
  %v845 = vpop.f32.mrf.mxu0
  %v846 = vadd.f32 0.0, %v845
  %847 = vmatmul.f32.gmra.mxu0 %v736
  %v848 = vpop.f32.mrf.mxu0
  %v849 = vadd.f32 0.0, %v848
  %850 = vmatmul.f32.gmra.mxu0 %v739
  %v851 = vpop.f32.mrf.mxu0
  %v852 = vadd.f32 0.0, %v851
  %853 = vmatmul.f32.gmra.mxu0 %v742
  %v854 = vpop.f32.mrf.mxu0
  %v855 = vadd.f32 0.0, %v854
  %856 = vmatmul.f32.gmra.mxu0 %v745
  %v857 = vpop.f32.mrf.mxu0
  %v858 = vadd.f32 0.0, %v857
  %859 = vmatmul.f32.gmra.mxu0 %v748
  %v860 = vpop.f32.mrf.mxu0
  %v861 = vadd.f32 0.0, %v860
  %862 = vmatmul.f32.gmra.mxu0 %v751
  %v863 = vpop.f32.mrf.mxu0
  %v864 = vadd.f32 0.0, %v863
  %865 = vmatmul.f32.gmra.mxu0 %v754
  %v866 = vpop.f32.mrf.mxu0
  %v867 = vadd.f32 0.0, %v866
  %868 = vmatmul.f32.gmra.mxu0 %v757
  %v869 = vpop.f32.mrf.mxu0
  %v870 = vadd.f32 0.0, %v869
  %871 = vmatmul.f32.gmra.mxu0 %v760
  %v872 = vpop.f32.mrf.mxu0
  %v873 = vadd.f32 0.0, %v872
  %874 = vmatmul.f32.gmra.mxu0 %v763
  %v875 = vpop.f32.mrf.mxu0
  %v876 = vadd.f32 0.0, %v875
  %877 = vmatmul.f32.gmra.mxu0 %v766
  %v878 = vpop.f32.mrf.mxu0
  %v879 = vadd.f32 0.0, %v878
  %880 = vdwg.mxu0
  %v882 = vsel %vm326, %v104, 0
  %v885 = vsel %vm326, %v105, 0
  %v888 = vsel %vm326, %v106, 0
  %v891 = vsel %vm326, %v107, 0
  %v894 = vsel %vm326, %v108, 0
  %v897 = vsel %vm326, %v109, 0
  %v900 = vsel %vm326, %v110, 0
  %v903 = vsel %vm326, %v111, 0
  %v906 = vsel %vm326, %v112, 0
  %v909 = vsel %vm326, %v113, 0
  %v912 = vsel %vm326, %v114, 0
  %v915 = vsel %vm326, %v115, 0
  %v918 = vsel %vm326, %v116, 0
  %v921 = vsel %vm326, %v117, 0
  %v924 = vsel %vm326, %v118, 0
  %v927 = vsel %vm326, %v119, 0
  %v930 = vsel %vm326, %v120, 0
  %v933 = vsel %vm326, %v121, 0
  %v936 = vsel %vm326, %v122, 0
  %v939 = vsel %vm326, %v123, 0
  %v942 = vsel %vm326, %v124, 0
  %v945 = vsel %vm326, %v125, 0
  %v948 = vsel %vm326, %v126, 0
  %v951 = vsel %vm326, %v127, 0
  %v954 = vsel %vm326, %v128, 0
  %v957 = vsel %vm326, %v129, 0
  %v960 = vsel %vm326, %v130, 0
  %v963 = vsel %vm326, %v131, 0
  %v966 = vsel %vm326, %v132, 0
  %v969 = vsel %vm326, %v133, 0
  %v972 = vsel %vm326, %v134, 0
  %v975 = vsel %vm326, %v135, 0
  %977 = vmatpush.msra.mxu0 0.0
  %978 = vmatpush.msra.mxu0 0.0
  %979 = vmatpush.msra.mxu0 0.0
  %980 = vmatpush.msra.mxu0 0.0
  %981 = vmatpush.msra.mxu0 0.0
  %982 = vmatpush.msra.mxu0 0.0
  %983 = vmatpush.msra.mxu0 0.0
  %984 = vmatpush.msra.mxu0 0.0
  %985 = vmatpush.msra.mxu0 0.0
  %986 = vmatpush.msra.mxu0 0.0
  %987 = vmatpush.msra.mxu0 0.0
  %988 = vmatpush.msra.mxu0 0.0
  %989 = vmatpush.msra.mxu0 0.0
  %990 = vmatpush.msra.mxu0 0.0
  %991 = vmatpush.msra.mxu0 %v644
  %992 = vmatpush.msra.mxu0 %v641
  %993 = vmatmul.f32.gmra.mxu0 %v882
  %v994 = vpop.f32.mrf.mxu0
  %v995 = vadd.f32 0.0, %v994
  %996 = vmatmul.f32.gmra.mxu0 %v885
  %v997 = vpop.f32.mrf.mxu0
  %v998 = vadd.f32 0.0, %v997
  %999 = vmatmul.f32.gmra.mxu0 %v888
  %v1000 = vpop.f32.mrf.mxu0
  %v1001 = vadd.f32 0.0, %v1000
  %1002 = vmatmul.f32.gmra.mxu0 %v891
  %v1003 = vpop.f32.mrf.mxu0
  %v1004 = vadd.f32 0.0, %v1003
  %1005 = vmatmul.f32.gmra.mxu0 %v894
  %v1006 = vpop.f32.mrf.mxu0
  %v1007 = vadd.f32 0.0, %v1006
  %1008 = vmatmul.f32.gmra.mxu0 %v897
  %v1009 = vpop.f32.mrf.mxu0
  %v1010 = vadd.f32 0.0, %v1009
  %1011 = vmatmul.f32.gmra.mxu0 %v900
  %v1012 = vpop.f32.mrf.mxu0
  %v1013 = vadd.f32 0.0, %v1012
  %1014 = vmatmul.f32.gmra.mxu0 %v903
  %v1015 = vpop.f32.mrf.mxu0
  %v1016 = vadd.f32 0.0, %v1015
  %1017 = vmatmul.f32.gmra.mxu0 %v906
  %v1018 = vpop.f32.mrf.mxu0
  %v1019 = vadd.f32 0.0, %v1018
  %1020 = vmatmul.f32.gmra.mxu0 %v909
  %v1021 = vpop.f32.mrf.mxu0
  %v1022 = vadd.f32 0.0, %v1021
  %1023 = vmatmul.f32.gmra.mxu0 %v912
  %v1024 = vpop.f32.mrf.mxu0
  %v1025 = vadd.f32 0.0, %v1024
  %1026 = vmatmul.f32.gmra.mxu0 %v915
  %v1027 = vpop.f32.mrf.mxu0
  %v1028 = vadd.f32 0.0, %v1027
  %1029 = vmatmul.f32.gmra.mxu0 %v918
  %v1030 = vpop.f32.mrf.mxu0
  %v1031 = vadd.f32 0.0, %v1030
  %1032 = vmatmul.f32.gmra.mxu0 %v921
  %v1033 = vpop.f32.mrf.mxu0
  %v1034 = vadd.f32 0.0, %v1033
  %1035 = vmatmul.f32.gmra.mxu0 %v924
  %v1036 = vpop.f32.mrf.mxu0
  %v1037 = vadd.f32 0.0, %v1036
  %1038 = vmatmul.f32.gmra.mxu0 %v927
  %v1039 = vpop.f32.mrf.mxu0
  %v1040 = vadd.f32 0.0, %v1039
  %1041 = vmatmul.f32.gmra.mxu0 %v930
  %v1042 = vpop.f32.mrf.mxu0
  %v1043 = vadd.f32 0.0, %v1042
  %1044 = vmatmul.f32.gmra.mxu0 %v933
  %v1045 = vpop.f32.mrf.mxu0
  %v1046 = vadd.f32 0.0, %v1045
  %1047 = vmatmul.f32.gmra.mxu0 %v936
  %v1048 = vpop.f32.mrf.mxu0
  %v1049 = vadd.f32 0.0, %v1048
  %1050 = vmatmul.f32.gmra.mxu0 %v939
  %v1051 = vpop.f32.mrf.mxu0
  %v1052 = vadd.f32 0.0, %v1051
  %1053 = vmatmul.f32.gmra.mxu0 %v942
  %v1054 = vpop.f32.mrf.mxu0
  %v1055 = vadd.f32 0.0, %v1054
  %1056 = vmatmul.f32.gmra.mxu0 %v945
  %v1057 = vpop.f32.mrf.mxu0
  %v1058 = vadd.f32 0.0, %v1057
  %1059 = vmatmul.f32.gmra.mxu0 %v948
  %v1060 = vpop.f32.mrf.mxu0
  %v1061 = vadd.f32 0.0, %v1060
  %1062 = vmatmul.f32.gmra.mxu0 %v951
  %v1063 = vpop.f32.mrf.mxu0
  %v1064 = vadd.f32 0.0, %v1063
  %1065 = vmatmul.f32.gmra.mxu0 %v954
  %v1066 = vpop.f32.mrf.mxu0
  %v1067 = vadd.f32 0.0, %v1066
  %1068 = vmatmul.f32.gmra.mxu0 %v957
  %v1069 = vpop.f32.mrf.mxu0
  %v1070 = vadd.f32 0.0, %v1069
  %1071 = vmatmul.f32.gmra.mxu0 %v960
  %v1072 = vpop.f32.mrf.mxu0
  %v1073 = vadd.f32 0.0, %v1072
  %1074 = vmatmul.f32.gmra.mxu0 %v963
  %v1075 = vpop.f32.mrf.mxu0
  %v1076 = vadd.f32 0.0, %v1075
  %1077 = vmatmul.f32.gmra.mxu0 %v966
  %v1078 = vpop.f32.mrf.mxu0
  %v1079 = vadd.f32 0.0, %v1078
  %1080 = vmatmul.f32.gmra.mxu0 %v969
  %v1081 = vpop.f32.mrf.mxu0
  %v1082 = vadd.f32 0.0, %v1081
  %1083 = vmatmul.f32.gmra.mxu0 %v972
  %v1084 = vpop.f32.mrf.mxu0
  %v1085 = vadd.f32 0.0, %v1084
  %1086 = vmatmul.f32.gmra.mxu0 %v975
  %v1087 = vpop.f32.mrf.mxu0
  %v1088 = vadd.f32 0.0, %v1087
  %1089 = vdwg.mxu0
  %v1090 = vmul.f32 %v786, %v995
  %v1091 = vmul.f32 %v789, %v998
  %v1092 = vmul.f32 %v792, %v1001
  %v1093 = vmul.f32 %v795, %v1004
  %v1094 = vmul.f32 %v798, %v1007
  %v1095 = vmul.f32 %v801, %v1010
  %v1096 = vmul.f32 %v804, %v1013
  %v1097 = vmul.f32 %v807, %v1016
  %v1098 = vmul.f32 %v810, %v1019
  %v1099 = vmul.f32 %v813, %v1022
  %v1100 = vmul.f32 %v816, %v1025
  %v1101 = vmul.f32 %v819, %v1028
  %v1102 = vmul.f32 %v822, %v1031
  %v1103 = vmul.f32 %v825, %v1034
  %v1104 = vmul.f32 %v828, %v1037
  %v1105 = vmul.f32 %v831, %v1040
  %v1106 = vmul.f32 %v834, %v1043
  %v1107 = vmul.f32 %v837, %v1046
  %v1108 = vmul.f32 %v840, %v1049
  %v1109 = vmul.f32 %v843, %v1052
  %v1110 = vmul.f32 %v846, %v1055
  %v1111 = vmul.f32 %v849, %v1058
  %v1112 = vmul.f32 %v852, %v1061
  %v1113 = vmul.f32 %v855, %v1064
  %v1114 = vmul.f32 %v858, %v1067
  %v1115 = vmul.f32 %v861, %v1070
  %v1116 = vmul.f32 %v864, %v1073
  %v1117 = vmul.f32 %v867, %v1076
  %v1118 = vmul.f32 %v870, %v1079
  %v1119 = vmul.f32 %v873, %v1082
  %v1120 = vmul.f32 %v876, %v1085
  %v1121 = vmul.f32 %v879, %v1088
  %v1122 = vsel %vm590, %v1090, 0.0
  %1123 = vadd.xlane.f32.xlu0 %v1122
  %v1124 = vpop.xlane.xlu0 %1123
  %v1125 = vsel %vm590, %v1091, 0.0
  %1126 = vadd.xlane.f32.xlu0 %v1125
  %v1127 = vpop.xlane.xlu0 %1126
  %v1128 = vsel %vm590, %v1092, 0.0
  %1129 = vadd.xlane.f32.xlu0 %v1128
  %v1130 = vpop.xlane.xlu0 %1129
  %v1131 = vsel %vm590, %v1093, 0.0
  %1132 = vadd.xlane.f32.xlu0 %v1131
  %v1133 = vpop.xlane.xlu0 %1132
  %v1134 = vsel %vm590, %v1094, 0.0
  %1135 = vadd.xlane.f32.xlu0 %v1134
  %v1136 = vpop.xlane.xlu0 %1135
  %v1137 = vsel %vm590, %v1095, 0.0
  %1138 = vadd.xlane.f32.xlu0 %v1137
  %v1139 = vpop.xlane.xlu0 %1138
  %v1140 = vsel %vm590, %v1096, 0.0
  %1141 = vadd.xlane.f32.xlu0 %v1140
  %v1142 = vpop.xlane.xlu0 %1141
  %v1143 = vsel %vm590, %v1097, 0.0
  %1144 = vadd.xlane.f32.xlu0 %v1143
  %v1145 = vpop.xlane.xlu0 %1144
  %v1146 = vsel %vm590, %v1098, 0.0
  %1147 = vadd.xlane.f32.xlu0 %v1146
  %v1148 = vpop.xlane.xlu0 %1147
  %v1149 = vsel %vm590, %v1099, 0.0
  %1150 = vadd.xlane.f32.xlu0 %v1149
  %v1151 = vpop.xlane.xlu0 %1150
  %v1152 = vsel %vm590, %v1100, 0.0
  %1153 = vadd.xlane.f32.xlu0 %v1152
  %v1154 = vpop.xlane.xlu0 %1153
  %v1155 = vsel %vm590, %v1101, 0.0
  %1156 = vadd.xlane.f32.xlu0 %v1155
  %v1157 = vpop.xlane.xlu0 %1156
  %v1158 = vsel %vm590, %v1102, 0.0
  %1159 = vadd.xlane.f32.xlu0 %v1158
  %v1160 = vpop.xlane.xlu0 %1159
  %v1161 = vsel %vm590, %v1103, 0.0
  %1162 = vadd.xlane.f32.xlu0 %v1161
  %v1163 = vpop.xlane.xlu0 %1162
  %v1164 = vsel %vm590, %v1104, 0.0
  %1165 = vadd.xlane.f32.xlu0 %v1164
  %v1166 = vpop.xlane.xlu0 %1165
  %v1167 = vsel %vm590, %v1105, 0.0
  %1168 = vadd.xlane.f32.xlu0 %v1167
  %v1169 = vpop.xlane.xlu0 %1168
  %v1170 = vsel %vm590, %v1106, 0.0
  %1171 = vadd.xlane.f32.xlu0 %v1170
  %v1172 = vpop.xlane.xlu0 %1171
  %v1173 = vsel %vm590, %v1107, 0.0
  %1174 = vadd.xlane.f32.xlu0 %v1173
  %v1175 = vpop.xlane.xlu0 %1174
  %v1176 = vsel %vm590, %v1108, 0.0
  %1177 = vadd.xlane.f32.xlu0 %v1176
  %v1178 = vpop.xlane.xlu0 %1177
  %v1179 = vsel %vm590, %v1109, 0.0
  %1180 = vadd.xlane.f32.xlu0 %v1179
  %v1181 = vpop.xlane.xlu0 %1180
  %v1182 = vsel %vm590, %v1110, 0.0
  %1183 = vadd.xlane.f32.xlu0 %v1182
  %v1184 = vpop.xlane.xlu0 %1183
  %v1185 = vsel %vm590, %v1111, 0.0
  %1186 = vadd.xlane.f32.xlu0 %v1185
  %v1187 = vpop.xlane.xlu0 %1186
  %v1188 = vsel %vm590, %v1112, 0.0
  %1189 = vadd.xlane.f32.xlu0 %v1188
  %v1190 = vpop.xlane.xlu0 %1189
  %v1191 = vsel %vm590, %v1113, 0.0
  %1192 = vadd.xlane.f32.xlu0 %v1191
  %v1193 = vpop.xlane.xlu0 %1192
  %v1194 = vsel %vm590, %v1114, 0.0
  %1195 = vadd.xlane.f32.xlu0 %v1194
  %v1196 = vpop.xlane.xlu0 %1195
  %v1197 = vsel %vm590, %v1115, 0.0
  %1198 = vadd.xlane.f32.xlu0 %v1197
  %v1199 = vpop.xlane.xlu0 %1198
  %v1200 = vsel %vm590, %v1116, 0.0
  %1201 = vadd.xlane.f32.xlu0 %v1200
  %v1202 = vpop.xlane.xlu0 %1201
  %v1203 = vsel %vm590, %v1117, 0.0
  %1204 = vadd.xlane.f32.xlu0 %v1203
  %v1205 = vpop.xlane.xlu0 %1204
  %v1206 = vsel %vm590, %v1118, 0.0
  %1207 = vadd.xlane.f32.xlu0 %v1206
  %v1208 = vpop.xlane.xlu0 %1207
  %v1209 = vsel %vm590, %v1119, 0.0
  %1210 = vadd.xlane.f32.xlu0 %v1209
  %v1211 = vpop.xlane.xlu0 %1210
  %v1212 = vsel %vm590, %v1120, 0.0
  %1213 = vadd.xlane.f32.xlu0 %v1212
  %v1214 = vpop.xlane.xlu0 %1213
  %v1215 = vsel %vm590, %v1121, 0.0
  %1216 = vadd.xlane.f32.xlu0 %v1215
  %v1217 = vpop.xlane.xlu0 %1216
  %1218 = vmatpush.msra.mxu0 %v1169
  %1219 = vmatpush.msra.mxu0 %v1166
  %1220 = vmatpush.msra.mxu0 %v1163
  %1221 = vmatpush.msra.mxu0 %v1160
  %1222 = vmatpush.msra.mxu0 %v1157
  %1223 = vmatpush.msra.mxu0 %v1154
  %1224 = vmatpush.msra.mxu0 %v1151
  %1225 = vmatpush.msra.mxu0 %v1148
  %1226 = vmatpush.msra.mxu0 %v1145
  %1227 = vmatpush.msra.mxu0 %v1142
  %1228 = vmatpush.msra.mxu0 %v1139
  %1229 = vmatpush.msra.mxu0 %v1136
  %1230 = vmatpush.msra.mxu0 %v1133
  %1231 = vmatpush.msra.mxu0 %v1130
  %1232 = vmatpush.msra.mxu0 %v1127
  %1233 = vmatpush.msra.mxu0 %v1124
  %1234 = vmatmul.f32.gmra.mxu0 %v174
  %v1235 = vpop.f32.mrf.mxu0
  %v1236 = vadd.f32 0.0, %v1235
  %1237 = vmatmul.f32.gmra.mxu0 %v176
  %v1238 = vpop.f32.mrf.mxu0
  %v1239 = vadd.f32 0.0, %v1238
  %1240 = vdwg.mxu0
  %1241 = vmatpush.msra.mxu0 %v1217
  %1242 = vmatpush.msra.mxu0 %v1214
  %1243 = vmatpush.msra.mxu0 %v1211
  %1244 = vmatpush.msra.mxu0 %v1208
  %1245 = vmatpush.msra.mxu0 %v1205
  %1246 = vmatpush.msra.mxu0 %v1202
  %1247 = vmatpush.msra.mxu0 %v1199
  %1248 = vmatpush.msra.mxu0 %v1196
  %1249 = vmatpush.msra.mxu0 %v1193
  %1250 = vmatpush.msra.mxu0 %v1190
  %1251 = vmatpush.msra.mxu0 %v1187
  %1252 = vmatpush.msra.mxu0 %v1184
  %1253 = vmatpush.msra.mxu0 %v1181
  %1254 = vmatpush.msra.mxu0 %v1178
  %1255 = vmatpush.msra.mxu0 %v1175
  %1256 = vmatpush.msra.mxu0 %v1172
  %1257 = vmatmul.f32.gmra.mxu0 %v175
  %v1258 = vpop.f32.mrf.mxu0
  %v1259 = vadd.f32 %v1236, %v1258
  %1260 = vmatmul.f32.gmra.mxu0 %v177
  %v1261 = vpop.f32.mrf.mxu0
  %v1262 = vadd.f32 %v1239, %v1261
  %1263 = vdwg.mxu0
  %v1264 = vmul.f32 %v1259, 0.03125
  %v1265 = vmul.f32 %v1262, 0.03125
  %vm1266 = vcmask 7168
  %v1267 = vsel %vm1266, %v1264, -inf
  %v1268 = vsel %vm1266, %v1265, -inf
  %v1269 = vmax.f32 %v1267, %v1268
  %v1270 = vrot.slane %v1269, 4
  %v1271 = vmax.f32 %v1269, %v1270
  %v1272 = vrot.slane %v1271, 2
  %v1273 = vmax.f32 %v1271, %v1272
  %v1274 = vrot.slane %v1273, 1
  %v1275 = vmax.f32 %v1273, %v1274
  %vm1276 = vcmp.ge.f32.partialorder %v1264, %v1275
  %vm1277 = vcmp.ge.f32.partialorder %v1265, %v1275
  %v1278 = vsel %vm1276, %v316, 16.0
  %v1279 = vsel %vm1277, %v317, 16.0
  %v1280 = vsel %vm1266, %v1278, inf
  %v1281 = vsel %vm1266, %v1279, inf
  %v1282 = vmin.f32 %v1280, %v1281
  %v1283 = vrot.slane %v1282, 4
  %v1284 = vmin.f32 %v1282, %v1283
  %v1285 = vrot.slane %v1284, 2
  %v1286 = vmin.f32 %v1284, %v1285
  %v1287 = vrot.slane %v1286, 1
  %v1288 = vmin.f32 %v1286, %v1287
  %vm1289 = vcmp.eq.f32.partialorder %v316, %v1288
  %vm1290 = vcmp.eq.f32.partialorder %v317, %v1288
  %v1291 = vsel %vm1289, 1, 0
  %v1292 = vsel %vm1290, 1, 0
  %v1293 = vcvt.s32.f32 %v1291
  %v1294 = vcvt.s32.f32 %v1292
  %vm1295 = vcmp.gt.f32.partialorder %v1293, 0.5
  %vm1296 = vcmp.gt.f32.partialorder %v1294, 0.5
  %v1297 = vsel %vm1295, -1e+30, %v1264
  %v1298 = vsel %vm1296, -1e+30, %v1265
  %v1299 = vsel %vm1266, %v1297, -inf
  %v1300 = vsel %vm1266, %v1298, -inf
  %v1301 = vmax.f32 %v1299, %v1300
  %v1302 = vrot.slane %v1301, 4
  %v1303 = vmax.f32 %v1301, %v1302
  %v1304 = vrot.slane %v1303, 2
  %v1305 = vmax.f32 %v1303, %v1304
  %v1306 = vrot.slane %v1305, 1
  %v1307 = vmax.f32 %v1305, %v1306
  %vm1308 = vcmp.ge.f32.partialorder %v1297, %v1307
  %vm1309 = vcmp.ge.f32.partialorder %v1298, %v1307
  %v1310 = vsel %vm1308, %v316, 16.0
  %v1311 = vsel %vm1309, %v317, 16.0
  %v1312 = vsel %vm1266, %v1310, inf
  %v1313 = vsel %vm1266, %v1311, inf
  %v1314 = vmin.f32 %v1312, %v1313
  %v1315 = vrot.slane %v1314, 4
  %v1316 = vmin.f32 %v1314, %v1315
  %v1317 = vrot.slane %v1316, 2
  %v1318 = vmin.f32 %v1316, %v1317
  %v1319 = vrot.slane %v1318, 1
  %v1320 = vmin.f32 %v1318, %v1319
  %vm1321 = vcmp.eq.f32.partialorder %v316, %v1320
  %vm1322 = vcmp.eq.f32.partialorder %v317, %v1320
  %v1323 = vsel %vm1321, 1, 0
  %v1324 = vsel %vm1322, 1, 0
  %v1325 = vcvt.s32.f32 %v1323
  %v1326 = vcvt.s32.f32 %v1324
  %v1327 = vsub.f32 %v1275, %v1275
  %v1328 = vmul.f32 %v1327, 1.442695
  %v1329 = vpow.pop %v1328
  %v1330 = vsub.f32 %v1307, %v1275
  %v1331 = vmul.f32 %v1330, 1.442695
  %v1332 = vpow.pop %v1331
  %v1333 = vadd.f32 %v1329, %v1332
  %v1334 = vrcp.pop %v1333
  %v1335 = vmul.f32 %v1333, %v1334
  %v1336 = vsub.f32 1.0, %v1335
  %v1337 = vmul.f32 %v1334, %v1336
  %v1338 = vadd.f32 %v1334, %v1337
  %vm1339 = vweird.f32 %v1333
  %vm1340 = vweird.f32 %v1334
  %vm1341 = vmor %vm1339, %vm1340
  %v1342 = vsel %vm1341, %v1334, %v1338
  %v1343 = vand.u32 2147483647, %v1333
  %vm1344 = vcmp.eq.f32.partialorder %v1343, 8.507059e+37
  %v1345 = vand.u32 %v1333, 2147483648
  %v1346 = vor.u32 1.1754944e-38, %v1345
  %v1347 = vsel %vm1344, %v1346, %v1342
  %v1348 = vmul.f32 %v1329, %v1347
  %v1349 = vmul.f32 %v1293, %v1348
  %v1350 = vmul.f32 %v1294, %v1348
  %v1351 = vmul.f32 %v1332, %v1347
  %v1352 = vmul.f32 %v1325, %v1351
  %v1353 = vmul.f32 %v1326, %v1351
  %v1354 = vadd.f32 %v1349, %v1352
  %v1355 = vadd.f32 %v1350, %v1353
  %v1357 = vsel %vm326, %v137, 0
  %v1360 = vsel %vm326, %v138, 0
  %v1363 = vsel %vm326, %v139, 0
  %v1366 = vsel %vm326, %v140, 0
  %v1369 = vsel %vm326, %v141, 0
  %v1372 = vsel %vm326, %v142, 0
  %v1375 = vsel %vm326, %v143, 0
  %v1378 = vsel %vm326, %v144, 0
  %v1381 = vsel %vm326, %v145, 0
  %v1384 = vsel %vm326, %v146, 0
  %v1387 = vsel %vm326, %v147, 0
  %v1390 = vsel %vm326, %v148, 0
  %v1393 = vsel %vm326, %v149, 0
  %v1396 = vsel %vm326, %v150, 0
  %v1399 = vsel %vm326, %v151, 0
  %v1402 = vsel %vm326, %v152, 0
  %v1405 = vsel %vm326, %v153, 0
  %v1408 = vsel %vm326, %v154, 0
  %v1411 = vsel %vm326, %v155, 0
  %v1414 = vsel %vm326, %v156, 0
  %v1417 = vsel %vm326, %v157, 0
  %v1420 = vsel %vm326, %v158, 0
  %v1423 = vsel %vm326, %v159, 0
  %v1426 = vsel %vm326, %v160, 0
  %v1429 = vsel %vm326, %v161, 0
  %v1432 = vsel %vm326, %v162, 0
  %v1435 = vsel %vm326, %v163, 0
  %v1438 = vsel %vm326, %v164, 0
  %v1441 = vsel %vm326, %v165, 0
  %v1444 = vsel %vm326, %v166, 0
  %v1447 = vsel %vm326, %v167, 0
  %v1450 = vsel %vm326, %v168, 0
  %1452 = vmatpush.msra.mxu0 0.0
  %1453 = vmatpush.msra.mxu0 0.0
  %1454 = vmatpush.msra.mxu0 0.0
  %1455 = vmatpush.msra.mxu0 0.0
  %1456 = vmatpush.msra.mxu0 0.0
  %1457 = vmatpush.msra.mxu0 0.0
  %1458 = vmatpush.msra.mxu0 0.0
  %1459 = vmatpush.msra.mxu0 0.0
  %1460 = vmatpush.msra.mxu0 0.0
  %1461 = vmatpush.msra.mxu0 0.0
  %1462 = vmatpush.msra.mxu0 0.0
  %1463 = vmatpush.msra.mxu0 0.0
  %1464 = vmatpush.msra.mxu0 0.0
  %1465 = vmatpush.msra.mxu0 0.0
  %1466 = vmatpush.msra.mxu0 %v1355
  %1467 = vmatpush.msra.mxu0 %v1354
  %1468 = vmatmul.f32.gmra.mxu0 %v1357
  %v1469 = vpop.f32.mrf.mxu0
  %v1470 = vadd.f32 0.0, %v1469
  %1471 = vmatmul.f32.gmra.mxu0 %v1360
  %v1472 = vpop.f32.mrf.mxu0
  %v1473 = vadd.f32 0.0, %v1472
  %1474 = vmatmul.f32.gmra.mxu0 %v1363
  %v1475 = vpop.f32.mrf.mxu0
  %v1476 = vadd.f32 0.0, %v1475
  %1477 = vmatmul.f32.gmra.mxu0 %v1366
  %v1478 = vpop.f32.mrf.mxu0
  %v1479 = vadd.f32 0.0, %v1478
  %1480 = vmatmul.f32.gmra.mxu0 %v1369
  %v1481 = vpop.f32.mrf.mxu0
  %v1482 = vadd.f32 0.0, %v1481
  %1483 = vmatmul.f32.gmra.mxu0 %v1372
  %v1484 = vpop.f32.mrf.mxu0
  %v1485 = vadd.f32 0.0, %v1484
  %1486 = vmatmul.f32.gmra.mxu0 %v1375
  %v1487 = vpop.f32.mrf.mxu0
  %v1488 = vadd.f32 0.0, %v1487
  %1489 = vmatmul.f32.gmra.mxu0 %v1378
  %v1490 = vpop.f32.mrf.mxu0
  %v1491 = vadd.f32 0.0, %v1490
  %1492 = vmatmul.f32.gmra.mxu0 %v1381
  %v1493 = vpop.f32.mrf.mxu0
  %v1494 = vadd.f32 0.0, %v1493
  %1495 = vmatmul.f32.gmra.mxu0 %v1384
  %v1496 = vpop.f32.mrf.mxu0
  %v1497 = vadd.f32 0.0, %v1496
  %1498 = vmatmul.f32.gmra.mxu0 %v1387
  %v1499 = vpop.f32.mrf.mxu0
  %v1500 = vadd.f32 0.0, %v1499
  %1501 = vmatmul.f32.gmra.mxu0 %v1390
  %v1502 = vpop.f32.mrf.mxu0
  %v1503 = vadd.f32 0.0, %v1502
  %1504 = vmatmul.f32.gmra.mxu0 %v1393
  %v1505 = vpop.f32.mrf.mxu0
  %v1506 = vadd.f32 0.0, %v1505
  %1507 = vmatmul.f32.gmra.mxu0 %v1396
  %v1508 = vpop.f32.mrf.mxu0
  %v1509 = vadd.f32 0.0, %v1508
  %1510 = vmatmul.f32.gmra.mxu0 %v1399
  %v1511 = vpop.f32.mrf.mxu0
  %v1512 = vadd.f32 0.0, %v1511
  %1513 = vmatmul.f32.gmra.mxu0 %v1402
  %v1514 = vpop.f32.mrf.mxu0
  %v1515 = vadd.f32 0.0, %v1514
  %1516 = vmatmul.f32.gmra.mxu0 %v1405
  %v1517 = vpop.f32.mrf.mxu0
  %v1518 = vadd.f32 0.0, %v1517
  %1519 = vmatmul.f32.gmra.mxu0 %v1408
  %v1520 = vpop.f32.mrf.mxu0
  %v1521 = vadd.f32 0.0, %v1520
  %1522 = vmatmul.f32.gmra.mxu0 %v1411
  %v1523 = vpop.f32.mrf.mxu0
  %v1524 = vadd.f32 0.0, %v1523
  %1525 = vmatmul.f32.gmra.mxu0 %v1414
  %v1526 = vpop.f32.mrf.mxu0
  %v1527 = vadd.f32 0.0, %v1526
  %1528 = vmatmul.f32.gmra.mxu0 %v1417
  %v1529 = vpop.f32.mrf.mxu0
  %v1530 = vadd.f32 0.0, %v1529
  %1531 = vmatmul.f32.gmra.mxu0 %v1420
  %v1532 = vpop.f32.mrf.mxu0
  %v1533 = vadd.f32 0.0, %v1532
  %1534 = vmatmul.f32.gmra.mxu0 %v1423
  %v1535 = vpop.f32.mrf.mxu0
  %v1536 = vadd.f32 0.0, %v1535
  %1537 = vmatmul.f32.gmra.mxu0 %v1426
  %v1538 = vpop.f32.mrf.mxu0
  %v1539 = vadd.f32 0.0, %v1538
  %1540 = vmatmul.f32.gmra.mxu0 %v1429
  %v1541 = vpop.f32.mrf.mxu0
  %v1542 = vadd.f32 0.0, %v1541
  %1543 = vmatmul.f32.gmra.mxu0 %v1432
  %v1544 = vpop.f32.mrf.mxu0
  %v1545 = vadd.f32 0.0, %v1544
  %1546 = vmatmul.f32.gmra.mxu0 %v1435
  %v1547 = vpop.f32.mrf.mxu0
  %v1548 = vadd.f32 0.0, %v1547
  %1549 = vmatmul.f32.gmra.mxu0 %v1438
  %v1550 = vpop.f32.mrf.mxu0
  %v1551 = vadd.f32 0.0, %v1550
  %1552 = vmatmul.f32.gmra.mxu0 %v1441
  %v1553 = vpop.f32.mrf.mxu0
  %v1554 = vadd.f32 0.0, %v1553
  %1555 = vmatmul.f32.gmra.mxu0 %v1444
  %v1556 = vpop.f32.mrf.mxu0
  %v1557 = vadd.f32 0.0, %v1556
  %1558 = vmatmul.f32.gmra.mxu0 %v1447
  %v1559 = vpop.f32.mrf.mxu0
  %v1560 = vadd.f32 0.0, %v1559
  %1561 = vmatmul.f32.gmra.mxu0 %v1450
  %v1562 = vpop.f32.mrf.mxu0
  %v1563 = vadd.f32 0.0, %v1562
  %1564 = vdwg.mxu0
  %1566 = vset.pattern.permute.xlu0 0
  %1567 = vperm.xlu0 %1566, %v1470
  %v1568 = vpop.permute.xlu0 %1567
  %1571 = vset.pattern.permute.xlu0 0
  %1572 = vperm.xlu0 %1571, %v1473
  %v1573 = vpop.permute.xlu0 %1572
  %1576 = vset.pattern.permute.xlu0 0
  %1577 = vperm.xlu0 %1576, %v1476
  %v1578 = vpop.permute.xlu0 %1577
  %1581 = vset.pattern.permute.xlu0 0
  %1582 = vperm.xlu0 %1581, %v1479
  %v1583 = vpop.permute.xlu0 %1582
  %1586 = vset.pattern.permute.xlu0 0
  %1587 = vperm.xlu0 %1586, %v1482
  %v1588 = vpop.permute.xlu0 %1587
  %1591 = vset.pattern.permute.xlu0 0
  %1592 = vperm.xlu0 %1591, %v1485
  %v1593 = vpop.permute.xlu0 %1592
  %1596 = vset.pattern.permute.xlu0 0
  %1597 = vperm.xlu0 %1596, %v1488
  %v1598 = vpop.permute.xlu0 %1597
  %1601 = vset.pattern.permute.xlu0 0
  %1602 = vperm.xlu0 %1601, %v1491
  %v1603 = vpop.permute.xlu0 %1602
  %1606 = vset.pattern.permute.xlu0 0
  %1607 = vperm.xlu0 %1606, %v1494
  %v1608 = vpop.permute.xlu0 %1607
  %1611 = vset.pattern.permute.xlu0 0
  %1612 = vperm.xlu0 %1611, %v1497
  %v1613 = vpop.permute.xlu0 %1612
  %1616 = vset.pattern.permute.xlu0 0
  %1617 = vperm.xlu0 %1616, %v1500
  %v1618 = vpop.permute.xlu0 %1617
  %1621 = vset.pattern.permute.xlu0 0
  %1622 = vperm.xlu0 %1621, %v1503
  %v1623 = vpop.permute.xlu0 %1622
  %1626 = vset.pattern.permute.xlu0 0
  %1627 = vperm.xlu0 %1626, %v1506
  %v1628 = vpop.permute.xlu0 %1627
  %1631 = vset.pattern.permute.xlu0 0
  %1632 = vperm.xlu0 %1631, %v1509
  %v1633 = vpop.permute.xlu0 %1632
  %1636 = vset.pattern.permute.xlu0 0
  %1637 = vperm.xlu0 %1636, %v1512
  %v1638 = vpop.permute.xlu0 %1637
  %1641 = vset.pattern.permute.xlu0 0
  %1642 = vperm.xlu0 %1641, %v1515
  %v1643 = vpop.permute.xlu0 %1642
  %1646 = vset.pattern.permute.xlu0 0
  %1647 = vperm.xlu0 %1646, %v1518
  %v1648 = vpop.permute.xlu0 %1647
  %1651 = vset.pattern.permute.xlu0 0
  %1652 = vperm.xlu0 %1651, %v1521
  %v1653 = vpop.permute.xlu0 %1652
  %1656 = vset.pattern.permute.xlu0 0
  %1657 = vperm.xlu0 %1656, %v1524
  %v1658 = vpop.permute.xlu0 %1657
  %1661 = vset.pattern.permute.xlu0 0
  %1662 = vperm.xlu0 %1661, %v1527
  %v1663 = vpop.permute.xlu0 %1662
  %1666 = vset.pattern.permute.xlu0 0
  %1667 = vperm.xlu0 %1666, %v1530
  %v1668 = vpop.permute.xlu0 %1667
  %1671 = vset.pattern.permute.xlu0 0
  %1672 = vperm.xlu0 %1671, %v1533
  %v1673 = vpop.permute.xlu0 %1672
  %1676 = vset.pattern.permute.xlu0 0
  %1677 = vperm.xlu0 %1676, %v1536
  %v1678 = vpop.permute.xlu0 %1677
  %1681 = vset.pattern.permute.xlu0 0
  %1682 = vperm.xlu0 %1681, %v1539
  %v1683 = vpop.permute.xlu0 %1682
  %1686 = vset.pattern.permute.xlu0 0
  %1687 = vperm.xlu0 %1686, %v1542
  %v1688 = vpop.permute.xlu0 %1687
  %1691 = vset.pattern.permute.xlu0 0
  %1692 = vperm.xlu0 %1691, %v1545
  %v1693 = vpop.permute.xlu0 %1692
  %1696 = vset.pattern.permute.xlu0 0
  %1697 = vperm.xlu0 %1696, %v1548
  %v1698 = vpop.permute.xlu0 %1697
  %1701 = vset.pattern.permute.xlu0 0
  %1702 = vperm.xlu0 %1701, %v1551
  %v1703 = vpop.permute.xlu0 %1702
  %1706 = vset.pattern.permute.xlu0 0
  %1707 = vperm.xlu0 %1706, %v1554
  %v1708 = vpop.permute.xlu0 %1707
  %1711 = vset.pattern.permute.xlu0 0
  %1712 = vperm.xlu0 %1711, %v1557
  %v1713 = vpop.permute.xlu0 %1712
  %1716 = vset.pattern.permute.xlu0 0
  %1717 = vperm.xlu0 %1716, %v1560
  %v1718 = vpop.permute.xlu0 %1717
  %1721 = vset.pattern.permute.xlu0 0
  %1722 = vperm.xlu0 %1721, %v1563
  %v1723 = vpop.permute.xlu0 %1722
  %v1725 = vmul.f32 %v1568, %v71
  %v1726 = vmul.f32 %v1573, %v72
  %v1727 = vmul.f32 %v1578, %v73
  %v1728 = vmul.f32 %v1583, %v74
  %v1729 = vmul.f32 %v1588, %v75
  %v1730 = vmul.f32 %v1593, %v76
  %v1731 = vmul.f32 %v1598, %v77
  %v1732 = vmul.f32 %v1603, %v78
  %v1733 = vmul.f32 %v1608, %v79
  %v1734 = vmul.f32 %v1613, %v80
  %v1735 = vmul.f32 %v1618, %v81
  %v1736 = vmul.f32 %v1623, %v82
  %v1737 = vmul.f32 %v1628, %v83
  %v1738 = vmul.f32 %v1633, %v84
  %v1739 = vmul.f32 %v1638, %v85
  %v1740 = vmul.f32 %v1643, %v86
  %v1741 = vmul.f32 %v1648, %v87
  %v1742 = vmul.f32 %v1653, %v88
  %v1743 = vmul.f32 %v1658, %v89
  %v1744 = vmul.f32 %v1663, %v90
  %v1745 = vmul.f32 %v1668, %v91
  %v1746 = vmul.f32 %v1673, %v92
  %v1747 = vmul.f32 %v1678, %v93
  %v1748 = vmul.f32 %v1683, %v94
  %v1749 = vmul.f32 %v1688, %v95
  %v1750 = vmul.f32 %v1693, %v96
  %v1751 = vmul.f32 %v1698, %v97
  %v1752 = vmul.f32 %v1703, %v98
  %v1753 = vmul.f32 %v1708, %v99
  %v1754 = vmul.f32 %v1713, %v100
  %v1755 = vmul.f32 %v1718, %v101
  %v1756 = vmul.f32 %v1723, %v102
  %1757 = vmatpush.msra.mxu0 %v1740
  %1758 = vmatpush.msra.mxu0 %v1739
  %1759 = vmatpush.msra.mxu0 %v1738
  %1760 = vmatpush.msra.mxu0 %v1737
  %1761 = vmatpush.msra.mxu0 %v1736
  %1762 = vmatpush.msra.mxu0 %v1735
  %1763 = vmatpush.msra.mxu0 %v1734
  %1764 = vmatpush.msra.mxu0 %v1733
  %1765 = vmatpush.msra.mxu0 %v1732
  %1766 = vmatpush.msra.mxu0 %v1731
  %1767 = vmatpush.msra.mxu0 %v1730
  %1768 = vmatpush.msra.mxu0 %v1729
  %1769 = vmatpush.msra.mxu0 %v1728
  %1770 = vmatpush.msra.mxu0 %v1727
  %1771 = vmatpush.msra.mxu0 %v1726
  %1772 = vmatpush.msra.mxu0 %v1725
  %1773 = vmatmul.f32.gmra.mxu0 %v169
  %v1774 = vpop.f32.mrf.mxu0
  %v1775 = vadd.f32 0.0, %v1774
  %1776 = vmatmul.f32.gmra.mxu0 %v171
  %v1777 = vpop.f32.mrf.mxu0
  %v1778 = vadd.f32 0.0, %v1777
  %1779 = vdwg.mxu0
  %1780 = vmatpush.msra.mxu0 %v1756
  %1781 = vmatpush.msra.mxu0 %v1755
  %1782 = vmatpush.msra.mxu0 %v1754
  %1783 = vmatpush.msra.mxu0 %v1753
  %1784 = vmatpush.msra.mxu0 %v1752
  %1785 = vmatpush.msra.mxu0 %v1751
  %1786 = vmatpush.msra.mxu0 %v1750
  %1787 = vmatpush.msra.mxu0 %v1749
  %1788 = vmatpush.msra.mxu0 %v1748
  %1789 = vmatpush.msra.mxu0 %v1747
  %1790 = vmatpush.msra.mxu0 %v1746
  %1791 = vmatpush.msra.mxu0 %v1745
  %1792 = vmatpush.msra.mxu0 %v1744
  %1793 = vmatpush.msra.mxu0 %v1743
  %1794 = vmatpush.msra.mxu0 %v1742
  %1795 = vmatpush.msra.mxu0 %v1741
  %1796 = vmatmul.f32.gmra.mxu0 %v170
  %v1797 = vpop.f32.mrf.mxu0
  %v1798 = vadd.f32 %v1775, %v1797
  %1799 = vmatmul.f32.gmra.mxu0 %v172
  %v1800 = vpop.f32.mrf.mxu0
  %v1801 = vadd.f32 %v1778, %v1800
  %1802 = vdwg.mxu0
  %v1804 = vsel %vm326, %v1798, 0
  %v1807 = vsel %vm326, %v1801, 0
  %1809 = vmatpush.msra.mxu0 0.0
  %1810 = vmatpush.msra.mxu0 0.0
  %1811 = vmatpush.msra.mxu0 0.0
  %1812 = vmatpush.msra.mxu0 0.0
  %1813 = vmatpush.msra.mxu0 0.0
  %1814 = vmatpush.msra.mxu0 0.0
  %1815 = vmatpush.msra.mxu0 0.0
  %1816 = vmatpush.msra.mxu0 0.0
  %1817 = vmatpush.msra.mxu0 0.0
  %1818 = vmatpush.msra.mxu0 0.0
  %1819 = vmatpush.msra.mxu0 0.0
  %1820 = vmatpush.msra.mxu0 0.0
  %1821 = vmatpush.msra.mxu0 0.0
  %1822 = vmatpush.msra.mxu0 0.0
  %1823 = vmatpush.msra.mxu0 %v670
  %1824 = vmatpush.msra.mxu0 %v667
  %1825 = vmatmul.f32.gmra.mxu0 %v1804
  %v1826 = vpop.f32.mrf.mxu0
  %v1827 = vadd.f32 0.0, %v1826
  %1828 = vmatmul.f32.gmra.mxu0 %v1807
  %v1829 = vpop.f32.mrf.mxu0
  %v1830 = vadd.f32 0.0, %v1829
  %1831 = vdwg.mxu0
  %v1833 = vperm.slane %v220, 0
  %v1836 = vsel %vm590, %v1827, 0
  %v1839 = vsel %vm590, %v1830, 0
  %1841 = vmatpush.msra.mxu0 0.0
  %1842 = vmatpush.msra.mxu0 0.0
  %1843 = vmatpush.msra.mxu0 0.0
  %1844 = vmatpush.msra.mxu0 0.0
  %1845 = vmatpush.msra.mxu0 0.0
  %1846 = vmatpush.msra.mxu0 0.0
  %1847 = vmatpush.msra.mxu0 0.0
  %1848 = vmatpush.msra.mxu0 0.0
  %1849 = vmatpush.msra.mxu0 0.0
  %1850 = vmatpush.msra.mxu0 0.0
  %1851 = vmatpush.msra.mxu0 0.0
  %1852 = vmatpush.msra.mxu0 0.0
  %1853 = vmatpush.msra.mxu0 %v213
  %1854 = vmatpush.msra.mxu0 %v212
  %1855 = vmatpush.msra.mxu0 %v211
  %1856 = vmatpush.msra.mxu0 %v210
  %1857 = vmatmul.f32.gmra.mxu0 %v1836
  %v1858 = vpop.f32.mrf.mxu0
  %v1859 = vadd.f32 %v1833, %v1858
  %1860 = vmatmul.f32.gmra.mxu0 %v1839
  %v1861 = vpop.f32.mrf.mxu0
  %v1862 = vadd.f32 %v1833, %v1861
  %1863 = vdwg.mxu0
  %v1864 = vadd.f32 %v585, %v1859
  %v1865 = vadd.f32 %v586, %v1862
  %1866 = vmatpush.msra.mxu0 0.0
  %1867 = vmatpush.msra.mxu0 0.0
  %1868 = vmatpush.msra.mxu0 0.0
  %1869 = vmatpush.msra.mxu0 0.0
  %1870 = vmatpush.msra.mxu0 0.0
  %1871 = vmatpush.msra.mxu0 0.0
  %1872 = vmatpush.msra.mxu0 0.0
  %1873 = vmatpush.msra.mxu0 0.0
  %1874 = vmatpush.msra.mxu0 0.0
  %1875 = vmatpush.msra.mxu0 0.0
  %1876 = vmatpush.msra.mxu0 0.0
  %1877 = vmatpush.msra.mxu0 0.0
  %1878 = vmatpush.msra.mxu0 0.0
  %1879 = vmatpush.msra.mxu0 0.0
  %1880 = vmatpush.msra.mxu0 %v1865
  %1881 = vmatpush.msra.mxu0 %v1864
  %1882 = vmatmul.f32.gmra.mxu0 %v328
  %v1883 = vpop.f32.mrf.mxu0
  %v1884 = vadd.f32 0.0, %v1883
  %1885 = vmatmul.f32.gmra.mxu0 %v331
  %v1886 = vpop.f32.mrf.mxu0
  %v1887 = vadd.f32 0.0, %v1886
  %1888 = vdwg.mxu0
  %v1889 = vsub.f32 %v1864, %v1884
  %v1890 = vsub.f32 %v1865, %v1887
  %v1892 = vsel %vm590, %v1889, 0
  %v1895 = vsel %vm590, %v1890, 0
  %1897 = vmatpush.msra.mxu0 0.0
  %1898 = vmatpush.msra.mxu0 0.0
  %1899 = vmatpush.msra.mxu0 0.0
  %1900 = vmatpush.msra.mxu0 0.0
  %1901 = vmatpush.msra.mxu0 0.0
  %1902 = vmatpush.msra.mxu0 0.0
  %1903 = vmatpush.msra.mxu0 0.0
  %1904 = vmatpush.msra.mxu0 0.0
  %1905 = vmatpush.msra.mxu0 0.0
  %1906 = vmatpush.msra.mxu0 0.0
  %1907 = vmatpush.msra.mxu0 0.0
  %1908 = vmatpush.msra.mxu0 0.0
  %1909 = vmatpush.msra.mxu0 %v224
  %1910 = vmatpush.msra.mxu0 %v223
  %1911 = vmatpush.msra.mxu0 %v222
  %1912 = vmatpush.msra.mxu0 %v221
  %1913 = vmatmul.f32.gmra.mxu0 %v1892
  %v1914 = vpop.f32.mrf.mxu0
  %v1915 = vadd.f32 0.0, %v1914
  %1916 = vmatmul.f32.gmra.mxu0 %v1895
  %v1917 = vpop.f32.mrf.mxu0
  %v1918 = vadd.f32 0.0, %v1917
  %1919 = vdwg.mxu0
  %v1920 = vmax.f32 %v1915, 0.0
  %v1921 = vmax.f32 %v1918, 0.0
  %v1923 = vsel %vm590, %v1920, 0
  %v1926 = vsel %vm590, %v1921, 0
  %1928 = vmatpush.msra.mxu0 0.0
  %1929 = vmatpush.msra.mxu0 0.0
  %1930 = vmatpush.msra.mxu0 0.0
  %1931 = vmatpush.msra.mxu0 0.0
  %1932 = vmatpush.msra.mxu0 0.0
  %1933 = vmatpush.msra.mxu0 0.0
  %1934 = vmatpush.msra.mxu0 0.0
  %1935 = vmatpush.msra.mxu0 0.0
  %1936 = vmatpush.msra.mxu0 0.0
  %1937 = vmatpush.msra.mxu0 0.0
  %1938 = vmatpush.msra.mxu0 0.0
  %1939 = vmatpush.msra.mxu0 0.0
  %1940 = vmatpush.msra.mxu0 %v228
  %1941 = vmatpush.msra.mxu0 %v227
  %1942 = vmatpush.msra.mxu0 %v226
  %1943 = vmatpush.msra.mxu0 %v225
  %1944 = vmatmul.f32.gmra.mxu0 %v1923
  %v1945 = vpop.f32.mrf.mxu0
  %v1946 = vadd.f32 0.0, %v1945
  %1947 = vmatmul.f32.gmra.mxu0 %v1926
  %v1948 = vpop.f32.mrf.mxu0
  %v1949 = vadd.f32 0.0, %v1948
  %1950 = vdwg.mxu0
  %v1951 = vadd.f32 %v1889, %v1946
  %v1952 = vadd.f32 %v1890, %v1949
  %1953 = vmatpush.msra.mxu0 0.0
  %1954 = vmatpush.msra.mxu0 0.0
  %1955 = vmatpush.msra.mxu0 0.0
  %1956 = vmatpush.msra.mxu0 0.0
  %1957 = vmatpush.msra.mxu0 0.0
  %1958 = vmatpush.msra.mxu0 0.0
  %1959 = vmatpush.msra.mxu0 0.0
  %1960 = vmatpush.msra.mxu0 0.0
  %1961 = vmatpush.msra.mxu0 0.0
  %1962 = vmatpush.msra.mxu0 0.0
  %1963 = vmatpush.msra.mxu0 0.0
  %1964 = vmatpush.msra.mxu0 0.0
  %1965 = vmatpush.msra.mxu0 0.0
  %1966 = vmatpush.msra.mxu0 0.0
  %1967 = vmatpush.msra.mxu0 %v1952
  %1968 = vmatpush.msra.mxu0 %v1951
  %1969 = vmatmul.f32.gmra.mxu0 %v328
  %v1970 = vpop.f32.mrf.mxu0
  %v1971 = vadd.f32 0.0, %v1970
  %1972 = vmatmul.f32.gmra.mxu0 %v331
  %v1973 = vpop.f32.mrf.mxu0
  %v1974 = vadd.f32 0.0, %v1973
  %1975 = vdwg.mxu0
  %v1976 = vsub.f32 %v1951, %v1971
  %v1977 = vsub.f32 %v1952, %v1974
  %v1978 = vsel %vm590, %v1976, 0.0
  %1979 = vadd.xlane.f32.xlu0 %v1978
  %v1980 = vpop.xlane.xlu0 %1979
  %v1981 = vsel %vm590, %v1977, 0.0
  %1982 = vadd.xlane.f32.xlu0 %v1981
  %v1983 = vpop.xlane.xlu0 %1982
  %v1984 = vrcp.pop 32.0
  %v1985 = vmul.f32 32.0, %v1984
  %v1986 = vsub.f32 1.0, %v1985
  %v1987 = vmul.f32 %v1984, %v1986
  %v1988 = vadd.f32 %v1984, %v1987
  %vm1989 = vweird.f32 %v1984
  %v1990 = vsel %vm1989, %v1984, %v1988
  %v1991 = vmul.f32 %v1980, %v1990
  %v1992 = vmul.f32 %v1983, %v1990
  %v1993 = vsub.f32 %v1976, %v1991
  %v1994 = vsub.f32 %v1977, %v1992
  %v1995 = vmul.f32 %v1993, %v1993
  %v1996 = vmul.f32 %v1994, %v1994
  %v1997 = vsel %vm590, %v1995, 0.0
  %1998 = vadd.xlane.f32.xlu0 %v1997
  %v1999 = vpop.xlane.xlu0 %1998
  %v2000 = vsel %vm590, %v1996, 0.0
  %2001 = vadd.xlane.f32.xlu0 %v2000
  %v2002 = vpop.xlane.xlu0 %2001
  %v2003 = vmul.f32 %v1999, %v1990
  %v2004 = vmul.f32 %v2002, %v1990
  %v2005 = vadd.f32 %v2003, 1e-05
  %v2006 = vadd.f32 %v2004, 1e-05
  %v2007 = vrsqrt.pop %v2005
  %v2008 = vmul.f32 %v2007, %v2005
  %v2009 = vmul.f32 %v2008, %v2007
  %v2010 = vmul.f32 0.5, %v2009
  %v2011 = vsub.f32 1.5, %v2010
  %v2012 = vmul.f32 %v2007, %v2011
  %vm2013 = vweird.f32 %v2005
  %vm2014 = vweird.f32 %v2007
  %vm2015 = vmor %vm2013, %vm2014
  %v2016 = vsel %vm2015, %v2007, %v2012
  %v2017 = vrsqrt.pop %v2006
  %v2018 = vmul.f32 %v2017, %v2006
  %v2019 = vmul.f32 %v2018, %v2017
  %v2020 = vmul.f32 0.5, %v2019
  %v2021 = vsub.f32 1.5, %v2020
  %v2022 = vmul.f32 %v2017, %v2021
  %vm2023 = vweird.f32 %v2006
  %vm2024 = vweird.f32 %v2017
  %vm2025 = vmor %vm2023, %vm2024
  %v2026 = vsel %vm2025, %v2017, %v2022
  %v2027 = vmul.f32 %v1993, %v2016
  %v2028 = vmul.f32 %v1994, %v2026
  %v2030 = vperm.slane %v307, 0
  %v2032 = vmul.f32 %v2027, %v2030
  %v2033 = vmul.f32 %v2028, %v2030
  %v2035 = vperm.slane %v309, 0
  %v2037 = vadd.f32 %v2032, %v2035
  %v2038 = vadd.f32 %v2033, %v2035
  %v2039 = vsel %vm590, %v2037, 0.0
  %v2040 = vsel %vm590, %v2038, 0.0
  %v2041 = vadd.f32 %v2039, %v2040
  %v2042 = vrot.slane %v2041, 4
  %v2043 = vadd.f32 %v2041, %v2042
  %v2044 = vrot.slane %v2043, 2
  %v2045 = vadd.f32 %v2043, %v2044
  %v2046 = vrot.slane %v2045, 1
  %v2047 = vadd.f32 %v2045, %v2046
  %v2048 = vmul.f32 %v2047, %v374
  %v2049 = vsub.f32 %v2037, %v2048
  %v2050 = vsub.f32 %v2038, %v2048
  %2051 = vmatpush.msra.mxu0 0.0
  %2052 = vmatpush.msra.mxu0 0.0
  %2053 = vmatpush.msra.mxu0 0.0
  %2054 = vmatpush.msra.mxu0 0.0
  %2055 = vmatpush.msra.mxu0 0.0
  %2056 = vmatpush.msra.mxu0 0.0
  %2057 = vmatpush.msra.mxu0 0.0
  %2058 = vmatpush.msra.mxu0 0.0
  %2059 = vmatpush.msra.mxu0 0.0
  %2060 = vmatpush.msra.mxu0 0.0
  %2061 = vmatpush.msra.mxu0 0.0
  %2062 = vmatpush.msra.mxu0 0.0
  %2063 = vmatpush.msra.mxu0 0.0
  %2064 = vmatpush.msra.mxu0 0.0
  %2065 = vmatpush.msra.mxu0 %v428
  %2066 = vmatpush.msra.mxu0 %v425
  %2067 = vmatmul.f32.gmra.mxu0 %v431
  %v2068 = vpop.f32.mrf.mxu0
  %v2069 = vadd.f32 0.0, %v2068
  %2070 = vmatmul.f32.gmra.mxu0 %v434
  %v2071 = vpop.f32.mrf.mxu0
  %v2072 = vadd.f32 0.0, %v2071
  %2073 = vdwg.mxu0
  %v2075 = vsel %vm358, %v425, 0
  %v2078 = vsel %vm358, %v428, 0
  %v2081 = vsel %vm465, %v193, 0
  %2083 = vmatpush.msra.mxu0 0.0
  %2084 = vmatpush.msra.mxu0 0.0
  %2085 = vmatpush.msra.mxu0 0.0
  %2086 = vmatpush.msra.mxu0 0.0
  %2087 = vmatpush.msra.mxu0 0.0
  %2088 = vmatpush.msra.mxu0 0.0
  %2089 = vmatpush.msra.mxu0 0.0
  %2090 = vmatpush.msra.mxu0 0.0
  %2091 = vmatpush.msra.mxu0 0.0
  %2092 = vmatpush.msra.mxu0 0.0
  %2093 = vmatpush.msra.mxu0 0.0
  %2094 = vmatpush.msra.mxu0 0.0
  %2095 = vmatpush.msra.mxu0 0.0
  %2096 = vmatpush.msra.mxu0 0.0
  %2097 = vmatpush.msra.mxu0 0.0
  %2098 = vmatpush.msra.mxu0 %v2081
  %2099 = vmatmul.f32.gmra.mxu0 %v2075
  %v2100 = vpop.f32.mrf.mxu0
  %v2101 = vadd.f32 0.0, %v2100
  %2102 = vmatmul.f32.gmra.mxu0 %v2078
  %v2103 = vpop.f32.mrf.mxu0
  %v2104 = vadd.f32 0.0, %v2103
  %2105 = vdwg.mxu0
  %v2107 = vsel %vm358, %v2069, 0
  %v2110 = vsel %vm358, %v2072, 0
  %v2113 = vsel %vm465, %v192, 0
  %2115 = vmatpush.msra.mxu0 0.0
  %2116 = vmatpush.msra.mxu0 0.0
  %2117 = vmatpush.msra.mxu0 0.0
  %2118 = vmatpush.msra.mxu0 0.0
  %2119 = vmatpush.msra.mxu0 0.0
  %2120 = vmatpush.msra.mxu0 0.0
  %2121 = vmatpush.msra.mxu0 0.0
  %2122 = vmatpush.msra.mxu0 0.0
  %2123 = vmatpush.msra.mxu0 0.0
  %2124 = vmatpush.msra.mxu0 0.0
  %2125 = vmatpush.msra.mxu0 0.0
  %2126 = vmatpush.msra.mxu0 0.0
  %2127 = vmatpush.msra.mxu0 0.0
  %2128 = vmatpush.msra.mxu0 0.0
  %2129 = vmatpush.msra.mxu0 0.0
  %2130 = vmatpush.msra.mxu0 %v2113
  %2131 = vmatmul.f32.gmra.mxu0 %v2107
  %v2132 = vpop.f32.mrf.mxu0
  %v2133 = vadd.f32 %v2101, %v2132
  %2134 = vmatmul.f32.gmra.mxu0 %v2110
  %v2135 = vpop.f32.mrf.mxu0
  %v2136 = vadd.f32 %v2104, %v2135
  %2137 = vdwg.mxu0
  %2138 = vmatpush.msra.mxu0 0.0
  %2139 = vmatpush.msra.mxu0 0.0
  %2140 = vmatpush.msra.mxu0 0.0
  %2141 = vmatpush.msra.mxu0 0.0
  %2142 = vmatpush.msra.mxu0 0.0
  %2143 = vmatpush.msra.mxu0 0.0
  %2144 = vmatpush.msra.mxu0 0.0
  %2145 = vmatpush.msra.mxu0 0.0
  %2146 = vmatpush.msra.mxu0 0.0
  %2147 = vmatpush.msra.mxu0 0.0
  %2148 = vmatpush.msra.mxu0 0.0
  %2149 = vmatpush.msra.mxu0 0.0
  %2150 = vmatpush.msra.mxu0 0.0
  %2151 = vmatpush.msra.mxu0 0.0
  %2152 = vmatpush.msra.mxu0 %v428
  %2153 = vmatpush.msra.mxu0 %v425
  %2154 = vmatmul.f32.gmra.mxu0 %v525
  %v2155 = vpop.f32.mrf.mxu0
  %v2156 = vadd.f32 0.0, %v2155
  %2157 = vmatmul.f32.gmra.mxu0 %v528
  %v2158 = vpop.f32.mrf.mxu0
  %v2159 = vadd.f32 0.0, %v2158
  %2160 = vdwg.mxu0
  %v2162 = vsel %vm358, %v2156, 0
  %v2165 = vsel %vm358, %v2159, 0
  %v2168 = vsel %vm465, %v194, 0
  %2170 = vmatpush.msra.mxu0 0.0
  %2171 = vmatpush.msra.mxu0 0.0
  %2172 = vmatpush.msra.mxu0 0.0
  %2173 = vmatpush.msra.mxu0 0.0
  %2174 = vmatpush.msra.mxu0 0.0
  %2175 = vmatpush.msra.mxu0 0.0
  %2176 = vmatpush.msra.mxu0 0.0
  %2177 = vmatpush.msra.mxu0 0.0
  %2178 = vmatpush.msra.mxu0 0.0
  %2179 = vmatpush.msra.mxu0 0.0
  %2180 = vmatpush.msra.mxu0 0.0
  %2181 = vmatpush.msra.mxu0 0.0
  %2182 = vmatpush.msra.mxu0 0.0
  %2183 = vmatpush.msra.mxu0 0.0
  %2184 = vmatpush.msra.mxu0 0.0
  %2185 = vmatpush.msra.mxu0 %v2168
  %2186 = vmatmul.f32.gmra.mxu0 %v2162
  %v2187 = vpop.f32.mrf.mxu0
  %v2188 = vadd.f32 0.0, %v2187
  %2189 = vmatmul.f32.gmra.mxu0 %v2165
  %v2190 = vpop.f32.mrf.mxu0
  %v2191 = vadd.f32 0.0, %v2190
  %2192 = vdwg.mxu0
  %v2193 = vadd.f32 %v2133, %v2188
  %v2194 = vadd.f32 %v2136, %v2191
  %v2196 = vperm.slane %v248, 0
  %v2199 = vsel %vm590, %v2193, 0
  %v2202 = vsel %vm590, %v2194, 0
  %2204 = vmatpush.msra.mxu0 0.0
  %2205 = vmatpush.msra.mxu0 0.0
  %2206 = vmatpush.msra.mxu0 0.0
  %2207 = vmatpush.msra.mxu0 0.0
  %2208 = vmatpush.msra.mxu0 0.0
  %2209 = vmatpush.msra.mxu0 0.0
  %2210 = vmatpush.msra.mxu0 0.0
  %2211 = vmatpush.msra.mxu0 0.0
  %2212 = vmatpush.msra.mxu0 0.0
  %2213 = vmatpush.msra.mxu0 0.0
  %2214 = vmatpush.msra.mxu0 0.0
  %2215 = vmatpush.msra.mxu0 0.0
  %2216 = vmatpush.msra.mxu0 %v232
  %2217 = vmatpush.msra.mxu0 %v231
  %2218 = vmatpush.msra.mxu0 %v230
  %2219 = vmatpush.msra.mxu0 %v229
  %2220 = vmatmul.f32.gmra.mxu0 %v2199
  %v2221 = vpop.f32.mrf.mxu0
  %v2222 = vadd.f32 %v2196, %v2221
  %2223 = vmatmul.f32.gmra.mxu0 %v2202
  %v2224 = vpop.f32.mrf.mxu0
  %v2225 = vadd.f32 %v2196, %v2224
  %2226 = vdwg.mxu0
  %v2228 = vperm.slane %v250, 0
  %2230 = vmatpush.msra.mxu0 0.0
  %2231 = vmatpush.msra.mxu0 0.0
  %2232 = vmatpush.msra.mxu0 0.0
  %2233 = vmatpush.msra.mxu0 0.0
  %2234 = vmatpush.msra.mxu0 0.0
  %2235 = vmatpush.msra.mxu0 0.0
  %2236 = vmatpush.msra.mxu0 0.0
  %2237 = vmatpush.msra.mxu0 0.0
  %2238 = vmatpush.msra.mxu0 0.0
  %2239 = vmatpush.msra.mxu0 0.0
  %2240 = vmatpush.msra.mxu0 0.0
  %2241 = vmatpush.msra.mxu0 0.0
  %2242 = vmatpush.msra.mxu0 %v237
  %2243 = vmatpush.msra.mxu0 %v236
  %2244 = vmatpush.msra.mxu0 %v235
  %2245 = vmatpush.msra.mxu0 %v234
  %2246 = vmatmul.f32.gmra.mxu0 %v2199
  %v2247 = vpop.f32.mrf.mxu0
  %v2248 = vadd.f32 %v2228, %v2247
  %2249 = vmatmul.f32.gmra.mxu0 %v2202
  %v2250 = vpop.f32.mrf.mxu0
  %v2251 = vadd.f32 %v2228, %v2250
  %2252 = vdwg.mxu0
  %v2254 = vperm.slane %v252, 0
  %2256 = vmatpush.msra.mxu0 0.0
  %2257 = vmatpush.msra.mxu0 0.0
  %2258 = vmatpush.msra.mxu0 0.0
  %2259 = vmatpush.msra.mxu0 0.0
  %2260 = vmatpush.msra.mxu0 0.0
  %2261 = vmatpush.msra.mxu0 0.0
  %2262 = vmatpush.msra.mxu0 0.0
  %2263 = vmatpush.msra.mxu0 0.0
  %2264 = vmatpush.msra.mxu0 0.0
  %2265 = vmatpush.msra.mxu0 0.0
  %2266 = vmatpush.msra.mxu0 0.0
  %2267 = vmatpush.msra.mxu0 0.0
  %2268 = vmatpush.msra.mxu0 %v242
  %2269 = vmatpush.msra.mxu0 %v241
  %2270 = vmatpush.msra.mxu0 %v240
  %2271 = vmatpush.msra.mxu0 %v239
  %2272 = vmatmul.f32.gmra.mxu0 %v2199
  %v2273 = vpop.f32.mrf.mxu0
  %v2274 = vadd.f32 %v2254, %v2273
  %2275 = vmatmul.f32.gmra.mxu0 %v2202
  %v2276 = vpop.f32.mrf.mxu0
  %v2277 = vadd.f32 %v2254, %v2276
  %2278 = vdwg.mxu0
  %2279 = vmatpush.msra.mxu0 0.0
  %2280 = vmatpush.msra.mxu0 0.0
  %2281 = vmatpush.msra.mxu0 0.0
  %2282 = vmatpush.msra.mxu0 0.0
  %2283 = vmatpush.msra.mxu0 0.0
  %2284 = vmatpush.msra.mxu0 0.0
  %2285 = vmatpush.msra.mxu0 0.0
  %2286 = vmatpush.msra.mxu0 0.0
  %2287 = vmatpush.msra.mxu0 0.0
  %2288 = vmatpush.msra.mxu0 0.0
  %2289 = vmatpush.msra.mxu0 0.0
  %2290 = vmatpush.msra.mxu0 0.0
  %2291 = vmatpush.msra.mxu0 0.0
  %2292 = vmatpush.msra.mxu0 0.0
  %2293 = vmatpush.msra.mxu0 %v2225
  %2294 = vmatpush.msra.mxu0 %v2222
  %2295 = vmatmul.f32.gmra.mxu0 %v673
  %v2296 = vpop.f32.mrf.mxu0
  %v2297 = vadd.f32 0.0, %v2296
  %2298 = vmatmul.f32.gmra.mxu0 %v676
  %v2299 = vpop.f32.mrf.mxu0
  %v2300 = vadd.f32 0.0, %v2299
  %2301 = vmatmul.f32.gmra.mxu0 %v679
  %v2302 = vpop.f32.mrf.mxu0
  %v2303 = vadd.f32 0.0, %v2302
  %2304 = vmatmul.f32.gmra.mxu0 %v682
  %v2305 = vpop.f32.mrf.mxu0
  %v2306 = vadd.f32 0.0, %v2305
  %2307 = vmatmul.f32.gmra.mxu0 %v685
  %v2308 = vpop.f32.mrf.mxu0
  %v2309 = vadd.f32 0.0, %v2308
  %2310 = vmatmul.f32.gmra.mxu0 %v688
  %v2311 = vpop.f32.mrf.mxu0
  %v2312 = vadd.f32 0.0, %v2311
  %2313 = vmatmul.f32.gmra.mxu0 %v691
  %v2314 = vpop.f32.mrf.mxu0
  %v2315 = vadd.f32 0.0, %v2314
  %2316 = vmatmul.f32.gmra.mxu0 %v694
  %v2317 = vpop.f32.mrf.mxu0
  %v2318 = vadd.f32 0.0, %v2317
  %2319 = vmatmul.f32.gmra.mxu0 %v697
  %v2320 = vpop.f32.mrf.mxu0
  %v2321 = vadd.f32 0.0, %v2320
  %2322 = vmatmul.f32.gmra.mxu0 %v700
  %v2323 = vpop.f32.mrf.mxu0
  %v2324 = vadd.f32 0.0, %v2323
  %2325 = vmatmul.f32.gmra.mxu0 %v703
  %v2326 = vpop.f32.mrf.mxu0
  %v2327 = vadd.f32 0.0, %v2326
  %2328 = vmatmul.f32.gmra.mxu0 %v706
  %v2329 = vpop.f32.mrf.mxu0
  %v2330 = vadd.f32 0.0, %v2329
  %2331 = vmatmul.f32.gmra.mxu0 %v709
  %v2332 = vpop.f32.mrf.mxu0
  %v2333 = vadd.f32 0.0, %v2332
  %2334 = vmatmul.f32.gmra.mxu0 %v712
  %v2335 = vpop.f32.mrf.mxu0
  %v2336 = vadd.f32 0.0, %v2335
  %2337 = vmatmul.f32.gmra.mxu0 %v715
  %v2338 = vpop.f32.mrf.mxu0
  %v2339 = vadd.f32 0.0, %v2338
  %2340 = vmatmul.f32.gmra.mxu0 %v718
  %v2341 = vpop.f32.mrf.mxu0
  %v2342 = vadd.f32 0.0, %v2341
  %2343 = vmatmul.f32.gmra.mxu0 %v721
  %v2344 = vpop.f32.mrf.mxu0
  %v2345 = vadd.f32 0.0, %v2344
  %2346 = vmatmul.f32.gmra.mxu0 %v724
  %v2347 = vpop.f32.mrf.mxu0
  %v2348 = vadd.f32 0.0, %v2347
  %2349 = vmatmul.f32.gmra.mxu0 %v727
  %v2350 = vpop.f32.mrf.mxu0
  %v2351 = vadd.f32 0.0, %v2350
  %2352 = vmatmul.f32.gmra.mxu0 %v730
  %v2353 = vpop.f32.mrf.mxu0
  %v2354 = vadd.f32 0.0, %v2353
  %2355 = vmatmul.f32.gmra.mxu0 %v733
  %v2356 = vpop.f32.mrf.mxu0
  %v2357 = vadd.f32 0.0, %v2356
  %2358 = vmatmul.f32.gmra.mxu0 %v736
  %v2359 = vpop.f32.mrf.mxu0
  %v2360 = vadd.f32 0.0, %v2359
  %2361 = vmatmul.f32.gmra.mxu0 %v739
  %v2362 = vpop.f32.mrf.mxu0
  %v2363 = vadd.f32 0.0, %v2362
  %2364 = vmatmul.f32.gmra.mxu0 %v742
  %v2365 = vpop.f32.mrf.mxu0
  %v2366 = vadd.f32 0.0, %v2365
  %2367 = vmatmul.f32.gmra.mxu0 %v745
  %v2368 = vpop.f32.mrf.mxu0
  %v2369 = vadd.f32 0.0, %v2368
  %2370 = vmatmul.f32.gmra.mxu0 %v748
  %v2371 = vpop.f32.mrf.mxu0
  %v2372 = vadd.f32 0.0, %v2371
  %2373 = vmatmul.f32.gmra.mxu0 %v751
  %v2374 = vpop.f32.mrf.mxu0
  %v2375 = vadd.f32 0.0, %v2374
  %2376 = vmatmul.f32.gmra.mxu0 %v754
  %v2377 = vpop.f32.mrf.mxu0
  %v2378 = vadd.f32 0.0, %v2377
  %2379 = vmatmul.f32.gmra.mxu0 %v757
  %v2380 = vpop.f32.mrf.mxu0
  %v2381 = vadd.f32 0.0, %v2380
  %2382 = vmatmul.f32.gmra.mxu0 %v760
  %v2383 = vpop.f32.mrf.mxu0
  %v2384 = vadd.f32 0.0, %v2383
  %2385 = vmatmul.f32.gmra.mxu0 %v763
  %v2386 = vpop.f32.mrf.mxu0
  %v2387 = vadd.f32 0.0, %v2386
  %2388 = vmatmul.f32.gmra.mxu0 %v766
  %v2389 = vpop.f32.mrf.mxu0
  %v2390 = vadd.f32 0.0, %v2389
  %2391 = vdwg.mxu0
  %2392 = vmatpush.msra.mxu0 0.0
  %2393 = vmatpush.msra.mxu0 0.0
  %2394 = vmatpush.msra.mxu0 0.0
  %2395 = vmatpush.msra.mxu0 0.0
  %2396 = vmatpush.msra.mxu0 0.0
  %2397 = vmatpush.msra.mxu0 0.0
  %2398 = vmatpush.msra.mxu0 0.0
  %2399 = vmatpush.msra.mxu0 0.0
  %2400 = vmatpush.msra.mxu0 0.0
  %2401 = vmatpush.msra.mxu0 0.0
  %2402 = vmatpush.msra.mxu0 0.0
  %2403 = vmatpush.msra.mxu0 0.0
  %2404 = vmatpush.msra.mxu0 0.0
  %2405 = vmatpush.msra.mxu0 0.0
  %2406 = vmatpush.msra.mxu0 %v2251
  %2407 = vmatpush.msra.mxu0 %v2248
  %2408 = vmatmul.f32.gmra.mxu0 %v882
  %v2409 = vpop.f32.mrf.mxu0
  %v2410 = vadd.f32 0.0, %v2409
  %2411 = vmatmul.f32.gmra.mxu0 %v885
  %v2412 = vpop.f32.mrf.mxu0
  %v2413 = vadd.f32 0.0, %v2412
  %2414 = vmatmul.f32.gmra.mxu0 %v888
  %v2415 = vpop.f32.mrf.mxu0
  %v2416 = vadd.f32 0.0, %v2415
  %2417 = vmatmul.f32.gmra.mxu0 %v891
  %v2418 = vpop.f32.mrf.mxu0
  %v2419 = vadd.f32 0.0, %v2418
  %2420 = vmatmul.f32.gmra.mxu0 %v894
  %v2421 = vpop.f32.mrf.mxu0
  %v2422 = vadd.f32 0.0, %v2421
  %2423 = vmatmul.f32.gmra.mxu0 %v897
  %v2424 = vpop.f32.mrf.mxu0
  %v2425 = vadd.f32 0.0, %v2424
  %2426 = vmatmul.f32.gmra.mxu0 %v900
  %v2427 = vpop.f32.mrf.mxu0
  %v2428 = vadd.f32 0.0, %v2427
  %2429 = vmatmul.f32.gmra.mxu0 %v903
  %v2430 = vpop.f32.mrf.mxu0
  %v2431 = vadd.f32 0.0, %v2430
  %2432 = vmatmul.f32.gmra.mxu0 %v906
  %v2433 = vpop.f32.mrf.mxu0
  %v2434 = vadd.f32 0.0, %v2433
  %2435 = vmatmul.f32.gmra.mxu0 %v909
  %v2436 = vpop.f32.mrf.mxu0
  %v2437 = vadd.f32 0.0, %v2436
  %2438 = vmatmul.f32.gmra.mxu0 %v912
  %v2439 = vpop.f32.mrf.mxu0
  %v2440 = vadd.f32 0.0, %v2439
  %2441 = vmatmul.f32.gmra.mxu0 %v915
  %v2442 = vpop.f32.mrf.mxu0
  %v2443 = vadd.f32 0.0, %v2442
  %2444 = vmatmul.f32.gmra.mxu0 %v918
  %v2445 = vpop.f32.mrf.mxu0
  %v2446 = vadd.f32 0.0, %v2445
  %2447 = vmatmul.f32.gmra.mxu0 %v921
  %v2448 = vpop.f32.mrf.mxu0
  %v2449 = vadd.f32 0.0, %v2448
  %2450 = vmatmul.f32.gmra.mxu0 %v924
  %v2451 = vpop.f32.mrf.mxu0
  %v2452 = vadd.f32 0.0, %v2451
  %2453 = vmatmul.f32.gmra.mxu0 %v927
  %v2454 = vpop.f32.mrf.mxu0
  %v2455 = vadd.f32 0.0, %v2454
  %2456 = vmatmul.f32.gmra.mxu0 %v930
  %v2457 = vpop.f32.mrf.mxu0
  %v2458 = vadd.f32 0.0, %v2457
  %2459 = vmatmul.f32.gmra.mxu0 %v933
  %v2460 = vpop.f32.mrf.mxu0
  %v2461 = vadd.f32 0.0, %v2460
  %2462 = vmatmul.f32.gmra.mxu0 %v936
  %v2463 = vpop.f32.mrf.mxu0
  %v2464 = vadd.f32 0.0, %v2463
  %2465 = vmatmul.f32.gmra.mxu0 %v939
  %v2466 = vpop.f32.mrf.mxu0
  %v2467 = vadd.f32 0.0, %v2466
  %2468 = vmatmul.f32.gmra.mxu0 %v942
  %v2469 = vpop.f32.mrf.mxu0
  %v2470 = vadd.f32 0.0, %v2469
  %2471 = vmatmul.f32.gmra.mxu0 %v945
  %v2472 = vpop.f32.mrf.mxu0
  %v2473 = vadd.f32 0.0, %v2472
  %2474 = vmatmul.f32.gmra.mxu0 %v948
  %v2475 = vpop.f32.mrf.mxu0
  %v2476 = vadd.f32 0.0, %v2475
  %2477 = vmatmul.f32.gmra.mxu0 %v951
  %v2478 = vpop.f32.mrf.mxu0
  %v2479 = vadd.f32 0.0, %v2478
  %2480 = vmatmul.f32.gmra.mxu0 %v954
  %v2481 = vpop.f32.mrf.mxu0
  %v2482 = vadd.f32 0.0, %v2481
  %2483 = vmatmul.f32.gmra.mxu0 %v957
  %v2484 = vpop.f32.mrf.mxu0
  %v2485 = vadd.f32 0.0, %v2484
  %2486 = vmatmul.f32.gmra.mxu0 %v960
  %v2487 = vpop.f32.mrf.mxu0
  %v2488 = vadd.f32 0.0, %v2487
  %2489 = vmatmul.f32.gmra.mxu0 %v963
  %v2490 = vpop.f32.mrf.mxu0
  %v2491 = vadd.f32 0.0, %v2490
  %2492 = vmatmul.f32.gmra.mxu0 %v966
  %v2493 = vpop.f32.mrf.mxu0
  %v2494 = vadd.f32 0.0, %v2493
  %2495 = vmatmul.f32.gmra.mxu0 %v969
  %v2496 = vpop.f32.mrf.mxu0
  %v2497 = vadd.f32 0.0, %v2496
  %2498 = vmatmul.f32.gmra.mxu0 %v972
  %v2499 = vpop.f32.mrf.mxu0
  %v2500 = vadd.f32 0.0, %v2499
  %2501 = vmatmul.f32.gmra.mxu0 %v975
  %v2502 = vpop.f32.mrf.mxu0
  %v2503 = vadd.f32 0.0, %v2502
  %2504 = vdwg.mxu0
  %v2505 = vmul.f32 %v2297, %v2410
  %v2506 = vmul.f32 %v2300, %v2413
  %v2507 = vmul.f32 %v2303, %v2416
  %v2508 = vmul.f32 %v2306, %v2419
  %v2509 = vmul.f32 %v2309, %v2422
  %v2510 = vmul.f32 %v2312, %v2425
  %v2511 = vmul.f32 %v2315, %v2428
  %v2512 = vmul.f32 %v2318, %v2431
  %v2513 = vmul.f32 %v2321, %v2434
  %v2514 = vmul.f32 %v2324, %v2437
  %v2515 = vmul.f32 %v2327, %v2440
  %v2516 = vmul.f32 %v2330, %v2443
  %v2517 = vmul.f32 %v2333, %v2446
  %v2518 = vmul.f32 %v2336, %v2449
  %v2519 = vmul.f32 %v2339, %v2452
  %v2520 = vmul.f32 %v2342, %v2455
  %v2521 = vmul.f32 %v2345, %v2458
  %v2522 = vmul.f32 %v2348, %v2461
  %v2523 = vmul.f32 %v2351, %v2464
  %v2524 = vmul.f32 %v2354, %v2467
  %v2525 = vmul.f32 %v2357, %v2470
  %v2526 = vmul.f32 %v2360, %v2473
  %v2527 = vmul.f32 %v2363, %v2476
  %v2528 = vmul.f32 %v2366, %v2479
  %v2529 = vmul.f32 %v2369, %v2482
  %v2530 = vmul.f32 %v2372, %v2485
  %v2531 = vmul.f32 %v2375, %v2488
  %v2532 = vmul.f32 %v2378, %v2491
  %v2533 = vmul.f32 %v2381, %v2494
  %v2534 = vmul.f32 %v2384, %v2497
  %v2535 = vmul.f32 %v2387, %v2500
  %v2536 = vmul.f32 %v2390, %v2503
  %v2537 = vsel %vm590, %v2505, 0.0
  %2538 = vadd.xlane.f32.xlu0 %v2537
  %v2539 = vpop.xlane.xlu0 %2538
  %v2540 = vsel %vm590, %v2506, 0.0
  %2541 = vadd.xlane.f32.xlu0 %v2540
  %v2542 = vpop.xlane.xlu0 %2541
  %v2543 = vsel %vm590, %v2507, 0.0
  %2544 = vadd.xlane.f32.xlu0 %v2543
  %v2545 = vpop.xlane.xlu0 %2544
  %v2546 = vsel %vm590, %v2508, 0.0
  %2547 = vadd.xlane.f32.xlu0 %v2546
  %v2548 = vpop.xlane.xlu0 %2547
  %v2549 = vsel %vm590, %v2509, 0.0
  %2550 = vadd.xlane.f32.xlu0 %v2549
  %v2551 = vpop.xlane.xlu0 %2550
  %v2552 = vsel %vm590, %v2510, 0.0
  %2553 = vadd.xlane.f32.xlu0 %v2552
  %v2554 = vpop.xlane.xlu0 %2553
  %v2555 = vsel %vm590, %v2511, 0.0
  %2556 = vadd.xlane.f32.xlu0 %v2555
  %v2557 = vpop.xlane.xlu0 %2556
  %v2558 = vsel %vm590, %v2512, 0.0
  %2559 = vadd.xlane.f32.xlu0 %v2558
  %v2560 = vpop.xlane.xlu0 %2559
  %v2561 = vsel %vm590, %v2513, 0.0
  %2562 = vadd.xlane.f32.xlu0 %v2561
  %v2563 = vpop.xlane.xlu0 %2562
  %v2564 = vsel %vm590, %v2514, 0.0
  %2565 = vadd.xlane.f32.xlu0 %v2564
  %v2566 = vpop.xlane.xlu0 %2565
  %v2567 = vsel %vm590, %v2515, 0.0
  %2568 = vadd.xlane.f32.xlu0 %v2567
  %v2569 = vpop.xlane.xlu0 %2568
  %v2570 = vsel %vm590, %v2516, 0.0
  %2571 = vadd.xlane.f32.xlu0 %v2570
  %v2572 = vpop.xlane.xlu0 %2571
  %v2573 = vsel %vm590, %v2517, 0.0
  %2574 = vadd.xlane.f32.xlu0 %v2573
  %v2575 = vpop.xlane.xlu0 %2574
  %v2576 = vsel %vm590, %v2518, 0.0
  %2577 = vadd.xlane.f32.xlu0 %v2576
  %v2578 = vpop.xlane.xlu0 %2577
  %v2579 = vsel %vm590, %v2519, 0.0
  %2580 = vadd.xlane.f32.xlu0 %v2579
  %v2581 = vpop.xlane.xlu0 %2580
  %v2582 = vsel %vm590, %v2520, 0.0
  %2583 = vadd.xlane.f32.xlu0 %v2582
  %v2584 = vpop.xlane.xlu0 %2583
  %v2585 = vsel %vm590, %v2521, 0.0
  %2586 = vadd.xlane.f32.xlu0 %v2585
  %v2587 = vpop.xlane.xlu0 %2586
  %v2588 = vsel %vm590, %v2522, 0.0
  %2589 = vadd.xlane.f32.xlu0 %v2588
  %v2590 = vpop.xlane.xlu0 %2589
  %v2591 = vsel %vm590, %v2523, 0.0
  %2592 = vadd.xlane.f32.xlu0 %v2591
  %v2593 = vpop.xlane.xlu0 %2592
  %v2594 = vsel %vm590, %v2524, 0.0
  %2595 = vadd.xlane.f32.xlu0 %v2594
  %v2596 = vpop.xlane.xlu0 %2595
  %v2597 = vsel %vm590, %v2525, 0.0
  %2598 = vadd.xlane.f32.xlu0 %v2597
  %v2599 = vpop.xlane.xlu0 %2598
  %v2600 = vsel %vm590, %v2526, 0.0
  %2601 = vadd.xlane.f32.xlu0 %v2600
  %v2602 = vpop.xlane.xlu0 %2601
  %v2603 = vsel %vm590, %v2527, 0.0
  %2604 = vadd.xlane.f32.xlu0 %v2603
  %v2605 = vpop.xlane.xlu0 %2604
  %v2606 = vsel %vm590, %v2528, 0.0
  %2607 = vadd.xlane.f32.xlu0 %v2606
  %v2608 = vpop.xlane.xlu0 %2607
  %v2609 = vsel %vm590, %v2529, 0.0
  %2610 = vadd.xlane.f32.xlu0 %v2609
  %v2611 = vpop.xlane.xlu0 %2610
  %v2612 = vsel %vm590, %v2530, 0.0
  %2613 = vadd.xlane.f32.xlu0 %v2612
  %v2614 = vpop.xlane.xlu0 %2613
  %v2615 = vsel %vm590, %v2531, 0.0
  %2616 = vadd.xlane.f32.xlu0 %v2615
  %v2617 = vpop.xlane.xlu0 %2616
  %v2618 = vsel %vm590, %v2532, 0.0
  %2619 = vadd.xlane.f32.xlu0 %v2618
  %v2620 = vpop.xlane.xlu0 %2619
  %v2621 = vsel %vm590, %v2533, 0.0
  %2622 = vadd.xlane.f32.xlu0 %v2621
  %v2623 = vpop.xlane.xlu0 %2622
  %v2624 = vsel %vm590, %v2534, 0.0
  %2625 = vadd.xlane.f32.xlu0 %v2624
  %v2626 = vpop.xlane.xlu0 %2625
  %v2627 = vsel %vm590, %v2535, 0.0
  %2628 = vadd.xlane.f32.xlu0 %v2627
  %v2629 = vpop.xlane.xlu0 %2628
  %v2630 = vsel %vm590, %v2536, 0.0
  %2631 = vadd.xlane.f32.xlu0 %v2630
  %v2632 = vpop.xlane.xlu0 %2631
  %2633 = vmatpush.msra.mxu0 %v2584
  %2634 = vmatpush.msra.mxu0 %v2581
  %2635 = vmatpush.msra.mxu0 %v2578
  %2636 = vmatpush.msra.mxu0 %v2575
  %2637 = vmatpush.msra.mxu0 %v2572
  %2638 = vmatpush.msra.mxu0 %v2569
  %2639 = vmatpush.msra.mxu0 %v2566
  %2640 = vmatpush.msra.mxu0 %v2563
  %2641 = vmatpush.msra.mxu0 %v2560
  %2642 = vmatpush.msra.mxu0 %v2557
  %2643 = vmatpush.msra.mxu0 %v2554
  %2644 = vmatpush.msra.mxu0 %v2551
  %2645 = vmatpush.msra.mxu0 %v2548
  %2646 = vmatpush.msra.mxu0 %v2545
  %2647 = vmatpush.msra.mxu0 %v2542
  %2648 = vmatpush.msra.mxu0 %v2539
  %2649 = vmatmul.f32.gmra.mxu0 %v174
  %v2650 = vpop.f32.mrf.mxu0
  %v2651 = vadd.f32 0.0, %v2650
  %2652 = vmatmul.f32.gmra.mxu0 %v176
  %v2653 = vpop.f32.mrf.mxu0
  %v2654 = vadd.f32 0.0, %v2653
  %2655 = vdwg.mxu0
  %2656 = vmatpush.msra.mxu0 %v2632
  %2657 = vmatpush.msra.mxu0 %v2629
  %2658 = vmatpush.msra.mxu0 %v2626
  %2659 = vmatpush.msra.mxu0 %v2623
  %2660 = vmatpush.msra.mxu0 %v2620
  %2661 = vmatpush.msra.mxu0 %v2617
  %2662 = vmatpush.msra.mxu0 %v2614
  %2663 = vmatpush.msra.mxu0 %v2611
  %2664 = vmatpush.msra.mxu0 %v2608
  %2665 = vmatpush.msra.mxu0 %v2605
  %2666 = vmatpush.msra.mxu0 %v2602
  %2667 = vmatpush.msra.mxu0 %v2599
  %2668 = vmatpush.msra.mxu0 %v2596
  %2669 = vmatpush.msra.mxu0 %v2593
  %2670 = vmatpush.msra.mxu0 %v2590
  %2671 = vmatpush.msra.mxu0 %v2587
  %2672 = vmatmul.f32.gmra.mxu0 %v175
  %v2673 = vpop.f32.mrf.mxu0
  %v2674 = vadd.f32 %v2651, %v2673
  %2675 = vmatmul.f32.gmra.mxu0 %v177
  %v2676 = vpop.f32.mrf.mxu0
  %v2677 = vadd.f32 %v2654, %v2676
  %2678 = vdwg.mxu0
  %v2679 = vmul.f32 %v2674, 0.03125
  %v2680 = vmul.f32 %v2677, 0.03125
  %v2681 = vsel %vm1266, %v2679, -inf
  %v2682 = vsel %vm1266, %v2680, -inf
  %v2683 = vmax.f32 %v2681, %v2682
  %v2684 = vrot.slane %v2683, 4
  %v2685 = vmax.f32 %v2683, %v2684
  %v2686 = vrot.slane %v2685, 2
  %v2687 = vmax.f32 %v2685, %v2686
  %v2688 = vrot.slane %v2687, 1
  %v2689 = vmax.f32 %v2687, %v2688
  %vm2690 = vcmp.ge.f32.partialorder %v2679, %v2689
  %vm2691 = vcmp.ge.f32.partialorder %v2680, %v2689
  %v2692 = vsel %vm2690, %v316, 16.0
  %v2693 = vsel %vm2691, %v317, 16.0
  %v2694 = vsel %vm1266, %v2692, inf
  %v2695 = vsel %vm1266, %v2693, inf
  %v2696 = vmin.f32 %v2694, %v2695
  %v2697 = vrot.slane %v2696, 4
  %v2698 = vmin.f32 %v2696, %v2697
  %v2699 = vrot.slane %v2698, 2
  %v2700 = vmin.f32 %v2698, %v2699
  %v2701 = vrot.slane %v2700, 1
  %v2702 = vmin.f32 %v2700, %v2701
  %vm2703 = vcmp.eq.f32.partialorder %v316, %v2702
  %vm2704 = vcmp.eq.f32.partialorder %v317, %v2702
  %v2705 = vsel %vm2703, 1, 0
  %v2706 = vsel %vm2704, 1, 0
  %v2707 = vcvt.s32.f32 %v2705
  %v2708 = vcvt.s32.f32 %v2706
  %vm2709 = vcmp.gt.f32.partialorder %v2707, 0.5
  %vm2710 = vcmp.gt.f32.partialorder %v2708, 0.5
  %v2711 = vsel %vm2709, -1e+30, %v2679
  %v2712 = vsel %vm2710, -1e+30, %v2680
  %v2713 = vsel %vm1266, %v2711, -inf
  %v2714 = vsel %vm1266, %v2712, -inf
  %v2715 = vmax.f32 %v2713, %v2714
  %v2716 = vrot.slane %v2715, 4
  %v2717 = vmax.f32 %v2715, %v2716
  %v2718 = vrot.slane %v2717, 2
  %v2719 = vmax.f32 %v2717, %v2718
  %v2720 = vrot.slane %v2719, 1
  %v2721 = vmax.f32 %v2719, %v2720
  %vm2722 = vcmp.ge.f32.partialorder %v2711, %v2721
  %vm2723 = vcmp.ge.f32.partialorder %v2712, %v2721
  %v2724 = vsel %vm2722, %v316, 16.0
  %v2725 = vsel %vm2723, %v317, 16.0
  %v2726 = vsel %vm1266, %v2724, inf
  %v2727 = vsel %vm1266, %v2725, inf
  %v2728 = vmin.f32 %v2726, %v2727
  %v2729 = vrot.slane %v2728, 4
  %v2730 = vmin.f32 %v2728, %v2729
  %v2731 = vrot.slane %v2730, 2
  %v2732 = vmin.f32 %v2730, %v2731
  %v2733 = vrot.slane %v2732, 1
  %v2734 = vmin.f32 %v2732, %v2733
  %vm2735 = vcmp.eq.f32.partialorder %v316, %v2734
  %vm2736 = vcmp.eq.f32.partialorder %v317, %v2734
  %v2737 = vsel %vm2735, 1, 0
  %v2738 = vsel %vm2736, 1, 0
  %v2739 = vcvt.s32.f32 %v2737
  %v2740 = vcvt.s32.f32 %v2738
  %v2741 = vsub.f32 %v2689, %v2689
  %v2742 = vmul.f32 %v2741, 1.442695
  %v2743 = vpow.pop %v2742
  %v2744 = vsub.f32 %v2721, %v2689
  %v2745 = vmul.f32 %v2744, 1.442695
  %v2746 = vpow.pop %v2745
  %v2747 = vadd.f32 %v2743, %v2746
  %v2748 = vrcp.pop %v2747
  %v2749 = vmul.f32 %v2747, %v2748
  %v2750 = vsub.f32 1.0, %v2749
  %v2751 = vmul.f32 %v2748, %v2750
  %v2752 = vadd.f32 %v2748, %v2751
  %vm2753 = vweird.f32 %v2747
  %vm2754 = vweird.f32 %v2748
  %vm2755 = vmor %vm2753, %vm2754
  %v2756 = vsel %vm2755, %v2748, %v2752
  %v2757 = vand.u32 2147483647, %v2747
  %vm2758 = vcmp.eq.f32.partialorder %v2757, 8.507059e+37
  %v2759 = vand.u32 %v2747, 2147483648
  %v2760 = vor.u32 1.1754944e-38, %v2759
  %v2761 = vsel %vm2758, %v2760, %v2756
  %v2762 = vmul.f32 %v2743, %v2761
  %v2763 = vmul.f32 %v2707, %v2762
  %v2764 = vmul.f32 %v2708, %v2762
  %v2765 = vmul.f32 %v2746, %v2761
  %v2766 = vmul.f32 %v2739, %v2765
  %v2767 = vmul.f32 %v2740, %v2765
  %v2768 = vadd.f32 %v2763, %v2766
  %v2769 = vadd.f32 %v2764, %v2767
  %2770 = vmatpush.msra.mxu0 0.0
  %2771 = vmatpush.msra.mxu0 0.0
  %2772 = vmatpush.msra.mxu0 0.0
  %2773 = vmatpush.msra.mxu0 0.0
  %2774 = vmatpush.msra.mxu0 0.0
  %2775 = vmatpush.msra.mxu0 0.0
  %2776 = vmatpush.msra.mxu0 0.0
  %2777 = vmatpush.msra.mxu0 0.0
  %2778 = vmatpush.msra.mxu0 0.0
  %2779 = vmatpush.msra.mxu0 0.0
  %2780 = vmatpush.msra.mxu0 0.0
  %2781 = vmatpush.msra.mxu0 0.0
  %2782 = vmatpush.msra.mxu0 0.0
  %2783 = vmatpush.msra.mxu0 0.0
  %2784 = vmatpush.msra.mxu0 %v2769
  %2785 = vmatpush.msra.mxu0 %v2768
  %2786 = vmatmul.f32.gmra.mxu0 %v1357
  %v2787 = vpop.f32.mrf.mxu0
  %v2788 = vadd.f32 0.0, %v2787
  %2789 = vmatmul.f32.gmra.mxu0 %v1360
  %v2790 = vpop.f32.mrf.mxu0
  %v2791 = vadd.f32 0.0, %v2790
  %2792 = vmatmul.f32.gmra.mxu0 %v1363
  %v2793 = vpop.f32.mrf.mxu0
  %v2794 = vadd.f32 0.0, %v2793
  %2795 = vmatmul.f32.gmra.mxu0 %v1366
  %v2796 = vpop.f32.mrf.mxu0
  %v2797 = vadd.f32 0.0, %v2796
  %2798 = vmatmul.f32.gmra.mxu0 %v1369
  %v2799 = vpop.f32.mrf.mxu0
  %v2800 = vadd.f32 0.0, %v2799
  %2801 = vmatmul.f32.gmra.mxu0 %v1372
  %v2802 = vpop.f32.mrf.mxu0
  %v2803 = vadd.f32 0.0, %v2802
  %2804 = vmatmul.f32.gmra.mxu0 %v1375
  %v2805 = vpop.f32.mrf.mxu0
  %v2806 = vadd.f32 0.0, %v2805
  %2807 = vmatmul.f32.gmra.mxu0 %v1378
  %v2808 = vpop.f32.mrf.mxu0
  %v2809 = vadd.f32 0.0, %v2808
  %2810 = vmatmul.f32.gmra.mxu0 %v1381
  %v2811 = vpop.f32.mrf.mxu0
  %v2812 = vadd.f32 0.0, %v2811
  %2813 = vmatmul.f32.gmra.mxu0 %v1384
  %v2814 = vpop.f32.mrf.mxu0
  %v2815 = vadd.f32 0.0, %v2814
  %2816 = vmatmul.f32.gmra.mxu0 %v1387
  %v2817 = vpop.f32.mrf.mxu0
  %v2818 = vadd.f32 0.0, %v2817
  %2819 = vmatmul.f32.gmra.mxu0 %v1390
  %v2820 = vpop.f32.mrf.mxu0
  %v2821 = vadd.f32 0.0, %v2820
  %2822 = vmatmul.f32.gmra.mxu0 %v1393
  %v2823 = vpop.f32.mrf.mxu0
  %v2824 = vadd.f32 0.0, %v2823
  %2825 = vmatmul.f32.gmra.mxu0 %v1396
  %v2826 = vpop.f32.mrf.mxu0
  %v2827 = vadd.f32 0.0, %v2826
  %2828 = vmatmul.f32.gmra.mxu0 %v1399
  %v2829 = vpop.f32.mrf.mxu0
  %v2830 = vadd.f32 0.0, %v2829
  %2831 = vmatmul.f32.gmra.mxu0 %v1402
  %v2832 = vpop.f32.mrf.mxu0
  %v2833 = vadd.f32 0.0, %v2832
  %2834 = vmatmul.f32.gmra.mxu0 %v1405
  %v2835 = vpop.f32.mrf.mxu0
  %v2836 = vadd.f32 0.0, %v2835
  %2837 = vmatmul.f32.gmra.mxu0 %v1408
  %v2838 = vpop.f32.mrf.mxu0
  %v2839 = vadd.f32 0.0, %v2838
  %2840 = vmatmul.f32.gmra.mxu0 %v1411
  %v2841 = vpop.f32.mrf.mxu0
  %v2842 = vadd.f32 0.0, %v2841
  %2843 = vmatmul.f32.gmra.mxu0 %v1414
  %v2844 = vpop.f32.mrf.mxu0
  %v2845 = vadd.f32 0.0, %v2844
  %2846 = vmatmul.f32.gmra.mxu0 %v1417
  %v2847 = vpop.f32.mrf.mxu0
  %v2848 = vadd.f32 0.0, %v2847
  %2849 = vmatmul.f32.gmra.mxu0 %v1420
  %v2850 = vpop.f32.mrf.mxu0
  %v2851 = vadd.f32 0.0, %v2850
  %2852 = vmatmul.f32.gmra.mxu0 %v1423
  %v2853 = vpop.f32.mrf.mxu0
  %v2854 = vadd.f32 0.0, %v2853
  %2855 = vmatmul.f32.gmra.mxu0 %v1426
  %v2856 = vpop.f32.mrf.mxu0
  %v2857 = vadd.f32 0.0, %v2856
  %2858 = vmatmul.f32.gmra.mxu0 %v1429
  %v2859 = vpop.f32.mrf.mxu0
  %v2860 = vadd.f32 0.0, %v2859
  %2861 = vmatmul.f32.gmra.mxu0 %v1432
  %v2862 = vpop.f32.mrf.mxu0
  %v2863 = vadd.f32 0.0, %v2862
  %2864 = vmatmul.f32.gmra.mxu0 %v1435
  %v2865 = vpop.f32.mrf.mxu0
  %v2866 = vadd.f32 0.0, %v2865
  %2867 = vmatmul.f32.gmra.mxu0 %v1438
  %v2868 = vpop.f32.mrf.mxu0
  %v2869 = vadd.f32 0.0, %v2868
  %2870 = vmatmul.f32.gmra.mxu0 %v1441
  %v2871 = vpop.f32.mrf.mxu0
  %v2872 = vadd.f32 0.0, %v2871
  %2873 = vmatmul.f32.gmra.mxu0 %v1444
  %v2874 = vpop.f32.mrf.mxu0
  %v2875 = vadd.f32 0.0, %v2874
  %2876 = vmatmul.f32.gmra.mxu0 %v1447
  %v2877 = vpop.f32.mrf.mxu0
  %v2878 = vadd.f32 0.0, %v2877
  %2879 = vmatmul.f32.gmra.mxu0 %v1450
  %v2880 = vpop.f32.mrf.mxu0
  %v2881 = vadd.f32 0.0, %v2880
  %2882 = vdwg.mxu0
  %2884 = vset.pattern.permute.xlu0 0
  %2885 = vperm.xlu0 %2884, %v2788
  %v2886 = vpop.permute.xlu0 %2885
  %2889 = vset.pattern.permute.xlu0 0
  %2890 = vperm.xlu0 %2889, %v2791
  %v2891 = vpop.permute.xlu0 %2890
  %2894 = vset.pattern.permute.xlu0 0
  %2895 = vperm.xlu0 %2894, %v2794
  %v2896 = vpop.permute.xlu0 %2895
  %2899 = vset.pattern.permute.xlu0 0
  %2900 = vperm.xlu0 %2899, %v2797
  %v2901 = vpop.permute.xlu0 %2900
  %2904 = vset.pattern.permute.xlu0 0
  %2905 = vperm.xlu0 %2904, %v2800
  %v2906 = vpop.permute.xlu0 %2905
  %2909 = vset.pattern.permute.xlu0 0
  %2910 = vperm.xlu0 %2909, %v2803
  %v2911 = vpop.permute.xlu0 %2910
  %2914 = vset.pattern.permute.xlu0 0
  %2915 = vperm.xlu0 %2914, %v2806
  %v2916 = vpop.permute.xlu0 %2915
  %2919 = vset.pattern.permute.xlu0 0
  %2920 = vperm.xlu0 %2919, %v2809
  %v2921 = vpop.permute.xlu0 %2920
  %2924 = vset.pattern.permute.xlu0 0
  %2925 = vperm.xlu0 %2924, %v2812
  %v2926 = vpop.permute.xlu0 %2925
  %2929 = vset.pattern.permute.xlu0 0
  %2930 = vperm.xlu0 %2929, %v2815
  %v2931 = vpop.permute.xlu0 %2930
  %2934 = vset.pattern.permute.xlu0 0
  %2935 = vperm.xlu0 %2934, %v2818
  %v2936 = vpop.permute.xlu0 %2935
  %2939 = vset.pattern.permute.xlu0 0
  %2940 = vperm.xlu0 %2939, %v2821
  %v2941 = vpop.permute.xlu0 %2940
  %2944 = vset.pattern.permute.xlu0 0
  %2945 = vperm.xlu0 %2944, %v2824
  %v2946 = vpop.permute.xlu0 %2945
  %2949 = vset.pattern.permute.xlu0 0
  %2950 = vperm.xlu0 %2949, %v2827
  %v2951 = vpop.permute.xlu0 %2950
  %2954 = vset.pattern.permute.xlu0 0
  %2955 = vperm.xlu0 %2954, %v2830
  %v2956 = vpop.permute.xlu0 %2955
  %2959 = vset.pattern.permute.xlu0 0
  %2960 = vperm.xlu0 %2959, %v2833
  %v2961 = vpop.permute.xlu0 %2960
  %2964 = vset.pattern.permute.xlu0 0
  %2965 = vperm.xlu0 %2964, %v2836
  %v2966 = vpop.permute.xlu0 %2965
  %2969 = vset.pattern.permute.xlu0 0
  %2970 = vperm.xlu0 %2969, %v2839
  %v2971 = vpop.permute.xlu0 %2970
  %2974 = vset.pattern.permute.xlu0 0
  %2975 = vperm.xlu0 %2974, %v2842
  %v2976 = vpop.permute.xlu0 %2975
  %2979 = vset.pattern.permute.xlu0 0
  %2980 = vperm.xlu0 %2979, %v2845
  %v2981 = vpop.permute.xlu0 %2980
  %2984 = vset.pattern.permute.xlu0 0
  %2985 = vperm.xlu0 %2984, %v2848
  %v2986 = vpop.permute.xlu0 %2985
  %2989 = vset.pattern.permute.xlu0 0
  %2990 = vperm.xlu0 %2989, %v2851
  %v2991 = vpop.permute.xlu0 %2990
  %2994 = vset.pattern.permute.xlu0 0
  %2995 = vperm.xlu0 %2994, %v2854
  %v2996 = vpop.permute.xlu0 %2995
  %2999 = vset.pattern.permute.xlu0 0
  %3000 = vperm.xlu0 %2999, %v2857
  %v3001 = vpop.permute.xlu0 %3000
  %3004 = vset.pattern.permute.xlu0 0
  %3005 = vperm.xlu0 %3004, %v2860
  %v3006 = vpop.permute.xlu0 %3005
  %3009 = vset.pattern.permute.xlu0 0
  %3010 = vperm.xlu0 %3009, %v2863
  %v3011 = vpop.permute.xlu0 %3010
  %3014 = vset.pattern.permute.xlu0 0
  %3015 = vperm.xlu0 %3014, %v2866
  %v3016 = vpop.permute.xlu0 %3015
  %3019 = vset.pattern.permute.xlu0 0
  %3020 = vperm.xlu0 %3019, %v2869
  %v3021 = vpop.permute.xlu0 %3020
  %3024 = vset.pattern.permute.xlu0 0
  %3025 = vperm.xlu0 %3024, %v2872
  %v3026 = vpop.permute.xlu0 %3025
  %3029 = vset.pattern.permute.xlu0 0
  %3030 = vperm.xlu0 %3029, %v2875
  %v3031 = vpop.permute.xlu0 %3030
  %3034 = vset.pattern.permute.xlu0 0
  %3035 = vperm.xlu0 %3034, %v2878
  %v3036 = vpop.permute.xlu0 %3035
  %3039 = vset.pattern.permute.xlu0 0
  %3040 = vperm.xlu0 %3039, %v2881
  %v3041 = vpop.permute.xlu0 %3040
  %v3043 = vmul.f32 %v2886, %v71
  %v3044 = vmul.f32 %v2891, %v72
  %v3045 = vmul.f32 %v2896, %v73
  %v3046 = vmul.f32 %v2901, %v74
  %v3047 = vmul.f32 %v2906, %v75
  %v3048 = vmul.f32 %v2911, %v76
  %v3049 = vmul.f32 %v2916, %v77
  %v3050 = vmul.f32 %v2921, %v78
  %v3051 = vmul.f32 %v2926, %v79
  %v3052 = vmul.f32 %v2931, %v80
  %v3053 = vmul.f32 %v2936, %v81
  %v3054 = vmul.f32 %v2941, %v82
  %v3055 = vmul.f32 %v2946, %v83
  %v3056 = vmul.f32 %v2951, %v84
  %v3057 = vmul.f32 %v2956, %v85
  %v3058 = vmul.f32 %v2961, %v86
  %v3059 = vmul.f32 %v2966, %v87
  %v3060 = vmul.f32 %v2971, %v88
  %v3061 = vmul.f32 %v2976, %v89
  %v3062 = vmul.f32 %v2981, %v90
  %v3063 = vmul.f32 %v2986, %v91
  %v3064 = vmul.f32 %v2991, %v92
  %v3065 = vmul.f32 %v2996, %v93
  %v3066 = vmul.f32 %v3001, %v94
  %v3067 = vmul.f32 %v3006, %v95
  %v3068 = vmul.f32 %v3011, %v96
  %v3069 = vmul.f32 %v3016, %v97
  %v3070 = vmul.f32 %v3021, %v98
  %v3071 = vmul.f32 %v3026, %v99
  %v3072 = vmul.f32 %v3031, %v100
  %v3073 = vmul.f32 %v3036, %v101
  %v3074 = vmul.f32 %v3041, %v102
  %3075 = vmatpush.msra.mxu0 %v3058
  %3076 = vmatpush.msra.mxu0 %v3057
  %3077 = vmatpush.msra.mxu0 %v3056
  %3078 = vmatpush.msra.mxu0 %v3055
  %3079 = vmatpush.msra.mxu0 %v3054
  %3080 = vmatpush.msra.mxu0 %v3053
  %3081 = vmatpush.msra.mxu0 %v3052
  %3082 = vmatpush.msra.mxu0 %v3051
  %3083 = vmatpush.msra.mxu0 %v3050
  %3084 = vmatpush.msra.mxu0 %v3049
  %3085 = vmatpush.msra.mxu0 %v3048
  %3086 = vmatpush.msra.mxu0 %v3047
  %3087 = vmatpush.msra.mxu0 %v3046
  %3088 = vmatpush.msra.mxu0 %v3045
  %3089 = vmatpush.msra.mxu0 %v3044
  %3090 = vmatpush.msra.mxu0 %v3043
  %3091 = vmatmul.f32.gmra.mxu0 %v169
  %v3092 = vpop.f32.mrf.mxu0
  %v3093 = vadd.f32 0.0, %v3092
  %3094 = vmatmul.f32.gmra.mxu0 %v171
  %v3095 = vpop.f32.mrf.mxu0
  %v3096 = vadd.f32 0.0, %v3095
  %3097 = vdwg.mxu0
  %3098 = vmatpush.msra.mxu0 %v3074
  %3099 = vmatpush.msra.mxu0 %v3073
  %3100 = vmatpush.msra.mxu0 %v3072
  %3101 = vmatpush.msra.mxu0 %v3071
  %3102 = vmatpush.msra.mxu0 %v3070
  %3103 = vmatpush.msra.mxu0 %v3069
  %3104 = vmatpush.msra.mxu0 %v3068
  %3105 = vmatpush.msra.mxu0 %v3067
  %3106 = vmatpush.msra.mxu0 %v3066
  %3107 = vmatpush.msra.mxu0 %v3065
  %3108 = vmatpush.msra.mxu0 %v3064
  %3109 = vmatpush.msra.mxu0 %v3063
  %3110 = vmatpush.msra.mxu0 %v3062
  %3111 = vmatpush.msra.mxu0 %v3061
  %3112 = vmatpush.msra.mxu0 %v3060
  %3113 = vmatpush.msra.mxu0 %v3059
  %3114 = vmatmul.f32.gmra.mxu0 %v170
  %v3115 = vpop.f32.mrf.mxu0
  %v3116 = vadd.f32 %v3093, %v3115
  %3117 = vmatmul.f32.gmra.mxu0 %v172
  %v3118 = vpop.f32.mrf.mxu0
  %v3119 = vadd.f32 %v3096, %v3118
  %3120 = vdwg.mxu0
  %v3122 = vsel %vm326, %v3116, 0
  %v3125 = vsel %vm326, %v3119, 0
  %3127 = vmatpush.msra.mxu0 0.0
  %3128 = vmatpush.msra.mxu0 0.0
  %3129 = vmatpush.msra.mxu0 0.0
  %3130 = vmatpush.msra.mxu0 0.0
  %3131 = vmatpush.msra.mxu0 0.0
  %3132 = vmatpush.msra.mxu0 0.0
  %3133 = vmatpush.msra.mxu0 0.0
  %3134 = vmatpush.msra.mxu0 0.0
  %3135 = vmatpush.msra.mxu0 0.0
  %3136 = vmatpush.msra.mxu0 0.0
  %3137 = vmatpush.msra.mxu0 0.0
  %3138 = vmatpush.msra.mxu0 0.0
  %3139 = vmatpush.msra.mxu0 0.0
  %3140 = vmatpush.msra.mxu0 0.0
  %3141 = vmatpush.msra.mxu0 %v2277
  %3142 = vmatpush.msra.mxu0 %v2274
  %3143 = vmatmul.f32.gmra.mxu0 %v3122
  %v3144 = vpop.f32.mrf.mxu0
  %v3145 = vadd.f32 0.0, %v3144
  %3146 = vmatmul.f32.gmra.mxu0 %v3125
  %v3147 = vpop.f32.mrf.mxu0
  %v3148 = vadd.f32 0.0, %v3147
  %3149 = vdwg.mxu0
  %v3151 = vperm.slane %v254, 0
  %v3154 = vsel %vm590, %v3145, 0
  %v3157 = vsel %vm590, %v3148, 0
  %3159 = vmatpush.msra.mxu0 0.0
  %3160 = vmatpush.msra.mxu0 0.0
  %3161 = vmatpush.msra.mxu0 0.0
  %3162 = vmatpush.msra.mxu0 0.0
  %3163 = vmatpush.msra.mxu0 0.0
  %3164 = vmatpush.msra.mxu0 0.0
  %3165 = vmatpush.msra.mxu0 0.0
  %3166 = vmatpush.msra.mxu0 0.0
  %3167 = vmatpush.msra.mxu0 0.0
  %3168 = vmatpush.msra.mxu0 0.0
  %3169 = vmatpush.msra.mxu0 0.0
  %3170 = vmatpush.msra.mxu0 0.0
  %3171 = vmatpush.msra.mxu0 %v247
  %3172 = vmatpush.msra.mxu0 %v246
  %3173 = vmatpush.msra.mxu0 %v245
  %3174 = vmatpush.msra.mxu0 %v244
  %3175 = vmatmul.f32.gmra.mxu0 %v3154
  %v3176 = vpop.f32.mrf.mxu0
  %v3177 = vadd.f32 %v3151, %v3176
  %3178 = vmatmul.f32.gmra.mxu0 %v3157
  %v3179 = vpop.f32.mrf.mxu0
  %v3180 = vadd.f32 %v3151, %v3179
  %3181 = vdwg.mxu0
  %v3182 = vadd.f32 %v2193, %v3177
  %v3183 = vadd.f32 %v2194, %v3180
  %3184 = vmatpush.msra.mxu0 0.0
  %3185 = vmatpush.msra.mxu0 0.0
  %3186 = vmatpush.msra.mxu0 0.0
  %3187 = vmatpush.msra.mxu0 0.0
  %3188 = vmatpush.msra.mxu0 0.0
  %3189 = vmatpush.msra.mxu0 0.0
  %3190 = vmatpush.msra.mxu0 0.0
  %3191 = vmatpush.msra.mxu0 0.0
  %3192 = vmatpush.msra.mxu0 0.0
  %3193 = vmatpush.msra.mxu0 0.0
  %3194 = vmatpush.msra.mxu0 0.0
  %3195 = vmatpush.msra.mxu0 0.0
  %3196 = vmatpush.msra.mxu0 0.0
  %3197 = vmatpush.msra.mxu0 0.0
  %3198 = vmatpush.msra.mxu0 %v3183
  %3199 = vmatpush.msra.mxu0 %v3182
  %3200 = vmatmul.f32.gmra.mxu0 %v328
  %v3201 = vpop.f32.mrf.mxu0
  %v3202 = vadd.f32 0.0, %v3201
  %3203 = vmatmul.f32.gmra.mxu0 %v331
  %v3204 = vpop.f32.mrf.mxu0
  %v3205 = vadd.f32 0.0, %v3204
  %3206 = vdwg.mxu0
  %v3207 = vsub.f32 %v3182, %v3202
  %v3208 = vsub.f32 %v3183, %v3205
  %v3210 = vperm.slane %v274, 0
  %v3213 = vsel %vm590, %v3207, 0
  %v3216 = vsel %vm590, %v3208, 0
  %3218 = vmatpush.msra.mxu0 0.0
  %3219 = vmatpush.msra.mxu0 0.0
  %3220 = vmatpush.msra.mxu0 0.0
  %3221 = vmatpush.msra.mxu0 0.0
  %3222 = vmatpush.msra.mxu0 0.0
  %3223 = vmatpush.msra.mxu0 0.0
  %3224 = vmatpush.msra.mxu0 0.0
  %3225 = vmatpush.msra.mxu0 0.0
  %3226 = vmatpush.msra.mxu0 0.0
  %3227 = vmatpush.msra.mxu0 0.0
  %3228 = vmatpush.msra.mxu0 0.0
  %3229 = vmatpush.msra.mxu0 0.0
  %3230 = vmatpush.msra.mxu0 %v258
  %3231 = vmatpush.msra.mxu0 %v257
  %3232 = vmatpush.msra.mxu0 %v256
  %3233 = vmatpush.msra.mxu0 %v255
  %3234 = vmatmul.f32.gmra.mxu0 %v3213
  %v3235 = vpop.f32.mrf.mxu0
  %v3236 = vadd.f32 %v3210, %v3235
  %3237 = vmatmul.f32.gmra.mxu0 %v3216
  %v3238 = vpop.f32.mrf.mxu0
  %v3239 = vadd.f32 %v3210, %v3238
  %3240 = vdwg.mxu0
  %v3242 = vperm.slane %v276, 0
  %v3245 = vsel %vm590, %v2049, 0
  %v3248 = vsel %vm590, %v2050, 0
  %3250 = vmatpush.msra.mxu0 0.0
  %3251 = vmatpush.msra.mxu0 0.0
  %3252 = vmatpush.msra.mxu0 0.0
  %3253 = vmatpush.msra.mxu0 0.0
  %3254 = vmatpush.msra.mxu0 0.0
  %3255 = vmatpush.msra.mxu0 0.0
  %3256 = vmatpush.msra.mxu0 0.0
  %3257 = vmatpush.msra.mxu0 0.0
  %3258 = vmatpush.msra.mxu0 0.0
  %3259 = vmatpush.msra.mxu0 0.0
  %3260 = vmatpush.msra.mxu0 0.0
  %3261 = vmatpush.msra.mxu0 0.0
  %3262 = vmatpush.msra.mxu0 %v263
  %3263 = vmatpush.msra.mxu0 %v262
  %3264 = vmatpush.msra.mxu0 %v261
  %3265 = vmatpush.msra.mxu0 %v260
  %3266 = vmatmul.f32.gmra.mxu0 %v3245
  %v3267 = vpop.f32.mrf.mxu0
  %v3268 = vadd.f32 %v3242, %v3267
  %3269 = vmatmul.f32.gmra.mxu0 %v3248
  %v3270 = vpop.f32.mrf.mxu0
  %v3271 = vadd.f32 %v3242, %v3270
  %3272 = vdwg.mxu0
  %v3274 = vperm.slane %v278, 0
  %3276 = vmatpush.msra.mxu0 0.0
  %3277 = vmatpush.msra.mxu0 0.0
  %3278 = vmatpush.msra.mxu0 0.0
  %3279 = vmatpush.msra.mxu0 0.0
  %3280 = vmatpush.msra.mxu0 0.0
  %3281 = vmatpush.msra.mxu0 0.0
  %3282 = vmatpush.msra.mxu0 0.0
  %3283 = vmatpush.msra.mxu0 0.0
  %3284 = vmatpush.msra.mxu0 0.0
  %3285 = vmatpush.msra.mxu0 0.0
  %3286 = vmatpush.msra.mxu0 0.0
  %3287 = vmatpush.msra.mxu0 0.0
  %3288 = vmatpush.msra.mxu0 %v268
  %3289 = vmatpush.msra.mxu0 %v267
  %3290 = vmatpush.msra.mxu0 %v266
  %3291 = vmatpush.msra.mxu0 %v265
  %3292 = vmatmul.f32.gmra.mxu0 %v3245
  %v3293 = vpop.f32.mrf.mxu0
  %v3294 = vadd.f32 %v3274, %v3293
  %3295 = vmatmul.f32.gmra.mxu0 %v3248
  %v3296 = vpop.f32.mrf.mxu0
  %v3297 = vadd.f32 %v3274, %v3296
  %3298 = vdwg.mxu0
  %3299 = vmatpush.msra.mxu0 0.0
  %3300 = vmatpush.msra.mxu0 0.0
  %3301 = vmatpush.msra.mxu0 0.0
  %3302 = vmatpush.msra.mxu0 0.0
  %3303 = vmatpush.msra.mxu0 0.0
  %3304 = vmatpush.msra.mxu0 0.0
  %3305 = vmatpush.msra.mxu0 0.0
  %3306 = vmatpush.msra.mxu0 0.0
  %3307 = vmatpush.msra.mxu0 0.0
  %3308 = vmatpush.msra.mxu0 0.0
  %3309 = vmatpush.msra.mxu0 0.0
  %3310 = vmatpush.msra.mxu0 0.0
  %3311 = vmatpush.msra.mxu0 0.0
  %3312 = vmatpush.msra.mxu0 0.0
  %3313 = vmatpush.msra.mxu0 %v3239
  %3314 = vmatpush.msra.mxu0 %v3236
  %3315 = vmatmul.f32.gmra.mxu0 %v673
  %v3316 = vpop.f32.mrf.mxu0
  %v3317 = vadd.f32 0.0, %v3316
  %3318 = vmatmul.f32.gmra.mxu0 %v676
  %v3319 = vpop.f32.mrf.mxu0
  %v3320 = vadd.f32 0.0, %v3319
  %3321 = vmatmul.f32.gmra.mxu0 %v679
  %v3322 = vpop.f32.mrf.mxu0
  %v3323 = vadd.f32 0.0, %v3322
  %3324 = vmatmul.f32.gmra.mxu0 %v682
  %v3325 = vpop.f32.mrf.mxu0
  %v3326 = vadd.f32 0.0, %v3325
  %3327 = vmatmul.f32.gmra.mxu0 %v685
  %v3328 = vpop.f32.mrf.mxu0
  %v3329 = vadd.f32 0.0, %v3328
  %3330 = vmatmul.f32.gmra.mxu0 %v688
  %v3331 = vpop.f32.mrf.mxu0
  %v3332 = vadd.f32 0.0, %v3331
  %3333 = vmatmul.f32.gmra.mxu0 %v691
  %v3334 = vpop.f32.mrf.mxu0
  %v3335 = vadd.f32 0.0, %v3334
  %3336 = vmatmul.f32.gmra.mxu0 %v694
  %v3337 = vpop.f32.mrf.mxu0
  %v3338 = vadd.f32 0.0, %v3337
  %3339 = vmatmul.f32.gmra.mxu0 %v697
  %v3340 = vpop.f32.mrf.mxu0
  %v3341 = vadd.f32 0.0, %v3340
  %3342 = vmatmul.f32.gmra.mxu0 %v700
  %v3343 = vpop.f32.mrf.mxu0
  %v3344 = vadd.f32 0.0, %v3343
  %3345 = vmatmul.f32.gmra.mxu0 %v703
  %v3346 = vpop.f32.mrf.mxu0
  %v3347 = vadd.f32 0.0, %v3346
  %3348 = vmatmul.f32.gmra.mxu0 %v706
  %v3349 = vpop.f32.mrf.mxu0
  %v3350 = vadd.f32 0.0, %v3349
  %3351 = vmatmul.f32.gmra.mxu0 %v709
  %v3352 = vpop.f32.mrf.mxu0
  %v3353 = vadd.f32 0.0, %v3352
  %3354 = vmatmul.f32.gmra.mxu0 %v712
  %v3355 = vpop.f32.mrf.mxu0
  %v3356 = vadd.f32 0.0, %v3355
  %3357 = vmatmul.f32.gmra.mxu0 %v715
  %v3358 = vpop.f32.mrf.mxu0
  %v3359 = vadd.f32 0.0, %v3358
  %3360 = vmatmul.f32.gmra.mxu0 %v718
  %v3361 = vpop.f32.mrf.mxu0
  %v3362 = vadd.f32 0.0, %v3361
  %3363 = vmatmul.f32.gmra.mxu0 %v721
  %v3364 = vpop.f32.mrf.mxu0
  %v3365 = vadd.f32 0.0, %v3364
  %3366 = vmatmul.f32.gmra.mxu0 %v724
  %v3367 = vpop.f32.mrf.mxu0
  %v3368 = vadd.f32 0.0, %v3367
  %3369 = vmatmul.f32.gmra.mxu0 %v727
  %v3370 = vpop.f32.mrf.mxu0
  %v3371 = vadd.f32 0.0, %v3370
  %3372 = vmatmul.f32.gmra.mxu0 %v730
  %v3373 = vpop.f32.mrf.mxu0
  %v3374 = vadd.f32 0.0, %v3373
  %3375 = vmatmul.f32.gmra.mxu0 %v733
  %v3376 = vpop.f32.mrf.mxu0
  %v3377 = vadd.f32 0.0, %v3376
  %3378 = vmatmul.f32.gmra.mxu0 %v736
  %v3379 = vpop.f32.mrf.mxu0
  %v3380 = vadd.f32 0.0, %v3379
  %3381 = vmatmul.f32.gmra.mxu0 %v739
  %v3382 = vpop.f32.mrf.mxu0
  %v3383 = vadd.f32 0.0, %v3382
  %3384 = vmatmul.f32.gmra.mxu0 %v742
  %v3385 = vpop.f32.mrf.mxu0
  %v3386 = vadd.f32 0.0, %v3385
  %3387 = vmatmul.f32.gmra.mxu0 %v745
  %v3388 = vpop.f32.mrf.mxu0
  %v3389 = vadd.f32 0.0, %v3388
  %3390 = vmatmul.f32.gmra.mxu0 %v748
  %v3391 = vpop.f32.mrf.mxu0
  %v3392 = vadd.f32 0.0, %v3391
  %3393 = vmatmul.f32.gmra.mxu0 %v751
  %v3394 = vpop.f32.mrf.mxu0
  %v3395 = vadd.f32 0.0, %v3394
  %3396 = vmatmul.f32.gmra.mxu0 %v754
  %v3397 = vpop.f32.mrf.mxu0
  %v3398 = vadd.f32 0.0, %v3397
  %3399 = vmatmul.f32.gmra.mxu0 %v757
  %v3400 = vpop.f32.mrf.mxu0
  %v3401 = vadd.f32 0.0, %v3400
  %3402 = vmatmul.f32.gmra.mxu0 %v760
  %v3403 = vpop.f32.mrf.mxu0
  %v3404 = vadd.f32 0.0, %v3403
  %3405 = vmatmul.f32.gmra.mxu0 %v763
  %v3406 = vpop.f32.mrf.mxu0
  %v3407 = vadd.f32 0.0, %v3406
  %3408 = vmatmul.f32.gmra.mxu0 %v766
  %v3409 = vpop.f32.mrf.mxu0
  %v3410 = vadd.f32 0.0, %v3409
  %3411 = vdwg.mxu0
  %3412 = vmatpush.msra.mxu0 0.0
  %3413 = vmatpush.msra.mxu0 0.0
  %3414 = vmatpush.msra.mxu0 0.0
  %3415 = vmatpush.msra.mxu0 0.0
  %3416 = vmatpush.msra.mxu0 0.0
  %3417 = vmatpush.msra.mxu0 0.0
  %3418 = vmatpush.msra.mxu0 0.0
  %3419 = vmatpush.msra.mxu0 0.0
  %3420 = vmatpush.msra.mxu0 0.0
  %3421 = vmatpush.msra.mxu0 0.0
  %3422 = vmatpush.msra.mxu0 0.0
  %3423 = vmatpush.msra.mxu0 0.0
  %3424 = vmatpush.msra.mxu0 0.0
  %3425 = vmatpush.msra.mxu0 0.0
  %3426 = vmatpush.msra.mxu0 %v3271
  %3427 = vmatpush.msra.mxu0 %v3268
  %3428 = vmatmul.f32.gmra.mxu0 %v882
  %v3429 = vpop.f32.mrf.mxu0
  %v3430 = vadd.f32 0.0, %v3429
  %3431 = vmatmul.f32.gmra.mxu0 %v885
  %v3432 = vpop.f32.mrf.mxu0
  %v3433 = vadd.f32 0.0, %v3432
  %3434 = vmatmul.f32.gmra.mxu0 %v888
  %v3435 = vpop.f32.mrf.mxu0
  %v3436 = vadd.f32 0.0, %v3435
  %3437 = vmatmul.f32.gmra.mxu0 %v891
  %v3438 = vpop.f32.mrf.mxu0
  %v3439 = vadd.f32 0.0, %v3438
  %3440 = vmatmul.f32.gmra.mxu0 %v894
  %v3441 = vpop.f32.mrf.mxu0
  %v3442 = vadd.f32 0.0, %v3441
  %3443 = vmatmul.f32.gmra.mxu0 %v897
  %v3444 = vpop.f32.mrf.mxu0
  %v3445 = vadd.f32 0.0, %v3444
  %3446 = vmatmul.f32.gmra.mxu0 %v900
  %v3447 = vpop.f32.mrf.mxu0
  %v3448 = vadd.f32 0.0, %v3447
  %3449 = vmatmul.f32.gmra.mxu0 %v903
  %v3450 = vpop.f32.mrf.mxu0
  %v3451 = vadd.f32 0.0, %v3450
  %3452 = vmatmul.f32.gmra.mxu0 %v906
  %v3453 = vpop.f32.mrf.mxu0
  %v3454 = vadd.f32 0.0, %v3453
  %3455 = vmatmul.f32.gmra.mxu0 %v909
  %v3456 = vpop.f32.mrf.mxu0
  %v3457 = vadd.f32 0.0, %v3456
  %3458 = vmatmul.f32.gmra.mxu0 %v912
  %v3459 = vpop.f32.mrf.mxu0
  %v3460 = vadd.f32 0.0, %v3459
  %3461 = vmatmul.f32.gmra.mxu0 %v915
  %v3462 = vpop.f32.mrf.mxu0
  %v3463 = vadd.f32 0.0, %v3462
  %3464 = vmatmul.f32.gmra.mxu0 %v918
  %v3465 = vpop.f32.mrf.mxu0
  %v3466 = vadd.f32 0.0, %v3465
  %3467 = vmatmul.f32.gmra.mxu0 %v921
  %v3468 = vpop.f32.mrf.mxu0
  %v3469 = vadd.f32 0.0, %v3468
  %3470 = vmatmul.f32.gmra.mxu0 %v924
  %v3471 = vpop.f32.mrf.mxu0
  %v3472 = vadd.f32 0.0, %v3471
  %3473 = vmatmul.f32.gmra.mxu0 %v927
  %v3474 = vpop.f32.mrf.mxu0
  %v3475 = vadd.f32 0.0, %v3474
  %3476 = vmatmul.f32.gmra.mxu0 %v930
  %v3477 = vpop.f32.mrf.mxu0
  %v3478 = vadd.f32 0.0, %v3477
  %3479 = vmatmul.f32.gmra.mxu0 %v933
  %v3480 = vpop.f32.mrf.mxu0
  %v3481 = vadd.f32 0.0, %v3480
  %3482 = vmatmul.f32.gmra.mxu0 %v936
  %v3483 = vpop.f32.mrf.mxu0
  %v3484 = vadd.f32 0.0, %v3483
  %3485 = vmatmul.f32.gmra.mxu0 %v939
  %v3486 = vpop.f32.mrf.mxu0
  %v3487 = vadd.f32 0.0, %v3486
  %3488 = vmatmul.f32.gmra.mxu0 %v942
  %v3489 = vpop.f32.mrf.mxu0
  %v3490 = vadd.f32 0.0, %v3489
  %3491 = vmatmul.f32.gmra.mxu0 %v945
  %v3492 = vpop.f32.mrf.mxu0
  %v3493 = vadd.f32 0.0, %v3492
  %3494 = vmatmul.f32.gmra.mxu0 %v948
  %v3495 = vpop.f32.mrf.mxu0
  %v3496 = vadd.f32 0.0, %v3495
  %3497 = vmatmul.f32.gmra.mxu0 %v951
  %v3498 = vpop.f32.mrf.mxu0
  %v3499 = vadd.f32 0.0, %v3498
  %3500 = vmatmul.f32.gmra.mxu0 %v954
  %v3501 = vpop.f32.mrf.mxu0
  %v3502 = vadd.f32 0.0, %v3501
  %3503 = vmatmul.f32.gmra.mxu0 %v957
  %v3504 = vpop.f32.mrf.mxu0
  %v3505 = vadd.f32 0.0, %v3504
  %3506 = vmatmul.f32.gmra.mxu0 %v960
  %v3507 = vpop.f32.mrf.mxu0
  %v3508 = vadd.f32 0.0, %v3507
  %3509 = vmatmul.f32.gmra.mxu0 %v963
  %v3510 = vpop.f32.mrf.mxu0
  %v3511 = vadd.f32 0.0, %v3510
  %3512 = vmatmul.f32.gmra.mxu0 %v966
  %v3513 = vpop.f32.mrf.mxu0
  %v3514 = vadd.f32 0.0, %v3513
  %3515 = vmatmul.f32.gmra.mxu0 %v969
  %v3516 = vpop.f32.mrf.mxu0
  %v3517 = vadd.f32 0.0, %v3516
  %3518 = vmatmul.f32.gmra.mxu0 %v972
  %v3519 = vpop.f32.mrf.mxu0
  %v3520 = vadd.f32 0.0, %v3519
  %3521 = vmatmul.f32.gmra.mxu0 %v975
  %v3522 = vpop.f32.mrf.mxu0
  %v3523 = vadd.f32 0.0, %v3522
  %3524 = vdwg.mxu0
  %v3525 = vmul.f32 %v3317, %v3430
  %v3526 = vmul.f32 %v3320, %v3433
  %v3527 = vmul.f32 %v3323, %v3436
  %v3528 = vmul.f32 %v3326, %v3439
  %v3529 = vmul.f32 %v3329, %v3442
  %v3530 = vmul.f32 %v3332, %v3445
  %v3531 = vmul.f32 %v3335, %v3448
  %v3532 = vmul.f32 %v3338, %v3451
  %v3533 = vmul.f32 %v3341, %v3454
  %v3534 = vmul.f32 %v3344, %v3457
  %v3535 = vmul.f32 %v3347, %v3460
  %v3536 = vmul.f32 %v3350, %v3463
  %v3537 = vmul.f32 %v3353, %v3466
  %v3538 = vmul.f32 %v3356, %v3469
  %v3539 = vmul.f32 %v3359, %v3472
  %v3540 = vmul.f32 %v3362, %v3475
  %v3541 = vmul.f32 %v3365, %v3478
  %v3542 = vmul.f32 %v3368, %v3481
  %v3543 = vmul.f32 %v3371, %v3484
  %v3544 = vmul.f32 %v3374, %v3487
  %v3545 = vmul.f32 %v3377, %v3490
  %v3546 = vmul.f32 %v3380, %v3493
  %v3547 = vmul.f32 %v3383, %v3496
  %v3548 = vmul.f32 %v3386, %v3499
  %v3549 = vmul.f32 %v3389, %v3502
  %v3550 = vmul.f32 %v3392, %v3505
  %v3551 = vmul.f32 %v3395, %v3508
  %v3552 = vmul.f32 %v3398, %v3511
  %v3553 = vmul.f32 %v3401, %v3514
  %v3554 = vmul.f32 %v3404, %v3517
  %v3555 = vmul.f32 %v3407, %v3520
  %v3556 = vmul.f32 %v3410, %v3523
  %v3557 = vsel %vm590, %v3525, 0.0
  %3558 = vadd.xlane.f32.xlu0 %v3557
  %v3559 = vpop.xlane.xlu0 %3558
  %v3560 = vsel %vm590, %v3526, 0.0
  %3561 = vadd.xlane.f32.xlu0 %v3560
  %v3562 = vpop.xlane.xlu0 %3561
  %v3563 = vsel %vm590, %v3527, 0.0
  %3564 = vadd.xlane.f32.xlu0 %v3563
  %v3565 = vpop.xlane.xlu0 %3564
  %v3566 = vsel %vm590, %v3528, 0.0
  %3567 = vadd.xlane.f32.xlu0 %v3566
  %v3568 = vpop.xlane.xlu0 %3567
  %v3569 = vsel %vm590, %v3529, 0.0
  %3570 = vadd.xlane.f32.xlu0 %v3569
  %v3571 = vpop.xlane.xlu0 %3570
  %v3572 = vsel %vm590, %v3530, 0.0
  %3573 = vadd.xlane.f32.xlu0 %v3572
  %v3574 = vpop.xlane.xlu0 %3573
  %v3575 = vsel %vm590, %v3531, 0.0
  %3576 = vadd.xlane.f32.xlu0 %v3575
  %v3577 = vpop.xlane.xlu0 %3576
  %v3578 = vsel %vm590, %v3532, 0.0
  %3579 = vadd.xlane.f32.xlu0 %v3578
  %v3580 = vpop.xlane.xlu0 %3579
  %v3581 = vsel %vm590, %v3533, 0.0
  %3582 = vadd.xlane.f32.xlu0 %v3581
  %v3583 = vpop.xlane.xlu0 %3582
  %v3584 = vsel %vm590, %v3534, 0.0
  %3585 = vadd.xlane.f32.xlu0 %v3584
  %v3586 = vpop.xlane.xlu0 %3585
  %v3587 = vsel %vm590, %v3535, 0.0
  %3588 = vadd.xlane.f32.xlu0 %v3587
  %v3589 = vpop.xlane.xlu0 %3588
  %v3590 = vsel %vm590, %v3536, 0.0
  %3591 = vadd.xlane.f32.xlu0 %v3590
  %v3592 = vpop.xlane.xlu0 %3591
  %v3593 = vsel %vm590, %v3537, 0.0
  %3594 = vadd.xlane.f32.xlu0 %v3593
  %v3595 = vpop.xlane.xlu0 %3594
  %v3596 = vsel %vm590, %v3538, 0.0
  %3597 = vadd.xlane.f32.xlu0 %v3596
  %v3598 = vpop.xlane.xlu0 %3597
  %v3599 = vsel %vm590, %v3539, 0.0
  %3600 = vadd.xlane.f32.xlu0 %v3599
  %v3601 = vpop.xlane.xlu0 %3600
  %v3602 = vsel %vm590, %v3540, 0.0
  %3603 = vadd.xlane.f32.xlu0 %v3602
  %v3604 = vpop.xlane.xlu0 %3603
  %v3605 = vsel %vm590, %v3541, 0.0
  %3606 = vadd.xlane.f32.xlu0 %v3605
  %v3607 = vpop.xlane.xlu0 %3606
  %v3608 = vsel %vm590, %v3542, 0.0
  %3609 = vadd.xlane.f32.xlu0 %v3608
  %v3610 = vpop.xlane.xlu0 %3609
  %v3611 = vsel %vm590, %v3543, 0.0
  %3612 = vadd.xlane.f32.xlu0 %v3611
  %v3613 = vpop.xlane.xlu0 %3612
  %v3614 = vsel %vm590, %v3544, 0.0
  %3615 = vadd.xlane.f32.xlu0 %v3614
  %v3616 = vpop.xlane.xlu0 %3615
  %v3617 = vsel %vm590, %v3545, 0.0
  %3618 = vadd.xlane.f32.xlu0 %v3617
  %v3619 = vpop.xlane.xlu0 %3618
  %v3620 = vsel %vm590, %v3546, 0.0
  %3621 = vadd.xlane.f32.xlu0 %v3620
  %v3622 = vpop.xlane.xlu0 %3621
  %v3623 = vsel %vm590, %v3547, 0.0
  %3624 = vadd.xlane.f32.xlu0 %v3623
  %v3625 = vpop.xlane.xlu0 %3624
  %v3626 = vsel %vm590, %v3548, 0.0
  %3627 = vadd.xlane.f32.xlu0 %v3626
  %v3628 = vpop.xlane.xlu0 %3627
  %v3629 = vsel %vm590, %v3549, 0.0
  %3630 = vadd.xlane.f32.xlu0 %v3629
  %v3631 = vpop.xlane.xlu0 %3630
  %v3632 = vsel %vm590, %v3550, 0.0
  %3633 = vadd.xlane.f32.xlu0 %v3632
  %v3634 = vpop.xlane.xlu0 %3633
  %v3635 = vsel %vm590, %v3551, 0.0
  %3636 = vadd.xlane.f32.xlu0 %v3635
  %v3637 = vpop.xlane.xlu0 %3636
  %v3638 = vsel %vm590, %v3552, 0.0
  %3639 = vadd.xlane.f32.xlu0 %v3638
  %v3640 = vpop.xlane.xlu0 %3639
  %v3641 = vsel %vm590, %v3553, 0.0
  %3642 = vadd.xlane.f32.xlu0 %v3641
  %v3643 = vpop.xlane.xlu0 %3642
  %v3644 = vsel %vm590, %v3554, 0.0
  %3645 = vadd.xlane.f32.xlu0 %v3644
  %v3646 = vpop.xlane.xlu0 %3645
  %v3647 = vsel %vm590, %v3555, 0.0
  %3648 = vadd.xlane.f32.xlu0 %v3647
  %v3649 = vpop.xlane.xlu0 %3648
  %v3650 = vsel %vm590, %v3556, 0.0
  %3651 = vadd.xlane.f32.xlu0 %v3650
  %v3652 = vpop.xlane.xlu0 %3651
  %3653 = vmatpush.msra.mxu0 %v3604
  %3654 = vmatpush.msra.mxu0 %v3601
  %3655 = vmatpush.msra.mxu0 %v3598
  %3656 = vmatpush.msra.mxu0 %v3595
  %3657 = vmatpush.msra.mxu0 %v3592
  %3658 = vmatpush.msra.mxu0 %v3589
  %3659 = vmatpush.msra.mxu0 %v3586
  %3660 = vmatpush.msra.mxu0 %v3583
  %3661 = vmatpush.msra.mxu0 %v3580
  %3662 = vmatpush.msra.mxu0 %v3577
  %3663 = vmatpush.msra.mxu0 %v3574
  %3664 = vmatpush.msra.mxu0 %v3571
  %3665 = vmatpush.msra.mxu0 %v3568
  %3666 = vmatpush.msra.mxu0 %v3565
  %3667 = vmatpush.msra.mxu0 %v3562
  %3668 = vmatpush.msra.mxu0 %v3559
  %3669 = vmatmul.f32.gmra.mxu0 %v174
  %v3670 = vpop.f32.mrf.mxu0
  %v3671 = vadd.f32 0.0, %v3670
  %3672 = vmatmul.f32.gmra.mxu0 %v176
  %v3673 = vpop.f32.mrf.mxu0
  %v3674 = vadd.f32 0.0, %v3673
  %3675 = vdwg.mxu0
  %3676 = vmatpush.msra.mxu0 %v3652
  %3677 = vmatpush.msra.mxu0 %v3649
  %3678 = vmatpush.msra.mxu0 %v3646
  %3679 = vmatpush.msra.mxu0 %v3643
  %3680 = vmatpush.msra.mxu0 %v3640
  %3681 = vmatpush.msra.mxu0 %v3637
  %3682 = vmatpush.msra.mxu0 %v3634
  %3683 = vmatpush.msra.mxu0 %v3631
  %3684 = vmatpush.msra.mxu0 %v3628
  %3685 = vmatpush.msra.mxu0 %v3625
  %3686 = vmatpush.msra.mxu0 %v3622
  %3687 = vmatpush.msra.mxu0 %v3619
  %3688 = vmatpush.msra.mxu0 %v3616
  %3689 = vmatpush.msra.mxu0 %v3613
  %3690 = vmatpush.msra.mxu0 %v3610
  %3691 = vmatpush.msra.mxu0 %v3607
  %3692 = vmatmul.f32.gmra.mxu0 %v175
  %v3693 = vpop.f32.mrf.mxu0
  %v3694 = vadd.f32 %v3671, %v3693
  %3695 = vmatmul.f32.gmra.mxu0 %v177
  %v3696 = vpop.f32.mrf.mxu0
  %v3697 = vadd.f32 %v3674, %v3696
  %3698 = vdwg.mxu0
  %v3699 = vmul.f32 %v3694, 0.03125
  %v3700 = vmul.f32 %v3697, 0.03125
  %v3701 = vsel %vm1266, %v3699, -inf
  %v3702 = vsel %vm1266, %v3700, -inf
  %v3703 = vmax.f32 %v3701, %v3702
  %v3704 = vrot.slane %v3703, 4
  %v3705 = vmax.f32 %v3703, %v3704
  %v3706 = vrot.slane %v3705, 2
  %v3707 = vmax.f32 %v3705, %v3706
  %v3708 = vrot.slane %v3707, 1
  %v3709 = vmax.f32 %v3707, %v3708
  %vm3710 = vcmp.ge.f32.partialorder %v3699, %v3709
  %vm3711 = vcmp.ge.f32.partialorder %v3700, %v3709
  %v3712 = vsel %vm3710, %v316, 16.0
  %v3713 = vsel %vm3711, %v317, 16.0
  %v3714 = vsel %vm1266, %v3712, inf
  %v3715 = vsel %vm1266, %v3713, inf
  %v3716 = vmin.f32 %v3714, %v3715
  %v3717 = vrot.slane %v3716, 4
  %v3718 = vmin.f32 %v3716, %v3717
  %v3719 = vrot.slane %v3718, 2
  %v3720 = vmin.f32 %v3718, %v3719
  %v3721 = vrot.slane %v3720, 1
  %v3722 = vmin.f32 %v3720, %v3721
  %vm3723 = vcmp.eq.f32.partialorder %v316, %v3722
  %vm3724 = vcmp.eq.f32.partialorder %v317, %v3722
  %v3725 = vsel %vm3723, 1, 0
  %v3726 = vsel %vm3724, 1, 0
  %v3727 = vcvt.s32.f32 %v3725
  %v3728 = vcvt.s32.f32 %v3726
  %vm3729 = vcmp.gt.f32.partialorder %v3727, 0.5
  %vm3730 = vcmp.gt.f32.partialorder %v3728, 0.5
  %v3731 = vsel %vm3729, -1e+30, %v3699
  %v3732 = vsel %vm3730, -1e+30, %v3700
  %v3733 = vsel %vm1266, %v3731, -inf
  %v3734 = vsel %vm1266, %v3732, -inf
  %v3735 = vmax.f32 %v3733, %v3734
  %v3736 = vrot.slane %v3735, 4
  %v3737 = vmax.f32 %v3735, %v3736
  %v3738 = vrot.slane %v3737, 2
  %v3739 = vmax.f32 %v3737, %v3738
  %v3740 = vrot.slane %v3739, 1
  %v3741 = vmax.f32 %v3739, %v3740
  %vm3742 = vcmp.ge.f32.partialorder %v3731, %v3741
  %vm3743 = vcmp.ge.f32.partialorder %v3732, %v3741
  %v3744 = vsel %vm3742, %v316, 16.0
  %v3745 = vsel %vm3743, %v317, 16.0
  %v3746 = vsel %vm1266, %v3744, inf
  %v3747 = vsel %vm1266, %v3745, inf
  %v3748 = vmin.f32 %v3746, %v3747
  %v3749 = vrot.slane %v3748, 4
  %v3750 = vmin.f32 %v3748, %v3749
  %v3751 = vrot.slane %v3750, 2
  %v3752 = vmin.f32 %v3750, %v3751
  %v3753 = vrot.slane %v3752, 1
  %v3754 = vmin.f32 %v3752, %v3753
  %vm3755 = vcmp.eq.f32.partialorder %v316, %v3754
  %vm3756 = vcmp.eq.f32.partialorder %v317, %v3754
  %v3757 = vsel %vm3755, 1, 0
  %v3758 = vsel %vm3756, 1, 0
  %v3759 = vcvt.s32.f32 %v3757
  %v3760 = vcvt.s32.f32 %v3758
  %v3761 = vsub.f32 %v3709, %v3709
  %v3762 = vmul.f32 %v3761, 1.442695
  %v3763 = vpow.pop %v3762
  %v3764 = vsub.f32 %v3741, %v3709
  %v3765 = vmul.f32 %v3764, 1.442695
  %v3766 = vpow.pop %v3765
  %v3767 = vadd.f32 %v3763, %v3766
  %v3768 = vrcp.pop %v3767
  %v3769 = vmul.f32 %v3767, %v3768
  %v3770 = vsub.f32 1.0, %v3769
  %v3771 = vmul.f32 %v3768, %v3770
  %v3772 = vadd.f32 %v3768, %v3771
  %vm3773 = vweird.f32 %v3767
  %vm3774 = vweird.f32 %v3768
  %vm3775 = vmor %vm3773, %vm3774
  %v3776 = vsel %vm3775, %v3768, %v3772
  %v3777 = vand.u32 2147483647, %v3767
  %vm3778 = vcmp.eq.f32.partialorder %v3777, 8.507059e+37
  %v3779 = vand.u32 %v3767, 2147483648
  %v3780 = vor.u32 1.1754944e-38, %v3779
  %v3781 = vsel %vm3778, %v3780, %v3776
  %v3782 = vmul.f32 %v3763, %v3781
  %v3783 = vmul.f32 %v3727, %v3782
  %v3784 = vmul.f32 %v3728, %v3782
  %v3785 = vmul.f32 %v3766, %v3781
  %v3786 = vmul.f32 %v3759, %v3785
  %v3787 = vmul.f32 %v3760, %v3785
  %v3788 = vadd.f32 %v3783, %v3786
  %v3789 = vadd.f32 %v3784, %v3787
  %3790 = vmatpush.msra.mxu0 0.0
  %3791 = vmatpush.msra.mxu0 0.0
  %3792 = vmatpush.msra.mxu0 0.0
  %3793 = vmatpush.msra.mxu0 0.0
  %3794 = vmatpush.msra.mxu0 0.0
  %3795 = vmatpush.msra.mxu0 0.0
  %3796 = vmatpush.msra.mxu0 0.0
  %3797 = vmatpush.msra.mxu0 0.0
  %3798 = vmatpush.msra.mxu0 0.0
  %3799 = vmatpush.msra.mxu0 0.0
  %3800 = vmatpush.msra.mxu0 0.0
  %3801 = vmatpush.msra.mxu0 0.0
  %3802 = vmatpush.msra.mxu0 0.0
  %3803 = vmatpush.msra.mxu0 0.0
  %3804 = vmatpush.msra.mxu0 %v3789
  %3805 = vmatpush.msra.mxu0 %v3788
  %3806 = vmatmul.f32.gmra.mxu0 %v1357
  %v3807 = vpop.f32.mrf.mxu0
  %v3808 = vadd.f32 0.0, %v3807
  %3809 = vmatmul.f32.gmra.mxu0 %v1360
  %v3810 = vpop.f32.mrf.mxu0
  %v3811 = vadd.f32 0.0, %v3810
  %3812 = vmatmul.f32.gmra.mxu0 %v1363
  %v3813 = vpop.f32.mrf.mxu0
  %v3814 = vadd.f32 0.0, %v3813
  %3815 = vmatmul.f32.gmra.mxu0 %v1366
  %v3816 = vpop.f32.mrf.mxu0
  %v3817 = vadd.f32 0.0, %v3816
  %3818 = vmatmul.f32.gmra.mxu0 %v1369
  %v3819 = vpop.f32.mrf.mxu0
  %v3820 = vadd.f32 0.0, %v3819
  %3821 = vmatmul.f32.gmra.mxu0 %v1372
  %v3822 = vpop.f32.mrf.mxu0
  %v3823 = vadd.f32 0.0, %v3822
  %3824 = vmatmul.f32.gmra.mxu0 %v1375
  %v3825 = vpop.f32.mrf.mxu0
  %v3826 = vadd.f32 0.0, %v3825
  %3827 = vmatmul.f32.gmra.mxu0 %v1378
  %v3828 = vpop.f32.mrf.mxu0
  %v3829 = vadd.f32 0.0, %v3828
  %3830 = vmatmul.f32.gmra.mxu0 %v1381
  %v3831 = vpop.f32.mrf.mxu0
  %v3832 = vadd.f32 0.0, %v3831
  %3833 = vmatmul.f32.gmra.mxu0 %v1384
  %v3834 = vpop.f32.mrf.mxu0
  %v3835 = vadd.f32 0.0, %v3834
  %3836 = vmatmul.f32.gmra.mxu0 %v1387
  %v3837 = vpop.f32.mrf.mxu0
  %v3838 = vadd.f32 0.0, %v3837
  %3839 = vmatmul.f32.gmra.mxu0 %v1390
  %v3840 = vpop.f32.mrf.mxu0
  %v3841 = vadd.f32 0.0, %v3840
  %3842 = vmatmul.f32.gmra.mxu0 %v1393
  %v3843 = vpop.f32.mrf.mxu0
  %v3844 = vadd.f32 0.0, %v3843
  %3845 = vmatmul.f32.gmra.mxu0 %v1396
  %v3846 = vpop.f32.mrf.mxu0
  %v3847 = vadd.f32 0.0, %v3846
  %3848 = vmatmul.f32.gmra.mxu0 %v1399
  %v3849 = vpop.f32.mrf.mxu0
  %v3850 = vadd.f32 0.0, %v3849
  %3851 = vmatmul.f32.gmra.mxu0 %v1402
  %v3852 = vpop.f32.mrf.mxu0
  %v3853 = vadd.f32 0.0, %v3852
  %3854 = vmatmul.f32.gmra.mxu0 %v1405
  %v3855 = vpop.f32.mrf.mxu0
  %v3856 = vadd.f32 0.0, %v3855
  %3857 = vmatmul.f32.gmra.mxu0 %v1408
  %v3858 = vpop.f32.mrf.mxu0
  %v3859 = vadd.f32 0.0, %v3858
  %3860 = vmatmul.f32.gmra.mxu0 %v1411
  %v3861 = vpop.f32.mrf.mxu0
  %v3862 = vadd.f32 0.0, %v3861
  %3863 = vmatmul.f32.gmra.mxu0 %v1414
  %v3864 = vpop.f32.mrf.mxu0
  %v3865 = vadd.f32 0.0, %v3864
  %3866 = vmatmul.f32.gmra.mxu0 %v1417
  %v3867 = vpop.f32.mrf.mxu0
  %v3868 = vadd.f32 0.0, %v3867
  %3869 = vmatmul.f32.gmra.mxu0 %v1420
  %v3870 = vpop.f32.mrf.mxu0
  %v3871 = vadd.f32 0.0, %v3870
  %3872 = vmatmul.f32.gmra.mxu0 %v1423
  %v3873 = vpop.f32.mrf.mxu0
  %v3874 = vadd.f32 0.0, %v3873
  %3875 = vmatmul.f32.gmra.mxu0 %v1426
  %v3876 = vpop.f32.mrf.mxu0
  %v3877 = vadd.f32 0.0, %v3876
  %3878 = vmatmul.f32.gmra.mxu0 %v1429
  %v3879 = vpop.f32.mrf.mxu0
  %v3880 = vadd.f32 0.0, %v3879
  %3881 = vmatmul.f32.gmra.mxu0 %v1432
  %v3882 = vpop.f32.mrf.mxu0
  %v3883 = vadd.f32 0.0, %v3882
  %3884 = vmatmul.f32.gmra.mxu0 %v1435
  %v3885 = vpop.f32.mrf.mxu0
  %v3886 = vadd.f32 0.0, %v3885
  %3887 = vmatmul.f32.gmra.mxu0 %v1438
  %v3888 = vpop.f32.mrf.mxu0
  %v3889 = vadd.f32 0.0, %v3888
  %3890 = vmatmul.f32.gmra.mxu0 %v1441
  %v3891 = vpop.f32.mrf.mxu0
  %v3892 = vadd.f32 0.0, %v3891
  %3893 = vmatmul.f32.gmra.mxu0 %v1444
  %v3894 = vpop.f32.mrf.mxu0
  %v3895 = vadd.f32 0.0, %v3894
  %3896 = vmatmul.f32.gmra.mxu0 %v1447
  %v3897 = vpop.f32.mrf.mxu0
  %v3898 = vadd.f32 0.0, %v3897
  %3899 = vmatmul.f32.gmra.mxu0 %v1450
  %v3900 = vpop.f32.mrf.mxu0
  %v3901 = vadd.f32 0.0, %v3900
  %3902 = vdwg.mxu0
  %3904 = vset.pattern.permute.xlu0 0
  %3905 = vperm.xlu0 %3904, %v3808
  %v3906 = vpop.permute.xlu0 %3905
  %3909 = vset.pattern.permute.xlu0 0
  %3910 = vperm.xlu0 %3909, %v3811
  %v3911 = vpop.permute.xlu0 %3910
  %3914 = vset.pattern.permute.xlu0 0
  %3915 = vperm.xlu0 %3914, %v3814
  %v3916 = vpop.permute.xlu0 %3915
  %3919 = vset.pattern.permute.xlu0 0
  %3920 = vperm.xlu0 %3919, %v3817
  %v3921 = vpop.permute.xlu0 %3920
  %3924 = vset.pattern.permute.xlu0 0
  %3925 = vperm.xlu0 %3924, %v3820
  %v3926 = vpop.permute.xlu0 %3925
  %3929 = vset.pattern.permute.xlu0 0
  %3930 = vperm.xlu0 %3929, %v3823
  %v3931 = vpop.permute.xlu0 %3930
  %3934 = vset.pattern.permute.xlu0 0
  %3935 = vperm.xlu0 %3934, %v3826
  %v3936 = vpop.permute.xlu0 %3935
  %3939 = vset.pattern.permute.xlu0 0
  %3940 = vperm.xlu0 %3939, %v3829
  %v3941 = vpop.permute.xlu0 %3940
  %3944 = vset.pattern.permute.xlu0 0
  %3945 = vperm.xlu0 %3944, %v3832
  %v3946 = vpop.permute.xlu0 %3945
  %3949 = vset.pattern.permute.xlu0 0
  %3950 = vperm.xlu0 %3949, %v3835
  %v3951 = vpop.permute.xlu0 %3950
  %3954 = vset.pattern.permute.xlu0 0
  %3955 = vperm.xlu0 %3954, %v3838
  %v3956 = vpop.permute.xlu0 %3955
  %3959 = vset.pattern.permute.xlu0 0
  %3960 = vperm.xlu0 %3959, %v3841
  %v3961 = vpop.permute.xlu0 %3960
  %3964 = vset.pattern.permute.xlu0 0
  %3965 = vperm.xlu0 %3964, %v3844
  %v3966 = vpop.permute.xlu0 %3965
  %3969 = vset.pattern.permute.xlu0 0
  %3970 = vperm.xlu0 %3969, %v3847
  %v3971 = vpop.permute.xlu0 %3970
  %3974 = vset.pattern.permute.xlu0 0
  %3975 = vperm.xlu0 %3974, %v3850
  %v3976 = vpop.permute.xlu0 %3975
  %3979 = vset.pattern.permute.xlu0 0
  %3980 = vperm.xlu0 %3979, %v3853
  %v3981 = vpop.permute.xlu0 %3980
  %3984 = vset.pattern.permute.xlu0 0
  %3985 = vperm.xlu0 %3984, %v3856
  %v3986 = vpop.permute.xlu0 %3985
  %3989 = vset.pattern.permute.xlu0 0
  %3990 = vperm.xlu0 %3989, %v3859
  %v3991 = vpop.permute.xlu0 %3990
  %3994 = vset.pattern.permute.xlu0 0
  %3995 = vperm.xlu0 %3994, %v3862
  %v3996 = vpop.permute.xlu0 %3995
  %3999 = vset.pattern.permute.xlu0 0
  %4000 = vperm.xlu0 %3999, %v3865
  %v4001 = vpop.permute.xlu0 %4000
  %4004 = vset.pattern.permute.xlu0 0
  %4005 = vperm.xlu0 %4004, %v3868
  %v4006 = vpop.permute.xlu0 %4005
  %4009 = vset.pattern.permute.xlu0 0
  %4010 = vperm.xlu0 %4009, %v3871
  %v4011 = vpop.permute.xlu0 %4010
  %4014 = vset.pattern.permute.xlu0 0
  %4015 = vperm.xlu0 %4014, %v3874
  %v4016 = vpop.permute.xlu0 %4015
  %4019 = vset.pattern.permute.xlu0 0
  %4020 = vperm.xlu0 %4019, %v3877
  %v4021 = vpop.permute.xlu0 %4020
  %4024 = vset.pattern.permute.xlu0 0
  %4025 = vperm.xlu0 %4024, %v3880
  %v4026 = vpop.permute.xlu0 %4025
  %4029 = vset.pattern.permute.xlu0 0
  %4030 = vperm.xlu0 %4029, %v3883
  %v4031 = vpop.permute.xlu0 %4030
  %4034 = vset.pattern.permute.xlu0 0
  %4035 = vperm.xlu0 %4034, %v3886
  %v4036 = vpop.permute.xlu0 %4035
  %4039 = vset.pattern.permute.xlu0 0
  %4040 = vperm.xlu0 %4039, %v3889
  %v4041 = vpop.permute.xlu0 %4040
  %4044 = vset.pattern.permute.xlu0 0
  %4045 = vperm.xlu0 %4044, %v3892
  %v4046 = vpop.permute.xlu0 %4045
  %4049 = vset.pattern.permute.xlu0 0
  %4050 = vperm.xlu0 %4049, %v3895
  %v4051 = vpop.permute.xlu0 %4050
  %4054 = vset.pattern.permute.xlu0 0
  %4055 = vperm.xlu0 %4054, %v3898
  %v4056 = vpop.permute.xlu0 %4055
  %4059 = vset.pattern.permute.xlu0 0
  %4060 = vperm.xlu0 %4059, %v3901
  %v4061 = vpop.permute.xlu0 %4060
  %v4063 = vmul.f32 %v3906, %v71
  %v4064 = vmul.f32 %v3911, %v72
  %v4065 = vmul.f32 %v3916, %v73
  %v4066 = vmul.f32 %v3921, %v74
  %v4067 = vmul.f32 %v3926, %v75
  %v4068 = vmul.f32 %v3931, %v76
  %v4069 = vmul.f32 %v3936, %v77
  %v4070 = vmul.f32 %v3941, %v78
  %v4071 = vmul.f32 %v3946, %v79
  %v4072 = vmul.f32 %v3951, %v80
  %v4073 = vmul.f32 %v3956, %v81
  %v4074 = vmul.f32 %v3961, %v82
  %v4075 = vmul.f32 %v3966, %v83
  %v4076 = vmul.f32 %v3971, %v84
  %v4077 = vmul.f32 %v3976, %v85
  %v4078 = vmul.f32 %v3981, %v86
  %v4079 = vmul.f32 %v3986, %v87
  %v4080 = vmul.f32 %v3991, %v88
  %v4081 = vmul.f32 %v3996, %v89
  %v4082 = vmul.f32 %v4001, %v90
  %v4083 = vmul.f32 %v4006, %v91
  %v4084 = vmul.f32 %v4011, %v92
  %v4085 = vmul.f32 %v4016, %v93
  %v4086 = vmul.f32 %v4021, %v94
  %v4087 = vmul.f32 %v4026, %v95
  %v4088 = vmul.f32 %v4031, %v96
  %v4089 = vmul.f32 %v4036, %v97
  %v4090 = vmul.f32 %v4041, %v98
  %v4091 = vmul.f32 %v4046, %v99
  %v4092 = vmul.f32 %v4051, %v100
  %v4093 = vmul.f32 %v4056, %v101
  %v4094 = vmul.f32 %v4061, %v102
  %4095 = vmatpush.msra.mxu0 %v4078
  %4096 = vmatpush.msra.mxu0 %v4077
  %4097 = vmatpush.msra.mxu0 %v4076
  %4098 = vmatpush.msra.mxu0 %v4075
  %4099 = vmatpush.msra.mxu0 %v4074
  %4100 = vmatpush.msra.mxu0 %v4073
  %4101 = vmatpush.msra.mxu0 %v4072
  %4102 = vmatpush.msra.mxu0 %v4071
  %4103 = vmatpush.msra.mxu0 %v4070
  %4104 = vmatpush.msra.mxu0 %v4069
  %4105 = vmatpush.msra.mxu0 %v4068
  %4106 = vmatpush.msra.mxu0 %v4067
  %4107 = vmatpush.msra.mxu0 %v4066
  %4108 = vmatpush.msra.mxu0 %v4065
  %4109 = vmatpush.msra.mxu0 %v4064
  %4110 = vmatpush.msra.mxu0 %v4063
  %4111 = vmatmul.f32.gmra.mxu0 %v169
  %v4112 = vpop.f32.mrf.mxu0
  %v4113 = vadd.f32 0.0, %v4112
  %4114 = vmatmul.f32.gmra.mxu0 %v171
  %v4115 = vpop.f32.mrf.mxu0
  %v4116 = vadd.f32 0.0, %v4115
  %4117 = vdwg.mxu0
  %4118 = vmatpush.msra.mxu0 %v4094
  %4119 = vmatpush.msra.mxu0 %v4093
  %4120 = vmatpush.msra.mxu0 %v4092
  %4121 = vmatpush.msra.mxu0 %v4091
  %4122 = vmatpush.msra.mxu0 %v4090
  %4123 = vmatpush.msra.mxu0 %v4089
  %4124 = vmatpush.msra.mxu0 %v4088
  %4125 = vmatpush.msra.mxu0 %v4087
  %4126 = vmatpush.msra.mxu0 %v4086
  %4127 = vmatpush.msra.mxu0 %v4085
  %4128 = vmatpush.msra.mxu0 %v4084
  %4129 = vmatpush.msra.mxu0 %v4083
  %4130 = vmatpush.msra.mxu0 %v4082
  %4131 = vmatpush.msra.mxu0 %v4081
  %4132 = vmatpush.msra.mxu0 %v4080
  %4133 = vmatpush.msra.mxu0 %v4079
  %4134 = vmatmul.f32.gmra.mxu0 %v170
  %v4135 = vpop.f32.mrf.mxu0
  %v4136 = vadd.f32 %v4113, %v4135
  %4137 = vmatmul.f32.gmra.mxu0 %v172
  %v4138 = vpop.f32.mrf.mxu0
  %v4139 = vadd.f32 %v4116, %v4138
  %4140 = vdwg.mxu0
  %v4142 = vsel %vm326, %v4136, 0
  %v4145 = vsel %vm326, %v4139, 0
  %4147 = vmatpush.msra.mxu0 0.0
  %4148 = vmatpush.msra.mxu0 0.0
  %4149 = vmatpush.msra.mxu0 0.0
  %4150 = vmatpush.msra.mxu0 0.0
  %4151 = vmatpush.msra.mxu0 0.0
  %4152 = vmatpush.msra.mxu0 0.0
  %4153 = vmatpush.msra.mxu0 0.0
  %4154 = vmatpush.msra.mxu0 0.0
  %4155 = vmatpush.msra.mxu0 0.0
  %4156 = vmatpush.msra.mxu0 0.0
  %4157 = vmatpush.msra.mxu0 0.0
  %4158 = vmatpush.msra.mxu0 0.0
  %4159 = vmatpush.msra.mxu0 0.0
  %4160 = vmatpush.msra.mxu0 0.0
  %4161 = vmatpush.msra.mxu0 %v3297
  %4162 = vmatpush.msra.mxu0 %v3294
  %4163 = vmatmul.f32.gmra.mxu0 %v4142
  %v4164 = vpop.f32.mrf.mxu0
  %v4165 = vadd.f32 0.0, %v4164
  %4166 = vmatmul.f32.gmra.mxu0 %v4145
  %v4167 = vpop.f32.mrf.mxu0
  %v4168 = vadd.f32 0.0, %v4167
  %4169 = vdwg.mxu0
  %v4171 = vperm.slane %v280, 0
  %v4174 = vsel %vm590, %v4165, 0
  %v4177 = vsel %vm590, %v4168, 0
  %4179 = vmatpush.msra.mxu0 0.0
  %4180 = vmatpush.msra.mxu0 0.0
  %4181 = vmatpush.msra.mxu0 0.0
  %4182 = vmatpush.msra.mxu0 0.0
  %4183 = vmatpush.msra.mxu0 0.0
  %4184 = vmatpush.msra.mxu0 0.0
  %4185 = vmatpush.msra.mxu0 0.0
  %4186 = vmatpush.msra.mxu0 0.0
  %4187 = vmatpush.msra.mxu0 0.0
  %4188 = vmatpush.msra.mxu0 0.0
  %4189 = vmatpush.msra.mxu0 0.0
  %4190 = vmatpush.msra.mxu0 0.0
  %4191 = vmatpush.msra.mxu0 %v273
  %4192 = vmatpush.msra.mxu0 %v272
  %4193 = vmatpush.msra.mxu0 %v271
  %4194 = vmatpush.msra.mxu0 %v270
  %4195 = vmatmul.f32.gmra.mxu0 %v4174
  %v4196 = vpop.f32.mrf.mxu0
  %v4197 = vadd.f32 %v4171, %v4196
  %4198 = vmatmul.f32.gmra.mxu0 %v4177
  %v4199 = vpop.f32.mrf.mxu0
  %v4200 = vadd.f32 %v4171, %v4199
  %4201 = vdwg.mxu0
  %v4202 = vadd.f32 %v3207, %v4197
  %v4203 = vadd.f32 %v3208, %v4200
  %4204 = vmatpush.msra.mxu0 0.0
  %4205 = vmatpush.msra.mxu0 0.0
  %4206 = vmatpush.msra.mxu0 0.0
  %4207 = vmatpush.msra.mxu0 0.0
  %4208 = vmatpush.msra.mxu0 0.0
  %4209 = vmatpush.msra.mxu0 0.0
  %4210 = vmatpush.msra.mxu0 0.0
  %4211 = vmatpush.msra.mxu0 0.0
  %4212 = vmatpush.msra.mxu0 0.0
  %4213 = vmatpush.msra.mxu0 0.0
  %4214 = vmatpush.msra.mxu0 0.0
  %4215 = vmatpush.msra.mxu0 0.0
  %4216 = vmatpush.msra.mxu0 0.0
  %4217 = vmatpush.msra.mxu0 0.0
  %4218 = vmatpush.msra.mxu0 %v4203
  %4219 = vmatpush.msra.mxu0 %v4202
  %4220 = vmatmul.f32.gmra.mxu0 %v328
  %v4221 = vpop.f32.mrf.mxu0
  %v4222 = vadd.f32 0.0, %v4221
  %4223 = vmatmul.f32.gmra.mxu0 %v331
  %v4224 = vpop.f32.mrf.mxu0
  %v4225 = vadd.f32 0.0, %v4224
  %4226 = vdwg.mxu0
  %v4227 = vsub.f32 %v4202, %v4222
  %v4228 = vsub.f32 %v4203, %v4225
  %v4230 = vsel %vm590, %v4227, 0
  %v4233 = vsel %vm590, %v4228, 0
  %4235 = vmatpush.msra.mxu0 0.0
  %4236 = vmatpush.msra.mxu0 0.0
  %4237 = vmatpush.msra.mxu0 0.0
  %4238 = vmatpush.msra.mxu0 0.0
  %4239 = vmatpush.msra.mxu0 0.0
  %4240 = vmatpush.msra.mxu0 0.0
  %4241 = vmatpush.msra.mxu0 0.0
  %4242 = vmatpush.msra.mxu0 0.0
  %4243 = vmatpush.msra.mxu0 0.0
  %4244 = vmatpush.msra.mxu0 0.0
  %4245 = vmatpush.msra.mxu0 0.0
  %4246 = vmatpush.msra.mxu0 0.0
  %4247 = vmatpush.msra.mxu0 %v284
  %4248 = vmatpush.msra.mxu0 %v283
  %4249 = vmatpush.msra.mxu0 %v282
  %4250 = vmatpush.msra.mxu0 %v281
  %4251 = vmatmul.f32.gmra.mxu0 %v4230
  %v4252 = vpop.f32.mrf.mxu0
  %v4253 = vadd.f32 0.0, %v4252
  %4254 = vmatmul.f32.gmra.mxu0 %v4233
  %v4255 = vpop.f32.mrf.mxu0
  %v4256 = vadd.f32 0.0, %v4255
  %4257 = vdwg.mxu0
  %v4258 = vmax.f32 %v4253, 0.0
  %v4259 = vmax.f32 %v4256, 0.0
  %v4261 = vsel %vm590, %v4258, 0
  %v4264 = vsel %vm590, %v4259, 0
  %4266 = vmatpush.msra.mxu0 0.0
  %4267 = vmatpush.msra.mxu0 0.0
  %4268 = vmatpush.msra.mxu0 0.0
  %4269 = vmatpush.msra.mxu0 0.0
  %4270 = vmatpush.msra.mxu0 0.0
  %4271 = vmatpush.msra.mxu0 0.0
  %4272 = vmatpush.msra.mxu0 0.0
  %4273 = vmatpush.msra.mxu0 0.0
  %4274 = vmatpush.msra.mxu0 0.0
  %4275 = vmatpush.msra.mxu0 0.0
  %4276 = vmatpush.msra.mxu0 0.0
  %4277 = vmatpush.msra.mxu0 0.0
  %4278 = vmatpush.msra.mxu0 %v288
  %4279 = vmatpush.msra.mxu0 %v287
  %4280 = vmatpush.msra.mxu0 %v286
  %4281 = vmatpush.msra.mxu0 %v285
  %4282 = vmatmul.f32.gmra.mxu0 %v4261
  %v4283 = vpop.f32.mrf.mxu0
  %v4284 = vadd.f32 0.0, %v4283
  %4285 = vmatmul.f32.gmra.mxu0 %v4264
  %v4286 = vpop.f32.mrf.mxu0
  %v4287 = vadd.f32 0.0, %v4286
  %4288 = vdwg.mxu0
  %v4289 = vadd.f32 %v4227, %v4284
  %v4290 = vadd.f32 %v4228, %v4287
  %4291 = vmatpush.msra.mxu0 0.0
  %4292 = vmatpush.msra.mxu0 0.0
  %4293 = vmatpush.msra.mxu0 0.0
  %4294 = vmatpush.msra.mxu0 0.0
  %4295 = vmatpush.msra.mxu0 0.0
  %4296 = vmatpush.msra.mxu0 0.0
  %4297 = vmatpush.msra.mxu0 0.0
  %4298 = vmatpush.msra.mxu0 0.0
  %4299 = vmatpush.msra.mxu0 0.0
  %4300 = vmatpush.msra.mxu0 0.0
  %4301 = vmatpush.msra.mxu0 0.0
  %4302 = vmatpush.msra.mxu0 0.0
  %4303 = vmatpush.msra.mxu0 0.0
  %4304 = vmatpush.msra.mxu0 0.0
  %4305 = vmatpush.msra.mxu0 %v4290
  %4306 = vmatpush.msra.mxu0 %v4289
  %4307 = vmatmul.f32.gmra.mxu0 %v328
  %v4308 = vpop.f32.mrf.mxu0
  %v4309 = vadd.f32 0.0, %v4308
  %4310 = vmatmul.f32.gmra.mxu0 %v331
  %v4311 = vpop.f32.mrf.mxu0
  %v4312 = vadd.f32 0.0, %v4311
  %4313 = vdwg.mxu0
  %v4314 = vsub.f32 %v4289, %v4309
  %v4315 = vsub.f32 %v4290, %v4312
  %v4316 = vadd.f32 %v3202, %v4222
  %v4317 = vadd.f32 %v3205, %v4225
  %v4318 = vadd.f32 %v4316, %v4309
  %v4319 = vadd.f32 %v4317, %v4312
  %4320 = vmatpush.msra.mxu0 0.0
  %4321 = vmatpush.msra.mxu0 0.0
  %4322 = vmatpush.msra.mxu0 0.0
  %4323 = vmatpush.msra.mxu0 0.0
  %4324 = vmatpush.msra.mxu0 0.0
  %4325 = vmatpush.msra.mxu0 0.0
  %4326 = vmatpush.msra.mxu0 0.0
  %4327 = vmatpush.msra.mxu0 0.0
  %4328 = vmatpush.msra.mxu0 0.0
  %4329 = vmatpush.msra.mxu0 0.0
  %4330 = vmatpush.msra.mxu0 0.0
  %4331 = vmatpush.msra.mxu0 0.0
  %4332 = vmatpush.msra.mxu0 0.0
  %4333 = vmatpush.msra.mxu0 0.0
  %4334 = vmatpush.msra.mxu0 %v4319
  %4335 = vmatpush.msra.mxu0 %v4318
  %4336 = vmatmul.f32.gmra.mxu0 %v431
  %v4337 = vpop.f32.mrf.mxu0
  %v4338 = vadd.f32 0.0, %v4337
  %4339 = vmatmul.f32.gmra.mxu0 %v434
  %v4340 = vpop.f32.mrf.mxu0
  %v4341 = vadd.f32 0.0, %v4340
  %4342 = vdwg.mxu0
  %v4344 = vsel %vm590, %v4318, 0
  %v4347 = vsel %vm590, %v4319, 0
  %4349 = vmatpush.msra.mxu0 0.0
  %4350 = vmatpush.msra.mxu0 0.0
  %4351 = vmatpush.msra.mxu0 0.0
  %4352 = vmatpush.msra.mxu0 0.0
  %4353 = vmatpush.msra.mxu0 0.0
  %4354 = vmatpush.msra.mxu0 0.0
  %4355 = vmatpush.msra.mxu0 0.0
  %4356 = vmatpush.msra.mxu0 0.0
  %4357 = vmatpush.msra.mxu0 0.0
  %4358 = vmatpush.msra.mxu0 0.0
  %4359 = vmatpush.msra.mxu0 0.0
  %4360 = vmatpush.msra.mxu0 0.0
  %4361 = vmatpush.msra.mxu0 %v296
  %4362 = vmatpush.msra.mxu0 %v295
  %4363 = vmatpush.msra.mxu0 %v294
  %4364 = vmatpush.msra.mxu0 %v293
  %4365 = vmatmul.f32.gmra.mxu0 %v4344
  %v4366 = vpop.f32.mrf.mxu0
  %v4367 = vadd.f32 0.0, %v4366
  %4368 = vmatmul.f32.gmra.mxu0 %v4347
  %v4369 = vpop.f32.mrf.mxu0
  %v4370 = vadd.f32 0.0, %v4369
  %4371 = vdwg.mxu0
  %v4373 = vsel %vm590, %v4338, 0
  %v4376 = vsel %vm590, %v4341, 0
  %4378 = vmatpush.msra.mxu0 0.0
  %4379 = vmatpush.msra.mxu0 0.0
  %4380 = vmatpush.msra.mxu0 0.0
  %4381 = vmatpush.msra.mxu0 0.0
  %4382 = vmatpush.msra.mxu0 0.0
  %4383 = vmatpush.msra.mxu0 0.0
  %4384 = vmatpush.msra.mxu0 0.0
  %4385 = vmatpush.msra.mxu0 0.0
  %4386 = vmatpush.msra.mxu0 0.0
  %4387 = vmatpush.msra.mxu0 0.0
  %4388 = vmatpush.msra.mxu0 0.0
  %4389 = vmatpush.msra.mxu0 0.0
  %4390 = vmatpush.msra.mxu0 %v292
  %4391 = vmatpush.msra.mxu0 %v291
  %4392 = vmatpush.msra.mxu0 %v290
  %4393 = vmatpush.msra.mxu0 %v289
  %4394 = vmatmul.f32.gmra.mxu0 %v4373
  %v4395 = vpop.f32.mrf.mxu0
  %v4396 = vadd.f32 %v4367, %v4395
  %4397 = vmatmul.f32.gmra.mxu0 %v4376
  %v4398 = vpop.f32.mrf.mxu0
  %v4399 = vadd.f32 %v4370, %v4398
  %4400 = vdwg.mxu0
  %4401 = vmatpush.msra.mxu0 0.0
  %4402 = vmatpush.msra.mxu0 0.0
  %4403 = vmatpush.msra.mxu0 0.0
  %4404 = vmatpush.msra.mxu0 0.0
  %4405 = vmatpush.msra.mxu0 0.0
  %4406 = vmatpush.msra.mxu0 0.0
  %4407 = vmatpush.msra.mxu0 0.0
  %4408 = vmatpush.msra.mxu0 0.0
  %4409 = vmatpush.msra.mxu0 0.0
  %4410 = vmatpush.msra.mxu0 0.0
  %4411 = vmatpush.msra.mxu0 0.0
  %4412 = vmatpush.msra.mxu0 0.0
  %4413 = vmatpush.msra.mxu0 0.0
  %4414 = vmatpush.msra.mxu0 0.0
  %4415 = vmatpush.msra.mxu0 %v4319
  %4416 = vmatpush.msra.mxu0 %v4318
  %4417 = vmatmul.f32.gmra.mxu0 %v525
  %v4418 = vpop.f32.mrf.mxu0
  %v4419 = vadd.f32 0.0, %v4418
  %4420 = vmatmul.f32.gmra.mxu0 %v528
  %v4421 = vpop.f32.mrf.mxu0
  %v4422 = vadd.f32 0.0, %v4421
  %4423 = vdwg.mxu0
  %v4425 = vsel %vm590, %v4419, 0
  %v4428 = vsel %vm590, %v4422, 0
  %4430 = vmatpush.msra.mxu0 0.0
  %4431 = vmatpush.msra.mxu0 0.0
  %4432 = vmatpush.msra.mxu0 0.0
  %4433 = vmatpush.msra.mxu0 0.0
  %4434 = vmatpush.msra.mxu0 0.0
  %4435 = vmatpush.msra.mxu0 0.0
  %4436 = vmatpush.msra.mxu0 0.0
  %4437 = vmatpush.msra.mxu0 0.0
  %4438 = vmatpush.msra.mxu0 0.0
  %4439 = vmatpush.msra.mxu0 0.0
  %4440 = vmatpush.msra.mxu0 0.0
  %4441 = vmatpush.msra.mxu0 0.0
  %4442 = vmatpush.msra.mxu0 %v300
  %4443 = vmatpush.msra.mxu0 %v299
  %4444 = vmatpush.msra.mxu0 %v298
  %4445 = vmatpush.msra.mxu0 %v297
  %4446 = vmatmul.f32.gmra.mxu0 %v4425
  %v4447 = vpop.f32.mrf.mxu0
  %v4448 = vadd.f32 0.0, %v4447
  %4449 = vmatmul.f32.gmra.mxu0 %v4428
  %v4450 = vpop.f32.mrf.mxu0
  %v4451 = vadd.f32 0.0, %v4450
  %4452 = vdwg.mxu0
  %v4453 = vadd.f32 %v4396, %v4448
  %v4454 = vadd.f32 %v4399, %v4451
  %v4455 = vadd.f32 %v402, %v4453
  %v4456 = vadd.f32 %v405, %v4454
  %v4457 = vsel %vm590, %v4314, 0.0
  %4458 = vadd.xlane.f32.xlu0 %v4457
  %v4459 = vpop.xlane.xlu0 %4458
  %v4460 = vsel %vm590, %v4315, 0.0
  %4461 = vadd.xlane.f32.xlu0 %v4460
  %v4462 = vpop.xlane.xlu0 %4461
  %v4463 = vmul.f32 %v4459, %v1990
  %v4464 = vmul.f32 %v4462, %v1990
  %v4465 = vsub.f32 %v4314, %v4463
  %v4466 = vsub.f32 %v4315, %v4464
  %v4467 = vmul.f32 %v4465, %v4465
  %v4468 = vmul.f32 %v4466, %v4466
  %v4469 = vsel %vm590, %v4467, 0.0
  %4470 = vadd.xlane.f32.xlu0 %v4469
  %v4471 = vpop.xlane.xlu0 %4470
  %v4472 = vsel %vm590, %v4468, 0.0
  %4473 = vadd.xlane.f32.xlu0 %v4472
  %v4474 = vpop.xlane.xlu0 %4473
  %v4475 = vmul.f32 %v4471, %v1990
  %v4476 = vmul.f32 %v4474, %v1990
  %v4477 = vadd.f32 %v4475, 1e-05
  %v4478 = vadd.f32 %v4476, 1e-05
  %v4479 = vrsqrt.pop %v4477
  %v4480 = vmul.f32 %v4479, %v4477
  %v4481 = vmul.f32 %v4480, %v4479
  %v4482 = vmul.f32 0.5, %v4481
  %v4483 = vsub.f32 1.5, %v4482
  %v4484 = vmul.f32 %v4479, %v4483
  %vm4485 = vweird.f32 %v4477
  %vm4486 = vweird.f32 %v4479
  %vm4487 = vmor %vm4485, %vm4486
  %v4488 = vsel %vm4487, %v4479, %v4484
  %v4489 = vrsqrt.pop %v4478
  %v4490 = vmul.f32 %v4489, %v4478
  %v4491 = vmul.f32 %v4490, %v4489
  %v4492 = vmul.f32 0.5, %v4491
  %v4493 = vsub.f32 1.5, %v4492
  %v4494 = vmul.f32 %v4489, %v4493
  %vm4495 = vweird.f32 %v4478
  %vm4496 = vweird.f32 %v4489
  %vm4497 = vmor %vm4495, %vm4496
  %v4498 = vsel %vm4497, %v4489, %v4494
  %v4499 = vmul.f32 %v4465, %v4488
  %v4500 = vmul.f32 %v4466, %v4498
  %v4502 = vperm.slane %v310, 0
  %v4504 = vmul.f32 %v4499, %v4502
  %v4505 = vmul.f32 %v4500, %v4502
  %v4507 = vperm.slane %v312, 0
  %v4509 = vadd.f32 %v4504, %v4507
  %v4510 = vadd.f32 %v4505, %v4507
  %v4511 = vsel %vm590, %v4509, 0.0
  %v4512 = vsel %vm590, %v4510, 0.0
  %v4513 = vadd.f32 %v4511, %v4512
  %v4514 = vrot.slane %v4513, 4
  %v4515 = vadd.f32 %v4513, %v4514
  %v4516 = vrot.slane %v4515, 2
  %v4517 = vadd.f32 %v4515, %v4516
  %v4518 = vrot.slane %v4517, 1
  %v4519 = vadd.f32 %v4517, %v4518
  %v4520 = vmul.f32 %v4519, %v374
  %v4521 = vsub.f32 %v4509, %v4520
  %v4522 = vsub.f32 %v4510, %v4520
  %v4524 = vsel %vm590, %v4521, 0
  %v4527 = vsel %vm590, %v4522, 0
  %4529 = vmatpush.msra.mxu0 0.0
  %4530 = vmatpush.msra.mxu0 0.0
  %4531 = vmatpush.msra.mxu0 0.0
  %4532 = vmatpush.msra.mxu0 0.0
  %4533 = vmatpush.msra.mxu0 0.0
  %4534 = vmatpush.msra.mxu0 0.0
  %4535 = vmatpush.msra.mxu0 0.0
  %4536 = vmatpush.msra.mxu0 0.0
  %4537 = vmatpush.msra.mxu0 0.0
  %4538 = vmatpush.msra.mxu0 0.0
  %4539 = vmatpush.msra.mxu0 0.0
  %4540 = vmatpush.msra.mxu0 0.0
  %4541 = vmatpush.msra.mxu0 %v304
  %4542 = vmatpush.msra.mxu0 %v303
  %4543 = vmatpush.msra.mxu0 %v302
  %4544 = vmatpush.msra.mxu0 %v301
  %4545 = vmatmul.f32.gmra.mxu0 %v4524
  %v4546 = vpop.f32.mrf.mxu0
  %4547 = vmatmul.f32.gmra.mxu0 %v4527
  %v4548 = vpop.f32.mrf.mxu0
  %v4549 = vadd.f32 0.0, %v4548
  %4550 = vdwg.mxu0
  %v4552 = vsel %vm358, %v4455, 0
  %v4555 = vsel %vm358, %v4456, 0
  %v4558 = vsel %vm465, %v306, 0
  %4560 = vmatpush.msra.mxu0 0.0
  %4561 = vmatpush.msra.mxu0 0.0
  %4562 = vmatpush.msra.mxu0 0.0
  %4563 = vmatpush.msra.mxu0 0.0
  %4564 = vmatpush.msra.mxu0 0.0
  %4565 = vmatpush.msra.mxu0 0.0
  %4566 = vmatpush.msra.mxu0 0.0
  %4567 = vmatpush.msra.mxu0 0.0
  %4568 = vmatpush.msra.mxu0 0.0
  %4569 = vmatpush.msra.mxu0 0.0
  %4570 = vmatpush.msra.mxu0 0.0
  %4571 = vmatpush.msra.mxu0 0.0
  %4572 = vmatpush.msra.mxu0 0.0
  %4573 = vmatpush.msra.mxu0 0.0
  %4574 = vmatpush.msra.mxu0 0.0
  %4575 = vmatpush.msra.mxu0 %v4558
  %4576 = vmatmul.f32.gmra.mxu0 %v4552
  %v4577 = vpop.f32.mrf.mxu0
  %4578 = vmatmul.f32.gmra.mxu0 %v4555
  %v4579 = vpop.f32.mrf.mxu0
  %v4580 = vadd.f32 %v4549, %v4579
  %4581 = vdwg.mxu0
  %v4583 = vperm.slane %v305, 0
  %v4585 = vadd.f32 %v4580, %v4583
  %4586 = vst.msk [vmem:[%s22] sm:$0xff] %vm358, %v4585
  %s4587 = scalar_lea.vmem %s0, 16
  %v4588 = vld [vmem:[%s4587] sm:$0xff]
  %v4589 = vld [vmem:[%s4587 + $0x8] sm:$0xff]
  %4590 = vmatpush.msra.mxu0 0.0
  %4591 = vmatpush.msra.mxu0 0.0
  %4592 = vmatpush.msra.mxu0 0.0
  %4593 = vmatpush.msra.mxu0 0.0
  %4594 = vmatpush.msra.mxu0 0.0
  %4595 = vmatpush.msra.mxu0 0.0
  %4596 = vmatpush.msra.mxu0 0.0
  %4597 = vmatpush.msra.mxu0 0.0
  %4598 = vmatpush.msra.mxu0 0.0
  %4599 = vmatpush.msra.mxu0 0.0
  %4600 = vmatpush.msra.mxu0 0.0
  %4601 = vmatpush.msra.mxu0 0.0
  %4602 = vmatpush.msra.mxu0 0.0
  %4603 = vmatpush.msra.mxu0 0.0
  %4604 = vmatpush.msra.mxu0 %v4589
  %4605 = vmatpush.msra.mxu0 %v4588
  %4606 = vmatmul.f32.gmra.mxu0 %v328
  %v4607 = vpop.f32.mrf.mxu0
  %v4608 = vadd.f32 0.0, %v4607
  %4609 = vmatmul.f32.gmra.mxu0 %v331
  %v4610 = vpop.f32.mrf.mxu0
  %v4611 = vadd.f32 0.0, %v4610
  %4612 = vdwg.mxu0
  %v4613 = vsub.f32 %v4588, %v4608
  %v4614 = vsub.f32 %v4589, %v4611
  %v4615 = vsel %vm358, %v4588, 0.0
  %v4616 = vsel %vm358, %v4589, 0.0
  %v4617 = vadd.f32 %v4615, %v4616
  %v4618 = vrot.slane %v4617, 4
  %v4619 = vadd.f32 %v4617, %v4618
  %v4620 = vrot.slane %v4619, 2
  %v4621 = vadd.f32 %v4619, %v4620
  %v4622 = vrot.slane %v4621, 1
  %v4623 = vadd.f32 %v4621, %v4622
  %v4624 = vmul.f32 %v4623, %v374
  %v4625 = vmul.f32 %v322, %v4624
  %v4626 = vmul.f32 %v323, %v4624
  %4627 = vmatpush.msra.mxu0 0.0
  %4628 = vmatpush.msra.mxu0 0.0
  %4629 = vmatpush.msra.mxu0 0.0
  %4630 = vmatpush.msra.mxu0 0.0
  %4631 = vmatpush.msra.mxu0 0.0
  %4632 = vmatpush.msra.mxu0 0.0
  %4633 = vmatpush.msra.mxu0 0.0
  %4634 = vmatpush.msra.mxu0 0.0
  %4635 = vmatpush.msra.mxu0 0.0
  %4636 = vmatpush.msra.mxu0 0.0
  %4637 = vmatpush.msra.mxu0 0.0
  %4638 = vmatpush.msra.mxu0 0.0
  %4639 = vmatpush.msra.mxu0 0.0
  %4640 = vmatpush.msra.mxu0 0.0
  %4641 = vmatpush.msra.mxu0 %v4611
  %4642 = vmatpush.msra.mxu0 %v4608
  %4643 = vmatmul.f32.gmra.mxu0 %v379
  %v4644 = vpop.f32.mrf.mxu0
  %v4645 = vadd.f32 %v4625, %v4644
  %4646 = vmatmul.f32.gmra.mxu0 %v382
  %v4647 = vpop.f32.mrf.mxu0
  %v4648 = vadd.f32 %v4626, %v4647
  %4649 = vdwg.mxu0
  %4650 = vmatpush.msra.mxu0 0.0
  %4651 = vmatpush.msra.mxu0 0.0
  %4652 = vmatpush.msra.mxu0 0.0
  %4653 = vmatpush.msra.mxu0 0.0
  %4654 = vmatpush.msra.mxu0 0.0
  %4655 = vmatpush.msra.mxu0 0.0
  %4656 = vmatpush.msra.mxu0 0.0
  %4657 = vmatpush.msra.mxu0 0.0
  %4658 = vmatpush.msra.mxu0 0.0
  %4659 = vmatpush.msra.mxu0 0.0
  %4660 = vmatpush.msra.mxu0 0.0
  %4661 = vmatpush.msra.mxu0 0.0
  %4662 = vmatpush.msra.mxu0 0.0
  %4663 = vmatpush.msra.mxu0 0.0
  %4664 = vmatpush.msra.mxu0 %v4614
  %4665 = vmatpush.msra.mxu0 %v4613
  %4666 = vmatmul.f32.gmra.mxu0 %v379
  %v4667 = vpop.f32.mrf.mxu0
  %v4668 = vadd.f32 0.0, %v4667
  %4669 = vmatmul.f32.gmra.mxu0 %v382
  %v4670 = vpop.f32.mrf.mxu0
  %v4671 = vadd.f32 0.0, %v4670
  %4672 = vdwg.mxu0
  %4673 = vmatpush.msra.mxu0 0.0
  %4674 = vmatpush.msra.mxu0 0.0
  %4675 = vmatpush.msra.mxu0 0.0
  %4676 = vmatpush.msra.mxu0 0.0
  %4677 = vmatpush.msra.mxu0 0.0
  %4678 = vmatpush.msra.mxu0 0.0
  %4679 = vmatpush.msra.mxu0 0.0
  %4680 = vmatpush.msra.mxu0 0.0
  %4681 = vmatpush.msra.mxu0 0.0
  %4682 = vmatpush.msra.mxu0 0.0
  %4683 = vmatpush.msra.mxu0 0.0
  %4684 = vmatpush.msra.mxu0 0.0
  %4685 = vmatpush.msra.mxu0 0.0
  %4686 = vmatpush.msra.mxu0 0.0
  %4687 = vmatpush.msra.mxu0 %v4589
  %4688 = vmatpush.msra.mxu0 %v4588
  %4689 = vmatmul.f32.gmra.mxu0 %v431
  %v4690 = vpop.f32.mrf.mxu0
  %v4691 = vadd.f32 0.0, %v4690
  %4692 = vmatmul.f32.gmra.mxu0 %v434
  %v4693 = vpop.f32.mrf.mxu0
  %v4694 = vadd.f32 0.0, %v4693
  %4695 = vdwg.mxu0
  %v4697 = vsel %vm358, %v4588, 0
  %v4700 = vsel %vm358, %v4589, 0
  %4702 = vmatpush.msra.mxu0 0.0
  %4703 = vmatpush.msra.mxu0 0.0
  %4704 = vmatpush.msra.mxu0 0.0
  %4705 = vmatpush.msra.mxu0 0.0
  %4706 = vmatpush.msra.mxu0 0.0
  %4707 = vmatpush.msra.mxu0 0.0
  %4708 = vmatpush.msra.mxu0 0.0
  %4709 = vmatpush.msra.mxu0 0.0
  %4710 = vmatpush.msra.mxu0 0.0
  %4711 = vmatpush.msra.mxu0 0.0
  %4712 = vmatpush.msra.mxu0 0.0
  %4713 = vmatpush.msra.mxu0 0.0
  %4714 = vmatpush.msra.mxu0 0.0
  %4715 = vmatpush.msra.mxu0 0.0
  %4716 = vmatpush.msra.mxu0 0.0
  %4717 = vmatpush.msra.mxu0 %v467
  %4718 = vmatmul.f32.gmra.mxu0 %v4697
  %v4719 = vpop.f32.mrf.mxu0
  %v4720 = vadd.f32 0.0, %v4719
  %4721 = vmatmul.f32.gmra.mxu0 %v4700
  %v4722 = vpop.f32.mrf.mxu0
  %v4723 = vadd.f32 0.0, %v4722
  %4724 = vdwg.mxu0
  %v4726 = vsel %vm358, %v4691, 0
  %v4729 = vsel %vm358, %v4694, 0
  %4731 = vmatpush.msra.mxu0 0.0
  %4732 = vmatpush.msra.mxu0 0.0
  %4733 = vmatpush.msra.mxu0 0.0
  %4734 = vmatpush.msra.mxu0 0.0
  %4735 = vmatpush.msra.mxu0 0.0
  %4736 = vmatpush.msra.mxu0 0.0
  %4737 = vmatpush.msra.mxu0 0.0
  %4738 = vmatpush.msra.mxu0 0.0
  %4739 = vmatpush.msra.mxu0 0.0
  %4740 = vmatpush.msra.mxu0 0.0
  %4741 = vmatpush.msra.mxu0 0.0
  %4742 = vmatpush.msra.mxu0 0.0
  %4743 = vmatpush.msra.mxu0 0.0
  %4744 = vmatpush.msra.mxu0 0.0
  %4745 = vmatpush.msra.mxu0 0.0
  %4746 = vmatpush.msra.mxu0 %v499
  %4747 = vmatmul.f32.gmra.mxu0 %v4726
  %v4748 = vpop.f32.mrf.mxu0
  %v4749 = vadd.f32 %v4720, %v4748
  %4750 = vmatmul.f32.gmra.mxu0 %v4729
  %v4751 = vpop.f32.mrf.mxu0
  %v4752 = vadd.f32 %v4723, %v4751
  %4753 = vdwg.mxu0
  %4754 = vmatpush.msra.mxu0 0.0
  %4755 = vmatpush.msra.mxu0 0.0
  %4756 = vmatpush.msra.mxu0 0.0
  %4757 = vmatpush.msra.mxu0 0.0
  %4758 = vmatpush.msra.mxu0 0.0
  %4759 = vmatpush.msra.mxu0 0.0
  %4760 = vmatpush.msra.mxu0 0.0
  %4761 = vmatpush.msra.mxu0 0.0
  %4762 = vmatpush.msra.mxu0 0.0
  %4763 = vmatpush.msra.mxu0 0.0
  %4764 = vmatpush.msra.mxu0 0.0
  %4765 = vmatpush.msra.mxu0 0.0
  %4766 = vmatpush.msra.mxu0 0.0
  %4767 = vmatpush.msra.mxu0 0.0
  %4768 = vmatpush.msra.mxu0 %v4589
  %4769 = vmatpush.msra.mxu0 %v4588
  %4770 = vmatmul.f32.gmra.mxu0 %v525
  %v4771 = vpop.f32.mrf.mxu0
  %v4772 = vadd.f32 0.0, %v4771
  %4773 = vmatmul.f32.gmra.mxu0 %v528
  %v4774 = vpop.f32.mrf.mxu0
  %v4775 = vadd.f32 0.0, %v4774
  %4776 = vdwg.mxu0
  %v4778 = vsel %vm358, %v4772, 0
  %v4781 = vsel %vm358, %v4775, 0
  %4783 = vmatpush.msra.mxu0 0.0
  %4784 = vmatpush.msra.mxu0 0.0
  %4785 = vmatpush.msra.mxu0 0.0
  %4786 = vmatpush.msra.mxu0 0.0
  %4787 = vmatpush.msra.mxu0 0.0
  %4788 = vmatpush.msra.mxu0 0.0
  %4789 = vmatpush.msra.mxu0 0.0
  %4790 = vmatpush.msra.mxu0 0.0
  %4791 = vmatpush.msra.mxu0 0.0
  %4792 = vmatpush.msra.mxu0 0.0
  %4793 = vmatpush.msra.mxu0 0.0
  %4794 = vmatpush.msra.mxu0 0.0
  %4795 = vmatpush.msra.mxu0 0.0
  %4796 = vmatpush.msra.mxu0 0.0
  %4797 = vmatpush.msra.mxu0 0.0
  %4798 = vmatpush.msra.mxu0 %v560
  %4799 = vmatmul.f32.gmra.mxu0 %v4778
  %v4800 = vpop.f32.mrf.mxu0
  %v4801 = vadd.f32 0.0, %v4800
  %4802 = vmatmul.f32.gmra.mxu0 %v4781
  %v4803 = vpop.f32.mrf.mxu0
  %v4804 = vadd.f32 0.0, %v4803
  %4805 = vdwg.mxu0
  %v4806 = vadd.f32 %v4749, %v4801
  %v4807 = vadd.f32 %v4752, %v4804
  %v4809 = vsel %vm590, %v4806, 0
  %v4812 = vsel %vm590, %v4807, 0
  %4814 = vmatpush.msra.mxu0 0.0
  %4815 = vmatpush.msra.mxu0 0.0
  %4816 = vmatpush.msra.mxu0 0.0
  %4817 = vmatpush.msra.mxu0 0.0
  %4818 = vmatpush.msra.mxu0 0.0
  %4819 = vmatpush.msra.mxu0 0.0
  %4820 = vmatpush.msra.mxu0 0.0
  %4821 = vmatpush.msra.mxu0 0.0
  %4822 = vmatpush.msra.mxu0 0.0
  %4823 = vmatpush.msra.mxu0 0.0
  %4824 = vmatpush.msra.mxu0 0.0
  %4825 = vmatpush.msra.mxu0 0.0
  %4826 = vmatpush.msra.mxu0 %v198
  %4827 = vmatpush.msra.mxu0 %v197
  %4828 = vmatpush.msra.mxu0 %v196
  %4829 = vmatpush.msra.mxu0 %v195
  %4830 = vmatmul.f32.gmra.mxu0 %v4809
  %v4831 = vpop.f32.mrf.mxu0
  %v4832 = vadd.f32 %v588, %v4831
  %4833 = vmatmul.f32.gmra.mxu0 %v4812
  %v4834 = vpop.f32.mrf.mxu0
  %v4835 = vadd.f32 %v588, %v4834
  %4836 = vdwg.mxu0
  %4837 = vmatpush.msra.mxu0 0.0
  %4838 = vmatpush.msra.mxu0 0.0
  %4839 = vmatpush.msra.mxu0 0.0
  %4840 = vmatpush.msra.mxu0 0.0
  %4841 = vmatpush.msra.mxu0 0.0
  %4842 = vmatpush.msra.mxu0 0.0
  %4843 = vmatpush.msra.mxu0 0.0
  %4844 = vmatpush.msra.mxu0 0.0
  %4845 = vmatpush.msra.mxu0 0.0
  %4846 = vmatpush.msra.mxu0 0.0
  %4847 = vmatpush.msra.mxu0 0.0
  %4848 = vmatpush.msra.mxu0 0.0
  %4849 = vmatpush.msra.mxu0 %v203
  %4850 = vmatpush.msra.mxu0 %v202
  %4851 = vmatpush.msra.mxu0 %v201
  %4852 = vmatpush.msra.mxu0 %v200
  %4853 = vmatmul.f32.gmra.mxu0 %v4809
  %v4854 = vpop.f32.mrf.mxu0
  %v4855 = vadd.f32 %v621, %v4854
  %4856 = vmatmul.f32.gmra.mxu0 %v4812
  %v4857 = vpop.f32.mrf.mxu0
  %v4858 = vadd.f32 %v621, %v4857
  %4859 = vdwg.mxu0
  %4860 = vmatpush.msra.mxu0 0.0
  %4861 = vmatpush.msra.mxu0 0.0
  %4862 = vmatpush.msra.mxu0 0.0
  %4863 = vmatpush.msra.mxu0 0.0
  %4864 = vmatpush.msra.mxu0 0.0
  %4865 = vmatpush.msra.mxu0 0.0
  %4866 = vmatpush.msra.mxu0 0.0
  %4867 = vmatpush.msra.mxu0 0.0
  %4868 = vmatpush.msra.mxu0 0.0
  %4869 = vmatpush.msra.mxu0 0.0
  %4870 = vmatpush.msra.mxu0 0.0
  %4871 = vmatpush.msra.mxu0 0.0
  %4872 = vmatpush.msra.mxu0 %v208
  %4873 = vmatpush.msra.mxu0 %v207
  %4874 = vmatpush.msra.mxu0 %v206
  %4875 = vmatpush.msra.mxu0 %v205
  %4876 = vmatmul.f32.gmra.mxu0 %v4809
  %v4877 = vpop.f32.mrf.mxu0
  %v4878 = vadd.f32 %v647, %v4877
  %4879 = vmatmul.f32.gmra.mxu0 %v4812
  %v4880 = vpop.f32.mrf.mxu0
  %v4881 = vadd.f32 %v647, %v4880
  %4882 = vdwg.mxu0
  %4883 = vmatpush.msra.mxu0 0.0
  %4884 = vmatpush.msra.mxu0 0.0
  %4885 = vmatpush.msra.mxu0 0.0
  %4886 = vmatpush.msra.mxu0 0.0
  %4887 = vmatpush.msra.mxu0 0.0
  %4888 = vmatpush.msra.mxu0 0.0
  %4889 = vmatpush.msra.mxu0 0.0
  %4890 = vmatpush.msra.mxu0 0.0
  %4891 = vmatpush.msra.mxu0 0.0
  %4892 = vmatpush.msra.mxu0 0.0
  %4893 = vmatpush.msra.mxu0 0.0
  %4894 = vmatpush.msra.mxu0 0.0
  %4895 = vmatpush.msra.mxu0 0.0
  %4896 = vmatpush.msra.mxu0 0.0
  %4897 = vmatpush.msra.mxu0 %v4835
  %4898 = vmatpush.msra.mxu0 %v4832
  %4899 = vmatmul.f32.gmra.mxu0 %v673
  %v4900 = vpop.f32.mrf.mxu0
  %v4901 = vadd.f32 0.0, %v4900
  %4902 = vmatmul.f32.gmra.mxu0 %v676
  %v4903 = vpop.f32.mrf.mxu0
  %v4904 = vadd.f32 0.0, %v4903
  %4905 = vmatmul.f32.gmra.mxu0 %v679
  %v4906 = vpop.f32.mrf.mxu0
  %v4907 = vadd.f32 0.0, %v4906
  %4908 = vmatmul.f32.gmra.mxu0 %v682
  %v4909 = vpop.f32.mrf.mxu0
  %v4910 = vadd.f32 0.0, %v4909
  %4911 = vmatmul.f32.gmra.mxu0 %v685
  %v4912 = vpop.f32.mrf.mxu0
  %v4913 = vadd.f32 0.0, %v4912
  %4914 = vmatmul.f32.gmra.mxu0 %v688
  %v4915 = vpop.f32.mrf.mxu0
  %v4916 = vadd.f32 0.0, %v4915
  %4917 = vmatmul.f32.gmra.mxu0 %v691
  %v4918 = vpop.f32.mrf.mxu0
  %v4919 = vadd.f32 0.0, %v4918
  %4920 = vmatmul.f32.gmra.mxu0 %v694
  %v4921 = vpop.f32.mrf.mxu0
  %v4922 = vadd.f32 0.0, %v4921
  %4923 = vmatmul.f32.gmra.mxu0 %v697
  %v4924 = vpop.f32.mrf.mxu0
  %v4925 = vadd.f32 0.0, %v4924
  %4926 = vmatmul.f32.gmra.mxu0 %v700
  %v4927 = vpop.f32.mrf.mxu0
  %v4928 = vadd.f32 0.0, %v4927
  %4929 = vmatmul.f32.gmra.mxu0 %v703
  %v4930 = vpop.f32.mrf.mxu0
  %v4931 = vadd.f32 0.0, %v4930
  %4932 = vmatmul.f32.gmra.mxu0 %v706
  %v4933 = vpop.f32.mrf.mxu0
  %v4934 = vadd.f32 0.0, %v4933
  %4935 = vmatmul.f32.gmra.mxu0 %v709
  %v4936 = vpop.f32.mrf.mxu0
  %v4937 = vadd.f32 0.0, %v4936
  %4938 = vmatmul.f32.gmra.mxu0 %v712
  %v4939 = vpop.f32.mrf.mxu0
  %v4940 = vadd.f32 0.0, %v4939
  %4941 = vmatmul.f32.gmra.mxu0 %v715
  %v4942 = vpop.f32.mrf.mxu0
  %v4943 = vadd.f32 0.0, %v4942
  %4944 = vmatmul.f32.gmra.mxu0 %v718
  %v4945 = vpop.f32.mrf.mxu0
  %v4946 = vadd.f32 0.0, %v4945
  %4947 = vmatmul.f32.gmra.mxu0 %v721
  %v4948 = vpop.f32.mrf.mxu0
  %v4949 = vadd.f32 0.0, %v4948
  %4950 = vmatmul.f32.gmra.mxu0 %v724
  %v4951 = vpop.f32.mrf.mxu0
  %v4952 = vadd.f32 0.0, %v4951
  %4953 = vmatmul.f32.gmra.mxu0 %v727
  %v4954 = vpop.f32.mrf.mxu0
  %v4955 = vadd.f32 0.0, %v4954
  %4956 = vmatmul.f32.gmra.mxu0 %v730
  %v4957 = vpop.f32.mrf.mxu0
  %v4958 = vadd.f32 0.0, %v4957
  %4959 = vmatmul.f32.gmra.mxu0 %v733
  %v4960 = vpop.f32.mrf.mxu0
  %v4961 = vadd.f32 0.0, %v4960
  %4962 = vmatmul.f32.gmra.mxu0 %v736
  %v4963 = vpop.f32.mrf.mxu0
  %v4964 = vadd.f32 0.0, %v4963
  %4965 = vmatmul.f32.gmra.mxu0 %v739
  %v4966 = vpop.f32.mrf.mxu0
  %v4967 = vadd.f32 0.0, %v4966
  %4968 = vmatmul.f32.gmra.mxu0 %v742
  %v4969 = vpop.f32.mrf.mxu0
  %v4970 = vadd.f32 0.0, %v4969
  %4971 = vmatmul.f32.gmra.mxu0 %v745
  %v4972 = vpop.f32.mrf.mxu0
  %v4973 = vadd.f32 0.0, %v4972
  %4974 = vmatmul.f32.gmra.mxu0 %v748
  %v4975 = vpop.f32.mrf.mxu0
  %v4976 = vadd.f32 0.0, %v4975
  %4977 = vmatmul.f32.gmra.mxu0 %v751
  %v4978 = vpop.f32.mrf.mxu0
  %v4979 = vadd.f32 0.0, %v4978
  %4980 = vmatmul.f32.gmra.mxu0 %v754
  %v4981 = vpop.f32.mrf.mxu0
  %v4982 = vadd.f32 0.0, %v4981
  %4983 = vmatmul.f32.gmra.mxu0 %v757
  %v4984 = vpop.f32.mrf.mxu0
  %v4985 = vadd.f32 0.0, %v4984
  %4986 = vmatmul.f32.gmra.mxu0 %v760
  %v4987 = vpop.f32.mrf.mxu0
  %v4988 = vadd.f32 0.0, %v4987
  %4989 = vmatmul.f32.gmra.mxu0 %v763
  %v4990 = vpop.f32.mrf.mxu0
  %v4991 = vadd.f32 0.0, %v4990
  %4992 = vmatmul.f32.gmra.mxu0 %v766
  %v4993 = vpop.f32.mrf.mxu0
  %v4994 = vadd.f32 0.0, %v4993
  %4995 = vdwg.mxu0
  %4996 = vmatpush.msra.mxu0 0.0
  %4997 = vmatpush.msra.mxu0 0.0
  %4998 = vmatpush.msra.mxu0 0.0
  %4999 = vmatpush.msra.mxu0 0.0
  %5000 = vmatpush.msra.mxu0 0.0
  %5001 = vmatpush.msra.mxu0 0.0
  %5002 = vmatpush.msra.mxu0 0.0
  %5003 = vmatpush.msra.mxu0 0.0
  %5004 = vmatpush.msra.mxu0 0.0
  %5005 = vmatpush.msra.mxu0 0.0
  %5006 = vmatpush.msra.mxu0 0.0
  %5007 = vmatpush.msra.mxu0 0.0
  %5008 = vmatpush.msra.mxu0 0.0
  %5009 = vmatpush.msra.mxu0 0.0
  %5010 = vmatpush.msra.mxu0 %v4858
  %5011 = vmatpush.msra.mxu0 %v4855
  %5012 = vmatmul.f32.gmra.mxu0 %v882
  %v5013 = vpop.f32.mrf.mxu0
  %v5014 = vadd.f32 0.0, %v5013
  %5015 = vmatmul.f32.gmra.mxu0 %v885
  %v5016 = vpop.f32.mrf.mxu0
  %v5017 = vadd.f32 0.0, %v5016
  %5018 = vmatmul.f32.gmra.mxu0 %v888
  %v5019 = vpop.f32.mrf.mxu0
  %v5020 = vadd.f32 0.0, %v5019
  %5021 = vmatmul.f32.gmra.mxu0 %v891
  %v5022 = vpop.f32.mrf.mxu0
  %v5023 = vadd.f32 0.0, %v5022
  %5024 = vmatmul.f32.gmra.mxu0 %v894
  %v5025 = vpop.f32.mrf.mxu0
  %v5026 = vadd.f32 0.0, %v5025
  %5027 = vmatmul.f32.gmra.mxu0 %v897
  %v5028 = vpop.f32.mrf.mxu0
  %v5029 = vadd.f32 0.0, %v5028
  %5030 = vmatmul.f32.gmra.mxu0 %v900
  %v5031 = vpop.f32.mrf.mxu0
  %v5032 = vadd.f32 0.0, %v5031
  %5033 = vmatmul.f32.gmra.mxu0 %v903
  %v5034 = vpop.f32.mrf.mxu0
  %v5035 = vadd.f32 0.0, %v5034
  %5036 = vmatmul.f32.gmra.mxu0 %v906
  %v5037 = vpop.f32.mrf.mxu0
  %v5038 = vadd.f32 0.0, %v5037
  %5039 = vmatmul.f32.gmra.mxu0 %v909
  %v5040 = vpop.f32.mrf.mxu0
  %v5041 = vadd.f32 0.0, %v5040
  %5042 = vmatmul.f32.gmra.mxu0 %v912
  %v5043 = vpop.f32.mrf.mxu0
  %v5044 = vadd.f32 0.0, %v5043
  %5045 = vmatmul.f32.gmra.mxu0 %v915
  %v5046 = vpop.f32.mrf.mxu0
  %v5047 = vadd.f32 0.0, %v5046
  %5048 = vmatmul.f32.gmra.mxu0 %v918
  %v5049 = vpop.f32.mrf.mxu0
  %v5050 = vadd.f32 0.0, %v5049
  %5051 = vmatmul.f32.gmra.mxu0 %v921
  %v5052 = vpop.f32.mrf.mxu0
  %v5053 = vadd.f32 0.0, %v5052
  %5054 = vmatmul.f32.gmra.mxu0 %v924
  %v5055 = vpop.f32.mrf.mxu0
  %v5056 = vadd.f32 0.0, %v5055
  %5057 = vmatmul.f32.gmra.mxu0 %v927
  %v5058 = vpop.f32.mrf.mxu0
  %v5059 = vadd.f32 0.0, %v5058
  %5060 = vmatmul.f32.gmra.mxu0 %v930
  %v5061 = vpop.f32.mrf.mxu0
  %v5062 = vadd.f32 0.0, %v5061
  %5063 = vmatmul.f32.gmra.mxu0 %v933
  %v5064 = vpop.f32.mrf.mxu0
  %v5065 = vadd.f32 0.0, %v5064
  %5066 = vmatmul.f32.gmra.mxu0 %v936
  %v5067 = vpop.f32.mrf.mxu0
  %v5068 = vadd.f32 0.0, %v5067
  %5069 = vmatmul.f32.gmra.mxu0 %v939
  %v5070 = vpop.f32.mrf.mxu0
  %v5071 = vadd.f32 0.0, %v5070
  %5072 = vmatmul.f32.gmra.mxu0 %v942
  %v5073 = vpop.f32.mrf.mxu0
  %v5074 = vadd.f32 0.0, %v5073
  %5075 = vmatmul.f32.gmra.mxu0 %v945
  %v5076 = vpop.f32.mrf.mxu0
  %v5077 = vadd.f32 0.0, %v5076
  %5078 = vmatmul.f32.gmra.mxu0 %v948
  %v5079 = vpop.f32.mrf.mxu0
  %v5080 = vadd.f32 0.0, %v5079
  %5081 = vmatmul.f32.gmra.mxu0 %v951
  %v5082 = vpop.f32.mrf.mxu0
  %v5083 = vadd.f32 0.0, %v5082
  %5084 = vmatmul.f32.gmra.mxu0 %v954
  %v5085 = vpop.f32.mrf.mxu0
  %v5086 = vadd.f32 0.0, %v5085
  %5087 = vmatmul.f32.gmra.mxu0 %v957
  %v5088 = vpop.f32.mrf.mxu0
  %v5089 = vadd.f32 0.0, %v5088
  %5090 = vmatmul.f32.gmra.mxu0 %v960
  %v5091 = vpop.f32.mrf.mxu0
  %v5092 = vadd.f32 0.0, %v5091
  %5093 = vmatmul.f32.gmra.mxu0 %v963
  %v5094 = vpop.f32.mrf.mxu0
  %v5095 = vadd.f32 0.0, %v5094
  %5096 = vmatmul.f32.gmra.mxu0 %v966
  %v5097 = vpop.f32.mrf.mxu0
  %v5098 = vadd.f32 0.0, %v5097
  %5099 = vmatmul.f32.gmra.mxu0 %v969
  %v5100 = vpop.f32.mrf.mxu0
  %v5101 = vadd.f32 0.0, %v5100
  %5102 = vmatmul.f32.gmra.mxu0 %v972
  %v5103 = vpop.f32.mrf.mxu0
  %v5104 = vadd.f32 0.0, %v5103
  %5105 = vmatmul.f32.gmra.mxu0 %v975
  %v5106 = vpop.f32.mrf.mxu0
  %v5107 = vadd.f32 0.0, %v5106
  %5108 = vdwg.mxu0
  %v5109 = vmul.f32 %v4901, %v5014
  %v5110 = vmul.f32 %v4904, %v5017
  %v5111 = vmul.f32 %v4907, %v5020
  %v5112 = vmul.f32 %v4910, %v5023
  %v5113 = vmul.f32 %v4913, %v5026
  %v5114 = vmul.f32 %v4916, %v5029
  %v5115 = vmul.f32 %v4919, %v5032
  %v5116 = vmul.f32 %v4922, %v5035
  %v5117 = vmul.f32 %v4925, %v5038
  %v5118 = vmul.f32 %v4928, %v5041
  %v5119 = vmul.f32 %v4931, %v5044
  %v5120 = vmul.f32 %v4934, %v5047
  %v5121 = vmul.f32 %v4937, %v5050
  %v5122 = vmul.f32 %v4940, %v5053
  %v5123 = vmul.f32 %v4943, %v5056
  %v5124 = vmul.f32 %v4946, %v5059
  %v5125 = vmul.f32 %v4949, %v5062
  %v5126 = vmul.f32 %v4952, %v5065
  %v5127 = vmul.f32 %v4955, %v5068
  %v5128 = vmul.f32 %v4958, %v5071
  %v5129 = vmul.f32 %v4961, %v5074
  %v5130 = vmul.f32 %v4964, %v5077
  %v5131 = vmul.f32 %v4967, %v5080
  %v5132 = vmul.f32 %v4970, %v5083
  %v5133 = vmul.f32 %v4973, %v5086
  %v5134 = vmul.f32 %v4976, %v5089
  %v5135 = vmul.f32 %v4979, %v5092
  %v5136 = vmul.f32 %v4982, %v5095
  %v5137 = vmul.f32 %v4985, %v5098
  %v5138 = vmul.f32 %v4988, %v5101
  %v5139 = vmul.f32 %v4991, %v5104
  %v5140 = vmul.f32 %v4994, %v5107
  %v5141 = vsel %vm590, %v5109, 0.0
  %5142 = vadd.xlane.f32.xlu0 %v5141
  %v5143 = vpop.xlane.xlu0 %5142
  %v5144 = vsel %vm590, %v5110, 0.0
  %5145 = vadd.xlane.f32.xlu0 %v5144
  %v5146 = vpop.xlane.xlu0 %5145
  %v5147 = vsel %vm590, %v5111, 0.0
  %5148 = vadd.xlane.f32.xlu0 %v5147
  %v5149 = vpop.xlane.xlu0 %5148
  %v5150 = vsel %vm590, %v5112, 0.0
  %5151 = vadd.xlane.f32.xlu0 %v5150
  %v5152 = vpop.xlane.xlu0 %5151
  %v5153 = vsel %vm590, %v5113, 0.0
  %5154 = vadd.xlane.f32.xlu0 %v5153
  %v5155 = vpop.xlane.xlu0 %5154
  %v5156 = vsel %vm590, %v5114, 0.0
  %5157 = vadd.xlane.f32.xlu0 %v5156
  %v5158 = vpop.xlane.xlu0 %5157
  %v5159 = vsel %vm590, %v5115, 0.0
  %5160 = vadd.xlane.f32.xlu0 %v5159
  %v5161 = vpop.xlane.xlu0 %5160
  %v5162 = vsel %vm590, %v5116, 0.0
  %5163 = vadd.xlane.f32.xlu0 %v5162
  %v5164 = vpop.xlane.xlu0 %5163
  %v5165 = vsel %vm590, %v5117, 0.0
  %5166 = vadd.xlane.f32.xlu0 %v5165
  %v5167 = vpop.xlane.xlu0 %5166
  %v5168 = vsel %vm590, %v5118, 0.0
  %5169 = vadd.xlane.f32.xlu0 %v5168
  %v5170 = vpop.xlane.xlu0 %5169
  %v5171 = vsel %vm590, %v5119, 0.0
  %5172 = vadd.xlane.f32.xlu0 %v5171
  %v5173 = vpop.xlane.xlu0 %5172
  %v5174 = vsel %vm590, %v5120, 0.0
  %5175 = vadd.xlane.f32.xlu0 %v5174
  %v5176 = vpop.xlane.xlu0 %5175
  %v5177 = vsel %vm590, %v5121, 0.0
  %5178 = vadd.xlane.f32.xlu0 %v5177
  %v5179 = vpop.xlane.xlu0 %5178
  %v5180 = vsel %vm590, %v5122, 0.0
  %5181 = vadd.xlane.f32.xlu0 %v5180
  %v5182 = vpop.xlane.xlu0 %5181
  %v5183 = vsel %vm590, %v5123, 0.0
  %5184 = vadd.xlane.f32.xlu0 %v5183
  %v5185 = vpop.xlane.xlu0 %5184
  %v5186 = vsel %vm590, %v5124, 0.0
  %5187 = vadd.xlane.f32.xlu0 %v5186
  %v5188 = vpop.xlane.xlu0 %5187
  %v5189 = vsel %vm590, %v5125, 0.0
  %5190 = vadd.xlane.f32.xlu0 %v5189
  %v5191 = vpop.xlane.xlu0 %5190
  %v5192 = vsel %vm590, %v5126, 0.0
  %5193 = vadd.xlane.f32.xlu0 %v5192
  %v5194 = vpop.xlane.xlu0 %5193
  %v5195 = vsel %vm590, %v5127, 0.0
  %5196 = vadd.xlane.f32.xlu0 %v5195
  %v5197 = vpop.xlane.xlu0 %5196
  %v5198 = vsel %vm590, %v5128, 0.0
  %5199 = vadd.xlane.f32.xlu0 %v5198
  %v5200 = vpop.xlane.xlu0 %5199
  %v5201 = vsel %vm590, %v5129, 0.0
  %5202 = vadd.xlane.f32.xlu0 %v5201
  %v5203 = vpop.xlane.xlu0 %5202
  %v5204 = vsel %vm590, %v5130, 0.0
  %5205 = vadd.xlane.f32.xlu0 %v5204
  %v5206 = vpop.xlane.xlu0 %5205
  %v5207 = vsel %vm590, %v5131, 0.0
  %5208 = vadd.xlane.f32.xlu0 %v5207
  %v5209 = vpop.xlane.xlu0 %5208
  %v5210 = vsel %vm590, %v5132, 0.0
  %5211 = vadd.xlane.f32.xlu0 %v5210
  %v5212 = vpop.xlane.xlu0 %5211
  %v5213 = vsel %vm590, %v5133, 0.0
  %5214 = vadd.xlane.f32.xlu0 %v5213
  %v5215 = vpop.xlane.xlu0 %5214
  %v5216 = vsel %vm590, %v5134, 0.0
  %5217 = vadd.xlane.f32.xlu0 %v5216
  %v5218 = vpop.xlane.xlu0 %5217
  %v5219 = vsel %vm590, %v5135, 0.0
  %5220 = vadd.xlane.f32.xlu0 %v5219
  %v5221 = vpop.xlane.xlu0 %5220
  %v5222 = vsel %vm590, %v5136, 0.0
  %5223 = vadd.xlane.f32.xlu0 %v5222
  %v5224 = vpop.xlane.xlu0 %5223
  %v5225 = vsel %vm590, %v5137, 0.0
  %5226 = vadd.xlane.f32.xlu0 %v5225
  %v5227 = vpop.xlane.xlu0 %5226
  %v5228 = vsel %vm590, %v5138, 0.0
  %5229 = vadd.xlane.f32.xlu0 %v5228
  %v5230 = vpop.xlane.xlu0 %5229
  %v5231 = vsel %vm590, %v5139, 0.0
  %5232 = vadd.xlane.f32.xlu0 %v5231
  %v5233 = vpop.xlane.xlu0 %5232
  %v5234 = vsel %vm590, %v5140, 0.0
  %5235 = vadd.xlane.f32.xlu0 %v5234
  %v5236 = vpop.xlane.xlu0 %5235
  %5237 = vmatpush.msra.mxu0 %v5188
  %5238 = vmatpush.msra.mxu0 %v5185
  %5239 = vmatpush.msra.mxu0 %v5182
  %5240 = vmatpush.msra.mxu0 %v5179
  %5241 = vmatpush.msra.mxu0 %v5176
  %5242 = vmatpush.msra.mxu0 %v5173
  %5243 = vmatpush.msra.mxu0 %v5170
  %5244 = vmatpush.msra.mxu0 %v5167
  %5245 = vmatpush.msra.mxu0 %v5164
  %5246 = vmatpush.msra.mxu0 %v5161
  %5247 = vmatpush.msra.mxu0 %v5158
  %5248 = vmatpush.msra.mxu0 %v5155
  %5249 = vmatpush.msra.mxu0 %v5152
  %5250 = vmatpush.msra.mxu0 %v5149
  %5251 = vmatpush.msra.mxu0 %v5146
  %5252 = vmatpush.msra.mxu0 %v5143
  %5253 = vmatmul.f32.gmra.mxu0 %v174
  %v5254 = vpop.f32.mrf.mxu0
  %v5255 = vadd.f32 0.0, %v5254
  %5256 = vmatmul.f32.gmra.mxu0 %v176
  %v5257 = vpop.f32.mrf.mxu0
  %v5258 = vadd.f32 0.0, %v5257
  %5259 = vdwg.mxu0
  %5260 = vmatpush.msra.mxu0 %v5236
  %5261 = vmatpush.msra.mxu0 %v5233
  %5262 = vmatpush.msra.mxu0 %v5230
  %5263 = vmatpush.msra.mxu0 %v5227
  %5264 = vmatpush.msra.mxu0 %v5224
  %5265 = vmatpush.msra.mxu0 %v5221
  %5266 = vmatpush.msra.mxu0 %v5218
  %5267 = vmatpush.msra.mxu0 %v5215
  %5268 = vmatpush.msra.mxu0 %v5212
  %5269 = vmatpush.msra.mxu0 %v5209
  %5270 = vmatpush.msra.mxu0 %v5206
  %5271 = vmatpush.msra.mxu0 %v5203
  %5272 = vmatpush.msra.mxu0 %v5200
  %5273 = vmatpush.msra.mxu0 %v5197
  %5274 = vmatpush.msra.mxu0 %v5194
  %5275 = vmatpush.msra.mxu0 %v5191
  %5276 = vmatmul.f32.gmra.mxu0 %v175
  %v5277 = vpop.f32.mrf.mxu0
  %v5278 = vadd.f32 %v5255, %v5277
  %5279 = vmatmul.f32.gmra.mxu0 %v177
  %v5280 = vpop.f32.mrf.mxu0
  %v5281 = vadd.f32 %v5258, %v5280
  %5282 = vdwg.mxu0
  %v5283 = vmul.f32 %v5278, 0.03125
  %v5284 = vmul.f32 %v5281, 0.03125
  %v5285 = vsel %vm1266, %v5283, -inf
  %v5286 = vsel %vm1266, %v5284, -inf
  %v5287 = vmax.f32 %v5285, %v5286
  %v5288 = vrot.slane %v5287, 4
  %v5289 = vmax.f32 %v5287, %v5288
  %v5290 = vrot.slane %v5289, 2
  %v5291 = vmax.f32 %v5289, %v5290
  %v5292 = vrot.slane %v5291, 1
  %v5293 = vmax.f32 %v5291, %v5292
  %vm5294 = vcmp.ge.f32.partialorder %v5283, %v5293
  %vm5295 = vcmp.ge.f32.partialorder %v5284, %v5293
  %v5296 = vsel %vm5294, %v316, 16.0
  %v5297 = vsel %vm5295, %v317, 16.0
  %v5298 = vsel %vm1266, %v5296, inf
  %v5299 = vsel %vm1266, %v5297, inf
  %v5300 = vmin.f32 %v5298, %v5299
  %v5301 = vrot.slane %v5300, 4
  %v5302 = vmin.f32 %v5300, %v5301
  %v5303 = vrot.slane %v5302, 2
  %v5304 = vmin.f32 %v5302, %v5303
  %v5305 = vrot.slane %v5304, 1
  %v5306 = vmin.f32 %v5304, %v5305
  %vm5307 = vcmp.eq.f32.partialorder %v316, %v5306
  %vm5308 = vcmp.eq.f32.partialorder %v317, %v5306
  %v5309 = vsel %vm5307, 1, 0
  %v5310 = vsel %vm5308, 1, 0
  %v5311 = vcvt.s32.f32 %v5309
  %v5312 = vcvt.s32.f32 %v5310
  %vm5313 = vcmp.gt.f32.partialorder %v5311, 0.5
  %vm5314 = vcmp.gt.f32.partialorder %v5312, 0.5
  %v5315 = vsel %vm5313, -1e+30, %v5283
  %v5316 = vsel %vm5314, -1e+30, %v5284
  %v5317 = vsel %vm1266, %v5315, -inf
  %v5318 = vsel %vm1266, %v5316, -inf
  %v5319 = vmax.f32 %v5317, %v5318
  %v5320 = vrot.slane %v5319, 4
  %v5321 = vmax.f32 %v5319, %v5320
  %v5322 = vrot.slane %v5321, 2
  %v5323 = vmax.f32 %v5321, %v5322
  %v5324 = vrot.slane %v5323, 1
  %v5325 = vmax.f32 %v5323, %v5324
  %vm5326 = vcmp.ge.f32.partialorder %v5315, %v5325
  %vm5327 = vcmp.ge.f32.partialorder %v5316, %v5325
  %v5328 = vsel %vm5326, %v316, 16.0
  %v5329 = vsel %vm5327, %v317, 16.0
  %v5330 = vsel %vm1266, %v5328, inf
  %v5331 = vsel %vm1266, %v5329, inf
  %v5332 = vmin.f32 %v5330, %v5331
  %v5333 = vrot.slane %v5332, 4
  %v5334 = vmin.f32 %v5332, %v5333
  %v5335 = vrot.slane %v5334, 2
  %v5336 = vmin.f32 %v5334, %v5335
  %v5337 = vrot.slane %v5336, 1
  %v5338 = vmin.f32 %v5336, %v5337
  %vm5339 = vcmp.eq.f32.partialorder %v316, %v5338
  %vm5340 = vcmp.eq.f32.partialorder %v317, %v5338
  %v5341 = vsel %vm5339, 1, 0
  %v5342 = vsel %vm5340, 1, 0
  %v5343 = vcvt.s32.f32 %v5341
  %v5344 = vcvt.s32.f32 %v5342
  %v5345 = vsub.f32 %v5293, %v5293
  %v5346 = vmul.f32 %v5345, 1.442695
  %v5347 = vpow.pop %v5346
  %v5348 = vsub.f32 %v5325, %v5293
  %v5349 = vmul.f32 %v5348, 1.442695
  %v5350 = vpow.pop %v5349
  %v5351 = vadd.f32 %v5347, %v5350
  %v5352 = vrcp.pop %v5351
  %v5353 = vmul.f32 %v5351, %v5352
  %v5354 = vsub.f32 1.0, %v5353
  %v5355 = vmul.f32 %v5352, %v5354
  %v5356 = vadd.f32 %v5352, %v5355
  %vm5357 = vweird.f32 %v5351
  %vm5358 = vweird.f32 %v5352
  %vm5359 = vmor %vm5357, %vm5358
  %v5360 = vsel %vm5359, %v5352, %v5356
  %v5361 = vand.u32 2147483647, %v5351
  %vm5362 = vcmp.eq.f32.partialorder %v5361, 8.507059e+37
  %v5363 = vand.u32 %v5351, 2147483648
  %v5364 = vor.u32 1.1754944e-38, %v5363
  %v5365 = vsel %vm5362, %v5364, %v5360
  %v5366 = vmul.f32 %v5347, %v5365
  %v5367 = vmul.f32 %v5311, %v5366
  %v5368 = vmul.f32 %v5312, %v5366
  %v5369 = vmul.f32 %v5350, %v5365
  %v5370 = vmul.f32 %v5343, %v5369
  %v5371 = vmul.f32 %v5344, %v5369
  %v5372 = vadd.f32 %v5367, %v5370
  %v5373 = vadd.f32 %v5368, %v5371
  %5374 = vmatpush.msra.mxu0 0.0
  %5375 = vmatpush.msra.mxu0 0.0
  %5376 = vmatpush.msra.mxu0 0.0
  %5377 = vmatpush.msra.mxu0 0.0
  %5378 = vmatpush.msra.mxu0 0.0
  %5379 = vmatpush.msra.mxu0 0.0
  %5380 = vmatpush.msra.mxu0 0.0
  %5381 = vmatpush.msra.mxu0 0.0
  %5382 = vmatpush.msra.mxu0 0.0
  %5383 = vmatpush.msra.mxu0 0.0
  %5384 = vmatpush.msra.mxu0 0.0
  %5385 = vmatpush.msra.mxu0 0.0
  %5386 = vmatpush.msra.mxu0 0.0
  %5387 = vmatpush.msra.mxu0 0.0
  %5388 = vmatpush.msra.mxu0 %v5373
  %5389 = vmatpush.msra.mxu0 %v5372
  %5390 = vmatmul.f32.gmra.mxu0 %v1357
  %v5391 = vpop.f32.mrf.mxu0
  %v5392 = vadd.f32 0.0, %v5391
  %5393 = vmatmul.f32.gmra.mxu0 %v1360
  %v5394 = vpop.f32.mrf.mxu0
  %v5395 = vadd.f32 0.0, %v5394
  %5396 = vmatmul.f32.gmra.mxu0 %v1363
  %v5397 = vpop.f32.mrf.mxu0
  %v5398 = vadd.f32 0.0, %v5397
  %5399 = vmatmul.f32.gmra.mxu0 %v1366
  %v5400 = vpop.f32.mrf.mxu0
  %v5401 = vadd.f32 0.0, %v5400
  %5402 = vmatmul.f32.gmra.mxu0 %v1369
  %v5403 = vpop.f32.mrf.mxu0
  %v5404 = vadd.f32 0.0, %v5403
  %5405 = vmatmul.f32.gmra.mxu0 %v1372
  %v5406 = vpop.f32.mrf.mxu0
  %v5407 = vadd.f32 0.0, %v5406
  %5408 = vmatmul.f32.gmra.mxu0 %v1375
  %v5409 = vpop.f32.mrf.mxu0
  %v5410 = vadd.f32 0.0, %v5409
  %5411 = vmatmul.f32.gmra.mxu0 %v1378
  %v5412 = vpop.f32.mrf.mxu0
  %v5413 = vadd.f32 0.0, %v5412
  %5414 = vmatmul.f32.gmra.mxu0 %v1381
  %v5415 = vpop.f32.mrf.mxu0
  %v5416 = vadd.f32 0.0, %v5415
  %5417 = vmatmul.f32.gmra.mxu0 %v1384
  %v5418 = vpop.f32.mrf.mxu0
  %v5419 = vadd.f32 0.0, %v5418
  %5420 = vmatmul.f32.gmra.mxu0 %v1387
  %v5421 = vpop.f32.mrf.mxu0
  %v5422 = vadd.f32 0.0, %v5421
  %5423 = vmatmul.f32.gmra.mxu0 %v1390
  %v5424 = vpop.f32.mrf.mxu0
  %v5425 = vadd.f32 0.0, %v5424
  %5426 = vmatmul.f32.gmra.mxu0 %v1393
  %v5427 = vpop.f32.mrf.mxu0
  %v5428 = vadd.f32 0.0, %v5427
  %5429 = vmatmul.f32.gmra.mxu0 %v1396
  %v5430 = vpop.f32.mrf.mxu0
  %v5431 = vadd.f32 0.0, %v5430
  %5432 = vmatmul.f32.gmra.mxu0 %v1399
  %v5433 = vpop.f32.mrf.mxu0
  %v5434 = vadd.f32 0.0, %v5433
  %5435 = vmatmul.f32.gmra.mxu0 %v1402
  %v5436 = vpop.f32.mrf.mxu0
  %v5437 = vadd.f32 0.0, %v5436
  %5438 = vmatmul.f32.gmra.mxu0 %v1405
  %v5439 = vpop.f32.mrf.mxu0
  %v5440 = vadd.f32 0.0, %v5439
  %5441 = vmatmul.f32.gmra.mxu0 %v1408
  %v5442 = vpop.f32.mrf.mxu0
  %v5443 = vadd.f32 0.0, %v5442
  %5444 = vmatmul.f32.gmra.mxu0 %v1411
  %v5445 = vpop.f32.mrf.mxu0
  %v5446 = vadd.f32 0.0, %v5445
  %5447 = vmatmul.f32.gmra.mxu0 %v1414
  %v5448 = vpop.f32.mrf.mxu0
  %v5449 = vadd.f32 0.0, %v5448
  %5450 = vmatmul.f32.gmra.mxu0 %v1417
  %v5451 = vpop.f32.mrf.mxu0
  %v5452 = vadd.f32 0.0, %v5451
  %5453 = vmatmul.f32.gmra.mxu0 %v1420
  %v5454 = vpop.f32.mrf.mxu0
  %v5455 = vadd.f32 0.0, %v5454
  %5456 = vmatmul.f32.gmra.mxu0 %v1423
  %v5457 = vpop.f32.mrf.mxu0
  %v5458 = vadd.f32 0.0, %v5457
  %5459 = vmatmul.f32.gmra.mxu0 %v1426
  %v5460 = vpop.f32.mrf.mxu0
  %v5461 = vadd.f32 0.0, %v5460
  %5462 = vmatmul.f32.gmra.mxu0 %v1429
  %v5463 = vpop.f32.mrf.mxu0
  %v5464 = vadd.f32 0.0, %v5463
  %5465 = vmatmul.f32.gmra.mxu0 %v1432
  %v5466 = vpop.f32.mrf.mxu0
  %v5467 = vadd.f32 0.0, %v5466
  %5468 = vmatmul.f32.gmra.mxu0 %v1435
  %v5469 = vpop.f32.mrf.mxu0
  %v5470 = vadd.f32 0.0, %v5469
  %5471 = vmatmul.f32.gmra.mxu0 %v1438
  %v5472 = vpop.f32.mrf.mxu0
  %v5473 = vadd.f32 0.0, %v5472
  %5474 = vmatmul.f32.gmra.mxu0 %v1441
  %v5475 = vpop.f32.mrf.mxu0
  %v5476 = vadd.f32 0.0, %v5475
  %5477 = vmatmul.f32.gmra.mxu0 %v1444
  %v5478 = vpop.f32.mrf.mxu0
  %v5479 = vadd.f32 0.0, %v5478
  %5480 = vmatmul.f32.gmra.mxu0 %v1447
  %v5481 = vpop.f32.mrf.mxu0
  %v5482 = vadd.f32 0.0, %v5481
  %5483 = vmatmul.f32.gmra.mxu0 %v1450
  %v5484 = vpop.f32.mrf.mxu0
  %v5485 = vadd.f32 0.0, %v5484
  %5486 = vdwg.mxu0
  %5488 = vset.pattern.permute.xlu0 0
  %5489 = vperm.xlu0 %5488, %v5392
  %v5490 = vpop.permute.xlu0 %5489
  %5493 = vset.pattern.permute.xlu0 0
  %5494 = vperm.xlu0 %5493, %v5395
  %v5495 = vpop.permute.xlu0 %5494
  %5498 = vset.pattern.permute.xlu0 0
  %5499 = vperm.xlu0 %5498, %v5398
  %v5500 = vpop.permute.xlu0 %5499
  %5503 = vset.pattern.permute.xlu0 0
  %5504 = vperm.xlu0 %5503, %v5401
  %v5505 = vpop.permute.xlu0 %5504
  %5508 = vset.pattern.permute.xlu0 0
  %5509 = vperm.xlu0 %5508, %v5404
  %v5510 = vpop.permute.xlu0 %5509
  %5513 = vset.pattern.permute.xlu0 0
  %5514 = vperm.xlu0 %5513, %v5407
  %v5515 = vpop.permute.xlu0 %5514
  %5518 = vset.pattern.permute.xlu0 0
  %5519 = vperm.xlu0 %5518, %v5410
  %v5520 = vpop.permute.xlu0 %5519
  %5523 = vset.pattern.permute.xlu0 0
  %5524 = vperm.xlu0 %5523, %v5413
  %v5525 = vpop.permute.xlu0 %5524
  %5528 = vset.pattern.permute.xlu0 0
  %5529 = vperm.xlu0 %5528, %v5416
  %v5530 = vpop.permute.xlu0 %5529
  %5533 = vset.pattern.permute.xlu0 0
  %5534 = vperm.xlu0 %5533, %v5419
  %v5535 = vpop.permute.xlu0 %5534
  %5538 = vset.pattern.permute.xlu0 0
  %5539 = vperm.xlu0 %5538, %v5422
  %v5540 = vpop.permute.xlu0 %5539
  %5543 = vset.pattern.permute.xlu0 0
  %5544 = vperm.xlu0 %5543, %v5425
  %v5545 = vpop.permute.xlu0 %5544
  %5548 = vset.pattern.permute.xlu0 0
  %5549 = vperm.xlu0 %5548, %v5428
  %v5550 = vpop.permute.xlu0 %5549
  %5553 = vset.pattern.permute.xlu0 0
  %5554 = vperm.xlu0 %5553, %v5431
  %v5555 = vpop.permute.xlu0 %5554
  %5558 = vset.pattern.permute.xlu0 0
  %5559 = vperm.xlu0 %5558, %v5434
  %v5560 = vpop.permute.xlu0 %5559
  %5563 = vset.pattern.permute.xlu0 0
  %5564 = vperm.xlu0 %5563, %v5437
  %v5565 = vpop.permute.xlu0 %5564
  %5568 = vset.pattern.permute.xlu0 0
  %5569 = vperm.xlu0 %5568, %v5440
  %v5570 = vpop.permute.xlu0 %5569
  %5573 = vset.pattern.permute.xlu0 0
  %5574 = vperm.xlu0 %5573, %v5443
  %v5575 = vpop.permute.xlu0 %5574
  %5578 = vset.pattern.permute.xlu0 0
  %5579 = vperm.xlu0 %5578, %v5446
  %v5580 = vpop.permute.xlu0 %5579
  %5583 = vset.pattern.permute.xlu0 0
  %5584 = vperm.xlu0 %5583, %v5449
  %v5585 = vpop.permute.xlu0 %5584
  %5588 = vset.pattern.permute.xlu0 0
  %5589 = vperm.xlu0 %5588, %v5452
  %v5590 = vpop.permute.xlu0 %5589
  %5593 = vset.pattern.permute.xlu0 0
  %5594 = vperm.xlu0 %5593, %v5455
  %v5595 = vpop.permute.xlu0 %5594
  %5598 = vset.pattern.permute.xlu0 0
  %5599 = vperm.xlu0 %5598, %v5458
  %v5600 = vpop.permute.xlu0 %5599
  %5603 = vset.pattern.permute.xlu0 0
  %5604 = vperm.xlu0 %5603, %v5461
  %v5605 = vpop.permute.xlu0 %5604
  %5608 = vset.pattern.permute.xlu0 0
  %5609 = vperm.xlu0 %5608, %v5464
  %v5610 = vpop.permute.xlu0 %5609
  %5613 = vset.pattern.permute.xlu0 0
  %5614 = vperm.xlu0 %5613, %v5467
  %v5615 = vpop.permute.xlu0 %5614
  %5618 = vset.pattern.permute.xlu0 0
  %5619 = vperm.xlu0 %5618, %v5470
  %v5620 = vpop.permute.xlu0 %5619
  %5623 = vset.pattern.permute.xlu0 0
  %5624 = vperm.xlu0 %5623, %v5473
  %v5625 = vpop.permute.xlu0 %5624
  %5628 = vset.pattern.permute.xlu0 0
  %5629 = vperm.xlu0 %5628, %v5476
  %v5630 = vpop.permute.xlu0 %5629
  %5633 = vset.pattern.permute.xlu0 0
  %5634 = vperm.xlu0 %5633, %v5479
  %v5635 = vpop.permute.xlu0 %5634
  %5638 = vset.pattern.permute.xlu0 0
  %5639 = vperm.xlu0 %5638, %v5482
  %v5640 = vpop.permute.xlu0 %5639
  %5643 = vset.pattern.permute.xlu0 0
  %5644 = vperm.xlu0 %5643, %v5485
  %v5645 = vpop.permute.xlu0 %5644
  %v5647 = vmul.f32 %v5490, %v71
  %v5648 = vmul.f32 %v5495, %v72
  %v5649 = vmul.f32 %v5500, %v73
  %v5650 = vmul.f32 %v5505, %v74
  %v5651 = vmul.f32 %v5510, %v75
  %v5652 = vmul.f32 %v5515, %v76
  %v5653 = vmul.f32 %v5520, %v77
  %v5654 = vmul.f32 %v5525, %v78
  %v5655 = vmul.f32 %v5530, %v79
  %v5656 = vmul.f32 %v5535, %v80
  %v5657 = vmul.f32 %v5540, %v81
  %v5658 = vmul.f32 %v5545, %v82
  %v5659 = vmul.f32 %v5550, %v83
  %v5660 = vmul.f32 %v5555, %v84
  %v5661 = vmul.f32 %v5560, %v85
  %v5662 = vmul.f32 %v5565, %v86
  %v5663 = vmul.f32 %v5570, %v87
  %v5664 = vmul.f32 %v5575, %v88
  %v5665 = vmul.f32 %v5580, %v89
  %v5666 = vmul.f32 %v5585, %v90
  %v5667 = vmul.f32 %v5590, %v91
  %v5668 = vmul.f32 %v5595, %v92
  %v5669 = vmul.f32 %v5600, %v93
  %v5670 = vmul.f32 %v5605, %v94
  %v5671 = vmul.f32 %v5610, %v95
  %v5672 = vmul.f32 %v5615, %v96
  %v5673 = vmul.f32 %v5620, %v97
  %v5674 = vmul.f32 %v5625, %v98
  %v5675 = vmul.f32 %v5630, %v99
  %v5676 = vmul.f32 %v5635, %v100
  %v5677 = vmul.f32 %v5640, %v101
  %v5678 = vmul.f32 %v5645, %v102
  %5679 = vmatpush.msra.mxu0 %v5662
  %5680 = vmatpush.msra.mxu0 %v5661
  %5681 = vmatpush.msra.mxu0 %v5660
  %5682 = vmatpush.msra.mxu0 %v5659
  %5683 = vmatpush.msra.mxu0 %v5658
  %5684 = vmatpush.msra.mxu0 %v5657
  %5685 = vmatpush.msra.mxu0 %v5656
  %5686 = vmatpush.msra.mxu0 %v5655
  %5687 = vmatpush.msra.mxu0 %v5654
  %5688 = vmatpush.msra.mxu0 %v5653
  %5689 = vmatpush.msra.mxu0 %v5652
  %5690 = vmatpush.msra.mxu0 %v5651
  %5691 = vmatpush.msra.mxu0 %v5650
  %5692 = vmatpush.msra.mxu0 %v5649
  %5693 = vmatpush.msra.mxu0 %v5648
  %5694 = vmatpush.msra.mxu0 %v5647
  %5695 = vmatmul.f32.gmra.mxu0 %v169
  %v5696 = vpop.f32.mrf.mxu0
  %v5697 = vadd.f32 0.0, %v5696
  %5698 = vmatmul.f32.gmra.mxu0 %v171
  %v5699 = vpop.f32.mrf.mxu0
  %v5700 = vadd.f32 0.0, %v5699
  %5701 = vdwg.mxu0
  %5702 = vmatpush.msra.mxu0 %v5678
  %5703 = vmatpush.msra.mxu0 %v5677
  %5704 = vmatpush.msra.mxu0 %v5676
  %5705 = vmatpush.msra.mxu0 %v5675
  %5706 = vmatpush.msra.mxu0 %v5674
  %5707 = vmatpush.msra.mxu0 %v5673
  %5708 = vmatpush.msra.mxu0 %v5672
  %5709 = vmatpush.msra.mxu0 %v5671
  %5710 = vmatpush.msra.mxu0 %v5670
  %5711 = vmatpush.msra.mxu0 %v5669
  %5712 = vmatpush.msra.mxu0 %v5668
  %5713 = vmatpush.msra.mxu0 %v5667
  %5714 = vmatpush.msra.mxu0 %v5666
  %5715 = vmatpush.msra.mxu0 %v5665
  %5716 = vmatpush.msra.mxu0 %v5664
  %5717 = vmatpush.msra.mxu0 %v5663
  %5718 = vmatmul.f32.gmra.mxu0 %v170
  %v5719 = vpop.f32.mrf.mxu0
  %v5720 = vadd.f32 %v5697, %v5719
  %5721 = vmatmul.f32.gmra.mxu0 %v172
  %v5722 = vpop.f32.mrf.mxu0
  %v5723 = vadd.f32 %v5700, %v5722
  %5724 = vdwg.mxu0
  %v5726 = vsel %vm326, %v5720, 0
  %v5729 = vsel %vm326, %v5723, 0
  %5731 = vmatpush.msra.mxu0 0.0
  %5732 = vmatpush.msra.mxu0 0.0
  %5733 = vmatpush.msra.mxu0 0.0
  %5734 = vmatpush.msra.mxu0 0.0
  %5735 = vmatpush.msra.mxu0 0.0
  %5736 = vmatpush.msra.mxu0 0.0
  %5737 = vmatpush.msra.mxu0 0.0
  %5738 = vmatpush.msra.mxu0 0.0
  %5739 = vmatpush.msra.mxu0 0.0
  %5740 = vmatpush.msra.mxu0 0.0
  %5741 = vmatpush.msra.mxu0 0.0
  %5742 = vmatpush.msra.mxu0 0.0
  %5743 = vmatpush.msra.mxu0 0.0
  %5744 = vmatpush.msra.mxu0 0.0
  %5745 = vmatpush.msra.mxu0 %v4881
  %5746 = vmatpush.msra.mxu0 %v4878
  %5747 = vmatmul.f32.gmra.mxu0 %v5726
  %v5748 = vpop.f32.mrf.mxu0
  %v5749 = vadd.f32 0.0, %v5748
  %5750 = vmatmul.f32.gmra.mxu0 %v5729
  %v5751 = vpop.f32.mrf.mxu0
  %v5752 = vadd.f32 0.0, %v5751
  %5753 = vdwg.mxu0
  %v5755 = vsel %vm590, %v5749, 0
  %v5758 = vsel %vm590, %v5752, 0
  %5760 = vmatpush.msra.mxu0 0.0
  %5761 = vmatpush.msra.mxu0 0.0
  %5762 = vmatpush.msra.mxu0 0.0
  %5763 = vmatpush.msra.mxu0 0.0
  %5764 = vmatpush.msra.mxu0 0.0
  %5765 = vmatpush.msra.mxu0 0.0
  %5766 = vmatpush.msra.mxu0 0.0
  %5767 = vmatpush.msra.mxu0 0.0
  %5768 = vmatpush.msra.mxu0 0.0
  %5769 = vmatpush.msra.mxu0 0.0
  %5770 = vmatpush.msra.mxu0 0.0
  %5771 = vmatpush.msra.mxu0 0.0
  %5772 = vmatpush.msra.mxu0 %v213
  %5773 = vmatpush.msra.mxu0 %v212
  %5774 = vmatpush.msra.mxu0 %v211
  %5775 = vmatpush.msra.mxu0 %v210
  %5776 = vmatmul.f32.gmra.mxu0 %v5755
  %v5777 = vpop.f32.mrf.mxu0
  %v5778 = vadd.f32 %v1833, %v5777
  %5779 = vmatmul.f32.gmra.mxu0 %v5758
  %v5780 = vpop.f32.mrf.mxu0
  %v5781 = vadd.f32 %v1833, %v5780
  %5782 = vdwg.mxu0
  %v5783 = vadd.f32 %v4806, %v5778
  %v5784 = vadd.f32 %v4807, %v5781
  %5785 = vmatpush.msra.mxu0 0.0
  %5786 = vmatpush.msra.mxu0 0.0
  %5787 = vmatpush.msra.mxu0 0.0
  %5788 = vmatpush.msra.mxu0 0.0
  %5789 = vmatpush.msra.mxu0 0.0
  %5790 = vmatpush.msra.mxu0 0.0
  %5791 = vmatpush.msra.mxu0 0.0
  %5792 = vmatpush.msra.mxu0 0.0
  %5793 = vmatpush.msra.mxu0 0.0
  %5794 = vmatpush.msra.mxu0 0.0
  %5795 = vmatpush.msra.mxu0 0.0
  %5796 = vmatpush.msra.mxu0 0.0
  %5797 = vmatpush.msra.mxu0 0.0
  %5798 = vmatpush.msra.mxu0 0.0
  %5799 = vmatpush.msra.mxu0 %v5784
  %5800 = vmatpush.msra.mxu0 %v5783
  %5801 = vmatmul.f32.gmra.mxu0 %v328
  %v5802 = vpop.f32.mrf.mxu0
  %v5803 = vadd.f32 0.0, %v5802
  %5804 = vmatmul.f32.gmra.mxu0 %v331
  %v5805 = vpop.f32.mrf.mxu0
  %v5806 = vadd.f32 0.0, %v5805
  %5807 = vdwg.mxu0
  %v5808 = vsub.f32 %v5783, %v5803
  %v5809 = vsub.f32 %v5784, %v5806
  %v5811 = vsel %vm590, %v5808, 0
  %v5814 = vsel %vm590, %v5809, 0
  %5816 = vmatpush.msra.mxu0 0.0
  %5817 = vmatpush.msra.mxu0 0.0
  %5818 = vmatpush.msra.mxu0 0.0
  %5819 = vmatpush.msra.mxu0 0.0
  %5820 = vmatpush.msra.mxu0 0.0
  %5821 = vmatpush.msra.mxu0 0.0
  %5822 = vmatpush.msra.mxu0 0.0
  %5823 = vmatpush.msra.mxu0 0.0
  %5824 = vmatpush.msra.mxu0 0.0
  %5825 = vmatpush.msra.mxu0 0.0
  %5826 = vmatpush.msra.mxu0 0.0
  %5827 = vmatpush.msra.mxu0 0.0
  %5828 = vmatpush.msra.mxu0 %v224
  %5829 = vmatpush.msra.mxu0 %v223
  %5830 = vmatpush.msra.mxu0 %v222
  %5831 = vmatpush.msra.mxu0 %v221
  %5832 = vmatmul.f32.gmra.mxu0 %v5811
  %v5833 = vpop.f32.mrf.mxu0
  %v5834 = vadd.f32 0.0, %v5833
  %5835 = vmatmul.f32.gmra.mxu0 %v5814
  %v5836 = vpop.f32.mrf.mxu0
  %v5837 = vadd.f32 0.0, %v5836
  %5838 = vdwg.mxu0
  %v5839 = vmax.f32 %v5834, 0.0
  %v5840 = vmax.f32 %v5837, 0.0
  %v5842 = vsel %vm590, %v5839, 0
  %v5845 = vsel %vm590, %v5840, 0
  %5847 = vmatpush.msra.mxu0 0.0
  %5848 = vmatpush.msra.mxu0 0.0
  %5849 = vmatpush.msra.mxu0 0.0
  %5850 = vmatpush.msra.mxu0 0.0
  %5851 = vmatpush.msra.mxu0 0.0
  %5852 = vmatpush.msra.mxu0 0.0
  %5853 = vmatpush.msra.mxu0 0.0
  %5854 = vmatpush.msra.mxu0 0.0
  %5855 = vmatpush.msra.mxu0 0.0
  %5856 = vmatpush.msra.mxu0 0.0
  %5857 = vmatpush.msra.mxu0 0.0
  %5858 = vmatpush.msra.mxu0 0.0
  %5859 = vmatpush.msra.mxu0 %v228
  %5860 = vmatpush.msra.mxu0 %v227
  %5861 = vmatpush.msra.mxu0 %v226
  %5862 = vmatpush.msra.mxu0 %v225
  %5863 = vmatmul.f32.gmra.mxu0 %v5842
  %v5864 = vpop.f32.mrf.mxu0
  %v5865 = vadd.f32 0.0, %v5864
  %5866 = vmatmul.f32.gmra.mxu0 %v5845
  %v5867 = vpop.f32.mrf.mxu0
  %v5868 = vadd.f32 0.0, %v5867
  %5869 = vdwg.mxu0
  %v5870 = vadd.f32 %v5808, %v5865
  %v5871 = vadd.f32 %v5809, %v5868
  %5872 = vmatpush.msra.mxu0 0.0
  %5873 = vmatpush.msra.mxu0 0.0
  %5874 = vmatpush.msra.mxu0 0.0
  %5875 = vmatpush.msra.mxu0 0.0
  %5876 = vmatpush.msra.mxu0 0.0
  %5877 = vmatpush.msra.mxu0 0.0
  %5878 = vmatpush.msra.mxu0 0.0
  %5879 = vmatpush.msra.mxu0 0.0
  %5880 = vmatpush.msra.mxu0 0.0
  %5881 = vmatpush.msra.mxu0 0.0
  %5882 = vmatpush.msra.mxu0 0.0
  %5883 = vmatpush.msra.mxu0 0.0
  %5884 = vmatpush.msra.mxu0 0.0
  %5885 = vmatpush.msra.mxu0 0.0
  %5886 = vmatpush.msra.mxu0 %v5871
  %5887 = vmatpush.msra.mxu0 %v5870
  %5888 = vmatmul.f32.gmra.mxu0 %v328
  %v5889 = vpop.f32.mrf.mxu0
  %v5890 = vadd.f32 0.0, %v5889
  %5891 = vmatmul.f32.gmra.mxu0 %v331
  %v5892 = vpop.f32.mrf.mxu0
  %v5893 = vadd.f32 0.0, %v5892
  %5894 = vdwg.mxu0
  %v5895 = vsub.f32 %v5870, %v5890
  %v5896 = vsub.f32 %v5871, %v5893
  %v5897 = vsel %vm590, %v5895, 0.0
  %5898 = vadd.xlane.f32.xlu0 %v5897
  %v5899 = vpop.xlane.xlu0 %5898
  %v5900 = vsel %vm590, %v5896, 0.0
  %5901 = vadd.xlane.f32.xlu0 %v5900
  %v5902 = vpop.xlane.xlu0 %5901
  %v5903 = vmul.f32 %v5899, %v1990
  %v5904 = vmul.f32 %v5902, %v1990
  %v5905 = vsub.f32 %v5895, %v5903
  %v5906 = vsub.f32 %v5896, %v5904
  %v5907 = vmul.f32 %v5905, %v5905
  %v5908 = vmul.f32 %v5906, %v5906
  %v5909 = vsel %vm590, %v5907, 0.0
  %5910 = vadd.xlane.f32.xlu0 %v5909
  %v5911 = vpop.xlane.xlu0 %5910
  %v5912 = vsel %vm590, %v5908, 0.0
  %5913 = vadd.xlane.f32.xlu0 %v5912
  %v5914 = vpop.xlane.xlu0 %5913
  %v5915 = vmul.f32 %v5911, %v1990
  %v5916 = vmul.f32 %v5914, %v1990
  %v5917 = vadd.f32 %v5915, 1e-05
  %v5918 = vadd.f32 %v5916, 1e-05
  %v5919 = vrsqrt.pop %v5917
  %v5920 = vmul.f32 %v5919, %v5917
  %v5921 = vmul.f32 %v5920, %v5919
  %v5922 = vmul.f32 0.5, %v5921
  %v5923 = vsub.f32 1.5, %v5922
  %v5924 = vmul.f32 %v5919, %v5923
  %vm5925 = vweird.f32 %v5917
  %vm5926 = vweird.f32 %v5919
  %vm5927 = vmor %vm5925, %vm5926
  %v5928 = vsel %vm5927, %v5919, %v5924
  %v5929 = vrsqrt.pop %v5918
  %v5930 = vmul.f32 %v5929, %v5918
  %v5931 = vmul.f32 %v5930, %v5929
  %v5932 = vmul.f32 0.5, %v5931
  %v5933 = vsub.f32 1.5, %v5932
  %v5934 = vmul.f32 %v5929, %v5933
  %vm5935 = vweird.f32 %v5918
  %vm5936 = vweird.f32 %v5929
  %vm5937 = vmor %vm5935, %vm5936
  %v5938 = vsel %vm5937, %v5929, %v5934
  %v5939 = vmul.f32 %v5905, %v5928
  %v5940 = vmul.f32 %v5906, %v5938
  %v5941 = vmul.f32 %v5939, %v2030
  %v5942 = vmul.f32 %v5940, %v2030
  %v5943 = vadd.f32 %v5941, %v2035
  %v5944 = vadd.f32 %v5942, %v2035
  %v5945 = vsel %vm590, %v5943, 0.0
  %v5946 = vsel %vm590, %v5944, 0.0
  %v5947 = vadd.f32 %v5945, %v5946
  %v5948 = vrot.slane %v5947, 4
  %v5949 = vadd.f32 %v5947, %v5948
  %v5950 = vrot.slane %v5949, 2
  %v5951 = vadd.f32 %v5949, %v5950
  %v5952 = vrot.slane %v5951, 1
  %v5953 = vadd.f32 %v5951, %v5952
  %v5954 = vmul.f32 %v5953, %v374
  %v5955 = vsub.f32 %v5943, %v5954
  %v5956 = vsub.f32 %v5944, %v5954
  %5957 = vmatpush.msra.mxu0 0.0
  %5958 = vmatpush.msra.mxu0 0.0
  %5959 = vmatpush.msra.mxu0 0.0
  %5960 = vmatpush.msra.mxu0 0.0
  %5961 = vmatpush.msra.mxu0 0.0
  %5962 = vmatpush.msra.mxu0 0.0
  %5963 = vmatpush.msra.mxu0 0.0
  %5964 = vmatpush.msra.mxu0 0.0
  %5965 = vmatpush.msra.mxu0 0.0
  %5966 = vmatpush.msra.mxu0 0.0
  %5967 = vmatpush.msra.mxu0 0.0
  %5968 = vmatpush.msra.mxu0 0.0
  %5969 = vmatpush.msra.mxu0 0.0
  %5970 = vmatpush.msra.mxu0 0.0
  %5971 = vmatpush.msra.mxu0 %v4671
  %5972 = vmatpush.msra.mxu0 %v4668
  %5973 = vmatmul.f32.gmra.mxu0 %v431
  %v5974 = vpop.f32.mrf.mxu0
  %v5975 = vadd.f32 0.0, %v5974
  %5976 = vmatmul.f32.gmra.mxu0 %v434
  %v5977 = vpop.f32.mrf.mxu0
  %v5978 = vadd.f32 0.0, %v5977
  %5979 = vdwg.mxu0
  %v5981 = vsel %vm358, %v4668, 0
  %v5984 = vsel %vm358, %v4671, 0
  %5986 = vmatpush.msra.mxu0 0.0
  %5987 = vmatpush.msra.mxu0 0.0
  %5988 = vmatpush.msra.mxu0 0.0
  %5989 = vmatpush.msra.mxu0 0.0
  %5990 = vmatpush.msra.mxu0 0.0
  %5991 = vmatpush.msra.mxu0 0.0
  %5992 = vmatpush.msra.mxu0 0.0
  %5993 = vmatpush.msra.mxu0 0.0
  %5994 = vmatpush.msra.mxu0 0.0
  %5995 = vmatpush.msra.mxu0 0.0
  %5996 = vmatpush.msra.mxu0 0.0
  %5997 = vmatpush.msra.mxu0 0.0
  %5998 = vmatpush.msra.mxu0 0.0
  %5999 = vmatpush.msra.mxu0 0.0
  %6000 = vmatpush.msra.mxu0 0.0
  %6001 = vmatpush.msra.mxu0 %v2081
  %6002 = vmatmul.f32.gmra.mxu0 %v5981
  %v6003 = vpop.f32.mrf.mxu0
  %v6004 = vadd.f32 0.0, %v6003
  %6005 = vmatmul.f32.gmra.mxu0 %v5984
  %v6006 = vpop.f32.mrf.mxu0
  %v6007 = vadd.f32 0.0, %v6006
  %6008 = vdwg.mxu0
  %v6010 = vsel %vm358, %v5975, 0
  %v6013 = vsel %vm358, %v5978, 0
  %6015 = vmatpush.msra.mxu0 0.0
  %6016 = vmatpush.msra.mxu0 0.0
  %6017 = vmatpush.msra.mxu0 0.0
  %6018 = vmatpush.msra.mxu0 0.0
  %6019 = vmatpush.msra.mxu0 0.0
  %6020 = vmatpush.msra.mxu0 0.0
  %6021 = vmatpush.msra.mxu0 0.0
  %6022 = vmatpush.msra.mxu0 0.0
  %6023 = vmatpush.msra.mxu0 0.0
  %6024 = vmatpush.msra.mxu0 0.0
  %6025 = vmatpush.msra.mxu0 0.0
  %6026 = vmatpush.msra.mxu0 0.0
  %6027 = vmatpush.msra.mxu0 0.0
  %6028 = vmatpush.msra.mxu0 0.0
  %6029 = vmatpush.msra.mxu0 0.0
  %6030 = vmatpush.msra.mxu0 %v2113
  %6031 = vmatmul.f32.gmra.mxu0 %v6010
  %v6032 = vpop.f32.mrf.mxu0
  %v6033 = vadd.f32 %v6004, %v6032
  %6034 = vmatmul.f32.gmra.mxu0 %v6013
  %v6035 = vpop.f32.mrf.mxu0
  %v6036 = vadd.f32 %v6007, %v6035
  %6037 = vdwg.mxu0
  %6038 = vmatpush.msra.mxu0 0.0
  %6039 = vmatpush.msra.mxu0 0.0
  %6040 = vmatpush.msra.mxu0 0.0
  %6041 = vmatpush.msra.mxu0 0.0
  %6042 = vmatpush.msra.mxu0 0.0
  %6043 = vmatpush.msra.mxu0 0.0
  %6044 = vmatpush.msra.mxu0 0.0
  %6045 = vmatpush.msra.mxu0 0.0
  %6046 = vmatpush.msra.mxu0 0.0
  %6047 = vmatpush.msra.mxu0 0.0
  %6048 = vmatpush.msra.mxu0 0.0
  %6049 = vmatpush.msra.mxu0 0.0
  %6050 = vmatpush.msra.mxu0 0.0
  %6051 = vmatpush.msra.mxu0 0.0
  %6052 = vmatpush.msra.mxu0 %v4671
  %6053 = vmatpush.msra.mxu0 %v4668
  %6054 = vmatmul.f32.gmra.mxu0 %v525
  %v6055 = vpop.f32.mrf.mxu0
  %v6056 = vadd.f32 0.0, %v6055
  %6057 = vmatmul.f32.gmra.mxu0 %v528
  %v6058 = vpop.f32.mrf.mxu0
  %v6059 = vadd.f32 0.0, %v6058
  %6060 = vdwg.mxu0
  %v6062 = vsel %vm358, %v6056, 0
  %v6065 = vsel %vm358, %v6059, 0
  %6067 = vmatpush.msra.mxu0 0.0
  %6068 = vmatpush.msra.mxu0 0.0
  %6069 = vmatpush.msra.mxu0 0.0
  %6070 = vmatpush.msra.mxu0 0.0
  %6071 = vmatpush.msra.mxu0 0.0
  %6072 = vmatpush.msra.mxu0 0.0
  %6073 = vmatpush.msra.mxu0 0.0
  %6074 = vmatpush.msra.mxu0 0.0
  %6075 = vmatpush.msra.mxu0 0.0
  %6076 = vmatpush.msra.mxu0 0.0
  %6077 = vmatpush.msra.mxu0 0.0
  %6078 = vmatpush.msra.mxu0 0.0
  %6079 = vmatpush.msra.mxu0 0.0
  %6080 = vmatpush.msra.mxu0 0.0
  %6081 = vmatpush.msra.mxu0 0.0
  %6082 = vmatpush.msra.mxu0 %v2168
  %6083 = vmatmul.f32.gmra.mxu0 %v6062
  %v6084 = vpop.f32.mrf.mxu0
  %v6085 = vadd.f32 0.0, %v6084
  %6086 = vmatmul.f32.gmra.mxu0 %v6065
  %v6087 = vpop.f32.mrf.mxu0
  %v6088 = vadd.f32 0.0, %v6087
  %6089 = vdwg.mxu0
  %v6090 = vadd.f32 %v6033, %v6085
  %v6091 = vadd.f32 %v6036, %v6088
  %v6093 = vsel %vm590, %v6090, 0
  %v6096 = vsel %vm590, %v6091, 0
  %6098 = vmatpush.msra.mxu0 0.0
  %6099 = vmatpush.msra.mxu0 0.0
  %6100 = vmatpush.msra.mxu0 0.0
  %6101 = vmatpush.msra.mxu0 0.0
  %6102 = vmatpush.msra.mxu0 0.0
  %6103 = vmatpush.msra.mxu0 0.0
  %6104 = vmatpush.msra.mxu0 0.0
  %6105 = vmatpush.msra.mxu0 0.0
  %6106 = vmatpush.msra.mxu0 0.0
  %6107 = vmatpush.msra.mxu0 0.0
  %6108 = vmatpush.msra.mxu0 0.0
  %6109 = vmatpush.msra.mxu0 0.0
  %6110 = vmatpush.msra.mxu0 %v232
  %6111 = vmatpush.msra.mxu0 %v231
  %6112 = vmatpush.msra.mxu0 %v230
  %6113 = vmatpush.msra.mxu0 %v229
  %6114 = vmatmul.f32.gmra.mxu0 %v6093
  %v6115 = vpop.f32.mrf.mxu0
  %v6116 = vadd.f32 %v2196, %v6115
  %6117 = vmatmul.f32.gmra.mxu0 %v6096
  %v6118 = vpop.f32.mrf.mxu0
  %v6119 = vadd.f32 %v2196, %v6118
  %6120 = vdwg.mxu0
  %6121 = vmatpush.msra.mxu0 0.0
  %6122 = vmatpush.msra.mxu0 0.0
  %6123 = vmatpush.msra.mxu0 0.0
  %6124 = vmatpush.msra.mxu0 0.0
  %6125 = vmatpush.msra.mxu0 0.0
  %6126 = vmatpush.msra.mxu0 0.0
  %6127 = vmatpush.msra.mxu0 0.0
  %6128 = vmatpush.msra.mxu0 0.0
  %6129 = vmatpush.msra.mxu0 0.0
  %6130 = vmatpush.msra.mxu0 0.0
  %6131 = vmatpush.msra.mxu0 0.0
  %6132 = vmatpush.msra.mxu0 0.0
  %6133 = vmatpush.msra.mxu0 %v237
  %6134 = vmatpush.msra.mxu0 %v236
  %6135 = vmatpush.msra.mxu0 %v235
  %6136 = vmatpush.msra.mxu0 %v234
  %6137 = vmatmul.f32.gmra.mxu0 %v6093
  %v6138 = vpop.f32.mrf.mxu0
  %v6139 = vadd.f32 %v2228, %v6138
  %6140 = vmatmul.f32.gmra.mxu0 %v6096
  %v6141 = vpop.f32.mrf.mxu0
  %v6142 = vadd.f32 %v2228, %v6141
  %6143 = vdwg.mxu0
  %6144 = vmatpush.msra.mxu0 0.0
  %6145 = vmatpush.msra.mxu0 0.0
  %6146 = vmatpush.msra.mxu0 0.0
  %6147 = vmatpush.msra.mxu0 0.0
  %6148 = vmatpush.msra.mxu0 0.0
  %6149 = vmatpush.msra.mxu0 0.0
  %6150 = vmatpush.msra.mxu0 0.0
  %6151 = vmatpush.msra.mxu0 0.0
  %6152 = vmatpush.msra.mxu0 0.0
  %6153 = vmatpush.msra.mxu0 0.0
  %6154 = vmatpush.msra.mxu0 0.0
  %6155 = vmatpush.msra.mxu0 0.0
  %6156 = vmatpush.msra.mxu0 %v242
  %6157 = vmatpush.msra.mxu0 %v241
  %6158 = vmatpush.msra.mxu0 %v240
  %6159 = vmatpush.msra.mxu0 %v239
  %6160 = vmatmul.f32.gmra.mxu0 %v6093
  %v6161 = vpop.f32.mrf.mxu0
  %v6162 = vadd.f32 %v2254, %v6161
  %6163 = vmatmul.f32.gmra.mxu0 %v6096
  %v6164 = vpop.f32.mrf.mxu0
  %v6165 = vadd.f32 %v2254, %v6164
  %6166 = vdwg.mxu0
  %6167 = vmatpush.msra.mxu0 0.0
  %6168 = vmatpush.msra.mxu0 0.0
  %6169 = vmatpush.msra.mxu0 0.0
  %6170 = vmatpush.msra.mxu0 0.0
  %6171 = vmatpush.msra.mxu0 0.0
  %6172 = vmatpush.msra.mxu0 0.0
  %6173 = vmatpush.msra.mxu0 0.0
  %6174 = vmatpush.msra.mxu0 0.0
  %6175 = vmatpush.msra.mxu0 0.0
  %6176 = vmatpush.msra.mxu0 0.0
  %6177 = vmatpush.msra.mxu0 0.0
  %6178 = vmatpush.msra.mxu0 0.0
  %6179 = vmatpush.msra.mxu0 0.0
  %6180 = vmatpush.msra.mxu0 0.0
  %6181 = vmatpush.msra.mxu0 %v6119
  %6182 = vmatpush.msra.mxu0 %v6116
  %6183 = vmatmul.f32.gmra.mxu0 %v673
  %v6184 = vpop.f32.mrf.mxu0
  %v6185 = vadd.f32 0.0, %v6184
  %6186 = vmatmul.f32.gmra.mxu0 %v676
  %v6187 = vpop.f32.mrf.mxu0
  %v6188 = vadd.f32 0.0, %v6187
  %6189 = vmatmul.f32.gmra.mxu0 %v679
  %v6190 = vpop.f32.mrf.mxu0
  %v6191 = vadd.f32 0.0, %v6190
  %6192 = vmatmul.f32.gmra.mxu0 %v682
  %v6193 = vpop.f32.mrf.mxu0
  %v6194 = vadd.f32 0.0, %v6193
  %6195 = vmatmul.f32.gmra.mxu0 %v685
  %v6196 = vpop.f32.mrf.mxu0
  %v6197 = vadd.f32 0.0, %v6196
  %6198 = vmatmul.f32.gmra.mxu0 %v688
  %v6199 = vpop.f32.mrf.mxu0
  %v6200 = vadd.f32 0.0, %v6199
  %6201 = vmatmul.f32.gmra.mxu0 %v691
  %v6202 = vpop.f32.mrf.mxu0
  %v6203 = vadd.f32 0.0, %v6202
  %6204 = vmatmul.f32.gmra.mxu0 %v694
  %v6205 = vpop.f32.mrf.mxu0
  %v6206 = vadd.f32 0.0, %v6205
  %6207 = vmatmul.f32.gmra.mxu0 %v697
  %v6208 = vpop.f32.mrf.mxu0
  %v6209 = vadd.f32 0.0, %v6208
  %6210 = vmatmul.f32.gmra.mxu0 %v700
  %v6211 = vpop.f32.mrf.mxu0
  %v6212 = vadd.f32 0.0, %v6211
  %6213 = vmatmul.f32.gmra.mxu0 %v703
  %v6214 = vpop.f32.mrf.mxu0
  %v6215 = vadd.f32 0.0, %v6214
  %6216 = vmatmul.f32.gmra.mxu0 %v706
  %v6217 = vpop.f32.mrf.mxu0
  %v6218 = vadd.f32 0.0, %v6217
  %6219 = vmatmul.f32.gmra.mxu0 %v709
  %v6220 = vpop.f32.mrf.mxu0
  %v6221 = vadd.f32 0.0, %v6220
  %6222 = vmatmul.f32.gmra.mxu0 %v712
  %v6223 = vpop.f32.mrf.mxu0
  %v6224 = vadd.f32 0.0, %v6223
  %6225 = vmatmul.f32.gmra.mxu0 %v715
  %v6226 = vpop.f32.mrf.mxu0
  %v6227 = vadd.f32 0.0, %v6226
  %6228 = vmatmul.f32.gmra.mxu0 %v718
  %v6229 = vpop.f32.mrf.mxu0
  %v6230 = vadd.f32 0.0, %v6229
  %6231 = vmatmul.f32.gmra.mxu0 %v721
  %v6232 = vpop.f32.mrf.mxu0
  %v6233 = vadd.f32 0.0, %v6232
  %6234 = vmatmul.f32.gmra.mxu0 %v724
  %v6235 = vpop.f32.mrf.mxu0
  %v6236 = vadd.f32 0.0, %v6235
  %6237 = vmatmul.f32.gmra.mxu0 %v727
  %v6238 = vpop.f32.mrf.mxu0
  %v6239 = vadd.f32 0.0, %v6238
  %6240 = vmatmul.f32.gmra.mxu0 %v730
  %v6241 = vpop.f32.mrf.mxu0
  %v6242 = vadd.f32 0.0, %v6241
  %6243 = vmatmul.f32.gmra.mxu0 %v733
  %v6244 = vpop.f32.mrf.mxu0
  %v6245 = vadd.f32 0.0, %v6244
  %6246 = vmatmul.f32.gmra.mxu0 %v736
  %v6247 = vpop.f32.mrf.mxu0
  %v6248 = vadd.f32 0.0, %v6247
  %6249 = vmatmul.f32.gmra.mxu0 %v739
  %v6250 = vpop.f32.mrf.mxu0
  %v6251 = vadd.f32 0.0, %v6250
  %6252 = vmatmul.f32.gmra.mxu0 %v742
  %v6253 = vpop.f32.mrf.mxu0
  %v6254 = vadd.f32 0.0, %v6253
  %6255 = vmatmul.f32.gmra.mxu0 %v745
  %v6256 = vpop.f32.mrf.mxu0
  %v6257 = vadd.f32 0.0, %v6256
  %6258 = vmatmul.f32.gmra.mxu0 %v748
  %v6259 = vpop.f32.mrf.mxu0
  %v6260 = vadd.f32 0.0, %v6259
  %6261 = vmatmul.f32.gmra.mxu0 %v751
  %v6262 = vpop.f32.mrf.mxu0
  %v6263 = vadd.f32 0.0, %v6262
  %6264 = vmatmul.f32.gmra.mxu0 %v754
  %v6265 = vpop.f32.mrf.mxu0
  %v6266 = vadd.f32 0.0, %v6265
  %6267 = vmatmul.f32.gmra.mxu0 %v757
  %v6268 = vpop.f32.mrf.mxu0
  %v6269 = vadd.f32 0.0, %v6268
  %6270 = vmatmul.f32.gmra.mxu0 %v760
  %v6271 = vpop.f32.mrf.mxu0
  %v6272 = vadd.f32 0.0, %v6271
  %6273 = vmatmul.f32.gmra.mxu0 %v763
  %v6274 = vpop.f32.mrf.mxu0
  %v6275 = vadd.f32 0.0, %v6274
  %6276 = vmatmul.f32.gmra.mxu0 %v766
  %v6277 = vpop.f32.mrf.mxu0
  %v6278 = vadd.f32 0.0, %v6277
  %6279 = vdwg.mxu0
  %6280 = vmatpush.msra.mxu0 0.0
  %6281 = vmatpush.msra.mxu0 0.0
  %6282 = vmatpush.msra.mxu0 0.0
  %6283 = vmatpush.msra.mxu0 0.0
  %6284 = vmatpush.msra.mxu0 0.0
  %6285 = vmatpush.msra.mxu0 0.0
  %6286 = vmatpush.msra.mxu0 0.0
  %6287 = vmatpush.msra.mxu0 0.0
  %6288 = vmatpush.msra.mxu0 0.0
  %6289 = vmatpush.msra.mxu0 0.0
  %6290 = vmatpush.msra.mxu0 0.0
  %6291 = vmatpush.msra.mxu0 0.0
  %6292 = vmatpush.msra.mxu0 0.0
  %6293 = vmatpush.msra.mxu0 0.0
  %6294 = vmatpush.msra.mxu0 %v6142
  %6295 = vmatpush.msra.mxu0 %v6139
  %6296 = vmatmul.f32.gmra.mxu0 %v882
  %v6297 = vpop.f32.mrf.mxu0
  %v6298 = vadd.f32 0.0, %v6297
  %6299 = vmatmul.f32.gmra.mxu0 %v885
  %v6300 = vpop.f32.mrf.mxu0
  %v6301 = vadd.f32 0.0, %v6300
  %6302 = vmatmul.f32.gmra.mxu0 %v888
  %v6303 = vpop.f32.mrf.mxu0
  %v6304 = vadd.f32 0.0, %v6303
  %6305 = vmatmul.f32.gmra.mxu0 %v891
  %v6306 = vpop.f32.mrf.mxu0
  %v6307 = vadd.f32 0.0, %v6306
  %6308 = vmatmul.f32.gmra.mxu0 %v894
  %v6309 = vpop.f32.mrf.mxu0
  %v6310 = vadd.f32 0.0, %v6309
  %6311 = vmatmul.f32.gmra.mxu0 %v897
  %v6312 = vpop.f32.mrf.mxu0
  %v6313 = vadd.f32 0.0, %v6312
  %6314 = vmatmul.f32.gmra.mxu0 %v900
  %v6315 = vpop.f32.mrf.mxu0
  %v6316 = vadd.f32 0.0, %v6315
  %6317 = vmatmul.f32.gmra.mxu0 %v903
  %v6318 = vpop.f32.mrf.mxu0
  %v6319 = vadd.f32 0.0, %v6318
  %6320 = vmatmul.f32.gmra.mxu0 %v906
  %v6321 = vpop.f32.mrf.mxu0
  %v6322 = vadd.f32 0.0, %v6321
  %6323 = vmatmul.f32.gmra.mxu0 %v909
  %v6324 = vpop.f32.mrf.mxu0
  %v6325 = vadd.f32 0.0, %v6324
  %6326 = vmatmul.f32.gmra.mxu0 %v912
  %v6327 = vpop.f32.mrf.mxu0
  %v6328 = vadd.f32 0.0, %v6327
  %6329 = vmatmul.f32.gmra.mxu0 %v915
  %v6330 = vpop.f32.mrf.mxu0
  %v6331 = vadd.f32 0.0, %v6330
  %6332 = vmatmul.f32.gmra.mxu0 %v918
  %v6333 = vpop.f32.mrf.mxu0
  %v6334 = vadd.f32 0.0, %v6333
  %6335 = vmatmul.f32.gmra.mxu0 %v921
  %v6336 = vpop.f32.mrf.mxu0
  %v6337 = vadd.f32 0.0, %v6336
  %6338 = vmatmul.f32.gmra.mxu0 %v924
  %v6339 = vpop.f32.mrf.mxu0
  %v6340 = vadd.f32 0.0, %v6339
  %6341 = vmatmul.f32.gmra.mxu0 %v927
  %v6342 = vpop.f32.mrf.mxu0
  %v6343 = vadd.f32 0.0, %v6342
  %6344 = vmatmul.f32.gmra.mxu0 %v930
  %v6345 = vpop.f32.mrf.mxu0
  %v6346 = vadd.f32 0.0, %v6345
  %6347 = vmatmul.f32.gmra.mxu0 %v933
  %v6348 = vpop.f32.mrf.mxu0
  %v6349 = vadd.f32 0.0, %v6348
  %6350 = vmatmul.f32.gmra.mxu0 %v936
  %v6351 = vpop.f32.mrf.mxu0
  %v6352 = vadd.f32 0.0, %v6351
  %6353 = vmatmul.f32.gmra.mxu0 %v939
  %v6354 = vpop.f32.mrf.mxu0
  %v6355 = vadd.f32 0.0, %v6354
  %6356 = vmatmul.f32.gmra.mxu0 %v942
  %v6357 = vpop.f32.mrf.mxu0
  %v6358 = vadd.f32 0.0, %v6357
  %6359 = vmatmul.f32.gmra.mxu0 %v945
  %v6360 = vpop.f32.mrf.mxu0
  %v6361 = vadd.f32 0.0, %v6360
  %6362 = vmatmul.f32.gmra.mxu0 %v948
  %v6363 = vpop.f32.mrf.mxu0
  %v6364 = vadd.f32 0.0, %v6363
  %6365 = vmatmul.f32.gmra.mxu0 %v951
  %v6366 = vpop.f32.mrf.mxu0
  %v6367 = vadd.f32 0.0, %v6366
  %6368 = vmatmul.f32.gmra.mxu0 %v954
  %v6369 = vpop.f32.mrf.mxu0
  %v6370 = vadd.f32 0.0, %v6369
  %6371 = vmatmul.f32.gmra.mxu0 %v957
  %v6372 = vpop.f32.mrf.mxu0
  %v6373 = vadd.f32 0.0, %v6372
  %6374 = vmatmul.f32.gmra.mxu0 %v960
  %v6375 = vpop.f32.mrf.mxu0
  %v6376 = vadd.f32 0.0, %v6375
  %6377 = vmatmul.f32.gmra.mxu0 %v963
  %v6378 = vpop.f32.mrf.mxu0
  %v6379 = vadd.f32 0.0, %v6378
  %6380 = vmatmul.f32.gmra.mxu0 %v966
  %v6381 = vpop.f32.mrf.mxu0
  %v6382 = vadd.f32 0.0, %v6381
  %6383 = vmatmul.f32.gmra.mxu0 %v969
  %v6384 = vpop.f32.mrf.mxu0
  %v6385 = vadd.f32 0.0, %v6384
  %6386 = vmatmul.f32.gmra.mxu0 %v972
  %v6387 = vpop.f32.mrf.mxu0
  %v6388 = vadd.f32 0.0, %v6387
  %6389 = vmatmul.f32.gmra.mxu0 %v975
  %v6390 = vpop.f32.mrf.mxu0
  %v6391 = vadd.f32 0.0, %v6390
  %6392 = vdwg.mxu0
  %v6393 = vmul.f32 %v6185, %v6298
  %v6394 = vmul.f32 %v6188, %v6301
  %v6395 = vmul.f32 %v6191, %v6304
  %v6396 = vmul.f32 %v6194, %v6307
  %v6397 = vmul.f32 %v6197, %v6310
  %v6398 = vmul.f32 %v6200, %v6313
  %v6399 = vmul.f32 %v6203, %v6316
  %v6400 = vmul.f32 %v6206, %v6319
  %v6401 = vmul.f32 %v6209, %v6322
  %v6402 = vmul.f32 %v6212, %v6325
  %v6403 = vmul.f32 %v6215, %v6328
  %v6404 = vmul.f32 %v6218, %v6331
  %v6405 = vmul.f32 %v6221, %v6334
  %v6406 = vmul.f32 %v6224, %v6337
  %v6407 = vmul.f32 %v6227, %v6340
  %v6408 = vmul.f32 %v6230, %v6343
  %v6409 = vmul.f32 %v6233, %v6346
  %v6410 = vmul.f32 %v6236, %v6349
  %v6411 = vmul.f32 %v6239, %v6352
  %v6412 = vmul.f32 %v6242, %v6355
  %v6413 = vmul.f32 %v6245, %v6358
  %v6414 = vmul.f32 %v6248, %v6361
  %v6415 = vmul.f32 %v6251, %v6364
  %v6416 = vmul.f32 %v6254, %v6367
  %v6417 = vmul.f32 %v6257, %v6370
  %v6418 = vmul.f32 %v6260, %v6373
  %v6419 = vmul.f32 %v6263, %v6376
  %v6420 = vmul.f32 %v6266, %v6379
  %v6421 = vmul.f32 %v6269, %v6382
  %v6422 = vmul.f32 %v6272, %v6385
  %v6423 = vmul.f32 %v6275, %v6388
  %v6424 = vmul.f32 %v6278, %v6391
  %v6425 = vsel %vm590, %v6393, 0.0
  %6426 = vadd.xlane.f32.xlu0 %v6425
  %v6427 = vpop.xlane.xlu0 %6426
  %v6428 = vsel %vm590, %v6394, 0.0
  %6429 = vadd.xlane.f32.xlu0 %v6428
  %v6430 = vpop.xlane.xlu0 %6429
  %v6431 = vsel %vm590, %v6395, 0.0
  %6432 = vadd.xlane.f32.xlu0 %v6431
  %v6433 = vpop.xlane.xlu0 %6432
  %v6434 = vsel %vm590, %v6396, 0.0
  %6435 = vadd.xlane.f32.xlu0 %v6434
  %v6436 = vpop.xlane.xlu0 %6435
  %v6437 = vsel %vm590, %v6397, 0.0
  %6438 = vadd.xlane.f32.xlu0 %v6437
  %v6439 = vpop.xlane.xlu0 %6438
  %v6440 = vsel %vm590, %v6398, 0.0
  %6441 = vadd.xlane.f32.xlu0 %v6440
  %v6442 = vpop.xlane.xlu0 %6441
  %v6443 = vsel %vm590, %v6399, 0.0
  %6444 = vadd.xlane.f32.xlu0 %v6443
  %v6445 = vpop.xlane.xlu0 %6444
  %v6446 = vsel %vm590, %v6400, 0.0
  %6447 = vadd.xlane.f32.xlu0 %v6446
  %v6448 = vpop.xlane.xlu0 %6447
  %v6449 = vsel %vm590, %v6401, 0.0
  %6450 = vadd.xlane.f32.xlu0 %v6449
  %v6451 = vpop.xlane.xlu0 %6450
  %v6452 = vsel %vm590, %v6402, 0.0
  %6453 = vadd.xlane.f32.xlu0 %v6452
  %v6454 = vpop.xlane.xlu0 %6453
  %v6455 = vsel %vm590, %v6403, 0.0
  %6456 = vadd.xlane.f32.xlu0 %v6455
  %v6457 = vpop.xlane.xlu0 %6456
  %v6458 = vsel %vm590, %v6404, 0.0
  %6459 = vadd.xlane.f32.xlu0 %v6458
  %v6460 = vpop.xlane.xlu0 %6459
  %v6461 = vsel %vm590, %v6405, 0.0
  %6462 = vadd.xlane.f32.xlu0 %v6461
  %v6463 = vpop.xlane.xlu0 %6462
  %v6464 = vsel %vm590, %v6406, 0.0
  %6465 = vadd.xlane.f32.xlu0 %v6464
  %v6466 = vpop.xlane.xlu0 %6465
  %v6467 = vsel %vm590, %v6407, 0.0
  %6468 = vadd.xlane.f32.xlu0 %v6467
  %v6469 = vpop.xlane.xlu0 %6468
  %v6470 = vsel %vm590, %v6408, 0.0
  %6471 = vadd.xlane.f32.xlu0 %v6470
  %v6472 = vpop.xlane.xlu0 %6471
  %v6473 = vsel %vm590, %v6409, 0.0
  %6474 = vadd.xlane.f32.xlu0 %v6473
  %v6475 = vpop.xlane.xlu0 %6474
  %v6476 = vsel %vm590, %v6410, 0.0
  %6477 = vadd.xlane.f32.xlu0 %v6476
  %v6478 = vpop.xlane.xlu0 %6477
  %v6479 = vsel %vm590, %v6411, 0.0
  %6480 = vadd.xlane.f32.xlu0 %v6479
  %v6481 = vpop.xlane.xlu0 %6480
  %v6482 = vsel %vm590, %v6412, 0.0
  %6483 = vadd.xlane.f32.xlu0 %v6482
  %v6484 = vpop.xlane.xlu0 %6483
  %v6485 = vsel %vm590, %v6413, 0.0
  %6486 = vadd.xlane.f32.xlu0 %v6485
  %v6487 = vpop.xlane.xlu0 %6486
  %v6488 = vsel %vm590, %v6414, 0.0
  %6489 = vadd.xlane.f32.xlu0 %v6488
  %v6490 = vpop.xlane.xlu0 %6489
  %v6491 = vsel %vm590, %v6415, 0.0
  %6492 = vadd.xlane.f32.xlu0 %v6491
  %v6493 = vpop.xlane.xlu0 %6492
  %v6494 = vsel %vm590, %v6416, 0.0
  %6495 = vadd.xlane.f32.xlu0 %v6494
  %v6496 = vpop.xlane.xlu0 %6495
  %v6497 = vsel %vm590, %v6417, 0.0
  %6498 = vadd.xlane.f32.xlu0 %v6497
  %v6499 = vpop.xlane.xlu0 %6498
  %v6500 = vsel %vm590, %v6418, 0.0
  %6501 = vadd.xlane.f32.xlu0 %v6500
  %v6502 = vpop.xlane.xlu0 %6501
  %v6503 = vsel %vm590, %v6419, 0.0
  %6504 = vadd.xlane.f32.xlu0 %v6503
  %v6505 = vpop.xlane.xlu0 %6504
  %v6506 = vsel %vm590, %v6420, 0.0
  %6507 = vadd.xlane.f32.xlu0 %v6506
  %v6508 = vpop.xlane.xlu0 %6507
  %v6509 = vsel %vm590, %v6421, 0.0
  %6510 = vadd.xlane.f32.xlu0 %v6509
  %v6511 = vpop.xlane.xlu0 %6510
  %v6512 = vsel %vm590, %v6422, 0.0
  %6513 = vadd.xlane.f32.xlu0 %v6512
  %v6514 = vpop.xlane.xlu0 %6513
  %v6515 = vsel %vm590, %v6423, 0.0
  %6516 = vadd.xlane.f32.xlu0 %v6515
  %v6517 = vpop.xlane.xlu0 %6516
  %v6518 = vsel %vm590, %v6424, 0.0
  %6519 = vadd.xlane.f32.xlu0 %v6518
  %v6520 = vpop.xlane.xlu0 %6519
  %6521 = vmatpush.msra.mxu0 %v6472
  %6522 = vmatpush.msra.mxu0 %v6469
  %6523 = vmatpush.msra.mxu0 %v6466
  %6524 = vmatpush.msra.mxu0 %v6463
  %6525 = vmatpush.msra.mxu0 %v6460
  %6526 = vmatpush.msra.mxu0 %v6457
  %6527 = vmatpush.msra.mxu0 %v6454
  %6528 = vmatpush.msra.mxu0 %v6451
  %6529 = vmatpush.msra.mxu0 %v6448
  %6530 = vmatpush.msra.mxu0 %v6445
  %6531 = vmatpush.msra.mxu0 %v6442
  %6532 = vmatpush.msra.mxu0 %v6439
  %6533 = vmatpush.msra.mxu0 %v6436
  %6534 = vmatpush.msra.mxu0 %v6433
  %6535 = vmatpush.msra.mxu0 %v6430
  %6536 = vmatpush.msra.mxu0 %v6427
  %6537 = vmatmul.f32.gmra.mxu0 %v174
  %v6538 = vpop.f32.mrf.mxu0
  %v6539 = vadd.f32 0.0, %v6538
  %6540 = vmatmul.f32.gmra.mxu0 %v176
  %v6541 = vpop.f32.mrf.mxu0
  %v6542 = vadd.f32 0.0, %v6541
  %6543 = vdwg.mxu0
  %6544 = vmatpush.msra.mxu0 %v6520
  %6545 = vmatpush.msra.mxu0 %v6517
  %6546 = vmatpush.msra.mxu0 %v6514
  %6547 = vmatpush.msra.mxu0 %v6511
  %6548 = vmatpush.msra.mxu0 %v6508
  %6549 = vmatpush.msra.mxu0 %v6505
  %6550 = vmatpush.msra.mxu0 %v6502
  %6551 = vmatpush.msra.mxu0 %v6499
  %6552 = vmatpush.msra.mxu0 %v6496
  %6553 = vmatpush.msra.mxu0 %v6493
  %6554 = vmatpush.msra.mxu0 %v6490
  %6555 = vmatpush.msra.mxu0 %v6487
  %6556 = vmatpush.msra.mxu0 %v6484
  %6557 = vmatpush.msra.mxu0 %v6481
  %6558 = vmatpush.msra.mxu0 %v6478
  %6559 = vmatpush.msra.mxu0 %v6475
  %6560 = vmatmul.f32.gmra.mxu0 %v175
  %v6561 = vpop.f32.mrf.mxu0
  %v6562 = vadd.f32 %v6539, %v6561
  %6563 = vmatmul.f32.gmra.mxu0 %v177
  %v6564 = vpop.f32.mrf.mxu0
  %v6565 = vadd.f32 %v6542, %v6564
  %6566 = vdwg.mxu0
  %v6567 = vmul.f32 %v6562, 0.03125
  %v6568 = vmul.f32 %v6565, 0.03125
  %v6569 = vsel %vm1266, %v6567, -inf
  %v6570 = vsel %vm1266, %v6568, -inf
  %v6571 = vmax.f32 %v6569, %v6570
  %v6572 = vrot.slane %v6571, 4
  %v6573 = vmax.f32 %v6571, %v6572
  %v6574 = vrot.slane %v6573, 2
  %v6575 = vmax.f32 %v6573, %v6574
  %v6576 = vrot.slane %v6575, 1
  %v6577 = vmax.f32 %v6575, %v6576
  %vm6578 = vcmp.ge.f32.partialorder %v6567, %v6577
  %vm6579 = vcmp.ge.f32.partialorder %v6568, %v6577
  %v6580 = vsel %vm6578, %v316, 16.0
  %v6581 = vsel %vm6579, %v317, 16.0
  %v6582 = vsel %vm1266, %v6580, inf
  %v6583 = vsel %vm1266, %v6581, inf
  %v6584 = vmin.f32 %v6582, %v6583
  %v6585 = vrot.slane %v6584, 4
  %v6586 = vmin.f32 %v6584, %v6585
  %v6587 = vrot.slane %v6586, 2
  %v6588 = vmin.f32 %v6586, %v6587
  %v6589 = vrot.slane %v6588, 1
  %v6590 = vmin.f32 %v6588, %v6589
  %vm6591 = vcmp.eq.f32.partialorder %v316, %v6590
  %vm6592 = vcmp.eq.f32.partialorder %v317, %v6590
  %v6593 = vsel %vm6591, 1, 0
  %v6594 = vsel %vm6592, 1, 0
  %v6595 = vcvt.s32.f32 %v6593
  %v6596 = vcvt.s32.f32 %v6594
  %vm6597 = vcmp.gt.f32.partialorder %v6595, 0.5
  %vm6598 = vcmp.gt.f32.partialorder %v6596, 0.5
  %v6599 = vsel %vm6597, -1e+30, %v6567
  %v6600 = vsel %vm6598, -1e+30, %v6568
  %v6601 = vsel %vm1266, %v6599, -inf
  %v6602 = vsel %vm1266, %v6600, -inf
  %v6603 = vmax.f32 %v6601, %v6602
  %v6604 = vrot.slane %v6603, 4
  %v6605 = vmax.f32 %v6603, %v6604
  %v6606 = vrot.slane %v6605, 2
  %v6607 = vmax.f32 %v6605, %v6606
  %v6608 = vrot.slane %v6607, 1
  %v6609 = vmax.f32 %v6607, %v6608
  %vm6610 = vcmp.ge.f32.partialorder %v6599, %v6609
  %vm6611 = vcmp.ge.f32.partialorder %v6600, %v6609
  %v6612 = vsel %vm6610, %v316, 16.0
  %v6613 = vsel %vm6611, %v317, 16.0
  %v6614 = vsel %vm1266, %v6612, inf
  %v6615 = vsel %vm1266, %v6613, inf
  %v6616 = vmin.f32 %v6614, %v6615
  %v6617 = vrot.slane %v6616, 4
  %v6618 = vmin.f32 %v6616, %v6617
  %v6619 = vrot.slane %v6618, 2
  %v6620 = vmin.f32 %v6618, %v6619
  %v6621 = vrot.slane %v6620, 1
  %v6622 = vmin.f32 %v6620, %v6621
  %vm6623 = vcmp.eq.f32.partialorder %v316, %v6622
  %vm6624 = vcmp.eq.f32.partialorder %v317, %v6622
  %v6625 = vsel %vm6623, 1, 0
  %v6626 = vsel %vm6624, 1, 0
  %v6627 = vcvt.s32.f32 %v6625
  %v6628 = vcvt.s32.f32 %v6626
  %v6629 = vsub.f32 %v6577, %v6577
  %v6630 = vmul.f32 %v6629, 1.442695
  %v6631 = vpow.pop %v6630
  %v6632 = vsub.f32 %v6609, %v6577
  %v6633 = vmul.f32 %v6632, 1.442695
  %v6634 = vpow.pop %v6633
  %v6635 = vadd.f32 %v6631, %v6634
  %v6636 = vrcp.pop %v6635
  %v6637 = vmul.f32 %v6635, %v6636
  %v6638 = vsub.f32 1.0, %v6637
  %v6639 = vmul.f32 %v6636, %v6638
  %v6640 = vadd.f32 %v6636, %v6639
  %vm6641 = vweird.f32 %v6635
  %vm6642 = vweird.f32 %v6636
  %vm6643 = vmor %vm6641, %vm6642
  %v6644 = vsel %vm6643, %v6636, %v6640
  %v6645 = vand.u32 2147483647, %v6635
  %vm6646 = vcmp.eq.f32.partialorder %v6645, 8.507059e+37
  %v6647 = vand.u32 %v6635, 2147483648
  %v6648 = vor.u32 1.1754944e-38, %v6647
  %v6649 = vsel %vm6646, %v6648, %v6644
  %v6650 = vmul.f32 %v6631, %v6649
  %v6651 = vmul.f32 %v6595, %v6650
  %v6652 = vmul.f32 %v6596, %v6650
  %v6653 = vmul.f32 %v6634, %v6649
  %v6654 = vmul.f32 %v6627, %v6653
  %v6655 = vmul.f32 %v6628, %v6653
  %v6656 = vadd.f32 %v6651, %v6654
  %v6657 = vadd.f32 %v6652, %v6655
  %6658 = vmatpush.msra.mxu0 0.0
  %6659 = vmatpush.msra.mxu0 0.0
  %6660 = vmatpush.msra.mxu0 0.0
  %6661 = vmatpush.msra.mxu0 0.0
  %6662 = vmatpush.msra.mxu0 0.0
  %6663 = vmatpush.msra.mxu0 0.0
  %6664 = vmatpush.msra.mxu0 0.0
  %6665 = vmatpush.msra.mxu0 0.0
  %6666 = vmatpush.msra.mxu0 0.0
  %6667 = vmatpush.msra.mxu0 0.0
  %6668 = vmatpush.msra.mxu0 0.0
  %6669 = vmatpush.msra.mxu0 0.0
  %6670 = vmatpush.msra.mxu0 0.0
  %6671 = vmatpush.msra.mxu0 0.0
  %6672 = vmatpush.msra.mxu0 %v6657
  %6673 = vmatpush.msra.mxu0 %v6656
  %6674 = vmatmul.f32.gmra.mxu0 %v1357
  %v6675 = vpop.f32.mrf.mxu0
  %v6676 = vadd.f32 0.0, %v6675
  %6677 = vmatmul.f32.gmra.mxu0 %v1360
  %v6678 = vpop.f32.mrf.mxu0
  %v6679 = vadd.f32 0.0, %v6678
  %6680 = vmatmul.f32.gmra.mxu0 %v1363
  %v6681 = vpop.f32.mrf.mxu0
  %v6682 = vadd.f32 0.0, %v6681
  %6683 = vmatmul.f32.gmra.mxu0 %v1366
  %v6684 = vpop.f32.mrf.mxu0
  %v6685 = vadd.f32 0.0, %v6684
  %6686 = vmatmul.f32.gmra.mxu0 %v1369
  %v6687 = vpop.f32.mrf.mxu0
  %v6688 = vadd.f32 0.0, %v6687
  %6689 = vmatmul.f32.gmra.mxu0 %v1372
  %v6690 = vpop.f32.mrf.mxu0
  %v6691 = vadd.f32 0.0, %v6690
  %6692 = vmatmul.f32.gmra.mxu0 %v1375
  %v6693 = vpop.f32.mrf.mxu0
  %v6694 = vadd.f32 0.0, %v6693
  %6695 = vmatmul.f32.gmra.mxu0 %v1378
  %v6696 = vpop.f32.mrf.mxu0
  %v6697 = vadd.f32 0.0, %v6696
  %6698 = vmatmul.f32.gmra.mxu0 %v1381
  %v6699 = vpop.f32.mrf.mxu0
  %v6700 = vadd.f32 0.0, %v6699
  %6701 = vmatmul.f32.gmra.mxu0 %v1384
  %v6702 = vpop.f32.mrf.mxu0
  %v6703 = vadd.f32 0.0, %v6702
  %6704 = vmatmul.f32.gmra.mxu0 %v1387
  %v6705 = vpop.f32.mrf.mxu0
  %v6706 = vadd.f32 0.0, %v6705
  %6707 = vmatmul.f32.gmra.mxu0 %v1390
  %v6708 = vpop.f32.mrf.mxu0
  %v6709 = vadd.f32 0.0, %v6708
  %6710 = vmatmul.f32.gmra.mxu0 %v1393
  %v6711 = vpop.f32.mrf.mxu0
  %v6712 = vadd.f32 0.0, %v6711
  %6713 = vmatmul.f32.gmra.mxu0 %v1396
  %v6714 = vpop.f32.mrf.mxu0
  %v6715 = vadd.f32 0.0, %v6714
  %6716 = vmatmul.f32.gmra.mxu0 %v1399
  %v6717 = vpop.f32.mrf.mxu0
  %v6718 = vadd.f32 0.0, %v6717
  %6719 = vmatmul.f32.gmra.mxu0 %v1402
  %v6720 = vpop.f32.mrf.mxu0
  %v6721 = vadd.f32 0.0, %v6720
  %6722 = vmatmul.f32.gmra.mxu0 %v1405
  %v6723 = vpop.f32.mrf.mxu0
  %v6724 = vadd.f32 0.0, %v6723
  %6725 = vmatmul.f32.gmra.mxu0 %v1408
  %v6726 = vpop.f32.mrf.mxu0
  %v6727 = vadd.f32 0.0, %v6726
  %6728 = vmatmul.f32.gmra.mxu0 %v1411
  %v6729 = vpop.f32.mrf.mxu0
  %v6730 = vadd.f32 0.0, %v6729
  %6731 = vmatmul.f32.gmra.mxu0 %v1414
  %v6732 = vpop.f32.mrf.mxu0
  %v6733 = vadd.f32 0.0, %v6732
  %6734 = vmatmul.f32.gmra.mxu0 %v1417
  %v6735 = vpop.f32.mrf.mxu0
  %v6736 = vadd.f32 0.0, %v6735
  %6737 = vmatmul.f32.gmra.mxu0 %v1420
  %v6738 = vpop.f32.mrf.mxu0
  %v6739 = vadd.f32 0.0, %v6738
  %6740 = vmatmul.f32.gmra.mxu0 %v1423
  %v6741 = vpop.f32.mrf.mxu0
  %v6742 = vadd.f32 0.0, %v6741
  %6743 = vmatmul.f32.gmra.mxu0 %v1426
  %v6744 = vpop.f32.mrf.mxu0
  %v6745 = vadd.f32 0.0, %v6744
  %6746 = vmatmul.f32.gmra.mxu0 %v1429
  %v6747 = vpop.f32.mrf.mxu0
  %v6748 = vadd.f32 0.0, %v6747
  %6749 = vmatmul.f32.gmra.mxu0 %v1432
  %v6750 = vpop.f32.mrf.mxu0
  %v6751 = vadd.f32 0.0, %v6750
  %6752 = vmatmul.f32.gmra.mxu0 %v1435
  %v6753 = vpop.f32.mrf.mxu0
  %v6754 = vadd.f32 0.0, %v6753
  %6755 = vmatmul.f32.gmra.mxu0 %v1438
  %v6756 = vpop.f32.mrf.mxu0
  %v6757 = vadd.f32 0.0, %v6756
  %6758 = vmatmul.f32.gmra.mxu0 %v1441
  %v6759 = vpop.f32.mrf.mxu0
  %v6760 = vadd.f32 0.0, %v6759
  %6761 = vmatmul.f32.gmra.mxu0 %v1444
  %v6762 = vpop.f32.mrf.mxu0
  %v6763 = vadd.f32 0.0, %v6762
  %6764 = vmatmul.f32.gmra.mxu0 %v1447
  %v6765 = vpop.f32.mrf.mxu0
  %v6766 = vadd.f32 0.0, %v6765
  %6767 = vmatmul.f32.gmra.mxu0 %v1450
  %v6768 = vpop.f32.mrf.mxu0
  %v6769 = vadd.f32 0.0, %v6768
  %6770 = vdwg.mxu0
  %6772 = vset.pattern.permute.xlu0 0
  %6773 = vperm.xlu0 %6772, %v6676
  %v6774 = vpop.permute.xlu0 %6773
  %6777 = vset.pattern.permute.xlu0 0
  %6778 = vperm.xlu0 %6777, %v6679
  %v6779 = vpop.permute.xlu0 %6778
  %6782 = vset.pattern.permute.xlu0 0
  %6783 = vperm.xlu0 %6782, %v6682
  %v6784 = vpop.permute.xlu0 %6783
  %6787 = vset.pattern.permute.xlu0 0
  %6788 = vperm.xlu0 %6787, %v6685
  %v6789 = vpop.permute.xlu0 %6788
  %6792 = vset.pattern.permute.xlu0 0
  %6793 = vperm.xlu0 %6792, %v6688
  %v6794 = vpop.permute.xlu0 %6793
  %6797 = vset.pattern.permute.xlu0 0
  %6798 = vperm.xlu0 %6797, %v6691
  %v6799 = vpop.permute.xlu0 %6798
  %6802 = vset.pattern.permute.xlu0 0
  %6803 = vperm.xlu0 %6802, %v6694
  %v6804 = vpop.permute.xlu0 %6803
  %6807 = vset.pattern.permute.xlu0 0
  %6808 = vperm.xlu0 %6807, %v6697
  %v6809 = vpop.permute.xlu0 %6808
  %6812 = vset.pattern.permute.xlu0 0
  %6813 = vperm.xlu0 %6812, %v6700
  %v6814 = vpop.permute.xlu0 %6813
  %6817 = vset.pattern.permute.xlu0 0
  %6818 = vperm.xlu0 %6817, %v6703
  %v6819 = vpop.permute.xlu0 %6818
  %6822 = vset.pattern.permute.xlu0 0
  %6823 = vperm.xlu0 %6822, %v6706
  %v6824 = vpop.permute.xlu0 %6823
  %6827 = vset.pattern.permute.xlu0 0
  %6828 = vperm.xlu0 %6827, %v6709
  %v6829 = vpop.permute.xlu0 %6828
  %6832 = vset.pattern.permute.xlu0 0
  %6833 = vperm.xlu0 %6832, %v6712
  %v6834 = vpop.permute.xlu0 %6833
  %6837 = vset.pattern.permute.xlu0 0
  %6838 = vperm.xlu0 %6837, %v6715
  %v6839 = vpop.permute.xlu0 %6838
  %6842 = vset.pattern.permute.xlu0 0
  %6843 = vperm.xlu0 %6842, %v6718
  %v6844 = vpop.permute.xlu0 %6843
  %6847 = vset.pattern.permute.xlu0 0
  %6848 = vperm.xlu0 %6847, %v6721
  %v6849 = vpop.permute.xlu0 %6848
  %6852 = vset.pattern.permute.xlu0 0
  %6853 = vperm.xlu0 %6852, %v6724
  %v6854 = vpop.permute.xlu0 %6853
  %6857 = vset.pattern.permute.xlu0 0
  %6858 = vperm.xlu0 %6857, %v6727
  %v6859 = vpop.permute.xlu0 %6858
  %6862 = vset.pattern.permute.xlu0 0
  %6863 = vperm.xlu0 %6862, %v6730
  %v6864 = vpop.permute.xlu0 %6863
  %6867 = vset.pattern.permute.xlu0 0
  %6868 = vperm.xlu0 %6867, %v6733
  %v6869 = vpop.permute.xlu0 %6868
  %6872 = vset.pattern.permute.xlu0 0
  %6873 = vperm.xlu0 %6872, %v6736
  %v6874 = vpop.permute.xlu0 %6873
  %6877 = vset.pattern.permute.xlu0 0
  %6878 = vperm.xlu0 %6877, %v6739
  %v6879 = vpop.permute.xlu0 %6878
  %6882 = vset.pattern.permute.xlu0 0
  %6883 = vperm.xlu0 %6882, %v6742
  %v6884 = vpop.permute.xlu0 %6883
  %6887 = vset.pattern.permute.xlu0 0
  %6888 = vperm.xlu0 %6887, %v6745
  %v6889 = vpop.permute.xlu0 %6888
  %6892 = vset.pattern.permute.xlu0 0
  %6893 = vperm.xlu0 %6892, %v6748
  %v6894 = vpop.permute.xlu0 %6893
  %6897 = vset.pattern.permute.xlu0 0
  %6898 = vperm.xlu0 %6897, %v6751
  %v6899 = vpop.permute.xlu0 %6898
  %6902 = vset.pattern.permute.xlu0 0
  %6903 = vperm.xlu0 %6902, %v6754
  %v6904 = vpop.permute.xlu0 %6903
  %6907 = vset.pattern.permute.xlu0 0
  %6908 = vperm.xlu0 %6907, %v6757
  %v6909 = vpop.permute.xlu0 %6908
  %6912 = vset.pattern.permute.xlu0 0
  %6913 = vperm.xlu0 %6912, %v6760
  %v6914 = vpop.permute.xlu0 %6913
  %6917 = vset.pattern.permute.xlu0 0
  %6918 = vperm.xlu0 %6917, %v6763
  %v6919 = vpop.permute.xlu0 %6918
  %6922 = vset.pattern.permute.xlu0 0
  %6923 = vperm.xlu0 %6922, %v6766
  %v6924 = vpop.permute.xlu0 %6923
  %6927 = vset.pattern.permute.xlu0 0
  %6928 = vperm.xlu0 %6927, %v6769
  %v6929 = vpop.permute.xlu0 %6928
  %v6931 = vmul.f32 %v6774, %v71
  %v6932 = vmul.f32 %v6779, %v72
  %v6933 = vmul.f32 %v6784, %v73
  %v6934 = vmul.f32 %v6789, %v74
  %v6935 = vmul.f32 %v6794, %v75
  %v6936 = vmul.f32 %v6799, %v76
  %v6937 = vmul.f32 %v6804, %v77
  %v6938 = vmul.f32 %v6809, %v78
  %v6939 = vmul.f32 %v6814, %v79
  %v6940 = vmul.f32 %v6819, %v80
  %v6941 = vmul.f32 %v6824, %v81
  %v6942 = vmul.f32 %v6829, %v82
  %v6943 = vmul.f32 %v6834, %v83
  %v6944 = vmul.f32 %v6839, %v84
  %v6945 = vmul.f32 %v6844, %v85
  %v6946 = vmul.f32 %v6849, %v86
  %v6947 = vmul.f32 %v6854, %v87
  %v6948 = vmul.f32 %v6859, %v88
  %v6949 = vmul.f32 %v6864, %v89
  %v6950 = vmul.f32 %v6869, %v90
  %v6951 = vmul.f32 %v6874, %v91
  %v6952 = vmul.f32 %v6879, %v92
  %v6953 = vmul.f32 %v6884, %v93
  %v6954 = vmul.f32 %v6889, %v94
  %v6955 = vmul.f32 %v6894, %v95
  %v6956 = vmul.f32 %v6899, %v96
  %v6957 = vmul.f32 %v6904, %v97
  %v6958 = vmul.f32 %v6909, %v98
  %v6959 = vmul.f32 %v6914, %v99
  %v6960 = vmul.f32 %v6919, %v100
  %v6961 = vmul.f32 %v6924, %v101
  %v6962 = vmul.f32 %v6929, %v102
  %6963 = vmatpush.msra.mxu0 %v6946
  %6964 = vmatpush.msra.mxu0 %v6945
  %6965 = vmatpush.msra.mxu0 %v6944
  %6966 = vmatpush.msra.mxu0 %v6943
  %6967 = vmatpush.msra.mxu0 %v6942
  %6968 = vmatpush.msra.mxu0 %v6941
  %6969 = vmatpush.msra.mxu0 %v6940
  %6970 = vmatpush.msra.mxu0 %v6939
  %6971 = vmatpush.msra.mxu0 %v6938
  %6972 = vmatpush.msra.mxu0 %v6937
  %6973 = vmatpush.msra.mxu0 %v6936
  %6974 = vmatpush.msra.mxu0 %v6935
  %6975 = vmatpush.msra.mxu0 %v6934
  %6976 = vmatpush.msra.mxu0 %v6933
  %6977 = vmatpush.msra.mxu0 %v6932
  %6978 = vmatpush.msra.mxu0 %v6931
  %6979 = vmatmul.f32.gmra.mxu0 %v169
  %v6980 = vpop.f32.mrf.mxu0
  %v6981 = vadd.f32 0.0, %v6980
  %6982 = vmatmul.f32.gmra.mxu0 %v171
  %v6983 = vpop.f32.mrf.mxu0
  %v6984 = vadd.f32 0.0, %v6983
  %6985 = vdwg.mxu0
  %6986 = vmatpush.msra.mxu0 %v6962
  %6987 = vmatpush.msra.mxu0 %v6961
  %6988 = vmatpush.msra.mxu0 %v6960
  %6989 = vmatpush.msra.mxu0 %v6959
  %6990 = vmatpush.msra.mxu0 %v6958
  %6991 = vmatpush.msra.mxu0 %v6957
  %6992 = vmatpush.msra.mxu0 %v6956
  %6993 = vmatpush.msra.mxu0 %v6955
  %6994 = vmatpush.msra.mxu0 %v6954
  %6995 = vmatpush.msra.mxu0 %v6953
  %6996 = vmatpush.msra.mxu0 %v6952
  %6997 = vmatpush.msra.mxu0 %v6951
  %6998 = vmatpush.msra.mxu0 %v6950
  %6999 = vmatpush.msra.mxu0 %v6949
  %7000 = vmatpush.msra.mxu0 %v6948
  %7001 = vmatpush.msra.mxu0 %v6947
  %7002 = vmatmul.f32.gmra.mxu0 %v170
  %v7003 = vpop.f32.mrf.mxu0
  %v7004 = vadd.f32 %v6981, %v7003
  %7005 = vmatmul.f32.gmra.mxu0 %v172
  %v7006 = vpop.f32.mrf.mxu0
  %v7007 = vadd.f32 %v6984, %v7006
  %7008 = vdwg.mxu0
  %v7010 = vsel %vm326, %v7004, 0
  %v7013 = vsel %vm326, %v7007, 0
  %7015 = vmatpush.msra.mxu0 0.0
  %7016 = vmatpush.msra.mxu0 0.0
  %7017 = vmatpush.msra.mxu0 0.0
  %7018 = vmatpush.msra.mxu0 0.0
  %7019 = vmatpush.msra.mxu0 0.0
  %7020 = vmatpush.msra.mxu0 0.0
  %7021 = vmatpush.msra.mxu0 0.0
  %7022 = vmatpush.msra.mxu0 0.0
  %7023 = vmatpush.msra.mxu0 0.0
  %7024 = vmatpush.msra.mxu0 0.0
  %7025 = vmatpush.msra.mxu0 0.0
  %7026 = vmatpush.msra.mxu0 0.0
  %7027 = vmatpush.msra.mxu0 0.0
  %7028 = vmatpush.msra.mxu0 0.0
  %7029 = vmatpush.msra.mxu0 %v6165
  %7030 = vmatpush.msra.mxu0 %v6162
  %7031 = vmatmul.f32.gmra.mxu0 %v7010
  %v7032 = vpop.f32.mrf.mxu0
  %v7033 = vadd.f32 0.0, %v7032
  %7034 = vmatmul.f32.gmra.mxu0 %v7013
  %v7035 = vpop.f32.mrf.mxu0
  %v7036 = vadd.f32 0.0, %v7035
  %7037 = vdwg.mxu0
  %v7039 = vsel %vm590, %v7033, 0
  %v7042 = vsel %vm590, %v7036, 0
  %7044 = vmatpush.msra.mxu0 0.0
  %7045 = vmatpush.msra.mxu0 0.0
  %7046 = vmatpush.msra.mxu0 0.0
  %7047 = vmatpush.msra.mxu0 0.0
  %7048 = vmatpush.msra.mxu0 0.0
  %7049 = vmatpush.msra.mxu0 0.0
  %7050 = vmatpush.msra.mxu0 0.0
  %7051 = vmatpush.msra.mxu0 0.0
  %7052 = vmatpush.msra.mxu0 0.0
  %7053 = vmatpush.msra.mxu0 0.0
  %7054 = vmatpush.msra.mxu0 0.0
  %7055 = vmatpush.msra.mxu0 0.0
  %7056 = vmatpush.msra.mxu0 %v247
  %7057 = vmatpush.msra.mxu0 %v246
  %7058 = vmatpush.msra.mxu0 %v245
  %7059 = vmatpush.msra.mxu0 %v244
  %7060 = vmatmul.f32.gmra.mxu0 %v7039
  %v7061 = vpop.f32.mrf.mxu0
  %v7062 = vadd.f32 %v3151, %v7061
  %7063 = vmatmul.f32.gmra.mxu0 %v7042
  %v7064 = vpop.f32.mrf.mxu0
  %v7065 = vadd.f32 %v3151, %v7064
  %7066 = vdwg.mxu0
  %v7067 = vadd.f32 %v6090, %v7062
  %v7068 = vadd.f32 %v6091, %v7065
  %7069 = vmatpush.msra.mxu0 0.0
  %7070 = vmatpush.msra.mxu0 0.0
  %7071 = vmatpush.msra.mxu0 0.0
  %7072 = vmatpush.msra.mxu0 0.0
  %7073 = vmatpush.msra.mxu0 0.0
  %7074 = vmatpush.msra.mxu0 0.0
  %7075 = vmatpush.msra.mxu0 0.0
  %7076 = vmatpush.msra.mxu0 0.0
  %7077 = vmatpush.msra.mxu0 0.0
  %7078 = vmatpush.msra.mxu0 0.0
  %7079 = vmatpush.msra.mxu0 0.0
  %7080 = vmatpush.msra.mxu0 0.0
  %7081 = vmatpush.msra.mxu0 0.0
  %7082 = vmatpush.msra.mxu0 0.0
  %7083 = vmatpush.msra.mxu0 %v7068
  %7084 = vmatpush.msra.mxu0 %v7067
  %7085 = vmatmul.f32.gmra.mxu0 %v328
  %v7086 = vpop.f32.mrf.mxu0
  %v7087 = vadd.f32 0.0, %v7086
  %7088 = vmatmul.f32.gmra.mxu0 %v331
  %v7089 = vpop.f32.mrf.mxu0
  %v7090 = vadd.f32 0.0, %v7089
  %7091 = vdwg.mxu0
  %v7092 = vsub.f32 %v7067, %v7087
  %v7093 = vsub.f32 %v7068, %v7090
  %v7095 = vsel %vm590, %v7092, 0
  %v7098 = vsel %vm590, %v7093, 0
  %7100 = vmatpush.msra.mxu0 0.0
  %7101 = vmatpush.msra.mxu0 0.0
  %7102 = vmatpush.msra.mxu0 0.0
  %7103 = vmatpush.msra.mxu0 0.0
  %7104 = vmatpush.msra.mxu0 0.0
  %7105 = vmatpush.msra.mxu0 0.0
  %7106 = vmatpush.msra.mxu0 0.0
  %7107 = vmatpush.msra.mxu0 0.0
  %7108 = vmatpush.msra.mxu0 0.0
  %7109 = vmatpush.msra.mxu0 0.0
  %7110 = vmatpush.msra.mxu0 0.0
  %7111 = vmatpush.msra.mxu0 0.0
  %7112 = vmatpush.msra.mxu0 %v258
  %7113 = vmatpush.msra.mxu0 %v257
  %7114 = vmatpush.msra.mxu0 %v256
  %7115 = vmatpush.msra.mxu0 %v255
  %7116 = vmatmul.f32.gmra.mxu0 %v7095
  %v7117 = vpop.f32.mrf.mxu0
  %v7118 = vadd.f32 %v3210, %v7117
  %7119 = vmatmul.f32.gmra.mxu0 %v7098
  %v7120 = vpop.f32.mrf.mxu0
  %v7121 = vadd.f32 %v3210, %v7120
  %7122 = vdwg.mxu0
  %v7124 = vsel %vm590, %v5955, 0
  %v7127 = vsel %vm590, %v5956, 0
  %7129 = vmatpush.msra.mxu0 0.0
  %7130 = vmatpush.msra.mxu0 0.0
  %7131 = vmatpush.msra.mxu0 0.0
  %7132 = vmatpush.msra.mxu0 0.0
  %7133 = vmatpush.msra.mxu0 0.0
  %7134 = vmatpush.msra.mxu0 0.0
  %7135 = vmatpush.msra.mxu0 0.0
  %7136 = vmatpush.msra.mxu0 0.0
  %7137 = vmatpush.msra.mxu0 0.0
  %7138 = vmatpush.msra.mxu0 0.0
  %7139 = vmatpush.msra.mxu0 0.0
  %7140 = vmatpush.msra.mxu0 0.0
  %7141 = vmatpush.msra.mxu0 %v263
  %7142 = vmatpush.msra.mxu0 %v262
  %7143 = vmatpush.msra.mxu0 %v261
  %7144 = vmatpush.msra.mxu0 %v260
  %7145 = vmatmul.f32.gmra.mxu0 %v7124
  %v7146 = vpop.f32.mrf.mxu0
  %v7147 = vadd.f32 %v3242, %v7146
  %7148 = vmatmul.f32.gmra.mxu0 %v7127
  %v7149 = vpop.f32.mrf.mxu0
  %v7150 = vadd.f32 %v3242, %v7149
  %7151 = vdwg.mxu0
  %7152 = vmatpush.msra.mxu0 0.0
  %7153 = vmatpush.msra.mxu0 0.0
  %7154 = vmatpush.msra.mxu0 0.0
  %7155 = vmatpush.msra.mxu0 0.0
  %7156 = vmatpush.msra.mxu0 0.0
  %7157 = vmatpush.msra.mxu0 0.0
  %7158 = vmatpush.msra.mxu0 0.0
  %7159 = vmatpush.msra.mxu0 0.0
  %7160 = vmatpush.msra.mxu0 0.0
  %7161 = vmatpush.msra.mxu0 0.0
  %7162 = vmatpush.msra.mxu0 0.0
  %7163 = vmatpush.msra.mxu0 0.0
  %7164 = vmatpush.msra.mxu0 %v268
  %7165 = vmatpush.msra.mxu0 %v267
  %7166 = vmatpush.msra.mxu0 %v266
  %7167 = vmatpush.msra.mxu0 %v265
  %7168 = vmatmul.f32.gmra.mxu0 %v7124
  %v7169 = vpop.f32.mrf.mxu0
  %v7170 = vadd.f32 %v3274, %v7169
  %7171 = vmatmul.f32.gmra.mxu0 %v7127
  %v7172 = vpop.f32.mrf.mxu0
  %v7173 = vadd.f32 %v3274, %v7172
  %7174 = vdwg.mxu0
  %7175 = vmatpush.msra.mxu0 0.0
  %7176 = vmatpush.msra.mxu0 0.0
  %7177 = vmatpush.msra.mxu0 0.0
  %7178 = vmatpush.msra.mxu0 0.0
  %7179 = vmatpush.msra.mxu0 0.0
  %7180 = vmatpush.msra.mxu0 0.0
  %7181 = vmatpush.msra.mxu0 0.0
  %7182 = vmatpush.msra.mxu0 0.0
  %7183 = vmatpush.msra.mxu0 0.0
  %7184 = vmatpush.msra.mxu0 0.0
  %7185 = vmatpush.msra.mxu0 0.0
  %7186 = vmatpush.msra.mxu0 0.0
  %7187 = vmatpush.msra.mxu0 0.0
  %7188 = vmatpush.msra.mxu0 0.0
  %7189 = vmatpush.msra.mxu0 %v7121
  %7190 = vmatpush.msra.mxu0 %v7118
  %7191 = vmatmul.f32.gmra.mxu0 %v673
  %v7192 = vpop.f32.mrf.mxu0
  %v7193 = vadd.f32 0.0, %v7192
  %7194 = vmatmul.f32.gmra.mxu0 %v676
  %v7195 = vpop.f32.mrf.mxu0
  %v7196 = vadd.f32 0.0, %v7195
  %7197 = vmatmul.f32.gmra.mxu0 %v679
  %v7198 = vpop.f32.mrf.mxu0
  %v7199 = vadd.f32 0.0, %v7198
  %7200 = vmatmul.f32.gmra.mxu0 %v682
  %v7201 = vpop.f32.mrf.mxu0
  %v7202 = vadd.f32 0.0, %v7201
  %7203 = vmatmul.f32.gmra.mxu0 %v685
  %v7204 = vpop.f32.mrf.mxu0
  %v7205 = vadd.f32 0.0, %v7204
  %7206 = vmatmul.f32.gmra.mxu0 %v688
  %v7207 = vpop.f32.mrf.mxu0
  %v7208 = vadd.f32 0.0, %v7207
  %7209 = vmatmul.f32.gmra.mxu0 %v691
  %v7210 = vpop.f32.mrf.mxu0
  %v7211 = vadd.f32 0.0, %v7210
  %7212 = vmatmul.f32.gmra.mxu0 %v694
  %v7213 = vpop.f32.mrf.mxu0
  %v7214 = vadd.f32 0.0, %v7213
  %7215 = vmatmul.f32.gmra.mxu0 %v697
  %v7216 = vpop.f32.mrf.mxu0
  %v7217 = vadd.f32 0.0, %v7216
  %7218 = vmatmul.f32.gmra.mxu0 %v700
  %v7219 = vpop.f32.mrf.mxu0
  %v7220 = vadd.f32 0.0, %v7219
  %7221 = vmatmul.f32.gmra.mxu0 %v703
  %v7222 = vpop.f32.mrf.mxu0
  %v7223 = vadd.f32 0.0, %v7222
  %7224 = vmatmul.f32.gmra.mxu0 %v706
  %v7225 = vpop.f32.mrf.mxu0
  %v7226 = vadd.f32 0.0, %v7225
  %7227 = vmatmul.f32.gmra.mxu0 %v709
  %v7228 = vpop.f32.mrf.mxu0
  %v7229 = vadd.f32 0.0, %v7228
  %7230 = vmatmul.f32.gmra.mxu0 %v712
  %v7231 = vpop.f32.mrf.mxu0
  %v7232 = vadd.f32 0.0, %v7231
  %7233 = vmatmul.f32.gmra.mxu0 %v715
  %v7234 = vpop.f32.mrf.mxu0
  %v7235 = vadd.f32 0.0, %v7234
  %7236 = vmatmul.f32.gmra.mxu0 %v718
  %v7237 = vpop.f32.mrf.mxu0
  %v7238 = vadd.f32 0.0, %v7237
  %7239 = vmatmul.f32.gmra.mxu0 %v721
  %v7240 = vpop.f32.mrf.mxu0
  %v7241 = vadd.f32 0.0, %v7240
  %7242 = vmatmul.f32.gmra.mxu0 %v724
  %v7243 = vpop.f32.mrf.mxu0
  %v7244 = vadd.f32 0.0, %v7243
  %7245 = vmatmul.f32.gmra.mxu0 %v727
  %v7246 = vpop.f32.mrf.mxu0
  %v7247 = vadd.f32 0.0, %v7246
  %7248 = vmatmul.f32.gmra.mxu0 %v730
  %v7249 = vpop.f32.mrf.mxu0
  %v7250 = vadd.f32 0.0, %v7249
  %7251 = vmatmul.f32.gmra.mxu0 %v733
  %v7252 = vpop.f32.mrf.mxu0
  %v7253 = vadd.f32 0.0, %v7252
  %7254 = vmatmul.f32.gmra.mxu0 %v736
  %v7255 = vpop.f32.mrf.mxu0
  %v7256 = vadd.f32 0.0, %v7255
  %7257 = vmatmul.f32.gmra.mxu0 %v739
  %v7258 = vpop.f32.mrf.mxu0
  %v7259 = vadd.f32 0.0, %v7258
  %7260 = vmatmul.f32.gmra.mxu0 %v742
  %v7261 = vpop.f32.mrf.mxu0
  %v7262 = vadd.f32 0.0, %v7261
  %7263 = vmatmul.f32.gmra.mxu0 %v745
  %v7264 = vpop.f32.mrf.mxu0
  %v7265 = vadd.f32 0.0, %v7264
  %7266 = vmatmul.f32.gmra.mxu0 %v748
  %v7267 = vpop.f32.mrf.mxu0
  %v7268 = vadd.f32 0.0, %v7267
  %7269 = vmatmul.f32.gmra.mxu0 %v751
  %v7270 = vpop.f32.mrf.mxu0
  %v7271 = vadd.f32 0.0, %v7270
  %7272 = vmatmul.f32.gmra.mxu0 %v754
  %v7273 = vpop.f32.mrf.mxu0
  %v7274 = vadd.f32 0.0, %v7273
  %7275 = vmatmul.f32.gmra.mxu0 %v757
  %v7276 = vpop.f32.mrf.mxu0
  %v7277 = vadd.f32 0.0, %v7276
  %7278 = vmatmul.f32.gmra.mxu0 %v760
  %v7279 = vpop.f32.mrf.mxu0
  %v7280 = vadd.f32 0.0, %v7279
  %7281 = vmatmul.f32.gmra.mxu0 %v763
  %v7282 = vpop.f32.mrf.mxu0
  %v7283 = vadd.f32 0.0, %v7282
  %7284 = vmatmul.f32.gmra.mxu0 %v766
  %v7285 = vpop.f32.mrf.mxu0
  %v7286 = vadd.f32 0.0, %v7285
  %7287 = vdwg.mxu0
  %7288 = vmatpush.msra.mxu0 0.0
  %7289 = vmatpush.msra.mxu0 0.0
  %7290 = vmatpush.msra.mxu0 0.0
  %7291 = vmatpush.msra.mxu0 0.0
  %7292 = vmatpush.msra.mxu0 0.0
  %7293 = vmatpush.msra.mxu0 0.0
  %7294 = vmatpush.msra.mxu0 0.0
  %7295 = vmatpush.msra.mxu0 0.0
  %7296 = vmatpush.msra.mxu0 0.0
  %7297 = vmatpush.msra.mxu0 0.0
  %7298 = vmatpush.msra.mxu0 0.0
  %7299 = vmatpush.msra.mxu0 0.0
  %7300 = vmatpush.msra.mxu0 0.0
  %7301 = vmatpush.msra.mxu0 0.0
  %7302 = vmatpush.msra.mxu0 %v7150
  %7303 = vmatpush.msra.mxu0 %v7147
  %7304 = vmatmul.f32.gmra.mxu0 %v882
  %v7305 = vpop.f32.mrf.mxu0
  %v7306 = vadd.f32 0.0, %v7305
  %7307 = vmatmul.f32.gmra.mxu0 %v885
  %v7308 = vpop.f32.mrf.mxu0
  %v7309 = vadd.f32 0.0, %v7308
  %7310 = vmatmul.f32.gmra.mxu0 %v888
  %v7311 = vpop.f32.mrf.mxu0
  %v7312 = vadd.f32 0.0, %v7311
  %7313 = vmatmul.f32.gmra.mxu0 %v891
  %v7314 = vpop.f32.mrf.mxu0
  %v7315 = vadd.f32 0.0, %v7314
  %7316 = vmatmul.f32.gmra.mxu0 %v894
  %v7317 = vpop.f32.mrf.mxu0
  %v7318 = vadd.f32 0.0, %v7317
  %7319 = vmatmul.f32.gmra.mxu0 %v897
  %v7320 = vpop.f32.mrf.mxu0
  %v7321 = vadd.f32 0.0, %v7320
  %7322 = vmatmul.f32.gmra.mxu0 %v900
  %v7323 = vpop.f32.mrf.mxu0
  %v7324 = vadd.f32 0.0, %v7323
  %7325 = vmatmul.f32.gmra.mxu0 %v903
  %v7326 = vpop.f32.mrf.mxu0
  %v7327 = vadd.f32 0.0, %v7326
  %7328 = vmatmul.f32.gmra.mxu0 %v906
  %v7329 = vpop.f32.mrf.mxu0
  %v7330 = vadd.f32 0.0, %v7329
  %7331 = vmatmul.f32.gmra.mxu0 %v909
  %v7332 = vpop.f32.mrf.mxu0
  %v7333 = vadd.f32 0.0, %v7332
  %7334 = vmatmul.f32.gmra.mxu0 %v912
  %v7335 = vpop.f32.mrf.mxu0
  %v7336 = vadd.f32 0.0, %v7335
  %7337 = vmatmul.f32.gmra.mxu0 %v915
  %v7338 = vpop.f32.mrf.mxu0
  %v7339 = vadd.f32 0.0, %v7338
  %7340 = vmatmul.f32.gmra.mxu0 %v918
  %v7341 = vpop.f32.mrf.mxu0
  %v7342 = vadd.f32 0.0, %v7341
  %7343 = vmatmul.f32.gmra.mxu0 %v921
  %v7344 = vpop.f32.mrf.mxu0
  %v7345 = vadd.f32 0.0, %v7344
  %7346 = vmatmul.f32.gmra.mxu0 %v924
  %v7347 = vpop.f32.mrf.mxu0
  %v7348 = vadd.f32 0.0, %v7347
  %7349 = vmatmul.f32.gmra.mxu0 %v927
  %v7350 = vpop.f32.mrf.mxu0
  %v7351 = vadd.f32 0.0, %v7350
  %7352 = vmatmul.f32.gmra.mxu0 %v930
  %v7353 = vpop.f32.mrf.mxu0
  %v7354 = vadd.f32 0.0, %v7353
  %7355 = vmatmul.f32.gmra.mxu0 %v933
  %v7356 = vpop.f32.mrf.mxu0
  %v7357 = vadd.f32 0.0, %v7356
  %7358 = vmatmul.f32.gmra.mxu0 %v936
  %v7359 = vpop.f32.mrf.mxu0
  %v7360 = vadd.f32 0.0, %v7359
  %7361 = vmatmul.f32.gmra.mxu0 %v939
  %v7362 = vpop.f32.mrf.mxu0
  %v7363 = vadd.f32 0.0, %v7362
  %7364 = vmatmul.f32.gmra.mxu0 %v942
  %v7365 = vpop.f32.mrf.mxu0
  %v7366 = vadd.f32 0.0, %v7365
  %7367 = vmatmul.f32.gmra.mxu0 %v945
  %v7368 = vpop.f32.mrf.mxu0
  %v7369 = vadd.f32 0.0, %v7368
  %7370 = vmatmul.f32.gmra.mxu0 %v948
  %v7371 = vpop.f32.mrf.mxu0
  %v7372 = vadd.f32 0.0, %v7371
  %7373 = vmatmul.f32.gmra.mxu0 %v951
  %v7374 = vpop.f32.mrf.mxu0
  %v7375 = vadd.f32 0.0, %v7374
  %7376 = vmatmul.f32.gmra.mxu0 %v954
  %v7377 = vpop.f32.mrf.mxu0
  %v7378 = vadd.f32 0.0, %v7377
  %7379 = vmatmul.f32.gmra.mxu0 %v957
  %v7380 = vpop.f32.mrf.mxu0
  %v7381 = vadd.f32 0.0, %v7380
  %7382 = vmatmul.f32.gmra.mxu0 %v960
  %v7383 = vpop.f32.mrf.mxu0
  %v7384 = vadd.f32 0.0, %v7383
  %7385 = vmatmul.f32.gmra.mxu0 %v963
  %v7386 = vpop.f32.mrf.mxu0
  %v7387 = vadd.f32 0.0, %v7386
  %7388 = vmatmul.f32.gmra.mxu0 %v966
  %v7389 = vpop.f32.mrf.mxu0
  %v7390 = vadd.f32 0.0, %v7389
  %7391 = vmatmul.f32.gmra.mxu0 %v969
  %v7392 = vpop.f32.mrf.mxu0
  %v7393 = vadd.f32 0.0, %v7392
  %7394 = vmatmul.f32.gmra.mxu0 %v972
  %v7395 = vpop.f32.mrf.mxu0
  %v7396 = vadd.f32 0.0, %v7395
  %7397 = vmatmul.f32.gmra.mxu0 %v975
  %v7398 = vpop.f32.mrf.mxu0
  %v7399 = vadd.f32 0.0, %v7398
  %7400 = vdwg.mxu0
  %v7401 = vmul.f32 %v7193, %v7306
  %v7402 = vmul.f32 %v7196, %v7309
  %v7403 = vmul.f32 %v7199, %v7312
  %v7404 = vmul.f32 %v7202, %v7315
  %v7405 = vmul.f32 %v7205, %v7318
  %v7406 = vmul.f32 %v7208, %v7321
  %v7407 = vmul.f32 %v7211, %v7324
  %v7408 = vmul.f32 %v7214, %v7327
  %v7409 = vmul.f32 %v7217, %v7330
  %v7410 = vmul.f32 %v7220, %v7333
  %v7411 = vmul.f32 %v7223, %v7336
  %v7412 = vmul.f32 %v7226, %v7339
  %v7413 = vmul.f32 %v7229, %v7342
  %v7414 = vmul.f32 %v7232, %v7345
  %v7415 = vmul.f32 %v7235, %v7348
  %v7416 = vmul.f32 %v7238, %v7351
  %v7417 = vmul.f32 %v7241, %v7354
  %v7418 = vmul.f32 %v7244, %v7357
  %v7419 = vmul.f32 %v7247, %v7360
  %v7420 = vmul.f32 %v7250, %v7363
  %v7421 = vmul.f32 %v7253, %v7366
  %v7422 = vmul.f32 %v7256, %v7369
  %v7423 = vmul.f32 %v7259, %v7372
  %v7424 = vmul.f32 %v7262, %v7375
  %v7425 = vmul.f32 %v7265, %v7378
  %v7426 = vmul.f32 %v7268, %v7381
  %v7427 = vmul.f32 %v7271, %v7384
  %v7428 = vmul.f32 %v7274, %v7387
  %v7429 = vmul.f32 %v7277, %v7390
  %v7430 = vmul.f32 %v7280, %v7393
  %v7431 = vmul.f32 %v7283, %v7396
  %v7432 = vmul.f32 %v7286, %v7399
  %v7433 = vsel %vm590, %v7401, 0.0
  %7434 = vadd.xlane.f32.xlu0 %v7433
  %v7435 = vpop.xlane.xlu0 %7434
  %v7436 = vsel %vm590, %v7402, 0.0
  %7437 = vadd.xlane.f32.xlu0 %v7436
  %v7438 = vpop.xlane.xlu0 %7437
  %v7439 = vsel %vm590, %v7403, 0.0
  %7440 = vadd.xlane.f32.xlu0 %v7439
  %v7441 = vpop.xlane.xlu0 %7440
  %v7442 = vsel %vm590, %v7404, 0.0
  %7443 = vadd.xlane.f32.xlu0 %v7442
  %v7444 = vpop.xlane.xlu0 %7443
  %v7445 = vsel %vm590, %v7405, 0.0
  %7446 = vadd.xlane.f32.xlu0 %v7445
  %v7447 = vpop.xlane.xlu0 %7446
  %v7448 = vsel %vm590, %v7406, 0.0
  %7449 = vadd.xlane.f32.xlu0 %v7448
  %v7450 = vpop.xlane.xlu0 %7449
  %v7451 = vsel %vm590, %v7407, 0.0
  %7452 = vadd.xlane.f32.xlu0 %v7451
  %v7453 = vpop.xlane.xlu0 %7452
  %v7454 = vsel %vm590, %v7408, 0.0
  %7455 = vadd.xlane.f32.xlu0 %v7454
  %v7456 = vpop.xlane.xlu0 %7455
  %v7457 = vsel %vm590, %v7409, 0.0
  %7458 = vadd.xlane.f32.xlu0 %v7457
  %v7459 = vpop.xlane.xlu0 %7458
  %v7460 = vsel %vm590, %v7410, 0.0
  %7461 = vadd.xlane.f32.xlu0 %v7460
  %v7462 = vpop.xlane.xlu0 %7461
  %v7463 = vsel %vm590, %v7411, 0.0
  %7464 = vadd.xlane.f32.xlu0 %v7463
  %v7465 = vpop.xlane.xlu0 %7464
  %v7466 = vsel %vm590, %v7412, 0.0
  %7467 = vadd.xlane.f32.xlu0 %v7466
  %v7468 = vpop.xlane.xlu0 %7467
  %v7469 = vsel %vm590, %v7413, 0.0
  %7470 = vadd.xlane.f32.xlu0 %v7469
  %v7471 = vpop.xlane.xlu0 %7470
  %v7472 = vsel %vm590, %v7414, 0.0
  %7473 = vadd.xlane.f32.xlu0 %v7472
  %v7474 = vpop.xlane.xlu0 %7473
  %v7475 = vsel %vm590, %v7415, 0.0
  %7476 = vadd.xlane.f32.xlu0 %v7475
  %v7477 = vpop.xlane.xlu0 %7476
  %v7478 = vsel %vm590, %v7416, 0.0
  %7479 = vadd.xlane.f32.xlu0 %v7478
  %v7480 = vpop.xlane.xlu0 %7479
  %v7481 = vsel %vm590, %v7417, 0.0
  %7482 = vadd.xlane.f32.xlu0 %v7481
  %v7483 = vpop.xlane.xlu0 %7482
  %v7484 = vsel %vm590, %v7418, 0.0
  %7485 = vadd.xlane.f32.xlu0 %v7484
  %v7486 = vpop.xlane.xlu0 %7485
  %v7487 = vsel %vm590, %v7419, 0.0
  %7488 = vadd.xlane.f32.xlu0 %v7487
  %v7489 = vpop.xlane.xlu0 %7488
  %v7490 = vsel %vm590, %v7420, 0.0
  %7491 = vadd.xlane.f32.xlu0 %v7490
  %v7492 = vpop.xlane.xlu0 %7491
  %v7493 = vsel %vm590, %v7421, 0.0
  %7494 = vadd.xlane.f32.xlu0 %v7493
  %v7495 = vpop.xlane.xlu0 %7494
  %v7496 = vsel %vm590, %v7422, 0.0
  %7497 = vadd.xlane.f32.xlu0 %v7496
  %v7498 = vpop.xlane.xlu0 %7497
  %v7499 = vsel %vm590, %v7423, 0.0
  %7500 = vadd.xlane.f32.xlu0 %v7499
  %v7501 = vpop.xlane.xlu0 %7500
  %v7502 = vsel %vm590, %v7424, 0.0
  %7503 = vadd.xlane.f32.xlu0 %v7502
  %v7504 = vpop.xlane.xlu0 %7503
  %v7505 = vsel %vm590, %v7425, 0.0
  %7506 = vadd.xlane.f32.xlu0 %v7505
  %v7507 = vpop.xlane.xlu0 %7506
  %v7508 = vsel %vm590, %v7426, 0.0
  %7509 = vadd.xlane.f32.xlu0 %v7508
  %v7510 = vpop.xlane.xlu0 %7509
  %v7511 = vsel %vm590, %v7427, 0.0
  %7512 = vadd.xlane.f32.xlu0 %v7511
  %v7513 = vpop.xlane.xlu0 %7512
  %v7514 = vsel %vm590, %v7428, 0.0
  %7515 = vadd.xlane.f32.xlu0 %v7514
  %v7516 = vpop.xlane.xlu0 %7515
  %v7517 = vsel %vm590, %v7429, 0.0
  %7518 = vadd.xlane.f32.xlu0 %v7517
  %v7519 = vpop.xlane.xlu0 %7518
  %v7520 = vsel %vm590, %v7430, 0.0
  %7521 = vadd.xlane.f32.xlu0 %v7520
  %v7522 = vpop.xlane.xlu0 %7521
  %v7523 = vsel %vm590, %v7431, 0.0
  %7524 = vadd.xlane.f32.xlu0 %v7523
  %v7525 = vpop.xlane.xlu0 %7524
  %v7526 = vsel %vm590, %v7432, 0.0
  %7527 = vadd.xlane.f32.xlu0 %v7526
  %v7528 = vpop.xlane.xlu0 %7527
  %7529 = vmatpush.msra.mxu0 %v7480
  %7530 = vmatpush.msra.mxu0 %v7477
  %7531 = vmatpush.msra.mxu0 %v7474
  %7532 = vmatpush.msra.mxu0 %v7471
  %7533 = vmatpush.msra.mxu0 %v7468
  %7534 = vmatpush.msra.mxu0 %v7465
  %7535 = vmatpush.msra.mxu0 %v7462
  %7536 = vmatpush.msra.mxu0 %v7459
  %7537 = vmatpush.msra.mxu0 %v7456
  %7538 = vmatpush.msra.mxu0 %v7453
  %7539 = vmatpush.msra.mxu0 %v7450
  %7540 = vmatpush.msra.mxu0 %v7447
  %7541 = vmatpush.msra.mxu0 %v7444
  %7542 = vmatpush.msra.mxu0 %v7441
  %7543 = vmatpush.msra.mxu0 %v7438
  %7544 = vmatpush.msra.mxu0 %v7435
  %7545 = vmatmul.f32.gmra.mxu0 %v174
  %v7546 = vpop.f32.mrf.mxu0
  %v7547 = vadd.f32 0.0, %v7546
  %7548 = vmatmul.f32.gmra.mxu0 %v176
  %v7549 = vpop.f32.mrf.mxu0
  %v7550 = vadd.f32 0.0, %v7549
  %7551 = vdwg.mxu0
  %7552 = vmatpush.msra.mxu0 %v7528
  %7553 = vmatpush.msra.mxu0 %v7525
  %7554 = vmatpush.msra.mxu0 %v7522
  %7555 = vmatpush.msra.mxu0 %v7519
  %7556 = vmatpush.msra.mxu0 %v7516
  %7557 = vmatpush.msra.mxu0 %v7513
  %7558 = vmatpush.msra.mxu0 %v7510
  %7559 = vmatpush.msra.mxu0 %v7507
  %7560 = vmatpush.msra.mxu0 %v7504
  %7561 = vmatpush.msra.mxu0 %v7501
  %7562 = vmatpush.msra.mxu0 %v7498
  %7563 = vmatpush.msra.mxu0 %v7495
  %7564 = vmatpush.msra.mxu0 %v7492
  %7565 = vmatpush.msra.mxu0 %v7489
  %7566 = vmatpush.msra.mxu0 %v7486
  %7567 = vmatpush.msra.mxu0 %v7483
  %7568 = vmatmul.f32.gmra.mxu0 %v175
  %v7569 = vpop.f32.mrf.mxu0
  %v7570 = vadd.f32 %v7547, %v7569
  %7571 = vmatmul.f32.gmra.mxu0 %v177
  %v7572 = vpop.f32.mrf.mxu0
  %v7573 = vadd.f32 %v7550, %v7572
  %7574 = vdwg.mxu0
  %v7575 = vmul.f32 %v7570, 0.03125
  %v7576 = vmul.f32 %v7573, 0.03125
  %v7577 = vsel %vm1266, %v7575, -inf
  %v7578 = vsel %vm1266, %v7576, -inf
  %v7579 = vmax.f32 %v7577, %v7578
  %v7580 = vrot.slane %v7579, 4
  %v7581 = vmax.f32 %v7579, %v7580
  %v7582 = vrot.slane %v7581, 2
  %v7583 = vmax.f32 %v7581, %v7582
  %v7584 = vrot.slane %v7583, 1
  %v7585 = vmax.f32 %v7583, %v7584
  %vm7586 = vcmp.ge.f32.partialorder %v7575, %v7585
  %vm7587 = vcmp.ge.f32.partialorder %v7576, %v7585
  %v7588 = vsel %vm7586, %v316, 16.0
  %v7589 = vsel %vm7587, %v317, 16.0
  %v7590 = vsel %vm1266, %v7588, inf
  %v7591 = vsel %vm1266, %v7589, inf
  %v7592 = vmin.f32 %v7590, %v7591
  %v7593 = vrot.slane %v7592, 4
  %v7594 = vmin.f32 %v7592, %v7593
  %v7595 = vrot.slane %v7594, 2
  %v7596 = vmin.f32 %v7594, %v7595
  %v7597 = vrot.slane %v7596, 1
  %v7598 = vmin.f32 %v7596, %v7597
  %vm7599 = vcmp.eq.f32.partialorder %v316, %v7598
  %vm7600 = vcmp.eq.f32.partialorder %v317, %v7598
  %v7601 = vsel %vm7599, 1, 0
  %v7602 = vsel %vm7600, 1, 0
  %v7603 = vcvt.s32.f32 %v7601
  %v7604 = vcvt.s32.f32 %v7602
  %vm7605 = vcmp.gt.f32.partialorder %v7603, 0.5
  %vm7606 = vcmp.gt.f32.partialorder %v7604, 0.5
  %v7607 = vsel %vm7605, -1e+30, %v7575
  %v7608 = vsel %vm7606, -1e+30, %v7576
  %v7609 = vsel %vm1266, %v7607, -inf
  %v7610 = vsel %vm1266, %v7608, -inf
  %v7611 = vmax.f32 %v7609, %v7610
  %v7612 = vrot.slane %v7611, 4
  %v7613 = vmax.f32 %v7611, %v7612
  %v7614 = vrot.slane %v7613, 2
  %v7615 = vmax.f32 %v7613, %v7614
  %v7616 = vrot.slane %v7615, 1
  %v7617 = vmax.f32 %v7615, %v7616
  %vm7618 = vcmp.ge.f32.partialorder %v7607, %v7617
  %vm7619 = vcmp.ge.f32.partialorder %v7608, %v7617
  %v7620 = vsel %vm7618, %v316, 16.0
  %v7621 = vsel %vm7619, %v317, 16.0
  %v7622 = vsel %vm1266, %v7620, inf
  %v7623 = vsel %vm1266, %v7621, inf
  %v7624 = vmin.f32 %v7622, %v7623
  %v7625 = vrot.slane %v7624, 4
  %v7626 = vmin.f32 %v7624, %v7625
  %v7627 = vrot.slane %v7626, 2
  %v7628 = vmin.f32 %v7626, %v7627
  %v7629 = vrot.slane %v7628, 1
  %v7630 = vmin.f32 %v7628, %v7629
  %vm7631 = vcmp.eq.f32.partialorder %v316, %v7630
  %vm7632 = vcmp.eq.f32.partialorder %v317, %v7630
  %v7633 = vsel %vm7631, 1, 0
  %v7634 = vsel %vm7632, 1, 0
  %v7635 = vcvt.s32.f32 %v7633
  %v7636 = vcvt.s32.f32 %v7634
  %v7637 = vsub.f32 %v7585, %v7585
  %v7638 = vmul.f32 %v7637, 1.442695
  %v7639 = vpow.pop %v7638
  %v7640 = vsub.f32 %v7617, %v7585
  %v7641 = vmul.f32 %v7640, 1.442695
  %v7642 = vpow.pop %v7641
  %v7643 = vadd.f32 %v7639, %v7642
  %v7644 = vrcp.pop %v7643
  %v7645 = vmul.f32 %v7643, %v7644
  %v7646 = vsub.f32 1.0, %v7645
  %v7647 = vmul.f32 %v7644, %v7646
  %v7648 = vadd.f32 %v7644, %v7647
  %vm7649 = vweird.f32 %v7643
  %vm7650 = vweird.f32 %v7644
  %vm7651 = vmor %vm7649, %vm7650
  %v7652 = vsel %vm7651, %v7644, %v7648
  %v7653 = vand.u32 2147483647, %v7643
  %vm7654 = vcmp.eq.f32.partialorder %v7653, 8.507059e+37
  %v7655 = vand.u32 %v7643, 2147483648
  %v7656 = vor.u32 1.1754944e-38, %v7655
  %v7657 = vsel %vm7654, %v7656, %v7652
  %v7658 = vmul.f32 %v7639, %v7657
  %v7659 = vmul.f32 %v7603, %v7658
  %v7660 = vmul.f32 %v7604, %v7658
  %v7661 = vmul.f32 %v7642, %v7657
  %v7662 = vmul.f32 %v7635, %v7661
  %v7663 = vmul.f32 %v7636, %v7661
  %v7664 = vadd.f32 %v7659, %v7662
  %v7665 = vadd.f32 %v7660, %v7663
  %7666 = vmatpush.msra.mxu0 0.0
  %7667 = vmatpush.msra.mxu0 0.0
  %7668 = vmatpush.msra.mxu0 0.0
  %7669 = vmatpush.msra.mxu0 0.0
  %7670 = vmatpush.msra.mxu0 0.0
  %7671 = vmatpush.msra.mxu0 0.0
  %7672 = vmatpush.msra.mxu0 0.0
  %7673 = vmatpush.msra.mxu0 0.0
  %7674 = vmatpush.msra.mxu0 0.0
  %7675 = vmatpush.msra.mxu0 0.0
  %7676 = vmatpush.msra.mxu0 0.0
  %7677 = vmatpush.msra.mxu0 0.0
  %7678 = vmatpush.msra.mxu0 0.0
  %7679 = vmatpush.msra.mxu0 0.0
  %7680 = vmatpush.msra.mxu0 %v7665
  %7681 = vmatpush.msra.mxu0 %v7664
  %7682 = vmatmul.f32.gmra.mxu0 %v1357
  %v7683 = vpop.f32.mrf.mxu0
  %v7684 = vadd.f32 0.0, %v7683
  %7685 = vmatmul.f32.gmra.mxu0 %v1360
  %v7686 = vpop.f32.mrf.mxu0
  %v7687 = vadd.f32 0.0, %v7686
  %7688 = vmatmul.f32.gmra.mxu0 %v1363
  %v7689 = vpop.f32.mrf.mxu0
  %v7690 = vadd.f32 0.0, %v7689
  %7691 = vmatmul.f32.gmra.mxu0 %v1366
  %v7692 = vpop.f32.mrf.mxu0
  %v7693 = vadd.f32 0.0, %v7692
  %7694 = vmatmul.f32.gmra.mxu0 %v1369
  %v7695 = vpop.f32.mrf.mxu0
  %v7696 = vadd.f32 0.0, %v7695
  %7697 = vmatmul.f32.gmra.mxu0 %v1372
  %v7698 = vpop.f32.mrf.mxu0
  %v7699 = vadd.f32 0.0, %v7698
  %7700 = vmatmul.f32.gmra.mxu0 %v1375
  %v7701 = vpop.f32.mrf.mxu0
  %v7702 = vadd.f32 0.0, %v7701
  %7703 = vmatmul.f32.gmra.mxu0 %v1378
  %v7704 = vpop.f32.mrf.mxu0
  %v7705 = vadd.f32 0.0, %v7704
  %7706 = vmatmul.f32.gmra.mxu0 %v1381
  %v7707 = vpop.f32.mrf.mxu0
  %v7708 = vadd.f32 0.0, %v7707
  %7709 = vmatmul.f32.gmra.mxu0 %v1384
  %v7710 = vpop.f32.mrf.mxu0
  %v7711 = vadd.f32 0.0, %v7710
  %7712 = vmatmul.f32.gmra.mxu0 %v1387
  %v7713 = vpop.f32.mrf.mxu0
  %v7714 = vadd.f32 0.0, %v7713
  %7715 = vmatmul.f32.gmra.mxu0 %v1390
  %v7716 = vpop.f32.mrf.mxu0
  %v7717 = vadd.f32 0.0, %v7716
  %7718 = vmatmul.f32.gmra.mxu0 %v1393
  %v7719 = vpop.f32.mrf.mxu0
  %v7720 = vadd.f32 0.0, %v7719
  %7721 = vmatmul.f32.gmra.mxu0 %v1396
  %v7722 = vpop.f32.mrf.mxu0
  %v7723 = vadd.f32 0.0, %v7722
  %7724 = vmatmul.f32.gmra.mxu0 %v1399
  %v7725 = vpop.f32.mrf.mxu0
  %v7726 = vadd.f32 0.0, %v7725
  %7727 = vmatmul.f32.gmra.mxu0 %v1402
  %v7728 = vpop.f32.mrf.mxu0
  %v7729 = vadd.f32 0.0, %v7728
  %7730 = vmatmul.f32.gmra.mxu0 %v1405
  %v7731 = vpop.f32.mrf.mxu0
  %v7732 = vadd.f32 0.0, %v7731
  %7733 = vmatmul.f32.gmra.mxu0 %v1408
  %v7734 = vpop.f32.mrf.mxu0
  %v7735 = vadd.f32 0.0, %v7734
  %7736 = vmatmul.f32.gmra.mxu0 %v1411
  %v7737 = vpop.f32.mrf.mxu0
  %v7738 = vadd.f32 0.0, %v7737
  %7739 = vmatmul.f32.gmra.mxu0 %v1414
  %v7740 = vpop.f32.mrf.mxu0
  %v7741 = vadd.f32 0.0, %v7740
  %7742 = vmatmul.f32.gmra.mxu0 %v1417
  %v7743 = vpop.f32.mrf.mxu0
  %v7744 = vadd.f32 0.0, %v7743
  %7745 = vmatmul.f32.gmra.mxu0 %v1420
  %v7746 = vpop.f32.mrf.mxu0
  %v7747 = vadd.f32 0.0, %v7746
  %7748 = vmatmul.f32.gmra.mxu0 %v1423
  %v7749 = vpop.f32.mrf.mxu0
  %v7750 = vadd.f32 0.0, %v7749
  %7751 = vmatmul.f32.gmra.mxu0 %v1426
  %v7752 = vpop.f32.mrf.mxu0
  %v7753 = vadd.f32 0.0, %v7752
  %7754 = vmatmul.f32.gmra.mxu0 %v1429
  %v7755 = vpop.f32.mrf.mxu0
  %v7756 = vadd.f32 0.0, %v7755
  %7757 = vmatmul.f32.gmra.mxu0 %v1432
  %v7758 = vpop.f32.mrf.mxu0
  %v7759 = vadd.f32 0.0, %v7758
  %7760 = vmatmul.f32.gmra.mxu0 %v1435
  %v7761 = vpop.f32.mrf.mxu0
  %v7762 = vadd.f32 0.0, %v7761
  %7763 = vmatmul.f32.gmra.mxu0 %v1438
  %v7764 = vpop.f32.mrf.mxu0
  %v7765 = vadd.f32 0.0, %v7764
  %7766 = vmatmul.f32.gmra.mxu0 %v1441
  %v7767 = vpop.f32.mrf.mxu0
  %v7768 = vadd.f32 0.0, %v7767
  %7769 = vmatmul.f32.gmra.mxu0 %v1444
  %v7770 = vpop.f32.mrf.mxu0
  %v7771 = vadd.f32 0.0, %v7770
  %7772 = vmatmul.f32.gmra.mxu0 %v1447
  %v7773 = vpop.f32.mrf.mxu0
  %v7774 = vadd.f32 0.0, %v7773
  %7775 = vmatmul.f32.gmra.mxu0 %v1450
  %v7776 = vpop.f32.mrf.mxu0
  %v7777 = vadd.f32 0.0, %v7776
  %7778 = vdwg.mxu0
  %7780 = vset.pattern.permute.xlu0 0
  %7781 = vperm.xlu0 %7780, %v7684
  %v7782 = vpop.permute.xlu0 %7781
  %7785 = vset.pattern.permute.xlu0 0
  %7786 = vperm.xlu0 %7785, %v7687
  %v7787 = vpop.permute.xlu0 %7786
  %7790 = vset.pattern.permute.xlu0 0
  %7791 = vperm.xlu0 %7790, %v7690
  %v7792 = vpop.permute.xlu0 %7791
  %7795 = vset.pattern.permute.xlu0 0
  %7796 = vperm.xlu0 %7795, %v7693
  %v7797 = vpop.permute.xlu0 %7796
  %7800 = vset.pattern.permute.xlu0 0
  %7801 = vperm.xlu0 %7800, %v7696
  %v7802 = vpop.permute.xlu0 %7801
  %7805 = vset.pattern.permute.xlu0 0
  %7806 = vperm.xlu0 %7805, %v7699
  %v7807 = vpop.permute.xlu0 %7806
  %7810 = vset.pattern.permute.xlu0 0
  %7811 = vperm.xlu0 %7810, %v7702
  %v7812 = vpop.permute.xlu0 %7811
  %7815 = vset.pattern.permute.xlu0 0
  %7816 = vperm.xlu0 %7815, %v7705
  %v7817 = vpop.permute.xlu0 %7816
  %7820 = vset.pattern.permute.xlu0 0
  %7821 = vperm.xlu0 %7820, %v7708
  %v7822 = vpop.permute.xlu0 %7821
  %7825 = vset.pattern.permute.xlu0 0
  %7826 = vperm.xlu0 %7825, %v7711
  %v7827 = vpop.permute.xlu0 %7826
  %7830 = vset.pattern.permute.xlu0 0
  %7831 = vperm.xlu0 %7830, %v7714
  %v7832 = vpop.permute.xlu0 %7831
  %7835 = vset.pattern.permute.xlu0 0
  %7836 = vperm.xlu0 %7835, %v7717
  %v7837 = vpop.permute.xlu0 %7836
  %7840 = vset.pattern.permute.xlu0 0
  %7841 = vperm.xlu0 %7840, %v7720
  %v7842 = vpop.permute.xlu0 %7841
  %7845 = vset.pattern.permute.xlu0 0
  %7846 = vperm.xlu0 %7845, %v7723
  %v7847 = vpop.permute.xlu0 %7846
  %7850 = vset.pattern.permute.xlu0 0
  %7851 = vperm.xlu0 %7850, %v7726
  %v7852 = vpop.permute.xlu0 %7851
  %7855 = vset.pattern.permute.xlu0 0
  %7856 = vperm.xlu0 %7855, %v7729
  %v7857 = vpop.permute.xlu0 %7856
  %7860 = vset.pattern.permute.xlu0 0
  %7861 = vperm.xlu0 %7860, %v7732
  %v7862 = vpop.permute.xlu0 %7861
  %7865 = vset.pattern.permute.xlu0 0
  %7866 = vperm.xlu0 %7865, %v7735
  %v7867 = vpop.permute.xlu0 %7866
  %7870 = vset.pattern.permute.xlu0 0
  %7871 = vperm.xlu0 %7870, %v7738
  %v7872 = vpop.permute.xlu0 %7871
  %7875 = vset.pattern.permute.xlu0 0
  %7876 = vperm.xlu0 %7875, %v7741
  %v7877 = vpop.permute.xlu0 %7876
  %7880 = vset.pattern.permute.xlu0 0
  %7881 = vperm.xlu0 %7880, %v7744
  %v7882 = vpop.permute.xlu0 %7881
  %7885 = vset.pattern.permute.xlu0 0
  %7886 = vperm.xlu0 %7885, %v7747
  %v7887 = vpop.permute.xlu0 %7886
  %7890 = vset.pattern.permute.xlu0 0
  %7891 = vperm.xlu0 %7890, %v7750
  %v7892 = vpop.permute.xlu0 %7891
  %7895 = vset.pattern.permute.xlu0 0
  %7896 = vperm.xlu0 %7895, %v7753
  %v7897 = vpop.permute.xlu0 %7896
  %7900 = vset.pattern.permute.xlu0 0
  %7901 = vperm.xlu0 %7900, %v7756
  %v7902 = vpop.permute.xlu0 %7901
  %7905 = vset.pattern.permute.xlu0 0
  %7906 = vperm.xlu0 %7905, %v7759
  %v7907 = vpop.permute.xlu0 %7906
  %7910 = vset.pattern.permute.xlu0 0
  %7911 = vperm.xlu0 %7910, %v7762
  %v7912 = vpop.permute.xlu0 %7911
  %7915 = vset.pattern.permute.xlu0 0
  %7916 = vperm.xlu0 %7915, %v7765
  %v7917 = vpop.permute.xlu0 %7916
  %7920 = vset.pattern.permute.xlu0 0
  %7921 = vperm.xlu0 %7920, %v7768
  %v7922 = vpop.permute.xlu0 %7921
  %7925 = vset.pattern.permute.xlu0 0
  %7926 = vperm.xlu0 %7925, %v7771
  %v7927 = vpop.permute.xlu0 %7926
  %7930 = vset.pattern.permute.xlu0 0
  %7931 = vperm.xlu0 %7930, %v7774
  %v7932 = vpop.permute.xlu0 %7931
  %7935 = vset.pattern.permute.xlu0 0
  %7936 = vperm.xlu0 %7935, %v7777
  %v7937 = vpop.permute.xlu0 %7936
  %v7939 = vmul.f32 %v7782, %v71
  %v7940 = vmul.f32 %v7787, %v72
  %v7941 = vmul.f32 %v7792, %v73
  %v7942 = vmul.f32 %v7797, %v74
  %v7943 = vmul.f32 %v7802, %v75
  %v7944 = vmul.f32 %v7807, %v76
  %v7945 = vmul.f32 %v7812, %v77
  %v7946 = vmul.f32 %v7817, %v78
  %v7947 = vmul.f32 %v7822, %v79
  %v7948 = vmul.f32 %v7827, %v80
  %v7949 = vmul.f32 %v7832, %v81
  %v7950 = vmul.f32 %v7837, %v82
  %v7951 = vmul.f32 %v7842, %v83
  %v7952 = vmul.f32 %v7847, %v84
  %v7953 = vmul.f32 %v7852, %v85
  %v7954 = vmul.f32 %v7857, %v86
  %v7955 = vmul.f32 %v7862, %v87
  %v7956 = vmul.f32 %v7867, %v88
  %v7957 = vmul.f32 %v7872, %v89
  %v7958 = vmul.f32 %v7877, %v90
  %v7959 = vmul.f32 %v7882, %v91
  %v7960 = vmul.f32 %v7887, %v92
  %v7961 = vmul.f32 %v7892, %v93
  %v7962 = vmul.f32 %v7897, %v94
  %v7963 = vmul.f32 %v7902, %v95
  %v7964 = vmul.f32 %v7907, %v96
  %v7965 = vmul.f32 %v7912, %v97
  %v7966 = vmul.f32 %v7917, %v98
  %v7967 = vmul.f32 %v7922, %v99
  %v7968 = vmul.f32 %v7927, %v100
  %v7969 = vmul.f32 %v7932, %v101
  %v7970 = vmul.f32 %v7937, %v102
  %7971 = vmatpush.msra.mxu0 %v7954
  %7972 = vmatpush.msra.mxu0 %v7953
  %7973 = vmatpush.msra.mxu0 %v7952
  %7974 = vmatpush.msra.mxu0 %v7951
  %7975 = vmatpush.msra.mxu0 %v7950
  %7976 = vmatpush.msra.mxu0 %v7949
  %7977 = vmatpush.msra.mxu0 %v7948
  %7978 = vmatpush.msra.mxu0 %v7947
  %7979 = vmatpush.msra.mxu0 %v7946
  %7980 = vmatpush.msra.mxu0 %v7945
  %7981 = vmatpush.msra.mxu0 %v7944
  %7982 = vmatpush.msra.mxu0 %v7943
  %7983 = vmatpush.msra.mxu0 %v7942
  %7984 = vmatpush.msra.mxu0 %v7941
  %7985 = vmatpush.msra.mxu0 %v7940
  %7986 = vmatpush.msra.mxu0 %v7939
  %7987 = vmatmul.f32.gmra.mxu0 %v169
  %v7988 = vpop.f32.mrf.mxu0
  %v7989 = vadd.f32 0.0, %v7988
  %7990 = vmatmul.f32.gmra.mxu0 %v171
  %v7991 = vpop.f32.mrf.mxu0
  %v7992 = vadd.f32 0.0, %v7991
  %7993 = vdwg.mxu0
  %7994 = vmatpush.msra.mxu0 %v7970
  %7995 = vmatpush.msra.mxu0 %v7969
  %7996 = vmatpush.msra.mxu0 %v7968
  %7997 = vmatpush.msra.mxu0 %v7967
  %7998 = vmatpush.msra.mxu0 %v7966
  %7999 = vmatpush.msra.mxu0 %v7965
  %8000 = vmatpush.msra.mxu0 %v7964
  %8001 = vmatpush.msra.mxu0 %v7963
  %8002 = vmatpush.msra.mxu0 %v7962
  %8003 = vmatpush.msra.mxu0 %v7961
  %8004 = vmatpush.msra.mxu0 %v7960
  %8005 = vmatpush.msra.mxu0 %v7959
  %8006 = vmatpush.msra.mxu0 %v7958
  %8007 = vmatpush.msra.mxu0 %v7957
  %8008 = vmatpush.msra.mxu0 %v7956
  %8009 = vmatpush.msra.mxu0 %v7955
  %8010 = vmatmul.f32.gmra.mxu0 %v170
  %v8011 = vpop.f32.mrf.mxu0
  %v8012 = vadd.f32 %v7989, %v8011
  %8013 = vmatmul.f32.gmra.mxu0 %v172
  %v8014 = vpop.f32.mrf.mxu0
  %v8015 = vadd.f32 %v7992, %v8014
  %8016 = vdwg.mxu0
  %v8018 = vsel %vm326, %v8012, 0
  %v8021 = vsel %vm326, %v8015, 0
  %8023 = vmatpush.msra.mxu0 0.0
  %8024 = vmatpush.msra.mxu0 0.0
  %8025 = vmatpush.msra.mxu0 0.0
  %8026 = vmatpush.msra.mxu0 0.0
  %8027 = vmatpush.msra.mxu0 0.0
  %8028 = vmatpush.msra.mxu0 0.0
  %8029 = vmatpush.msra.mxu0 0.0
  %8030 = vmatpush.msra.mxu0 0.0
  %8031 = vmatpush.msra.mxu0 0.0
  %8032 = vmatpush.msra.mxu0 0.0
  %8033 = vmatpush.msra.mxu0 0.0
  %8034 = vmatpush.msra.mxu0 0.0
  %8035 = vmatpush.msra.mxu0 0.0
  %8036 = vmatpush.msra.mxu0 0.0
  %8037 = vmatpush.msra.mxu0 %v7173
  %8038 = vmatpush.msra.mxu0 %v7170
  %8039 = vmatmul.f32.gmra.mxu0 %v8018
  %v8040 = vpop.f32.mrf.mxu0
  %v8041 = vadd.f32 0.0, %v8040
  %8042 = vmatmul.f32.gmra.mxu0 %v8021
  %v8043 = vpop.f32.mrf.mxu0
  %v8044 = vadd.f32 0.0, %v8043
  %8045 = vdwg.mxu0
  %v8047 = vsel %vm590, %v8041, 0
  %v8050 = vsel %vm590, %v8044, 0
  %8052 = vmatpush.msra.mxu0 0.0
  %8053 = vmatpush.msra.mxu0 0.0
  %8054 = vmatpush.msra.mxu0 0.0
  %8055 = vmatpush.msra.mxu0 0.0
  %8056 = vmatpush.msra.mxu0 0.0
  %8057 = vmatpush.msra.mxu0 0.0
  %8058 = vmatpush.msra.mxu0 0.0
  %8059 = vmatpush.msra.mxu0 0.0
  %8060 = vmatpush.msra.mxu0 0.0
  %8061 = vmatpush.msra.mxu0 0.0
  %8062 = vmatpush.msra.mxu0 0.0
  %8063 = vmatpush.msra.mxu0 0.0
  %8064 = vmatpush.msra.mxu0 %v273
  %8065 = vmatpush.msra.mxu0 %v272
  %8066 = vmatpush.msra.mxu0 %v271
  %8067 = vmatpush.msra.mxu0 %v270
  %8068 = vmatmul.f32.gmra.mxu0 %v8047
  %v8069 = vpop.f32.mrf.mxu0
  %v8070 = vadd.f32 %v4171, %v8069
  %8071 = vmatmul.f32.gmra.mxu0 %v8050
  %v8072 = vpop.f32.mrf.mxu0
  %v8073 = vadd.f32 %v4171, %v8072
  %8074 = vdwg.mxu0
  %v8075 = vadd.f32 %v7092, %v8070
  %v8076 = vadd.f32 %v7093, %v8073
  %8077 = vmatpush.msra.mxu0 0.0
  %8078 = vmatpush.msra.mxu0 0.0
  %8079 = vmatpush.msra.mxu0 0.0
  %8080 = vmatpush.msra.mxu0 0.0
  %8081 = vmatpush.msra.mxu0 0.0
  %8082 = vmatpush.msra.mxu0 0.0
  %8083 = vmatpush.msra.mxu0 0.0
  %8084 = vmatpush.msra.mxu0 0.0
  %8085 = vmatpush.msra.mxu0 0.0
  %8086 = vmatpush.msra.mxu0 0.0
  %8087 = vmatpush.msra.mxu0 0.0
  %8088 = vmatpush.msra.mxu0 0.0
  %8089 = vmatpush.msra.mxu0 0.0
  %8090 = vmatpush.msra.mxu0 0.0
  %8091 = vmatpush.msra.mxu0 %v8076
  %8092 = vmatpush.msra.mxu0 %v8075
  %8093 = vmatmul.f32.gmra.mxu0 %v328
  %v8094 = vpop.f32.mrf.mxu0
  %v8095 = vadd.f32 0.0, %v8094
  %8096 = vmatmul.f32.gmra.mxu0 %v331
  %v8097 = vpop.f32.mrf.mxu0
  %v8098 = vadd.f32 0.0, %v8097
  %8099 = vdwg.mxu0
  %v8100 = vsub.f32 %v8075, %v8095
  %v8101 = vsub.f32 %v8076, %v8098
  %v8103 = vsel %vm590, %v8100, 0
  %v8106 = vsel %vm590, %v8101, 0
  %8108 = vmatpush.msra.mxu0 0.0
  %8109 = vmatpush.msra.mxu0 0.0
  %8110 = vmatpush.msra.mxu0 0.0
  %8111 = vmatpush.msra.mxu0 0.0
  %8112 = vmatpush.msra.mxu0 0.0
  %8113 = vmatpush.msra.mxu0 0.0
  %8114 = vmatpush.msra.mxu0 0.0
  %8115 = vmatpush.msra.mxu0 0.0
  %8116 = vmatpush.msra.mxu0 0.0
  %8117 = vmatpush.msra.mxu0 0.0
  %8118 = vmatpush.msra.mxu0 0.0
  %8119 = vmatpush.msra.mxu0 0.0
  %8120 = vmatpush.msra.mxu0 %v284
  %8121 = vmatpush.msra.mxu0 %v283
  %8122 = vmatpush.msra.mxu0 %v282
  %8123 = vmatpush.msra.mxu0 %v281
  %8124 = vmatmul.f32.gmra.mxu0 %v8103
  %v8125 = vpop.f32.mrf.mxu0
  %v8126 = vadd.f32 0.0, %v8125
  %8127 = vmatmul.f32.gmra.mxu0 %v8106
  %v8128 = vpop.f32.mrf.mxu0
  %v8129 = vadd.f32 0.0, %v8128
  %8130 = vdwg.mxu0
  %v8131 = vmax.f32 %v8126, 0.0
  %v8132 = vmax.f32 %v8129, 0.0
  %v8134 = vsel %vm590, %v8131, 0
  %v8137 = vsel %vm590, %v8132, 0
  %8139 = vmatpush.msra.mxu0 0.0
  %8140 = vmatpush.msra.mxu0 0.0
  %8141 = vmatpush.msra.mxu0 0.0
  %8142 = vmatpush.msra.mxu0 0.0
  %8143 = vmatpush.msra.mxu0 0.0
  %8144 = vmatpush.msra.mxu0 0.0
  %8145 = vmatpush.msra.mxu0 0.0
  %8146 = vmatpush.msra.mxu0 0.0
  %8147 = vmatpush.msra.mxu0 0.0
  %8148 = vmatpush.msra.mxu0 0.0
  %8149 = vmatpush.msra.mxu0 0.0
  %8150 = vmatpush.msra.mxu0 0.0
  %8151 = vmatpush.msra.mxu0 %v288
  %8152 = vmatpush.msra.mxu0 %v287
  %8153 = vmatpush.msra.mxu0 %v286
  %8154 = vmatpush.msra.mxu0 %v285
  %8155 = vmatmul.f32.gmra.mxu0 %v8134
  %v8156 = vpop.f32.mrf.mxu0
  %v8157 = vadd.f32 0.0, %v8156
  %8158 = vmatmul.f32.gmra.mxu0 %v8137
  %v8159 = vpop.f32.mrf.mxu0
  %v8160 = vadd.f32 0.0, %v8159
  %8161 = vdwg.mxu0
  %v8162 = vadd.f32 %v8100, %v8157
  %v8163 = vadd.f32 %v8101, %v8160
  %8164 = vmatpush.msra.mxu0 0.0
  %8165 = vmatpush.msra.mxu0 0.0
  %8166 = vmatpush.msra.mxu0 0.0
  %8167 = vmatpush.msra.mxu0 0.0
  %8168 = vmatpush.msra.mxu0 0.0
  %8169 = vmatpush.msra.mxu0 0.0
  %8170 = vmatpush.msra.mxu0 0.0
  %8171 = vmatpush.msra.mxu0 0.0
  %8172 = vmatpush.msra.mxu0 0.0
  %8173 = vmatpush.msra.mxu0 0.0
  %8174 = vmatpush.msra.mxu0 0.0
  %8175 = vmatpush.msra.mxu0 0.0
  %8176 = vmatpush.msra.mxu0 0.0
  %8177 = vmatpush.msra.mxu0 0.0
  %8178 = vmatpush.msra.mxu0 %v8163
  %8179 = vmatpush.msra.mxu0 %v8162
  %8180 = vmatmul.f32.gmra.mxu0 %v328
  %v8181 = vpop.f32.mrf.mxu0
  %v8182 = vadd.f32 0.0, %v8181
  %8183 = vmatmul.f32.gmra.mxu0 %v331
  %v8184 = vpop.f32.mrf.mxu0
  %v8185 = vadd.f32 0.0, %v8184
  %8186 = vdwg.mxu0
  %v8187 = vsub.f32 %v8162, %v8182
  %v8188 = vsub.f32 %v8163, %v8185
  %v8189 = vadd.f32 %v7087, %v8095
  %v8190 = vadd.f32 %v7090, %v8098
  %v8191 = vadd.f32 %v8189, %v8182
  %v8192 = vadd.f32 %v8190, %v8185
  %8193 = vmatpush.msra.mxu0 0.0
  %8194 = vmatpush.msra.mxu0 0.0
  %8195 = vmatpush.msra.mxu0 0.0
  %8196 = vmatpush.msra.mxu0 0.0
  %8197 = vmatpush.msra.mxu0 0.0
  %8198 = vmatpush.msra.mxu0 0.0
  %8199 = vmatpush.msra.mxu0 0.0
  %8200 = vmatpush.msra.mxu0 0.0
  %8201 = vmatpush.msra.mxu0 0.0
  %8202 = vmatpush.msra.mxu0 0.0
  %8203 = vmatpush.msra.mxu0 0.0
  %8204 = vmatpush.msra.mxu0 0.0
  %8205 = vmatpush.msra.mxu0 0.0
  %8206 = vmatpush.msra.mxu0 0.0
  %8207 = vmatpush.msra.mxu0 %v8192
  %8208 = vmatpush.msra.mxu0 %v8191
  %8209 = vmatmul.f32.gmra.mxu0 %v431
  %v8210 = vpop.f32.mrf.mxu0
  %v8211 = vadd.f32 0.0, %v8210
  %8212 = vmatmul.f32.gmra.mxu0 %v434
  %v8213 = vpop.f32.mrf.mxu0
  %v8214 = vadd.f32 0.0, %v8213
  %8215 = vdwg.mxu0
  %v8217 = vsel %vm590, %v8191, 0
  %v8220 = vsel %vm590, %v8192, 0
  %8222 = vmatpush.msra.mxu0 0.0
  %8223 = vmatpush.msra.mxu0 0.0
  %8224 = vmatpush.msra.mxu0 0.0
  %8225 = vmatpush.msra.mxu0 0.0
  %8226 = vmatpush.msra.mxu0 0.0
  %8227 = vmatpush.msra.mxu0 0.0
  %8228 = vmatpush.msra.mxu0 0.0
  %8229 = vmatpush.msra.mxu0 0.0
  %8230 = vmatpush.msra.mxu0 0.0
  %8231 = vmatpush.msra.mxu0 0.0
  %8232 = vmatpush.msra.mxu0 0.0
  %8233 = vmatpush.msra.mxu0 0.0
  %8234 = vmatpush.msra.mxu0 %v296
  %8235 = vmatpush.msra.mxu0 %v295
  %8236 = vmatpush.msra.mxu0 %v294
  %8237 = vmatpush.msra.mxu0 %v293
  %8238 = vmatmul.f32.gmra.mxu0 %v8217
  %v8239 = vpop.f32.mrf.mxu0
  %v8240 = vadd.f32 0.0, %v8239
  %8241 = vmatmul.f32.gmra.mxu0 %v8220
  %v8242 = vpop.f32.mrf.mxu0
  %v8243 = vadd.f32 0.0, %v8242
  %8244 = vdwg.mxu0
  %v8246 = vsel %vm590, %v8211, 0
  %v8249 = vsel %vm590, %v8214, 0
  %8251 = vmatpush.msra.mxu0 0.0
  %8252 = vmatpush.msra.mxu0 0.0
  %8253 = vmatpush.msra.mxu0 0.0
  %8254 = vmatpush.msra.mxu0 0.0
  %8255 = vmatpush.msra.mxu0 0.0
  %8256 = vmatpush.msra.mxu0 0.0
  %8257 = vmatpush.msra.mxu0 0.0
  %8258 = vmatpush.msra.mxu0 0.0
  %8259 = vmatpush.msra.mxu0 0.0
  %8260 = vmatpush.msra.mxu0 0.0
  %8261 = vmatpush.msra.mxu0 0.0
  %8262 = vmatpush.msra.mxu0 0.0
  %8263 = vmatpush.msra.mxu0 %v292
  %8264 = vmatpush.msra.mxu0 %v291
  %8265 = vmatpush.msra.mxu0 %v290
  %8266 = vmatpush.msra.mxu0 %v289
  %8267 = vmatmul.f32.gmra.mxu0 %v8246
  %v8268 = vpop.f32.mrf.mxu0
  %v8269 = vadd.f32 %v8240, %v8268
  %8270 = vmatmul.f32.gmra.mxu0 %v8249
  %v8271 = vpop.f32.mrf.mxu0
  %v8272 = vadd.f32 %v8243, %v8271
  %8273 = vdwg.mxu0
  %8274 = vmatpush.msra.mxu0 0.0
  %8275 = vmatpush.msra.mxu0 0.0
  %8276 = vmatpush.msra.mxu0 0.0
  %8277 = vmatpush.msra.mxu0 0.0
  %8278 = vmatpush.msra.mxu0 0.0
  %8279 = vmatpush.msra.mxu0 0.0
  %8280 = vmatpush.msra.mxu0 0.0
  %8281 = vmatpush.msra.mxu0 0.0
  %8282 = vmatpush.msra.mxu0 0.0
  %8283 = vmatpush.msra.mxu0 0.0
  %8284 = vmatpush.msra.mxu0 0.0
  %8285 = vmatpush.msra.mxu0 0.0
  %8286 = vmatpush.msra.mxu0 0.0
  %8287 = vmatpush.msra.mxu0 0.0
  %8288 = vmatpush.msra.mxu0 %v8192
  %8289 = vmatpush.msra.mxu0 %v8191
  %8290 = vmatmul.f32.gmra.mxu0 %v525
  %v8291 = vpop.f32.mrf.mxu0
  %v8292 = vadd.f32 0.0, %v8291
  %8293 = vmatmul.f32.gmra.mxu0 %v528
  %v8294 = vpop.f32.mrf.mxu0
  %v8295 = vadd.f32 0.0, %v8294
  %8296 = vdwg.mxu0
  %v8298 = vsel %vm590, %v8292, 0
  %v8301 = vsel %vm590, %v8295, 0
  %8303 = vmatpush.msra.mxu0 0.0
  %8304 = vmatpush.msra.mxu0 0.0
  %8305 = vmatpush.msra.mxu0 0.0
  %8306 = vmatpush.msra.mxu0 0.0
  %8307 = vmatpush.msra.mxu0 0.0
  %8308 = vmatpush.msra.mxu0 0.0
  %8309 = vmatpush.msra.mxu0 0.0
  %8310 = vmatpush.msra.mxu0 0.0
  %8311 = vmatpush.msra.mxu0 0.0
  %8312 = vmatpush.msra.mxu0 0.0
  %8313 = vmatpush.msra.mxu0 0.0
  %8314 = vmatpush.msra.mxu0 0.0
  %8315 = vmatpush.msra.mxu0 %v300
  %8316 = vmatpush.msra.mxu0 %v299
  %8317 = vmatpush.msra.mxu0 %v298
  %8318 = vmatpush.msra.mxu0 %v297
  %8319 = vmatmul.f32.gmra.mxu0 %v8298
  %v8320 = vpop.f32.mrf.mxu0
  %v8321 = vadd.f32 0.0, %v8320
  %8322 = vmatmul.f32.gmra.mxu0 %v8301
  %v8323 = vpop.f32.mrf.mxu0
  %v8324 = vadd.f32 0.0, %v8323
  %8325 = vdwg.mxu0
  %v8326 = vadd.f32 %v8269, %v8321
  %v8327 = vadd.f32 %v8272, %v8324
  %v8328 = vadd.f32 %v4645, %v8326
  %v8329 = vadd.f32 %v4648, %v8327
  %v8330 = vsel %vm590, %v8187, 0.0
  %8331 = vadd.xlane.f32.xlu0 %v8330
  %v8332 = vpop.xlane.xlu0 %8331
  %v8333 = vsel %vm590, %v8188, 0.0
  %8334 = vadd.xlane.f32.xlu0 %v8333
  %v8335 = vpop.xlane.xlu0 %8334
  %v8336 = vmul.f32 %v8332, %v1990
  %v8337 = vmul.f32 %v8335, %v1990
  %v8338 = vsub.f32 %v8187, %v8336
  %v8339 = vsub.f32 %v8188, %v8337
  %v8340 = vmul.f32 %v8338, %v8338
  %v8341 = vmul.f32 %v8339, %v8339
  %v8342 = vsel %vm590, %v8340, 0.0
  %8343 = vadd.xlane.f32.xlu0 %v8342
  %v8344 = vpop.xlane.xlu0 %8343
  %v8345 = vsel %vm590, %v8341, 0.0
  %8346 = vadd.xlane.f32.xlu0 %v8345
  %v8347 = vpop.xlane.xlu0 %8346
  %v8348 = vmul.f32 %v8344, %v1990
  %v8349 = vmul.f32 %v8347, %v1990
  %v8350 = vadd.f32 %v8348, 1e-05
  %v8351 = vadd.f32 %v8349, 1e-05
  %v8352 = vrsqrt.pop %v8350
  %v8353 = vmul.f32 %v8352, %v8350
  %v8354 = vmul.f32 %v8353, %v8352
  %v8355 = vmul.f32 0.5, %v8354
  %v8356 = vsub.f32 1.5, %v8355
  %v8357 = vmul.f32 %v8352, %v8356
  %vm8358 = vweird.f32 %v8350
  %vm8359 = vweird.f32 %v8352
  %vm8360 = vmor %vm8358, %vm8359
  %v8361 = vsel %vm8360, %v8352, %v8357
  %v8362 = vrsqrt.pop %v8351
  %v8363 = vmul.f32 %v8362, %v8351
  %v8364 = vmul.f32 %v8363, %v8362
  %v8365 = vmul.f32 0.5, %v8364
  %v8366 = vsub.f32 1.5, %v8365
  %v8367 = vmul.f32 %v8362, %v8366
  %vm8368 = vweird.f32 %v8351
  %vm8369 = vweird.f32 %v8362
  %vm8370 = vmor %vm8368, %vm8369
  %v8371 = vsel %vm8370, %v8362, %v8367
  %v8372 = vmul.f32 %v8338, %v8361
  %v8373 = vmul.f32 %v8339, %v8371
  %v8374 = vmul.f32 %v8372, %v4502
  %v8375 = vmul.f32 %v8373, %v4502
  %v8376 = vadd.f32 %v8374, %v4507
  %v8377 = vadd.f32 %v8375, %v4507
  %v8378 = vsel %vm590, %v8376, 0.0
  %v8379 = vsel %vm590, %v8377, 0.0
  %v8380 = vadd.f32 %v8378, %v8379
  %v8381 = vrot.slane %v8380, 4
  %v8382 = vadd.f32 %v8380, %v8381
  %v8383 = vrot.slane %v8382, 2
  %v8384 = vadd.f32 %v8382, %v8383
  %v8385 = vrot.slane %v8384, 1
  %v8386 = vadd.f32 %v8384, %v8385
  %v8387 = vmul.f32 %v8386, %v374
  %v8388 = vsub.f32 %v8376, %v8387
  %v8389 = vsub.f32 %v8377, %v8387
  %v8391 = vsel %vm590, %v8388, 0
  %v8394 = vsel %vm590, %v8389, 0
  %8396 = vmatpush.msra.mxu0 0.0
  %8397 = vmatpush.msra.mxu0 0.0
  %8398 = vmatpush.msra.mxu0 0.0
  %8399 = vmatpush.msra.mxu0 0.0
  %8400 = vmatpush.msra.mxu0 0.0
  %8401 = vmatpush.msra.mxu0 0.0
  %8402 = vmatpush.msra.mxu0 0.0
  %8403 = vmatpush.msra.mxu0 0.0
  %8404 = vmatpush.msra.mxu0 0.0
  %8405 = vmatpush.msra.mxu0 0.0
  %8406 = vmatpush.msra.mxu0 0.0
  %8407 = vmatpush.msra.mxu0 0.0
  %8408 = vmatpush.msra.mxu0 %v304
  %8409 = vmatpush.msra.mxu0 %v303
  %8410 = vmatpush.msra.mxu0 %v302
  %8411 = vmatpush.msra.mxu0 %v301
  %8412 = vmatmul.f32.gmra.mxu0 %v8391
  %v8413 = vpop.f32.mrf.mxu0
  %8414 = vmatmul.f32.gmra.mxu0 %v8394
  %v8415 = vpop.f32.mrf.mxu0
  %v8416 = vadd.f32 0.0, %v8415
  %8417 = vdwg.mxu0
  %v8419 = vsel %vm358, %v8328, 0
  %v8422 = vsel %vm358, %v8329, 0
  %8424 = vmatpush.msra.mxu0 0.0
  %8425 = vmatpush.msra.mxu0 0.0
  %8426 = vmatpush.msra.mxu0 0.0
  %8427 = vmatpush.msra.mxu0 0.0
  %8428 = vmatpush.msra.mxu0 0.0
  %8429 = vmatpush.msra.mxu0 0.0
  %8430 = vmatpush.msra.mxu0 0.0
  %8431 = vmatpush.msra.mxu0 0.0
  %8432 = vmatpush.msra.mxu0 0.0
  %8433 = vmatpush.msra.mxu0 0.0
  %8434 = vmatpush.msra.mxu0 0.0
  %8435 = vmatpush.msra.mxu0 0.0
  %8436 = vmatpush.msra.mxu0 0.0
  %8437 = vmatpush.msra.mxu0 0.0
  %8438 = vmatpush.msra.mxu0 0.0
  %8439 = vmatpush.msra.mxu0 %v4558
  %8440 = vmatmul.f32.gmra.mxu0 %v8419
  %v8441 = vpop.f32.mrf.mxu0
  %8442 = vmatmul.f32.gmra.mxu0 %v8422
  %v8443 = vpop.f32.mrf.mxu0
  %v8444 = vadd.f32 %v8416, %v8443
  %8445 = vdwg.mxu0
  %v8446 = vadd.f32 %v8444, %v4583
  %s8447 = scalar_lea.vmem %s22, 8
  %8448 = vst.msk [vmem:[%s8447] sm:$0xff] %vm358, %v8446
  // Predicated region
  $region90: #{autoformer_forward.1} parent=0 // pred_check
    _
  $region91: #{autoformer_forward.1} parent=0 // pred_check_branch
    %8450 = sbr.rel (0) target = $region93
  $region92: #{autoformer_forward.1} parent=0 // pred_region
    _
  $region93: #{autoformer_forward.1} parent=0 // pred_fallthru
    _
  // Predicated region
  $region94: #{autoformer_forward.1} parent=0 // pred_check
    _
  $region95: #{autoformer_forward.1} parent=0 // pred_check_branch
    %8452 = sbr.rel (0) target = $region97
  $region96: #{autoformer_forward.1} parent=0 // pred_region
    _
  $region97: #{autoformer_forward.1} parent=0 // pred_fallthru
    _

</llo_original>
